<compile_context>
chip_gen: v6e
topology: v6e:2x2x1
jax: 0.10.0
libtpu: 0.0.40
codegen_flags: <defaults>
</compile_context>

<pallas_src>
import functools

import numpy as np

import jax
import jax.numpy as jnp
from jax.experimental import pallas as pl
from jax.experimental.pallas import tpu as pltpu

# ----- dimensions fixed by the torch module -----
D_IMG = 39            # (39-5)//2 + 1 == 18, so 5*18*18 == 1620 matches layer1
CONV_C = 5
K = 5
STRIDE = 2
OUT_HW = 18
P = OUT_HW * OUT_HW   # 324 conv output positions
FEAT = CONV_C * P     # 1620 flattened conv features (torch (C,H,W) order)
BN_EPS = 1e-5

# ----- TPU-friendly padded dims -----
LANE = 128
IMG_PAD = 1536        # 39*39 = 1521 -> 12 lane tiles
FEAT_PAD = 1664       # 1620       -> 13 lane tiles
VMEM_LIMIT = 48 * 1024 * 1024


def _round_up(x, m):
    return ((x + m - 1) // m) * m


def _pick_tile(b):
    """Pick (tb, b_pad) minimizing padded rows; tb is a multiple of 8."""
    if b <= 512:
        tb = _round_up(b, 8)
    else:
        tb = min((512, 256, 128), key=lambda t: (_round_up(b, t), -t))
    return tb, _round_up(b, tb)


# ---------------- fused Pallas kernel ----------------

def make_fused_kernel(b_actual, m_pad):
    """conv(as dense matmul)+ReLU -> Linear -> two-pass BN -> ReLU -> fused head.

    grid = (2, n_tiles): axis 0 is the BN pass (0 = accumulate stats, 1 = emit),
    axis 1 is the B tile.  h is recomputed in pass 1 so VMEM stays O(tile).
    """
    inv_b = 1.0 / float(b_actual)   # baked at trace time (static shapes under jit)

    def kernel(img_ref, wc_ref, bc_ref, w1_ref, b1_ref, g_ref, be_ref,
               wh_ref, bh_ref, out_ref, sum_scr, sq_scr, scale_scr, shift_scr):
        p = pl.program_id(0)
        i = pl.program_id(1)
        tb = img_ref.shape[0]

        # Conv2d lowered to one weight-stationary MXU matmul (columns already in
        # torch (C,H,W) flatten order), then bias + ReLU, then Linear -> h.
        feats = jnp.dot(img_ref[...], wc_ref[...],
                        preferred_element_type=jnp.float32) + bc_ref[...]
        feats = jnp.maximum(feats, 0.0).astype(jnp.bfloat16)
        h = jnp.dot(feats, w1_ref[...],
                    preferred_element_type=jnp.float32) + b1_ref[...]

        # validity mask for padded batch rows
        row = jax.lax.broadcasted_iota(jnp.int32, (tb, 1), 0) + i * tb
        valid = (row < b_actual).astype(jnp.float32)

        @pl.when(jnp.logical_and(p == 0, i == 0))
        def _init():
            sum_scr[...] = jnp.zeros_like(sum_scr)
            sq_scr[...] = jnp.zeros_like(sq_scr)

        @pl.when(p == 0)
        def _accumulate():
            hm = h * valid
            sum_scr[...] += jnp.sum(hm, axis=0, keepdims=True)
            sq_scr[...] += jnp.sum(hm * h, axis=0, keepdims=True)
            out_ref[...] = jnp.zeros_like(out_ref)     # deterministic pass-0 writeback

        @pl.when(jnp.logical_and(p == 1, i == 0))
        def _finalize_stats():
            mu = sum_scr[...] * inv_b
            var = jnp.maximum(sq_scr[...] * inv_b - mu * mu, 0.0)
            sc = g_ref[...] * jax.lax.rsqrt(var + BN_EPS)
            scale_scr[...] = sc
            shift_scr[...] = be_ref[...] - mu * sc

        @pl.when(p == 1)
        def _emit():
            hn = jnp.maximum(h * scale_scr[...] + shift_scr[...], 0.0)
            head = jnp.dot(hn.astype(jnp.bfloat16), wh_ref[...],
                           preferred_element_type=jnp.float32) + bh_ref[...]
            out_ref[:, :m_pad] = head[:, :m_pad] * valid
            out_ref[:, m_pad:] = jnp.exp(head[:, m_pad:] * 0.5) * valid

    return kernel


# ---------------- one-time parameter prep (outside the jitted forward) ----------------

def prep_params(params, hidden_dim, output_dim):
    """Lower the conv to a dense matrix and pad/permute torch-layout params into
    bf16/f32 kernel operands.  Done once; do NOT call inside the jitted forward."""
    h_pad = _round_up(hidden_dim, LANE)
    m_pad = _round_up(output_dim, LANE)

    # wconv[r*39 + j, c*324 + oh*18 + ow] = w[c, r-2*oh, j-2*ow] for taps in range
    w = np.asarray(params["wc"], np.float32).reshape(CONV_C, K, K)
    sel = np.zeros((D_IMG, OUT_HW, K), np.float32)
    for o in range(OUT_HW):
        for k in range(K):
            sel[STRIDE * o + k, o, k] = 1.0
    wconv = np.einsum("ckl,rhk,jwl->rjchw", w, sel, sel).reshape(D_IMG * D_IMG, FEAT)
    wconv = np.pad(wconv, ((0, IMG_PAD - D_IMG * D_IMG), (0, FEAT_PAD - FEAT)))

    bconv = np.zeros((1, FEAT_PAD), np.float32)
    bconv[0, :FEAT] = np.repeat(np.asarray(params["bc"], np.float32), P)

    def pad_row(v, n):
        v = np.asarray(v, np.float32).reshape(1, -1)
        return np.pad(v, ((0, 0), (0, n - v.shape[1])))

    w1 = np.pad(np.asarray(params["w1"], np.float32),
                ((0, FEAT_PAD - FEAT), (0, h_pad - hidden_dim)))

    def pad_head(wh):
        return np.pad(np.asarray(wh, np.float32),
                      ((0, h_pad - hidden_dim), (0, m_pad - output_dim)))

    whead = np.concatenate([pad_head(params["wm"]), pad_head(params["wv"])], axis=1)
    bhead = np.concatenate([pad_row(params["bm"], m_pad),
                            pad_row(params["bv"], m_pad)], axis=1)

    return dict(
        wconv=jnp.asarray(wconv, jnp.bfloat16),
        bconv=jnp.asarray(bconv, jnp.float32),
        w1=jnp.asarray(w1, jnp.bfloat16),
        b1=jnp.asarray(pad_row(params["b1"], h_pad), jnp.float32),
        gamma=jnp.asarray(pad_row(params["gamma"], h_pad), jnp.float32),
        beta=jnp.asarray(pad_row(params["beta"], h_pad), jnp.float32),
        whead=jnp.asarray(whead, jnp.bfloat16),
        bhead=jnp.asarray(bhead, jnp.float32),
    )


# ---------------- forward wrapper ----------------

def vae_encoder_forward(x, kp, *, output_dim):
    bs, N, d, _ = x.shape
    assert d == D_IMG, "layer1 hard-codes 5*18*18, so d must be 39"
    B = bs * N
    tb, b_pad = _pick_tile(B)
    nb = b_pad // tb

    h_pad = kp["w1"].shape[1]
    m2 = kp["whead"].shape[1]          # 2 * m_pad
    m_pad = m2 // 2

    imgs = x.reshape(B, d * d).astype(jnp.bfloat16)
    imgs = jnp.pad(imgs, ((0, b_pad - B), (0, IMG_PAD - d * d)))

    tile = lambda p, i: (i, 0)
    const = lambda p, i: (0, 0)

    out_slab = pl.pallas_call(
        make_fused_kernel(B, m_pad),
        out_shape=jax.ShapeDtypeStruct((b_pad, m2), jnp.float32),
        grid=(2, nb),                  # axis 0: BN pass (stats / emit); axis 1: B tiles
        in_specs=[
            pl.BlockSpec((tb, IMG_PAD), tile),        # raw flattened pixels
            pl.BlockSpec((IMG_PAD, FEAT_PAD), const),  # lowered conv matrix (resident)
            pl.BlockSpec((1, FEAT_PAD), const),        # conv bias (broadcast over positions)
            pl.BlockSpec((FEAT_PAD, h_pad), const),    # Linear weight (resident)
            pl.BlockSpec((1, h_pad), const),           # Linear bias
            pl.BlockSpec((1, h_pad), const),           # BN gamma
            pl.BlockSpec((1, h_pad), const),           # BN beta
            pl.BlockSpec((h_pad, m2), const),          # fused [mean | logvar] head weight
            pl.BlockSpec((1, m2), const),              # fused head bias
        ],
        out_specs=pl.BlockSpec((tb, m2), tile),
        scratch_shapes=[
            pltpu.VMEM((1, h_pad), jnp.float32),   # sum(h)
            pltpu.VMEM((1, h_pad), jnp.float32),   # sum(h*h)
            pltpu.VMEM((1, h_pad), jnp.float32),   # BN scale
            pltpu.VMEM((1, h_pad), jnp.float32),   # BN shift
        ],
        compiler_params=pltpu.CompilerParams(
            dimension_semantics=("arbitrary", "arbitrary"),
            vmem_limit_bytes=VMEM_LIMIT),
    )(imgs, kp["wconv"], kp["bconv"], kp["w1"], kp["b1"],
      kp["gamma"], kp["beta"], kp["whead"], kp["bhead"])

    mean = out_slab[:B, :output_dim].reshape(bs, N, output_dim)
    var = out_slab[:B, m_pad:m_pad + output_dim].reshape(bs, N, output_dim)
    return mean, var


# ---------------- parameter init & pure-JAX reference ----------------

def init_params(key, hidden_dim, output_dim):
    """Kaiming-normal(fan_in, relu) weights, zero biases, BN gamma=1 / beta=0."""
    ks = jax.random.split(key, 4)
    kk = K * K
    wc = jax.random.normal(ks[0], (CONV_C, 1, K, K), jnp.float32) * (2.0 / kk) ** 0.5
    w1 = jax.random.normal(ks[1], (FEAT, hidden_dim), jnp.float32) * (2.0 / FEAT) ** 0.5
    wm = jax.random.normal(ks[2], (hidden_dim, output_dim), jnp.float32) * (2.0 / hidden_dim) ** 0.5
    wv = jax.random.normal(ks[3], (hidden_dim, output_dim), jnp.float32) * (2.0 / hidden_dim) ** 0.5
    return dict(
        wc=wc, bc=jnp.zeros((CONV_C,), jnp.float32),
        w1=w1, b1=jnp.zeros((1, hidden_dim), jnp.float32),
        gamma=jnp.ones((1, hidden_dim), jnp.float32),
        beta=jnp.zeros((1, hidden_dim), jnp.float32),
        wm=wm, bm=jnp.zeros((1, output_dim), jnp.float32),
        wv=wv, bv=jnp.zeros((1, output_dim), jnp.float32),
    )


def reference(x, params):
    """Pure-JAX f32 reference of the torch forward (training-mode BatchNorm)."""
    bs, N, d, _ = x.shape
    B = bs * N
    imgs = x.reshape(B, 1, d, d).astype(jnp.float32)
    conv = jax.lax.conv_general_dilated(
        imgs, params["wc"], window_strides=(STRIDE, STRIDE), padding="VALID",
        dimension_numbers=("NCHW", "OIHW", "NCHW"))
    conv = jnp.maximum(conv + params["bc"].reshape(1, CONV_C, 1, 1), 0.0)
    feats = conv.reshape(B, FEAT)
    h = feats @ params["w1"] + params["b1"]
    mu = h.mean(0, keepdims=True)
    var = ((h - mu) ** 2).mean(0, keepdims=True)
    hn = (h - mu) / jnp.sqrt(var + BN_EPS) * params["gamma"] + params["beta"]
    hn = jnp.maximum(hn, 0.0)
    mean = hn @ params["wm"] + params["bm"]
    var_out = jnp.exp((hn @ params["wv"] + params["bv"]) / 2.0)
    M = params["wm"].shape[1]
    return mean.reshape(bs, N, M), var_out.reshape(bs, N, M)


if __name__ == "__main__":
    key = jax.random.PRNGKey(0)
    kx, kparam = jax.random.split(key)

    bs, N, hidden_dim, output_dim = 2, 8, 32, 16
    x = jax.random.normal(kx, (bs, N, D_IMG, D_IMG), jnp.float32)
    params = init_params(kparam, hidden_dim, output_dim)

    # One-time parameter prep (conv lowering + padding), kept outside the forward trace.
    kp = prep_params(params, hidden_dim, output_dim)

    fwd = jax.jit(functools.partial(vae_encoder_forward, output_dim=output_dim))
    mean, var = fwd(x, kp)
    mean = jax.block_until_ready(mean)
    var = jax.block_until_ready(var)

    ref_mean, ref_var = reference(x, params)
    assert mean.shape == (bs, N, output_dim) and var.shape == (bs, N, output_dim)
    # bf16 MXU operands (f32 accumulation) => bf16-appropriate tolerance vs f32 ref
    assert jnp.allclose(mean, ref_mean, rtol=5e-2, atol=5e-2), "mean mismatch vs reference"
    assert jnp.allclose(var, ref_var, rtol=5e-2, atol=5e-2), "var mismatch vs reference"

    print("KERNEL_OK")
</pallas_src>

<mosaic_0001>
module attributes {stable_mosaic.version = 11 : i64} {
  func.func @kernel(%arg0: i32, %arg1: i32, %arg2: memref<16x1536xbf16, #tpu.memory_space<vmem>>, %arg3: memref<1536x1664xbf16, #tpu.memory_space<vmem>>, %arg4: memref<1x1664xf32, #tpu.memory_space<vmem>>, %arg5: memref<1664x128xbf16, #tpu.memory_space<vmem>>, %arg6: memref<1x128xf32, #tpu.memory_space<vmem>>, %arg7: memref<1x128xf32, #tpu.memory_space<vmem>>, %arg8: memref<1x128xf32, #tpu.memory_space<vmem>>, %arg9: memref<128x256xbf16, #tpu.memory_space<vmem>>, %arg10: memref<1x256xf32, #tpu.memory_space<vmem>>, %arg11: memref<16x256xf32, #tpu.memory_space<vmem>>, %arg12: memref<1x128xf32, #tpu.memory_space<vmem>>, %arg13: memref<1x128xf32, #tpu.memory_space<vmem>>, %arg14: memref<1x128xf32, #tpu.memory_space<vmem>>, %arg15: memref<1x128xf32, #tpu.memory_space<vmem>>) attributes {dimension_semantics = [#tpu.dimension_semantics<arbitrary>, #tpu.dimension_semantics<arbitrary>], iteration_bounds = array<i64: 2, 1>, scalar_prefetch = 0 : i64, scratch_operands = 4 : i64, tpu.core_type = #tpu.core_type<tc>, window_params = [{transform_indices = @transform_0, window_bounds = array<i64: 16, 1536>}, {pipeline_mode = #tpu.pipeline_mode<synchronous>, transform_indices = @transform_1, window_bounds = array<i64: 1536, 1664>}, {pipeline_mode = #tpu.pipeline_mode<synchronous>, transform_indices = @transform_2, window_bounds = array<i64: 1, 1664>}, {pipeline_mode = #tpu.pipeline_mode<synchronous>, transform_indices = @transform_3, window_bounds = array<i64: 1664, 128>}, {pipeline_mode = #tpu.pipeline_mode<synchronous>, transform_indices = @transform_4, window_bounds = array<i64: 1, 128>}, {pipeline_mode = #tpu.pipeline_mode<synchronous>, transform_indices = @transform_5, window_bounds = array<i64: 1, 128>}, {pipeline_mode = #tpu.pipeline_mode<synchronous>, transform_indices = @transform_6, window_bounds = array<i64: 1, 128>}, {pipeline_mode = #tpu.pipeline_mode<synchronous>, transform_indices = @transform_7, window_bounds = array<i64: 128, 256>}, {pipeline_mode = #tpu.pipeline_mode<synchronous>, transform_indices = @transform_8, window_bounds = array<i64: 1, 256>}, {transform_indices = @transform_9, window_bounds = array<i64: 16, 256>}]} {
    %c0 = arith.constant 0 : index
    %c0_0 = arith.constant 0 : index
    %0 = vector.load %arg2[%c0, %c0_0] : memref<16x1536xbf16, #tpu.memory_space<vmem>>, vector<16x1536xbf16>
    %c0_1 = arith.constant 0 : index
    %c0_2 = arith.constant 0 : index
    %1 = vector.load %arg3[%c0_1, %c0_2] : memref<1536x1664xbf16, #tpu.memory_space<vmem>>, vector<1536x1664xbf16>
    %cst = arith.constant dense<0.000000e+00> : vector<16x1664xf32>
    %2 = tpu.matmul %0, %1, %cst {dimension_numbers = #tpu.dot_dimension_numbers<[1], [0], [0], [1], [0, 0, 1, 1], [], []>} : vector<16x1536xbf16>, vector<1536x1664xbf16>, vector<16x1664xf32> -> vector<16x1664xf32>
    %c0_3 = arith.constant 0 : index
    %c0_4 = arith.constant 0 : index
    %3 = vector.load %arg4[%c0_3, %c0_4] : memref<1x1664xf32, #tpu.memory_space<vmem>>, vector<1x1664xf32>
    %4 = vector.broadcast %3 : vector<1x1664xf32> to vector<16x1664xf32>
    %5 = arith.addf %2, %4 : vector<16x1664xf32>
    %cst_5 = arith.constant 0.000000e+00 : f32
    %6 = vector.broadcast %cst_5 : f32 to vector<16x1664xf32>
    %7 = arith.maximumf %5, %6 : vector<16x1664xf32>
    %8 = arith.truncf %7 : vector<16x1664xf32> to vector<16x1664xbf16>
    %c0_6 = arith.constant 0 : index
    %c0_7 = arith.constant 0 : index
    %9 = vector.load %arg5[%c0_6, %c0_7] : memref<1664x128xbf16, #tpu.memory_space<vmem>>, vector<1664x128xbf16>
    %cst_8 = arith.constant dense<0.000000e+00> : vector<16x128xf32>
    %10 = tpu.matmul %8, %9, %cst_8 {dimension_numbers = #tpu.dot_dimension_numbers<[1], [0], [0], [1], [0, 0, 1, 1], [], []>} : vector<16x1664xbf16>, vector<1664x128xbf16>, vector<16x128xf32> -> vector<16x128xf32>
    %c0_9 = arith.constant 0 : index
    %c0_10 = arith.constant 0 : index
    %11 = vector.load %arg6[%c0_9, %c0_10] : memref<1x128xf32, #tpu.memory_space<vmem>>, vector<1x128xf32>
    %12 = vector.broadcast %11 : vector<1x128xf32> to vector<16x128xf32>
    %13 = arith.addf %10, %12 : vector<16x128xf32>
    %14 = tpu.iota {dimensions = array<i32: 0>} : vector<16x1xi32>
    %c16_i32 = arith.constant 16 : i32
    %15 = arith.muli %arg1, %c16_i32 : i32
    %16 = vector.broadcast %15 : i32 to vector<16x1xi32>
    %17 = arith.addi %14, %16 : vector<16x1xi32>
    %c16_i32_11 = arith.constant 16 : i32
    %18 = vector.broadcast %c16_i32_11 : i32 to vector<16x1xi32>
    %19 = arith.cmpi slt, %17, %18 : vector<16x1xi32>
    %20 = arith.extui %19 : vector<16x1xi1> to vector<16x1xi32>
    %21 = arith.sitofp %20 : vector<16x1xi32> to vector<16x1xf32>
    %c0_i32 = arith.constant 0 : i32
    %22 = arith.cmpi eq, %arg0, %c0_i32 : i32
    %c0_i32_12 = arith.constant 0 : i32
    %23 = arith.cmpi eq, %arg1, %c0_i32_12 : i32
    %24 = arith.andi %22, %23 : i1
    %25 = arith.extui %24 : i1 to i32
    %c0_i32_13 = arith.constant 0 : i32
    %26 = arith.cmpi ne, %25, %c0_i32_13 : i32
    scf.if %26 {
      %cst_20 = arith.constant 0.000000e+00 : f32
      %38 = vector.broadcast %cst_20 : f32 to vector<1x128xf32>
      %c0_21 = arith.constant 0 : index
      %c0_22 = arith.constant 0 : index
      %39 = vector.load %arg12[%c0_21, %c0_22] : memref<1x128xf32, #tpu.memory_space<vmem>>, vector<1x128xf32>
      tpu.vector_store %arg12[%c0_21, %c0_22], %38 {strides = array<i32>} : memref<1x128xf32, #tpu.memory_space<vmem>>, vector<1x128xf32>,
      %cst_23 = arith.constant 0.000000e+00 : f32
      %40 = vector.broadcast %cst_23 : f32 to vector<1x128xf32>
      %c0_24 = arith.constant 0 : index
      %c0_25 = arith.constant 0 : index
      %41 = vector.load %arg13[%c0_24, %c0_25] : memref<1x128xf32, #tpu.memory_space<vmem>>, vector<1x128xf32>
      tpu.vector_store %arg13[%c0_24, %c0_25], %40 {strides = array<i32>} : memref<1x128xf32, #tpu.memory_space<vmem>>, vector<1x128xf32>,
    } else {
    }
    %c0_i32_14 = arith.constant 0 : i32
    %27 = arith.cmpi eq, %arg0, %c0_i32_14 : i32
    %28 = arith.extui %27 : i1 to i32
    %c0_i32_15 = arith.constant 0 : i32
    %29 = arith.cmpi ne, %28, %c0_i32_15 : i32
    scf.if %29 {
      %38 = vector.broadcast %21 : vector<16x1xf32> to vector<16x128xf32>
      %39 = arith.mulf %13, %38 : vector<16x128xf32>
      %c0_20 = arith.constant 0 : index
      %c0_21 = arith.constant 0 : index
      %40 = vector.load %arg12[%c0_20, %c0_21] : memref<1x128xf32, #tpu.memory_space<vmem>>, vector<1x128xf32>
      %cst_22 = arith.constant dense<0.000000e+00> : vector<128xf32>
      %41 = vector.multi_reduction <add>, %39, %cst_22 [0] : vector<16x128xf32> to vector<128xf32>
      %42 = vector.shape_cast %41 : vector<128xf32> to vector<1x128xf32>
      %43 = arith.addf %40, %42 : vector<1x128xf32>
      %c0_23 = arith.constant 0 : index
      %c0_24 = arith.constant 0 : index
      %44 = vector.load %arg12[%c0_23, %c0_24] : memref<1x128xf32, #tpu.memory_space<vmem>>, vector<1x128xf32>
      tpu.vector_store %arg12[%c0_23, %c0_24], %43 {strides = array<i32>} : memref<1x128xf32, #tpu.memory_space<vmem>>, vector<1x128xf32>,
      %c0_25 = arith.constant 0 : index
      %c0_26 = arith.constant 0 : index
      %45 = vector.load %arg13[%c0_25, %c0_26] : memref<1x128xf32, #tpu.memory_space<vmem>>, vector<1x128xf32>
      %46 = arith.mulf %39, %13 : vector<16x128xf32>
      %cst_27 = arith.constant dense<0.000000e+00> : vector<128xf32>
      %47 = vector.multi_reduction <add>, %46, %cst_27 [0] : vector<16x128xf32> to vector<128xf32>
      %48 = vector.shape_cast %47 : vector<128xf32> to vector<1x128xf32>
      %49 = arith.addf %45, %48 : vector<1x128xf32>
      %c0_28 = arith.constant 0 : index
      %c0_29 = arith.constant 0 : index
      %50 = vector.load %arg13[%c0_28, %c0_29] : memref<1x128xf32, #tpu.memory_space<vmem>>, vector<1x128xf32>
      tpu.vector_store %arg13[%c0_28, %c0_29], %49 {strides = array<i32>} : memref<1x128xf32, #tpu.memory_space<vmem>>, vector<1x128xf32>,
      %cst_30 = arith.constant 0.000000e+00 : f32
      %51 = vector.broadcast %cst_30 : f32 to vector<16x256xf32>
      %c0_31 = arith.constant 0 : index
      %c0_32 = arith.constant 0 : index
      %52 = vector.load %arg11[%c0_31, %c0_32] : memref<16x256xf32, #tpu.memory_space<vmem>>, vector<16x256xf32>
      tpu.vector_store %arg11[%c0_31, %c0_32], %51 {strides = array<i32>} : memref<16x256xf32, #tpu.memory_space<vmem>>, vector<16x256xf32>,
    } else {
    }
    %c1_i32 = arith.constant 1 : i32
    %30 = arith.cmpi eq, %arg0, %c1_i32 : i32
    %c0_i32_16 = arith.constant 0 : i32
    %31 = arith.cmpi eq, %arg1, %c0_i32_16 : i32
    %32 = arith.andi %30, %31 : i1
    %33 = arith.extui %32 : i1 to i32
    %c0_i32_17 = arith.constant 0 : i32
    %34 = arith.cmpi ne, %33, %c0_i32_17 : i32
    scf.if %34 {
      %c0_20 = arith.constant 0 : index
      %c0_21 = arith.constant 0 : index
      %38 = vector.load %arg12[%c0_20, %c0_21] : memref<1x128xf32, #tpu.memory_space<vmem>>, vector<1x128xf32>
      %cst_22 = arith.constant 6.250000e-02 : f32
      %39 = vector.broadcast %cst_22 : f32 to vector<1x128xf32>
      %40 = arith.mulf %38, %39 : vector<1x128xf32>
      %c0_23 = arith.constant 0 : index
      %c0_24 = arith.constant 0 : index
      %41 = vector.load %arg13[%c0_23, %c0_24] : memref<1x128xf32, #tpu.memory_space<vmem>>, vector<1x128xf32>
      %cst_25 = arith.constant 6.250000e-02 : f32
      %42 = vector.broadcast %cst_25 : f32 to vector<1x128xf32>
      %43 = arith.mulf %41, %42 : vector<1x128xf32>
      %44 = arith.mulf %40, %40 : vector<1x128xf32>
      %45 = arith.subf %43, %44 : vector<1x128xf32>
      %cst_26 = arith.constant 0.000000e+00 : f32
      %46 = vector.broadcast %cst_26 : f32 to vector<1x128xf32>
      %47 = arith.maximumf %45, %46 : vector<1x128xf32>
      %c0_27 = arith.constant 0 : index
      %c0_28 = arith.constant 0 : index
      %48 = vector.load %arg7[%c0_27, %c0_28] : memref<1x128xf32, #tpu.memory_space<vmem>>, vector<1x128xf32>
      %cst_29 = arith.constant 9.99999974E-6 : f32
      %49 = vector.broadcast %cst_29 : f32 to vector<1x128xf32>
      %50 = arith.addf %47, %49 : vector<1x128xf32>
      %51 = math.rsqrt %50 : vector<1x128xf32>
      %52 = arith.mulf %48, %51 : vector<1x128xf32>
      %c0_30 = arith.constant 0 : index
      %c0_31 = arith.constant 0 : index
      %53 = vector.load %arg14[%c0_30, %c0_31] : memref<1x128xf32, #tpu.memory_space<vmem>>, vector<1x128xf32>
      tpu.vector_store %arg14[%c0_30, %c0_31], %52 {strides = array<i32>} : memref<1x128xf32, #tpu.memory_space<vmem>>, vector<1x128xf32>,
      %c0_32 = arith.constant 0 : index
      %c0_33 = arith.constant 0 : index
      %54 = vector.load %arg8[%c0_32, %c0_33] : memref<1x128xf32, #tpu.memory_space<vmem>>, vector<1x128xf32>
      %55 = arith.mulf %40, %52 : vector<1x128xf32>
      %56 = arith.subf %54, %55 : vector<1x128xf32>
      %c0_34 = arith.constant 0 : index
      %c0_35 = arith.constant 0 : index
      %57 = vector.load %arg15[%c0_34, %c0_35] : memref<1x128xf32, #tpu.memory_space<vmem>>, vector<1x128xf32>
      tpu.vector_store %arg15[%c0_34, %c0_35], %56 {strides = array<i32>} : memref<1x128xf32, #tpu.memory_space<vmem>>, vector<1x128xf32>,
    } else {
    }
    %c1_i32_18 = arith.constant 1 : i32
    %35 = arith.cmpi eq, %arg0, %c1_i32_18 : i32
    %36 = arith.extui %35 : i1 to i32
    %c0_i32_19 = arith.constant 0 : i32
    %37 = arith.cmpi ne, %36, %c0_i32_19 : i32
    scf.if %37 {
      %c0_20 = arith.constant 0 : index
      %c0_21 = arith.constant 0 : index
      %38 = vector.load %arg14[%c0_20, %c0_21] : memref<1x128xf32, #tpu.memory_space<vmem>>, vector<1x128xf32>
      %39 = vector.broadcast %38 : vector<1x128xf32> to vector<16x128xf32>
      %40 = arith.mulf %13, %39 : vector<16x128xf32>
      %c0_22 = arith.constant 0 : index
      %c0_23 = arith.constant 0 : index
      %41 = vector.load %arg15[%c0_22, %c0_23] : memref<1x128xf32, #tpu.memory_space<vmem>>, vector<1x128xf32>
      %42 = vector.broadcast %41 : vector<1x128xf32> to vector<16x128xf32>
      %43 = arith.addf %40, %42 : vector<16x128xf32>
      %cst_24 = arith.constant 0.000000e+00 : f32
      %44 = vector.broadcast %cst_24 : f32 to vector<16x128xf32>
      %45 = arith.maximumf %43, %44 : vector<16x128xf32>
      %46 = arith.truncf %45 : vector<16x128xf32> to vector<16x128xbf16>
      %c0_25 = arith.constant 0 : index
      %c0_26 = arith.constant 0 : index
      %47 = vector.load %arg9[%c0_25, %c0_26] : memref<128x256xbf16, #tpu.memory_space<vmem>>, vector<128x256xbf16>
      %cst_27 = arith.constant dense<0.000000e+00> : vector<16x256xf32>
      %48 = tpu.matmul %46, %47, %cst_27 {dimension_numbers = #tpu.dot_dimension_numbers<[1], [0], [0], [1], [0, 0, 1, 1], [], []>} : vector<16x128xbf16>, vector<128x256xbf16>, vector<16x256xf32> -> vector<16x256xf32>
      %c0_28 = arith.constant 0 : index
      %c0_29 = arith.constant 0 : index
      %49 = vector.load %arg10[%c0_28, %c0_29] : memref<1x256xf32, #tpu.memory_space<vmem>>, vector<1x256xf32>
      %50 = vector.broadcast %49 : vector<1x256xf32> to vector<16x256xf32>
      %51 = arith.addf %48, %50 : vector<16x256xf32>
      %52 = vector.extract_strided_slice %51 {offsets = [0, 0], sizes = [16, 128], strides = [1, 1]} : vector<16x256xf32> to vector<16x128xf32>
      %53 = vector.broadcast %21 : vector<16x1xf32> to vector<16x128xf32>
      %54 = arith.mulf %52, %53 : vector<16x128xf32>
      %c0_30 = arith.constant 0 : index
      %c0_31 = arith.constant 0 : index
      %55 = vector.load %arg11[%c0_30, %c0_31] : memref<16x256xf32, #tpu.memory_space<vmem>>, vector<16x128xf32>
      tpu.vector_store %arg11[%c0_30, %c0_31], %54 {strides = array<i32>} : memref<16x256xf32, #tpu.memory_space<vmem>>, vector<16x128xf32>,
      %56 = vector.extract_strided_slice %51 {offsets = [0, 128], sizes = [16, 128], strides = [1, 1]} : vector<16x256xf32> to vector<16x128xf32>
      %cst_32 = arith.constant 5.000000e-01 : f32
      %57 = vector.broadcast %cst_32 : f32 to vector<16x128xf32>
      %58 = arith.mulf %56, %57 : vector<16x128xf32>
      %59 = math.exp %58 : vector<16x128xf32>
      %60 = vector.broadcast %21 : vector<16x1xf32> to vector<16x128xf32>
      %61 = arith.mulf %59, %60 : vector<16x128xf32>
      %c0_33 = arith.constant 0 : index
      %c128 = arith.constant 128 : index
      %62 = vector.load %arg11[%c0_33, %c128] : memref<16x256xf32, #tpu.memory_space<vmem>>, vector<16x128xf32>
      tpu.vector_store %arg11[%c0_33, %c128], %61 {strides = array<i32>} : memref<16x256xf32, #tpu.memory_space<vmem>>, vector<16x128xf32>,
    } else {
    }
    return
  }
  func.func @transform_0(%arg0: i32, %arg1: i32) -> (i32, i32) {
    %c0_i32 = arith.constant 0 : i32
    %c0_i32_0 = arith.constant 0 : i32
    return %arg1, %c0_i32 : i32, i32
  }
  func.func @transform_1(%arg0: i32, %arg1: i32) -> (i32, i32) {
    %c0_i32 = arith.constant 0 : i32
    %c0_i32_0 = arith.constant 0 : i32
    %c0_i32_1 = arith.constant 0 : i32
    return %c0_i32, %c0_i32_0 : i32, i32
  }
  func.func @transform_2(%arg0: i32, %arg1: i32) -> (i32, i32) {
    %c0_i32 = arith.constant 0 : i32
    %c0_i32_0 = arith.constant 0 : i32
    %c0_i32_1 = arith.constant 0 : i32
    return %c0_i32, %c0_i32_0 : i32, i32
  }
  func.func @transform_3(%arg0: i32, %arg1: i32) -> (i32, i32) {
    %c0_i32 = arith.constant 0 : i32
    %c0_i32_0 = arith.constant 0 : i32
    %c0_i32_1 = arith.constant 0 : i32
    return %c0_i32, %c0_i32_0 : i32, i32
  }
  func.func @transform_4(%arg0: i32, %arg1: i32) -> (i32, i32) {
    %c0_i32 = arith.constant 0 : i32
    %c0_i32_0 = arith.constant 0 : i32
    %c0_i32_1 = arith.constant 0 : i32
    return %c0_i32, %c0_i32_0 : i32, i32
  }
  func.func @transform_5(%arg0: i32, %arg1: i32) -> (i32, i32) {
    %c0_i32 = arith.constant 0 : i32
    %c0_i32_0 = arith.constant 0 : i32
    %c0_i32_1 = arith.constant 0 : i32
    return %c0_i32, %c0_i32_0 : i32, i32
  }
  func.func @transform_6(%arg0: i32, %arg1: i32) -> (i32, i32) {
    %c0_i32 = arith.constant 0 : i32
    %c0_i32_0 = arith.constant 0 : i32
    %c0_i32_1 = arith.constant 0 : i32
    return %c0_i32, %c0_i32_0 : i32, i32
  }
  func.func @transform_7(%arg0: i32, %arg1: i32) -> (i32, i32) {
    %c0_i32 = arith.constant 0 : i32
    %c0_i32_0 = arith.constant 0 : i32
    %c0_i32_1 = arith.constant 0 : i32
    return %c0_i32, %c0_i32_0 : i32, i32
  }
  func.func @transform_8(%arg0: i32, %arg1: i32) -> (i32, i32) {
    %c0_i32 = arith.constant 0 : i32
    %c0_i32_0 = arith.constant 0 : i32
    %c0_i32_1 = arith.constant 0 : i32
    return %c0_i32, %c0_i32_0 : i32, i32
  }
  func.func @transform_9(%arg0: i32, %arg1: i32) -> (i32, i32) {
    %c0_i32 = arith.constant 0 : i32
    %c0_i32_0 = arith.constant 0 : i32
    return %arg1, %c0_i32 : i32, i32
  }
}

</mosaic_0001>

<llo_original>
// kernel: vae_encoder_forward.1
$region0: #{vae_encoder_forward.1}
  #allocation0 [shape = 'u32[]', space=smem, size = 0x4, offset = 0x4, fixed_abs, tag = 'smem constant byte address 0x4 - core index']
  #allocation1 [shape = 'u32[144,128]{1,0:T(1,128)}', space=vmem, size = 0x12000, scoped, tag = 'internal scratch']
  #allocation2 [shape = 'f32[1,128]{1,0:T(1,128)}', space=vmem, size = 0x200, scoped, tag = 'scratch operand']
  #allocation3 [shape = 'f32[1,128]{1,0:T(1,128)}', space=vmem, size = 0x200, scoped, tag = 'scratch operand']
  #allocation4 [shape = 'f32[1,128]{1,0:T(1,128)}', space=vmem, size = 0x200, scoped, tag = 'scratch operand']
  #allocation5 [shape = 'f32[1,128]{1,0:T(1,128)}', space=vmem, size = 0x200, scoped, tag = 'scratch operand']
  %s0 = inlined_call_operand.vmem [shape: bf16[16,1536], index: 0, kind: input, shape index: {}]
  %s1 = inlined_call_operand.hbm [shape: bf16[1536,1664], index: 1, kind: input, shape index: {}]
  %s2 = inlined_call_operand.hbm [shape: f32[1,1664], index: 2, kind: input, shape index: {}]
  %s3 = inlined_call_operand.hbm [shape: bf16[1664,128], index: 3, kind: input, shape index: {}]
  %s4 = inlined_call_operand.hbm [shape: f32[1,128], index: 4, kind: input, shape index: {}]
  %s5 = inlined_call_operand.hbm [shape: f32[1,128], index: 5, kind: input, shape index: {}]
  %s6 = inlined_call_operand.hbm [shape: f32[1,128], index: 6, kind: input, shape index: {}]
  %s7 = inlined_call_operand.hbm [shape: bf16[128,256], index: 7, kind: input, shape index: {}]
  %s8 = inlined_call_operand.hbm [shape: f32[1,256], index: 8, kind: input, shape index: {}]
  %s9 = inlined_call_operand.vmem [shape: f32[16,256], index: 9, kind: output, shape index: {}]
  %s10 = sld [smem:[#allocation0]]
  $region117: #{vae_encoder_forward.1} parent=0
    _
  %s12 = ssub.s32 1, %s10
  %s13 = scalar_select 0, %s12, %s10
  $region1: #{vae_encoder_forward.1} parent=0
    #allocation6 [shape = 'u8[5111808]{0}', space=vmem, size = 0x4e0000, scoped, tag = 'input window, operand 1, single buffered']
    #allocation7 [shape = 's32[2]{0}', space=sflag, size = 0x8, scoped, tag = 'scoped memory for vae_encoder_forward.1']
    #allocation8 [shape = 'u8[6656]{0}', space=vmem, size = 0x1c00, scoped, tag = 'input window, operand 2, single buffered']
    #allocation9 [shape = 's32[1]{0}', space=sflag, size = 0x4, scoped, tag = 'scoped memory for vae_encoder_forward.1']
    #allocation10 [shape = 'u8[425984]{0}', space=vmem, size = 0x68000, scoped, tag = 'input window, operand 3, single buffered']
    #allocation11 [shape = 'u8[512]{0}', space=vmem, size = 0x400, scoped, tag = 'input window, operand 4, single buffered']
    #allocation12 [shape = 's32[1]{0}', space=sflag, size = 0x4, scoped, tag = 'scoped memory for vae_encoder_forward.1']
    #allocation13 [shape = 'u8[512]{0}', space=vmem, size = 0x400, scoped, tag = 'input window, operand 5, single buffered']
    #allocation14 [shape = 'u8[512]{0}', space=vmem, size = 0x400, scoped, tag = 'input window, operand 6, single buffered']
    #allocation15 [shape = 's32[1]{0}', space=sflag, size = 0x4, scoped, tag = 'scoped memory for vae_encoder_forward.1']
    #allocation16 [shape = 'u8[65536]{0}', space=vmem, size = 0x10000, scoped, tag = 'input window, operand 7, single buffered']
    #allocation17 [shape = 'u8[1024]{0}', space=vmem, size = 0x400, scoped, tag = 'input window, operand 8, single buffered']
    #allocation18 [shape = 's32[1]{0}', space=sflag, size = 0x4, scoped, tag = 'scoped memory for vae_encoder_forward.1']
    %14 = vsyncpa [#allocation7], 0
    %15 = vsyncpa [#allocation9], 0
    %16 = vsyncpa [#allocation12], 0
    %17 = vsyncpa [#allocation15], 0
    %18 = vsyncpa [#allocation18], 0
    loop: start=0, step=1, limit=4
    $region2: #{vae_encoder_forward.1} parent=1 // loop_pre_header
      _
    $region3: #{vae_encoder_forward.1} parent=1 // loop_header
      %s20 = sphi 0, %s24
      %p21 = scmp.ge.s32.totalorder %s20, 4
      %s27 = sphi 0, %s39
      %s28 = sphi 0, %s35
      %s29 = sphi 0, %s27
      %s30 = sphi 0, %s28
      %s31 = sphi 0, %s29
      %s32 = sphi 0, %s30
      %s42 = sphi 0, %s44
      %s45 = sphi 0, %s42
      %s46 = sphi 0, %s45
      %s62 = sphi 0, %s46
      %s66 = sphi 0, %s66
      %s68 = sphi 0, %s66
      %s69 = sphi 0, %s68
      %s83 = sphi 0, %s69
      %s87 = sphi 0, %s87
      %s89 = sphi 0, %s87
      %s90 = sphi 0, %s89
      %s104 = sphi 0, %s90
      %s108 = sphi 0, %s108
      %s110 = sphi 0, %s108
      %s111 = sphi 0, %s110
      %s125 = sphi 0, %s111
      %s129 = sphi 0, %s129
      %s131 = sphi 0, %s129
      %s132 = sphi 0, %s131
      %s146 = sphi 0, %s132
      %s150 = sphi 0, %s150
      %s152 = sphi 0, %s150
      %s153 = sphi 0, %s152
      %s167 = sphi 0, %s153
      %s171 = sphi 0, %s171
      %s173 = sphi 0, %s171
      %s174 = sphi 0, %s173
      %s188 = sphi 0, %s174
      %s192 = sphi 0, %s192
      %s194 = sphi 0, %s192
      %s195 = sphi 0, %s194
      %s209 = sphi 0, %s195
      %s213 = sphi 0, %s213
      %s215 = sphi 0, %s213
      %s216 = sphi 0, %s215
      %s230 = sphi 0, %s216
      %s236 = sphi 0, %s238
      %s239 = sphi 0, %s236
      %s240 = sphi 0, %s239
      %s256 = sphi 0, %s240
    $region4: #{vae_encoder_forward.1} parent=1 // loop_header_branch
      %23 = sbr.rel (%p21) target = $region8
    $region5: #{vae_encoder_forward.1} parent=1 // loop_body
      %s25 = ssub.s32 %s20, 1
      %s26 = ssub.s32 %s20, 2
      %s33 = sadd.s32 1, %s28
      %p34 = scmp.ge.s32.totalorder %s33, 1
      %s35 = scalar_select %p34, 0, %s33
      %s36 = sadd.s32 1, %s27
      %s37 = scalar_select %p34, %s36, %s27
      %p38 = scmp.ge.s32.totalorder %s37, 2
      %s39 = scalar_select %p38, 0, %s37
      %s40 = ssub.s32 %s28, %s35
      %p41 = scmp.eq.s32.totalorder %s40, 0
      %s43 = sadd.s32 %s42, 1
      %s44 = scalar_select %p41, %s42, %s43
      %p47 = pneg %p41
      %p48 = scmp.eq.s32.totalorder %s20, 1
      %p49 = por %p47, %p48
      %p50 = scmp.ne.s32.totalorder %s42, %s45
      %p51 = scmp.eq.s32.totalorder %s20, 0
      %p52 = por %p50, %p51
      %p53 = scmp.ne.s32.totalorder %s42, %s45
      %p54 = scmp.eq.s32.totalorder %s25, 1
      %p55 = por %p53, %p54
      %p56 = scmp.ne.s32.totalorder %s45, %s46
      %p57 = scmp.eq.s32.totalorder %s25, 0
      %p58 = por %p56, %p57
      %p59 = scmp.ne.s32.totalorder %s45, %s46
      %p60 = scmp.eq.s32.totalorder %s26, 1
      %p61 = por %p59, %p60
      %p63 = scmp.ne.s32.totalorder %s46, %s62
      %p64 = scmp.eq.s32.totalorder %s26, 0
      %p65 = por %p63, %p64
      %s67 = sadd.s32 %s66, 1
      %p70 = scmp.eq.s32.totalorder %s20, 1
      %p71 = scmp.ne.s32.totalorder %s66, %s68
      %p72 = scmp.eq.s32.totalorder %s20, 0
      %p73 = por %p71, %p72
      %p74 = scmp.ne.s32.totalorder %s66, %s68
      %p75 = scmp.eq.s32.totalorder %s25, 1
      %p76 = por %p74, %p75
      %p77 = scmp.ne.s32.totalorder %s68, %s69
      %p78 = scmp.eq.s32.totalorder %s25, 0
      %p79 = por %p77, %p78
      %p80 = scmp.ne.s32.totalorder %s68, %s69
      %p81 = scmp.eq.s32.totalorder %s26, 1
      %p82 = por %p80, %p81
      %p84 = scmp.ne.s32.totalorder %s69, %s83
      %p85 = scmp.eq.s32.totalorder %s26, 0
      %p86 = por %p84, %p85
      %s88 = sadd.s32 %s87, 1
      %p91 = scmp.eq.s32.totalorder %s20, 1
      %p92 = scmp.ne.s32.totalorder %s87, %s89
      %p93 = scmp.eq.s32.totalorder %s20, 0
      %p94 = por %p92, %p93
      %p95 = scmp.ne.s32.totalorder %s87, %s89
      %p96 = scmp.eq.s32.totalorder %s25, 1
      %p97 = por %p95, %p96
      %p98 = scmp.ne.s32.totalorder %s89, %s90
      %p99 = scmp.eq.s32.totalorder %s25, 0
      %p100 = por %p98, %p99
      %p101 = scmp.ne.s32.totalorder %s89, %s90
      %p102 = scmp.eq.s32.totalorder %s26, 1
      %p103 = por %p101, %p102
      %p105 = scmp.ne.s32.totalorder %s90, %s104
      %p106 = scmp.eq.s32.totalorder %s26, 0
      %p107 = por %p105, %p106
      %s109 = sadd.s32 %s108, 1
      %p112 = scmp.eq.s32.totalorder %s20, 1
      %p113 = scmp.ne.s32.totalorder %s108, %s110
      %p114 = scmp.eq.s32.totalorder %s20, 0
      %p115 = por %p113, %p114
      %p116 = scmp.ne.s32.totalorder %s108, %s110
      %p117 = scmp.eq.s32.totalorder %s25, 1
      %p118 = por %p116, %p117
      %p119 = scmp.ne.s32.totalorder %s110, %s111
      %p120 = scmp.eq.s32.totalorder %s25, 0
      %p121 = por %p119, %p120
      %p122 = scmp.ne.s32.totalorder %s110, %s111
      %p123 = scmp.eq.s32.totalorder %s26, 1
      %p124 = por %p122, %p123
      %p126 = scmp.ne.s32.totalorder %s111, %s125
      %p127 = scmp.eq.s32.totalorder %s26, 0
      %p128 = por %p126, %p127
      %s130 = sadd.s32 %s129, 1
      %p133 = scmp.eq.s32.totalorder %s20, 1
      %p134 = scmp.ne.s32.totalorder %s129, %s131
      %p135 = scmp.eq.s32.totalorder %s20, 0
      %p136 = por %p134, %p135
      %p137 = scmp.ne.s32.totalorder %s129, %s131
      %p138 = scmp.eq.s32.totalorder %s25, 1
      %p139 = por %p137, %p138
      %p140 = scmp.ne.s32.totalorder %s131, %s132
      %p141 = scmp.eq.s32.totalorder %s25, 0
      %p142 = por %p140, %p141
      %p143 = scmp.ne.s32.totalorder %s131, %s132
      %p144 = scmp.eq.s32.totalorder %s26, 1
      %p145 = por %p143, %p144
      %p147 = scmp.ne.s32.totalorder %s132, %s146
      %p148 = scmp.eq.s32.totalorder %s26, 0
      %p149 = por %p147, %p148
      %s151 = sadd.s32 %s150, 1
      %p154 = scmp.eq.s32.totalorder %s20, 1
      %p155 = scmp.ne.s32.totalorder %s150, %s152
      %p156 = scmp.eq.s32.totalorder %s20, 0
      %p157 = por %p155, %p156
      %p158 = scmp.ne.s32.totalorder %s150, %s152
      %p159 = scmp.eq.s32.totalorder %s25, 1
      %p160 = por %p158, %p159
      %p161 = scmp.ne.s32.totalorder %s152, %s153
      %p162 = scmp.eq.s32.totalorder %s25, 0
      %p163 = por %p161, %p162
      %p164 = scmp.ne.s32.totalorder %s152, %s153
      %p165 = scmp.eq.s32.totalorder %s26, 1
      %p166 = por %p164, %p165
      %p168 = scmp.ne.s32.totalorder %s153, %s167
      %p169 = scmp.eq.s32.totalorder %s26, 0
      %p170 = por %p168, %p169
      %s172 = sadd.s32 %s171, 1
      %p175 = scmp.eq.s32.totalorder %s20, 1
      %p176 = scmp.ne.s32.totalorder %s171, %s173
      %p177 = scmp.eq.s32.totalorder %s20, 0
      %p178 = por %p176, %p177
      %p179 = scmp.ne.s32.totalorder %s171, %s173
      %p180 = scmp.eq.s32.totalorder %s25, 1
      %p181 = por %p179, %p180
      %p182 = scmp.ne.s32.totalorder %s173, %s174
      %p183 = scmp.eq.s32.totalorder %s25, 0
      %p184 = por %p182, %p183
      %p185 = scmp.ne.s32.totalorder %s173, %s174
      %p186 = scmp.eq.s32.totalorder %s26, 1
      %p187 = por %p185, %p186
      %p189 = scmp.ne.s32.totalorder %s174, %s188
      %p190 = scmp.eq.s32.totalorder %s26, 0
      %p191 = por %p189, %p190
      %s193 = sadd.s32 %s192, 1
      %p196 = scmp.eq.s32.totalorder %s20, 1
      %p197 = scmp.ne.s32.totalorder %s192, %s194
      %p198 = scmp.eq.s32.totalorder %s20, 0
      %p199 = por %p197, %p198
      %p200 = scmp.ne.s32.totalorder %s192, %s194
      %p201 = scmp.eq.s32.totalorder %s25, 1
      %p202 = por %p200, %p201
      %p203 = scmp.ne.s32.totalorder %s194, %s195
      %p204 = scmp.eq.s32.totalorder %s25, 0
      %p205 = por %p203, %p204
      %p206 = scmp.ne.s32.totalorder %s194, %s195
      %p207 = scmp.eq.s32.totalorder %s26, 1
      %p208 = por %p206, %p207
      %p210 = scmp.ne.s32.totalorder %s195, %s209
      %p211 = scmp.eq.s32.totalorder %s26, 0
      %p212 = por %p210, %p211
      %s214 = sadd.s32 %s213, 1
      %p217 = scmp.eq.s32.totalorder %s20, 1
      %p218 = scmp.ne.s32.totalorder %s213, %s215
      %p219 = scmp.eq.s32.totalorder %s20, 0
      %p220 = por %p218, %p219
      %p221 = scmp.ne.s32.totalorder %s213, %s215
      %p222 = scmp.eq.s32.totalorder %s25, 1
      %p223 = por %p221, %p222
      %p224 = scmp.ne.s32.totalorder %s215, %s216
      %p225 = scmp.eq.s32.totalorder %s25, 0
      %p226 = por %p224, %p225
      %p227 = scmp.ne.s32.totalorder %s215, %s216
      %p228 = scmp.eq.s32.totalorder %s26, 1
      %p229 = por %p227, %p228
      %p231 = scmp.ne.s32.totalorder %s216, %s230
      %p232 = scmp.eq.s32.totalorder %s26, 0
      %p233 = por %p231, %p232
      %s234 = ssub.s32 %s28, %s35
      %p235 = scmp.eq.s32.totalorder %s234, 0
      %s237 = sadd.s32 %s236, 1
      %s238 = scalar_select %p235, %s236, %s237
      %p241 = pneg %p235
      %p242 = scmp.eq.s32.totalorder %s20, 1
      %p243 = por %p241, %p242
      %p244 = scmp.ne.s32.totalorder %s236, %s239
      %p245 = scmp.eq.s32.totalorder %s20, 0
      %p246 = por %p244, %p245
      %p247 = scmp.ne.s32.totalorder %s236, %s239
      %p248 = scmp.eq.s32.totalorder %s25, 1
      %p249 = por %p247, %p248
      %p250 = scmp.ne.s32.totalorder %s239, %s240
      %p251 = scmp.eq.s32.totalorder %s25, 0
      %p252 = por %p250, %p251
      %p253 = scmp.ne.s32.totalorder %s239, %s240
      %p254 = scmp.eq.s32.totalorder %s26, 1
      %p255 = por %p253, %p254
      %p257 = scmp.ne.s32.totalorder %s240, %s256
      %p258 = scmp.eq.s32.totalorder %s26, 0
      %p259 = por %p257, %p258
      %p260 = scmp.le.s32.totalorder 1, %s20
      %p261 = scmp.lt.s32.totalorder %s20, 3
      %p262 = pnand %p260, %p261
      %p263 = pneg %p262
      // Predicated region
      $region9: #{vae_encoder_forward.1} parent=5 // pred_check
        _
      $region10: #{vae_encoder_forward.1} parent=5 // pred_check_branch
        %265 = sbr.rel (%p262) target = $region12
      $region11: #{vae_encoder_forward.1} parent=5 // pred_region
        %s266 = ssub.s32 %s20, 1
        // Predicated region
        $region13: #{vae_encoder_forward.1} parent=11 // pred_check
          %p267 = pneg %p58
        $region14: #{vae_encoder_forward.1} parent=11 // pred_check_branch
          %269 = sbr.rel (%p267) target = $region16
        $region15: #{vae_encoder_forward.1} parent=11 // pred_region
          %s270 = smul.u32 2, %s30
          %p271 = scmp.lt.s32.totalorder %s270, 1
          %s272 = scalar_select %p271, %s270, 1
          %s273 = smul.addr %s272, 12
          %s274 = smul.addr %s273, 4
          %s275 = scalar_lea.vmem %s0, %s274
          %s276 = smul.u32 2, %s30
        $region16: #{vae_encoder_forward.1} parent=11 // pred_fallthru
          _
        // Predicated region
        $region17: #{vae_encoder_forward.1} parent=11 // pred_check
          %p277 = pneg %p79
        $region18: #{vae_encoder_forward.1} parent=11 // pred_check_branch
          %279 = sbr.rel (%p277) target = $region20
        $region19: #{vae_encoder_forward.1} parent=11 // pred_region
          %s281 = ssub.s32 159744, 159744
          %282 = vsyncadd [#allocation7], %s281
          %s283 = sshll.u32 [#allocation6], 4
          %s284 = int_to_ptr.vmem [resolvable:$true] %s283
          %289 = dma.hbm_to_vmem [thread:$0]  %s1, 159744, %s284, [#allocation7], 832, 832, 52
        $region20: #{vae_encoder_forward.1} parent=11 // pred_fallthru
          _
        // Predicated region
        $region21: #{vae_encoder_forward.1} parent=11 // pred_check
          %p290 = pneg %p100
        $region22: #{vae_encoder_forward.1} parent=11 // pred_check_branch
          %292 = sbr.rel (%p290) target = $region24
        $region23: #{vae_encoder_forward.1} parent=11 // pred_region
          %s294 = ssub.s32 208, 208
          %295 = vsyncadd [#allocation9], %s294
          %s297 = sshll.u32 [#allocation8], 4
          %s298 = int_to_ptr.vmem [resolvable:$true] %s297
          %300 = dma.hbm_to_vmem [thread:$0]  %s2, 208, %s298, [#allocation9]
        $region24: #{vae_encoder_forward.1} parent=11 // pred_fallthru
          _
        // Predicated region
        $region25: #{vae_encoder_forward.1} parent=11 // pred_check
          %p301 = pneg %p121
        $region26: #{vae_encoder_forward.1} parent=11 // pred_check_branch
          %303 = sbr.rel (%p301) target = $region28
        $region27: #{vae_encoder_forward.1} parent=11 // pred_region
          %s305 = ssub.s32 13312, 13312
          %306 = vsyncadd [#allocation9], %s305
          %s307 = sshll.u32 [#allocation10], 4
          %s308 = int_to_ptr.vmem [resolvable:$true] %s307
          %313 = dma.hbm_to_vmem [thread:$0]  %s3, 13312, %s308, [#allocation9], 64, 64, 4
        $region28: #{vae_encoder_forward.1} parent=11 // pred_fallthru
          _
        // Predicated region
        $region29: #{vae_encoder_forward.1} parent=11 // pred_check
          %p314 = pneg %p142
        $region30: #{vae_encoder_forward.1} parent=11 // pred_check_branch
          %316 = sbr.rel (%p314) target = $region32
        $region31: #{vae_encoder_forward.1} parent=11 // pred_region
          %s318 = ssub.s32 16, 16
          %319 = vsyncadd [#allocation12], %s318
          %s321 = sshll.u32 [#allocation11], 4
          %s322 = int_to_ptr.vmem [resolvable:$true] %s321
          %324 = dma.hbm_to_vmem [thread:$0]  %s4, 16, %s322, [#allocation12]
        $region32: #{vae_encoder_forward.1} parent=11 // pred_fallthru
          _
        // Predicated region
        $region33: #{vae_encoder_forward.1} parent=11 // pred_check
          %p325 = pneg %p163
        $region34: #{vae_encoder_forward.1} parent=11 // pred_check_branch
          %327 = sbr.rel (%p325) target = $region36
        $region35: #{vae_encoder_forward.1} parent=11 // pred_region
          %s329 = ssub.s32 16, 16
          %330 = vsyncadd [#allocation12], %s329
          %s332 = sshll.u32 [#allocation13], 4
          %s333 = int_to_ptr.vmem [resolvable:$true] %s332
          %335 = dma.hbm_to_vmem [thread:$0]  %s5, 16, %s333, [#allocation12]
        $region36: #{vae_encoder_forward.1} parent=11 // pred_fallthru
          _
        // Predicated region
        $region37: #{vae_encoder_forward.1} parent=11 // pred_check
          %p336 = pneg %p184
        $region38: #{vae_encoder_forward.1} parent=11 // pred_check_branch
          %338 = sbr.rel (%p336) target = $region40
        $region39: #{vae_encoder_forward.1} parent=11 // pred_region
          %s340 = ssub.s32 16, 16
          %341 = vsyncadd [#allocation15], %s340
          %s343 = sshll.u32 [#allocation14], 4
          %s344 = int_to_ptr.vmem [resolvable:$true] %s343
          %346 = dma.hbm_to_vmem [thread:$0]  %s6, 16, %s344, [#allocation15]
        $region40: #{vae_encoder_forward.1} parent=11 // pred_fallthru
          _
        // Predicated region
        $region41: #{vae_encoder_forward.1} parent=11 // pred_check
          %p347 = pneg %p205
        $region42: #{vae_encoder_forward.1} parent=11 // pred_check_branch
          %349 = sbr.rel (%p347) target = $region44
        $region43: #{vae_encoder_forward.1} parent=11 // pred_region
          %s351 = ssub.s32 2048, 2048
          %352 = vsyncadd [#allocation15], %s351
          %s353 = sshll.u32 [#allocation16], 4
          %s354 = int_to_ptr.vmem [resolvable:$true] %s353
          %359 = dma.hbm_to_vmem [thread:$0]  %s7, 2048, %s354, [#allocation15], 128, 128, 8
        $region44: #{vae_encoder_forward.1} parent=11 // pred_fallthru
          _
        // Predicated region
        $region45: #{vae_encoder_forward.1} parent=11 // pred_check
          %p360 = pneg %p226
        $region46: #{vae_encoder_forward.1} parent=11 // pred_check_branch
          %362 = sbr.rel (%p360) target = $region48
        $region47: #{vae_encoder_forward.1} parent=11 // pred_region
          %s364 = ssub.s32 32, 32
          %365 = vsyncadd [#allocation18], %s364
          %s367 = sshll.u32 [#allocation17], 4
          %s368 = int_to_ptr.vmem [resolvable:$true] %s367
          %370 = dma.hbm_to_vmem [thread:$0]  %s8, 32, %s368, [#allocation18]
        $region48: #{vae_encoder_forward.1} parent=11 // pred_fallthru
          _
      $region12: #{vae_encoder_forward.1} parent=5 // pred_fallthru
        _
      %p371 = scmp.lt.s32.totalorder %s20, 2
      // Predicated region
      $region49: #{vae_encoder_forward.1} parent=5 // pred_check
        %p372 = pneg %p371
      $region50: #{vae_encoder_forward.1} parent=5 // pred_check_branch
        %374 = sbr.rel (%p372) target = $region52
      $region51: #{vae_encoder_forward.1} parent=5 // pred_region
        _
      $region52: #{vae_encoder_forward.1} parent=5 // pred_fallthru
        _
      %p375 = scmp.le.s32.totalorder 1, %s20
      %p376 = scmp.lt.s32.totalorder %s20, 3
      %p377 = pnand %p375, %p376
      %p378 = pneg %p377
      // Predicated region
      $region53: #{vae_encoder_forward.1} parent=5 // pred_check
        _
      $region54: #{vae_encoder_forward.1} parent=5 // pred_check_branch
        %380 = sbr.rel (%p377) target = $region56
      $region55: #{vae_encoder_forward.1} parent=5 // pred_region
        %s381 = ssub.s32 %s20, 1
        // Predicated region
        $region57: #{vae_encoder_forward.1} parent=55 // pred_check
          %p382 = pneg %p79
        $region58: #{vae_encoder_forward.1} parent=55 // pred_check_branch
          %384 = sbr.rel (%p382) target = $region60
        $region59: #{vae_encoder_forward.1} parent=55 // pred_region
          %385 = dma.done [#allocation7], 159744
        $region60: #{vae_encoder_forward.1} parent=55 // pred_fallthru
          _
        // Predicated region
        $region61: #{vae_encoder_forward.1} parent=55 // pred_check
          %p386 = pneg %p100
        $region62: #{vae_encoder_forward.1} parent=55 // pred_check_branch
          %388 = sbr.rel (%p386) target = $region64
        $region63: #{vae_encoder_forward.1} parent=55 // pred_region
          %389 = dma.done [#allocation9], 208
        $region64: #{vae_encoder_forward.1} parent=55 // pred_fallthru
          _
        // Predicated region
        $region65: #{vae_encoder_forward.1} parent=55 // pred_check
          %p390 = pneg %p121
        $region66: #{vae_encoder_forward.1} parent=55 // pred_check_branch
          %392 = sbr.rel (%p390) target = $region68
        $region67: #{vae_encoder_forward.1} parent=55 // pred_region
          %393 = dma.done [#allocation9], 13312
        $region68: #{vae_encoder_forward.1} parent=55 // pred_fallthru
          _
        // Predicated region
        $region69: #{vae_encoder_forward.1} parent=55 // pred_check
          %p394 = pneg %p142
        $region70: #{vae_encoder_forward.1} parent=55 // pred_check_branch
          %396 = sbr.rel (%p394) target = $region72
        $region71: #{vae_encoder_forward.1} parent=55 // pred_region
          %397 = dma.done [#allocation12], 16
        $region72: #{vae_encoder_forward.1} parent=55 // pred_fallthru
          _
        // Predicated region
        $region73: #{vae_encoder_forward.1} parent=55 // pred_check
          %p398 = pneg %p163
        $region74: #{vae_encoder_forward.1} parent=55 // pred_check_branch
          %400 = sbr.rel (%p398) target = $region76
        $region75: #{vae_encoder_forward.1} parent=55 // pred_region
          %401 = dma.done [#allocation12], 16
        $region76: #{vae_encoder_forward.1} parent=55 // pred_fallthru
          _
        // Predicated region
        $region77: #{vae_encoder_forward.1} parent=55 // pred_check
          %p402 = pneg %p184
        $region78: #{vae_encoder_forward.1} parent=55 // pred_check_branch
          %404 = sbr.rel (%p402) target = $region80
        $region79: #{vae_encoder_forward.1} parent=55 // pred_region
          %405 = dma.done [#allocation15], 16
        $region80: #{vae_encoder_forward.1} parent=55 // pred_fallthru
          _
        // Predicated region
        $region81: #{vae_encoder_forward.1} parent=55 // pred_check
          %p406 = pneg %p205
        $region82: #{vae_encoder_forward.1} parent=55 // pred_check_branch
          %408 = sbr.rel (%p406) target = $region84
        $region83: #{vae_encoder_forward.1} parent=55 // pred_region
          %409 = dma.done [#allocation15], 2048
        $region84: #{vae_encoder_forward.1} parent=55 // pred_fallthru
          _
        // Predicated region
        $region85: #{vae_encoder_forward.1} parent=55 // pred_check
          %p410 = pneg %p226
        $region86: #{vae_encoder_forward.1} parent=55 // pred_check_branch
          %412 = sbr.rel (%p410) target = $region88
        $region87: #{vae_encoder_forward.1} parent=55 // pred_region
          %413 = dma.done [#allocation18], 32
        $region88: #{vae_encoder_forward.1} parent=55 // pred_fallthru
          _
        %s414 = smul.u32 2, %s30
        %p415 = scmp.lt.s32.totalorder %s414, 1
        %s416 = scalar_select %p415, %s414, 1
        %s417 = smul.addr %s416, 12
        %s418 = smul.addr %s417, 4
        %s419 = scalar_lea.vmem %s0, %s418
        %p420 = pneg %p58
        %p421 = pneg %p55
        %p422 = pneg %p79
        %p423 = pneg %p76
        %p424 = pneg %p100
        %p425 = pneg %p97
        %p426 = pneg %p121
        %p427 = pneg %p118
        %p428 = pneg %p142
        %p429 = pneg %p139
        %p430 = pneg %p163
        %p431 = pneg %p160
        %p432 = pneg %p184
        %p433 = pneg %p181
        %p434 = pneg %p205
        %p435 = pneg %p202
        %p436 = pneg %p226
        %p437 = pneg %p223
        %p438 = pneg %p252
        %p439 = pneg %p249
        %s440 = smul.u32 2, %s30
        %p441 = scmp.lt.s32.totalorder %s440, 1
        %s442 = scalar_select %p441, %s440, 1
        %s443 = smul.addr %s442, 2
        %s444 = smul.addr %s443, 8
        %s445 = scalar_lea.vmem %s9, %s444
        %s446 = smul.u32 2, %s30
        %p447 = scmp.lt.s32.totalorder %s446, 1
        %s448 = scalar_select %p447, %s446, 1
        %s449 = smul.addr %s448, 12
        %s450 = smul.addr %s449, 4
        %s451 = scalar_lea.vmem %s0, %s450
        %s452 = smul.u32 2, %s30
        %s453 = smul.u32 2, %s30
        %p454 = scmp.lt.s32.totalorder %s453, 1
        %s455 = scalar_select %p454, %s453, 1
        %s456 = smul.addr %s455, 2
        %s457 = smul.addr %s456, 8
        %s458 = scalar_lea.vmem %s9, %s457
        %s459 = smul.u32 2, %s30
        %v461 = vld [vmem:[%s451] sm:$0xff]
        %v462 = vld [vmem:[%s451 + $0x8] sm:$0xff]
        %v463 = vld [vmem:[%s451 + $0x10] sm:$0xff]
        %v464 = vld [vmem:[%s451 + $0x18] sm:$0xff]
        %v465 = vld [vmem:[%s451 + $0x20] sm:$0xff]
        %v466 = vld [vmem:[%s451 + $0x28] sm:$0xff]
        %v467 = vld [vmem:[%s451 + $0x30] sm:$0xff]
        %v468 = vld [vmem:[%s451 + $0x38] sm:$0xff]
        %v469 = vld [vmem:[%s451 + $0x40] sm:$0xff]
        %v470 = vld [vmem:[%s451 + $0x48] sm:$0xff]
        %v471 = vld [vmem:[%s451 + $0x50] sm:$0xff]
        %v472 = vld [vmem:[%s451 + $0x58] sm:$0xff]
        %v473 = vld [vmem:[#allocation6] sm:$0xff]
        %v474 = vld [vmem:[#allocation6 + $0x8] sm:$0xff]
        %v475 = vld [vmem:[#allocation6 + $0x10] sm:$0xff]
        %v476 = vld [vmem:[#allocation6 + $0x18] sm:$0xff]
        %v477 = vld [vmem:[#allocation6 + $0x20] sm:$0xff]
        %v478 = vld [vmem:[#allocation6 + $0x28] sm:$0xff]
        %v479 = vld [vmem:[#allocation6 + $0x30] sm:$0xf]
        %v480 = vld [vmem:[#allocation6 + $0x34] sm:$0xff]
        %v481 = vld [vmem:[#allocation6 + $0x3c] sm:$0xff]
        %v482 = vld [vmem:[#allocation6 + $0x44] sm:$0xff]
        %v483 = vld [vmem:[#allocation6 + $0x4c] sm:$0xff]
        %v484 = vld [vmem:[#allocation6 + $0x54] sm:$0xff]
        %v485 = vld [vmem:[#allocation6 + $0x5c] sm:$0xff]
        %v486 = vld [vmem:[#allocation6 + $0x64] sm:$0xf]
        %v487 = vld [vmem:[#allocation6 + $0x68] sm:$0xff]
        %v488 = vld [vmem:[#allocation6 + $0x70] sm:$0xff]
        %v489 = vld [vmem:[#allocation6 + $0x78] sm:$0xff]
        %v490 = vld [vmem:[#allocation6 + $0x80] sm:$0xff]
        %v491 = vld [vmem:[#allocation6 + $0x88] sm:$0xff]
        %v492 = vld [vmem:[#allocation6 + $0x90] sm:$0xff]
        %v493 = vld [vmem:[#allocation6 + $0x98] sm:$0xf]
        %v494 = vld [vmem:[#allocation6 + $0x9c] sm:$0xff]
        %v495 = vld [vmem:[#allocation6 + $0xa4] sm:$0xff]
        %v496 = vld [vmem:[#allocation6 + $0xac] sm:$0xff]
        %v497 = vld [vmem:[#allocation6 + $0xb4] sm:$0xff]
        %v498 = vld [vmem:[#allocation6 + $0xbc] sm:$0xff]
        %v499 = vld [vmem:[#allocation6 + $0xc4] sm:$0xff]
        %v500 = vld [vmem:[#allocation6 + $0xcc] sm:$0xf]
        %v501 = vld [vmem:[#allocation6 + $0xd0] sm:$0xff]
        %v502 = vld [vmem:[#allocation6 + $0xd8] sm:$0xff]
        %v503 = vld [vmem:[#allocation6 + $0xe0] sm:$0xff]
        %v504 = vld [vmem:[#allocation6 + $0xe8] sm:$0xff]
        %v505 = vld [vmem:[#allocation6 + $0xf0] sm:$0xff]
        %v506 = vld [vmem:[#allocation6 + $0xf8] sm:$0xff]
        %v507 = vld [vmem:[#allocation6 + $0x100] sm:$0xf]
        %v508 = vld [vmem:[#allocation6 + $0x104] sm:$0xff]
        %v509 = vld [vmem:[#allocation6 + $0x10c] sm:$0xff]
        %v510 = vld [vmem:[#allocation6 + $0x114] sm:$0xff]
        %v511 = vld [vmem:[#allocation6 + $0x11c] sm:$0xff]
        %v512 = vld [vmem:[#allocation6 + $0x124] sm:$0xff]
        %v513 = vld [vmem:[#allocation6 + $0x12c] sm:$0xff]
        %v514 = vld [vmem:[#allocation6 + $0x134] sm:$0xf]
        %v515 = vld [vmem:[#allocation6 + $0x138] sm:$0xff]
        %v516 = vld [vmem:[#allocation6 + $0x140] sm:$0xff]
        %v517 = vld [vmem:[#allocation6 + $0x148] sm:$0xff]
        %v518 = vld [vmem:[#allocation6 + $0x150] sm:$0xff]
        %v519 = vld [vmem:[#allocation6 + $0x158] sm:$0xff]
        %v520 = vld [vmem:[#allocation6 + $0x160] sm:$0xff]
        %v521 = vld [vmem:[#allocation6 + $0x168] sm:$0xf]
        %v522 = vld [vmem:[#allocation6 + $0x16c] sm:$0xff]
        %v523 = vld [vmem:[#allocation6 + $0x174] sm:$0xff]
        %v524 = vld [vmem:[#allocation6 + $0x17c] sm:$0xff]
        %v525 = vld [vmem:[#allocation6 + $0x184] sm:$0xff]
        %v526 = vld [vmem:[#allocation6 + $0x18c] sm:$0xff]
        %v527 = vld [vmem:[#allocation6 + $0x194] sm:$0xff]
        %v528 = vld [vmem:[#allocation6 + $0x19c] sm:$0xf]
        %v529 = vld [vmem:[#allocation6 + $0x1a0] sm:$0xff]
        %v530 = vld [vmem:[#allocation6 + $0x1a8] sm:$0xff]
        %v531 = vld [vmem:[#allocation6 + $0x1b0] sm:$0xff]
        %v532 = vld [vmem:[#allocation6 + $0x1b8] sm:$0xff]
        %v533 = vld [vmem:[#allocation6 + $0x1c0] sm:$0xff]
        %v534 = vld [vmem:[#allocation6 + $0x1c8] sm:$0xff]
        %v535 = vld [vmem:[#allocation6 + $0x1d0] sm:$0xf]
        %v536 = vld [vmem:[#allocation6 + $0x1d4] sm:$0xff]
        %v537 = vld [vmem:[#allocation6 + $0x1dc] sm:$0xff]
        %v538 = vld [vmem:[#allocation6 + $0x1e4] sm:$0xff]
        %v539 = vld [vmem:[#allocation6 + $0x1ec] sm:$0xff]
        %v540 = vld [vmem:[#allocation6 + $0x1f4] sm:$0xff]
        %v541 = vld [vmem:[#allocation6 + $0x1fc] sm:$0xff]
        %v542 = vld [vmem:[#allocation6 + $0x204] sm:$0xf]
        %v543 = vld [vmem:[#allocation6 + $0x208] sm:$0xff]
        %v544 = vld [vmem:[#allocation6 + $0x210] sm:$0xff]
        %v545 = vld [vmem:[#allocation6 + $0x218] sm:$0xff]
        %v546 = vld [vmem:[#allocation6 + $0x220] sm:$0xff]
        %v547 = vld [vmem:[#allocation6 + $0x228] sm:$0xff]
        %v548 = vld [vmem:[#allocation6 + $0x230] sm:$0xff]
        %v549 = vld [vmem:[#allocation6 + $0x238] sm:$0xf]
        %v550 = vld [vmem:[#allocation6 + $0x23c] sm:$0xff]
        %v551 = vld [vmem:[#allocation6 + $0x244] sm:$0xff]
        %v552 = vld [vmem:[#allocation6 + $0x24c] sm:$0xff]
        %v553 = vld [vmem:[#allocation6 + $0x254] sm:$0xff]
        %v554 = vld [vmem:[#allocation6 + $0x25c] sm:$0xff]
        %v555 = vld [vmem:[#allocation6 + $0x264] sm:$0xff]
        %v556 = vld [vmem:[#allocation6 + $0x26c] sm:$0xf]
        %v557 = vld [vmem:[#allocation6 + $0x270] sm:$0xff]
        %v558 = vld [vmem:[#allocation6 + $0x278] sm:$0xff]
        %v559 = vld [vmem:[#allocation6 + $0x280] sm:$0xff]
        %v560 = vld [vmem:[#allocation6 + $0x288] sm:$0xff]
        %v561 = vld [vmem:[#allocation6 + $0x290] sm:$0xff]
        %v562 = vld [vmem:[#allocation6 + $0x298] sm:$0xff]
        %v563 = vld [vmem:[#allocation6 + $0x2a0] sm:$0xf]
        %v564 = vld [vmem:[#allocation6 + $0x2a4] sm:$0xff]
        %v565 = vld [vmem:[#allocation6 + $0x2ac] sm:$0xff]
        %v566 = vld [vmem:[#allocation6 + $0x2b4] sm:$0xff]
        %v567 = vld [vmem:[#allocation6 + $0x2bc] sm:$0xff]
        %v568 = vld [vmem:[#allocation6 + $0x2c4] sm:$0xff]
        %v569 = vld [vmem:[#allocation6 + $0x2cc] sm:$0xff]
        %v570 = vld [vmem:[#allocation6 + $0x2d4] sm:$0xf]
        %v571 = vld [vmem:[#allocation6 + $0x2d8] sm:$0xff]
        %v572 = vld [vmem:[#allocation6 + $0x2e0] sm:$0xff]
        %v573 = vld [vmem:[#allocation6 + $0x2e8] sm:$0xff]
        %v574 = vld [vmem:[#allocation6 + $0x2f0] sm:$0xff]
        %v575 = vld [vmem:[#allocation6 + $0x2f8] sm:$0xff]
        %v576 = vld [vmem:[#allocation6 + $0x300] sm:$0xff]
        %v577 = vld [vmem:[#allocation6 + $0x308] sm:$0xf]
        %v578 = vld [vmem:[#allocation6 + $0x30c] sm:$0xff]
        %v579 = vld [vmem:[#allocation6 + $0x314] sm:$0xff]
        %v580 = vld [vmem:[#allocation6 + $0x31c] sm:$0xff]
        %v581 = vld [vmem:[#allocation6 + $0x324] sm:$0xff]
        %v582 = vld [vmem:[#allocation6 + $0x32c] sm:$0xff]
        %v583 = vld [vmem:[#allocation6 + $0x334] sm:$0xff]
        %v584 = vld [vmem:[#allocation6 + $0x33c] sm:$0xf]
        %v585 = vld [vmem:[#allocation6 + $0x340] sm:$0xff]
        %v586 = vld [vmem:[#allocation6 + $0x348] sm:$0xff]
        %v587 = vld [vmem:[#allocation6 + $0x350] sm:$0xff]
        %v588 = vld [vmem:[#allocation6 + $0x358] sm:$0xff]
        %v589 = vld [vmem:[#allocation6 + $0x360] sm:$0xff]
        %v590 = vld [vmem:[#allocation6 + $0x368] sm:$0xff]
        %v591 = vld [vmem:[#allocation6 + $0x370] sm:$0xf]
        %v592 = vld [vmem:[#allocation6 + $0x374] sm:$0xff]
        %v593 = vld [vmem:[#allocation6 + $0x37c] sm:$0xff]
        %v594 = vld [vmem:[#allocation6 + $0x384] sm:$0xff]
        %v595 = vld [vmem:[#allocation6 + $0x38c] sm:$0xff]
        %v596 = vld [vmem:[#allocation6 + $0x394] sm:$0xff]
        %v597 = vld [vmem:[#allocation6 + $0x39c] sm:$0xff]
        %v598 = vld [vmem:[#allocation6 + $0x3a4] sm:$0xf]
        %v599 = vld [vmem:[#allocation6 + $0x3a8] sm:$0xff]
        %v600 = vld [vmem:[#allocation6 + $0x3b0] sm:$0xff]
        %v601 = vld [vmem:[#allocation6 + $0x3b8] sm:$0xff]
        %v602 = vld [vmem:[#allocation6 + $0x3c0] sm:$0xff]
        %v603 = vld [vmem:[#allocation6 + $0x3c8] sm:$0xff]
        %v604 = vld [vmem:[#allocation6 + $0x3d0] sm:$0xff]
        %v605 = vld [vmem:[#allocation6 + $0x3d8] sm:$0xf]
        %v606 = vld [vmem:[#allocation6 + $0x3dc] sm:$0xff]
        %v607 = vld [vmem:[#allocation6 + $0x3e4] sm:$0xff]
        %v608 = vld [vmem:[#allocation6 + $0x3ec] sm:$0xff]
        %v609 = vld [vmem:[#allocation6 + $0x3f4] sm:$0xff]
        %v610 = vld [vmem:[#allocation6 + $0x3fc] sm:$0xff]
        %v611 = vld [vmem:[#allocation6 + $0x404] sm:$0xff]
        %v612 = vld [vmem:[#allocation6 + $0x40c] sm:$0xf]
        %v613 = vld [vmem:[#allocation6 + $0x410] sm:$0xff]
        %v614 = vld [vmem:[#allocation6 + $0x418] sm:$0xff]
        %v615 = vld [vmem:[#allocation6 + $0x420] sm:$0xff]
        %v616 = vld [vmem:[#allocation6 + $0x428] sm:$0xff]
        %v617 = vld [vmem:[#allocation6 + $0x430] sm:$0xff]
        %v618 = vld [vmem:[#allocation6 + $0x438] sm:$0xff]
        %v619 = vld [vmem:[#allocation6 + $0x440] sm:$0xf]
        %v620 = vld [vmem:[#allocation6 + $0x444] sm:$0xff]
        %v621 = vld [vmem:[#allocation6 + $0x44c] sm:$0xff]
        %v622 = vld [vmem:[#allocation6 + $0x454] sm:$0xff]
        %v623 = vld [vmem:[#allocation6 + $0x45c] sm:$0xff]
        %v624 = vld [vmem:[#allocation6 + $0x464] sm:$0xff]
        %v625 = vld [vmem:[#allocation6 + $0x46c] sm:$0xff]
        %v626 = vld [vmem:[#allocation6 + $0x474] sm:$0xf]
        %v627 = vld [vmem:[#allocation6 + $0x478] sm:$0xff]
        %v628 = vld [vmem:[#allocation6 + $0x480] sm:$0xff]
        %v629 = vld [vmem:[#allocation6 + $0x488] sm:$0xff]
        %v630 = vld [vmem:[#allocation6 + $0x490] sm:$0xff]
        %v631 = vld [vmem:[#allocation6 + $0x498] sm:$0xff]
        %v632 = vld [vmem:[#allocation6 + $0x4a0] sm:$0xff]
        %v633 = vld [vmem:[#allocation6 + $0x4a8] sm:$0xf]
        %v634 = vld [vmem:[#allocation6 + $0x4ac] sm:$0xff]
        %v635 = vld [vmem:[#allocation6 + $0x4b4] sm:$0xff]
        %v636 = vld [vmem:[#allocation6 + $0x4bc] sm:$0xff]
        %v637 = vld [vmem:[#allocation6 + $0x4c4] sm:$0xff]
        %v638 = vld [vmem:[#allocation6 + $0x4cc] sm:$0xff]
        %v639 = vld [vmem:[#allocation6 + $0x4d4] sm:$0xff]
        %v640 = vld [vmem:[#allocation6 + $0x4dc] sm:$0xf]
        %v641 = vld [vmem:[#allocation6 + $0x4e0] sm:$0xff]
        %v642 = vld [vmem:[#allocation6 + $0x4e8] sm:$0xff]
        %v643 = vld [vmem:[#allocation6 + $0x4f0] sm:$0xff]
        %v644 = vld [vmem:[#allocation6 + $0x4f8] sm:$0xff]
        %v645 = vld [vmem:[#allocation6 + $0x500] sm:$0xff]
        %v646 = vld [vmem:[#allocation6 + $0x508] sm:$0xff]
        %v647 = vld [vmem:[#allocation6 + $0x510] sm:$0xf]
        %v648 = vld [vmem:[#allocation6 + $0x514] sm:$0xff]
        %v649 = vld [vmem:[#allocation6 + $0x51c] sm:$0xff]
        %v650 = vld [vmem:[#allocation6 + $0x524] sm:$0xff]
        %v651 = vld [vmem:[#allocation6 + $0x52c] sm:$0xff]
        %v652 = vld [vmem:[#allocation6 + $0x534] sm:$0xff]
        %v653 = vld [vmem:[#allocation6 + $0x53c] sm:$0xff]
        %v654 = vld [vmem:[#allocation6 + $0x544] sm:$0xf]
        %v655 = vld [vmem:[#allocation6 + $0x548] sm:$0xff]
        %v656 = vld [vmem:[#allocation6 + $0x550] sm:$0xff]
        %v657 = vld [vmem:[#allocation6 + $0x558] sm:$0xff]
        %v658 = vld [vmem:[#allocation6 + $0x560] sm:$0xff]
        %v659 = vld [vmem:[#allocation6 + $0x568] sm:$0xff]
        %v660 = vld [vmem:[#allocation6 + $0x570] sm:$0xff]
        %v661 = vld [vmem:[#allocation6 + $0x578] sm:$0xf]
        %v662 = vld [vmem:[#allocation6 + $0x57c] sm:$0xff]
        %v663 = vld [vmem:[#allocation6 + $0x584] sm:$0xff]
        %v664 = vld [vmem:[#allocation6 + $0x58c] sm:$0xff]
        %v665 = vld [vmem:[#allocation6 + $0x594] sm:$0xff]
        %v666 = vld [vmem:[#allocation6 + $0x59c] sm:$0xff]
        %v667 = vld [vmem:[#allocation6 + $0x5a4] sm:$0xff]
        %v668 = vld [vmem:[#allocation6 + $0x5ac] sm:$0xf]
        %v669 = vld [vmem:[#allocation6 + $0x5b0] sm:$0xff]
        %v670 = vld [vmem:[#allocation6 + $0x5b8] sm:$0xff]
        %v671 = vld [vmem:[#allocation6 + $0x5c0] sm:$0xff]
        %v672 = vld [vmem:[#allocation6 + $0x5c8] sm:$0xff]
        %v673 = vld [vmem:[#allocation6 + $0x5d0] sm:$0xff]
        %v674 = vld [vmem:[#allocation6 + $0x5d8] sm:$0xff]
        %v675 = vld [vmem:[#allocation6 + $0x5e0] sm:$0xf]
        %v676 = vld [vmem:[#allocation6 + $0x5e4] sm:$0xff]
        %v677 = vld [vmem:[#allocation6 + $0x5ec] sm:$0xff]
        %v678 = vld [vmem:[#allocation6 + $0x5f4] sm:$0xff]
        %v679 = vld [vmem:[#allocation6 + $0x5fc] sm:$0xff]
        %v680 = vld [vmem:[#allocation6 + $0x604] sm:$0xff]
        %v681 = vld [vmem:[#allocation6 + $0x60c] sm:$0xff]
        %v682 = vld [vmem:[#allocation6 + $0x614] sm:$0xf]
        %v683 = vld [vmem:[#allocation6 + $0x618] sm:$0xff]
        %v684 = vld [vmem:[#allocation6 + $0x620] sm:$0xff]
        %v685 = vld [vmem:[#allocation6 + $0x628] sm:$0xff]
        %v686 = vld [vmem:[#allocation6 + $0x630] sm:$0xff]
        %v687 = vld [vmem:[#allocation6 + $0x638] sm:$0xff]
        %v688 = vld [vmem:[#allocation6 + $0x640] sm:$0xff]
        %v689 = vld [vmem:[#allocation6 + $0x648] sm:$0xf]
        %v690 = vld [vmem:[#allocation6 + $0x64c] sm:$0xff]
        %v691 = vld [vmem:[#allocation6 + $0x654] sm:$0xff]
        %v692 = vld [vmem:[#allocation6 + $0x65c] sm:$0xff]
        %v693 = vld [vmem:[#allocation6 + $0x664] sm:$0xff]
        %v694 = vld [vmem:[#allocation6 + $0x66c] sm:$0xff]
        %v695 = vld [vmem:[#allocation6 + $0x674] sm:$0xff]
        %v696 = vld [vmem:[#allocation6 + $0x67c] sm:$0xf]
        %v697 = vld [vmem:[#allocation6 + $0x680] sm:$0xff]
        %v698 = vld [vmem:[#allocation6 + $0x688] sm:$0xff]
        %v699 = vld [vmem:[#allocation6 + $0x690] sm:$0xff]
        %v700 = vld [vmem:[#allocation6 + $0x698] sm:$0xff]
        %v701 = vld [vmem:[#allocation6 + $0x6a0] sm:$0xff]
        %v702 = vld [vmem:[#allocation6 + $0x6a8] sm:$0xff]
        %v703 = vld [vmem:[#allocation6 + $0x6b0] sm:$0xf]
        %v704 = vld [vmem:[#allocation6 + $0x6b4] sm:$0xff]
        %v705 = vld [vmem:[#allocation6 + $0x6bc] sm:$0xff]
        %v706 = vld [vmem:[#allocation6 + $0x6c4] sm:$0xff]
        %v707 = vld [vmem:[#allocation6 + $0x6cc] sm:$0xff]
        %v708 = vld [vmem:[#allocation6 + $0x6d4] sm:$0xff]
        %v709 = vld [vmem:[#allocation6 + $0x6dc] sm:$0xff]
        %v710 = vld [vmem:[#allocation6 + $0x6e4] sm:$0xf]
        %v711 = vld [vmem:[#allocation6 + $0x6e8] sm:$0xff]
        %v712 = vld [vmem:[#allocation6 + $0x6f0] sm:$0xff]
        %v713 = vld [vmem:[#allocation6 + $0x6f8] sm:$0xff]
        %v714 = vld [vmem:[#allocation6 + $0x700] sm:$0xff]
        %v715 = vld [vmem:[#allocation6 + $0x708] sm:$0xff]
        %v716 = vld [vmem:[#allocation6 + $0x710] sm:$0xff]
        %v717 = vld [vmem:[#allocation6 + $0x718] sm:$0xf]
        %v718 = vld [vmem:[#allocation6 + $0x71c] sm:$0xff]
        %v719 = vld [vmem:[#allocation6 + $0x724] sm:$0xff]
        %v720 = vld [vmem:[#allocation6 + $0x72c] sm:$0xff]
        %v721 = vld [vmem:[#allocation6 + $0x734] sm:$0xff]
        %v722 = vld [vmem:[#allocation6 + $0x73c] sm:$0xff]
        %v723 = vld [vmem:[#allocation6 + $0x744] sm:$0xff]
        %v724 = vld [vmem:[#allocation6 + $0x74c] sm:$0xf]
        %v725 = vld [vmem:[#allocation6 + $0x750] sm:$0xff]
        %v726 = vld [vmem:[#allocation6 + $0x758] sm:$0xff]
        %v727 = vld [vmem:[#allocation6 + $0x760] sm:$0xff]
        %v728 = vld [vmem:[#allocation6 + $0x768] sm:$0xff]
        %v729 = vld [vmem:[#allocation6 + $0x770] sm:$0xff]
        %v730 = vld [vmem:[#allocation6 + $0x778] sm:$0xff]
        %v731 = vld [vmem:[#allocation6 + $0x780] sm:$0xf]
        %v732 = vld [vmem:[#allocation6 + $0x784] sm:$0xff]
        %v733 = vld [vmem:[#allocation6 + $0x78c] sm:$0xff]
        %v734 = vld [vmem:[#allocation6 + $0x794] sm:$0xff]
        %v735 = vld [vmem:[#allocation6 + $0x79c] sm:$0xff]
        %v736 = vld [vmem:[#allocation6 + $0x7a4] sm:$0xff]
        %v737 = vld [vmem:[#allocation6 + $0x7ac] sm:$0xff]
        %v738 = vld [vmem:[#allocation6 + $0x7b4] sm:$0xf]
        %v739 = vld [vmem:[#allocation6 + $0x7b8] sm:$0xff]
        %v740 = vld [vmem:[#allocation6 + $0x7c0] sm:$0xff]
        %v741 = vld [vmem:[#allocation6 + $0x7c8] sm:$0xff]
        %v742 = vld [vmem:[#allocation6 + $0x7d0] sm:$0xff]
        %v743 = vld [vmem:[#allocation6 + $0x7d8] sm:$0xff]
        %v744 = vld [vmem:[#allocation6 + $0x7e0] sm:$0xff]
        %v745 = vld [vmem:[#allocation6 + $0x7e8] sm:$0xf]
        %v746 = vld [vmem:[#allocation6 + $0x7ec] sm:$0xff]
        %v747 = vld [vmem:[#allocation6 + $0x7f4] sm:$0xff]
        %v748 = vld [vmem:[#allocation6 + $0x7fc] sm:$0xff]
        %v749 = vld [vmem:[#allocation6 + $0x804] sm:$0xff]
        %v750 = vld [vmem:[#allocation6 + $0x80c] sm:$0xff]
        %v751 = vld [vmem:[#allocation6 + $0x814] sm:$0xff]
        %v752 = vld [vmem:[#allocation6 + $0x81c] sm:$0xf]
        %v753 = vld [vmem:[#allocation6 + $0x820] sm:$0xff]
        %v754 = vld [vmem:[#allocation6 + $0x828] sm:$0xff]
        %v755 = vld [vmem:[#allocation6 + $0x830] sm:$0xff]
        %v756 = vld [vmem:[#allocation6 + $0x838] sm:$0xff]
        %v757 = vld [vmem:[#allocation6 + $0x840] sm:$0xff]
        %v758 = vld [vmem:[#allocation6 + $0x848] sm:$0xff]
        %v759 = vld [vmem:[#allocation6 + $0x850] sm:$0xf]
        %v760 = vld [vmem:[#allocation6 + $0x854] sm:$0xff]
        %v761 = vld [vmem:[#allocation6 + $0x85c] sm:$0xff]
        %v762 = vld [vmem:[#allocation6 + $0x864] sm:$0xff]
        %v763 = vld [vmem:[#allocation6 + $0x86c] sm:$0xff]
        %v764 = vld [vmem:[#allocation6 + $0x874] sm:$0xff]
        %v765 = vld [vmem:[#allocation6 + $0x87c] sm:$0xff]
        %v766 = vld [vmem:[#allocation6 + $0x884] sm:$0xf]
        %v767 = vld [vmem:[#allocation6 + $0x888] sm:$0xff]
        %v768 = vld [vmem:[#allocation6 + $0x890] sm:$0xff]
        %v769 = vld [vmem:[#allocation6 + $0x898] sm:$0xff]
        %v770 = vld [vmem:[#allocation6 + $0x8a0] sm:$0xff]
        %v771 = vld [vmem:[#allocation6 + $0x8a8] sm:$0xff]
        %v772 = vld [vmem:[#allocation6 + $0x8b0] sm:$0xff]
        %v773 = vld [vmem:[#allocation6 + $0x8b8] sm:$0xf]
        %v774 = vld [vmem:[#allocation6 + $0x8bc] sm:$0xff]
        %v775 = vld [vmem:[#allocation6 + $0x8c4] sm:$0xff]
        %v776 = vld [vmem:[#allocation6 + $0x8cc] sm:$0xff]
        %v777 = vld [vmem:[#allocation6 + $0x8d4] sm:$0xff]
        %v778 = vld [vmem:[#allocation6 + $0x8dc] sm:$0xff]
        %v779 = vld [vmem:[#allocation6 + $0x8e4] sm:$0xff]
        %v780 = vld [vmem:[#allocation6 + $0x8ec] sm:$0xf]
        %v781 = vld [vmem:[#allocation6 + $0x8f0] sm:$0xff]
        %v782 = vld [vmem:[#allocation6 + $0x8f8] sm:$0xff]
        %v783 = vld [vmem:[#allocation6 + $0x900] sm:$0xff]
        %v784 = vld [vmem:[#allocation6 + $0x908] sm:$0xff]
        %v785 = vld [vmem:[#allocation6 + $0x910] sm:$0xff]
        %v786 = vld [vmem:[#allocation6 + $0x918] sm:$0xff]
        %v787 = vld [vmem:[#allocation6 + $0x920] sm:$0xf]
        %v788 = vld [vmem:[#allocation6 + $0x924] sm:$0xff]
        %v789 = vld [vmem:[#allocation6 + $0x92c] sm:$0xff]
        %v790 = vld [vmem:[#allocation6 + $0x934] sm:$0xff]
        %v791 = vld [vmem:[#allocation6 + $0x93c] sm:$0xff]
        %v792 = vld [vmem:[#allocation6 + $0x944] sm:$0xff]
        %v793 = vld [vmem:[#allocation6 + $0x94c] sm:$0xff]
        %v794 = vld [vmem:[#allocation6 + $0x954] sm:$0xf]
        %v795 = vld [vmem:[#allocation6 + $0x958] sm:$0xff]
        %v796 = vld [vmem:[#allocation6 + $0x960] sm:$0xff]
        %v797 = vld [vmem:[#allocation6 + $0x968] sm:$0xff]
        %v798 = vld [vmem:[#allocation6 + $0x970] sm:$0xff]
        %v799 = vld [vmem:[#allocation6 + $0x978] sm:$0xff]
        %v800 = vld [vmem:[#allocation6 + $0x980] sm:$0xff]
        %v801 = vld [vmem:[#allocation6 + $0x988] sm:$0xf]
        %v802 = vld [vmem:[#allocation6 + $0x98c] sm:$0xff]
        %v803 = vld [vmem:[#allocation6 + $0x994] sm:$0xff]
        %v804 = vld [vmem:[#allocation6 + $0x99c] sm:$0xff]
        %v805 = vld [vmem:[#allocation6 + $0x9a4] sm:$0xff]
        %v806 = vld [vmem:[#allocation6 + $0x9ac] sm:$0xff]
        %v807 = vld [vmem:[#allocation6 + $0x9b4] sm:$0xff]
        %v808 = vld [vmem:[#allocation6 + $0x9bc] sm:$0xf]
        %v809 = vld [vmem:[#allocation6 + $0x9c0] sm:$0xff]
        %v810 = vld [vmem:[#allocation6 + $0x9c8] sm:$0xff]
        %v811 = vld [vmem:[#allocation6 + $0x9d0] sm:$0xff]
        %v812 = vld [vmem:[#allocation6 + $0x9d8] sm:$0xff]
        %v813 = vld [vmem:[#allocation6 + $0x9e0] sm:$0xff]
        %v814 = vld [vmem:[#allocation6 + $0x9e8] sm:$0xff]
        %v815 = vld [vmem:[#allocation6 + $0x9f0] sm:$0xf]
        %v816 = vld [vmem:[#allocation6 + $0x9f4] sm:$0xff]
        %v817 = vld [vmem:[#allocation6 + $0x9fc] sm:$0xff]
        %v818 = vld [vmem:[#allocation6 + $0xa04] sm:$0xff]
        %v819 = vld [vmem:[#allocation6 + $0xa0c] sm:$0xff]
        %v820 = vld [vmem:[#allocation6 + $0xa14] sm:$0xff]
        %v821 = vld [vmem:[#allocation6 + $0xa1c] sm:$0xff]
        %v822 = vld [vmem:[#allocation6 + $0xa24] sm:$0xf]
        %v823 = vld [vmem:[#allocation6 + $0xa28] sm:$0xff]
        %v824 = vld [vmem:[#allocation6 + $0xa30] sm:$0xff]
        %v825 = vld [vmem:[#allocation6 + $0xa38] sm:$0xff]
        %v826 = vld [vmem:[#allocation6 + $0xa40] sm:$0xff]
        %v827 = vld [vmem:[#allocation6 + $0xa48] sm:$0xff]
        %v828 = vld [vmem:[#allocation6 + $0xa50] sm:$0xff]
        %v829 = vld [vmem:[#allocation6 + $0xa58] sm:$0xf]
        %v830 = vld [vmem:[#allocation6 + $0xa5c] sm:$0xff]
        %v831 = vld [vmem:[#allocation6 + $0xa64] sm:$0xff]
        %v832 = vld [vmem:[#allocation6 + $0xa6c] sm:$0xff]
        %v833 = vld [vmem:[#allocation6 + $0xa74] sm:$0xff]
        %v834 = vld [vmem:[#allocation6 + $0xa7c] sm:$0xff]
        %v835 = vld [vmem:[#allocation6 + $0xa84] sm:$0xff]
        %v836 = vld [vmem:[#allocation6 + $0xa8c] sm:$0xf]
        %v837 = vld [vmem:[#allocation6 + $0xa90] sm:$0xff]
        %v838 = vld [vmem:[#allocation6 + $0xa98] sm:$0xff]
        %v839 = vld [vmem:[#allocation6 + $0xaa0] sm:$0xff]
        %v840 = vld [vmem:[#allocation6 + $0xaa8] sm:$0xff]
        %v841 = vld [vmem:[#allocation6 + $0xab0] sm:$0xff]
        %v842 = vld [vmem:[#allocation6 + $0xab8] sm:$0xff]
        %v843 = vld [vmem:[#allocation6 + $0xac0] sm:$0xf]
        %v844 = vld [vmem:[#allocation6 + $0xac4] sm:$0xff]
        %v845 = vld [vmem:[#allocation6 + $0xacc] sm:$0xff]
        %v846 = vld [vmem:[#allocation6 + $0xad4] sm:$0xff]
        %v847 = vld [vmem:[#allocation6 + $0xadc] sm:$0xff]
        %v848 = vld [vmem:[#allocation6 + $0xae4] sm:$0xff]
        %v849 = vld [vmem:[#allocation6 + $0xaec] sm:$0xff]
        %v850 = vld [vmem:[#allocation6 + $0xaf4] sm:$0xf]
        %v851 = vld [vmem:[#allocation6 + $0xaf8] sm:$0xff]
        %v852 = vld [vmem:[#allocation6 + $0xb00] sm:$0xff]
        %v853 = vld [vmem:[#allocation6 + $0xb08] sm:$0xff]
        %v854 = vld [vmem:[#allocation6 + $0xb10] sm:$0xff]
        %v855 = vld [vmem:[#allocation6 + $0xb18] sm:$0xff]
        %v856 = vld [vmem:[#allocation6 + $0xb20] sm:$0xff]
        %v857 = vld [vmem:[#allocation6 + $0xb28] sm:$0xf]
        %v858 = vld [vmem:[#allocation6 + $0xb2c] sm:$0xff]
        %v859 = vld [vmem:[#allocation6 + $0xb34] sm:$0xff]
        %v860 = vld [vmem:[#allocation6 + $0xb3c] sm:$0xff]
        %v861 = vld [vmem:[#allocation6 + $0xb44] sm:$0xff]
        %v862 = vld [vmem:[#allocation6 + $0xb4c] sm:$0xff]
        %v863 = vld [vmem:[#allocation6 + $0xb54] sm:$0xff]
        %v864 = vld [vmem:[#allocation6 + $0xb5c] sm:$0xf]
        %v865 = vld [vmem:[#allocation6 + $0xb60] sm:$0xff]
        %v866 = vld [vmem:[#allocation6 + $0xb68] sm:$0xff]
        %v867 = vld [vmem:[#allocation6 + $0xb70] sm:$0xff]
        %v868 = vld [vmem:[#allocation6 + $0xb78] sm:$0xff]
        %v869 = vld [vmem:[#allocation6 + $0xb80] sm:$0xff]
        %v870 = vld [vmem:[#allocation6 + $0xb88] sm:$0xff]
        %v871 = vld [vmem:[#allocation6 + $0xb90] sm:$0xf]
        %v872 = vld [vmem:[#allocation6 + $0xb94] sm:$0xff]
        %v873 = vld [vmem:[#allocation6 + $0xb9c] sm:$0xff]
        %v874 = vld [vmem:[#allocation6 + $0xba4] sm:$0xff]
        %v875 = vld [vmem:[#allocation6 + $0xbac] sm:$0xff]
        %v876 = vld [vmem:[#allocation6 + $0xbb4] sm:$0xff]
        %v877 = vld [vmem:[#allocation6 + $0xbbc] sm:$0xff]
        %v878 = vld [vmem:[#allocation6 + $0xbc4] sm:$0xf]
        %v879 = vld [vmem:[#allocation6 + $0xbc8] sm:$0xff]
        %v880 = vld [vmem:[#allocation6 + $0xbd0] sm:$0xff]
        %v881 = vld [vmem:[#allocation6 + $0xbd8] sm:$0xff]
        %v882 = vld [vmem:[#allocation6 + $0xbe0] sm:$0xff]
        %v883 = vld [vmem:[#allocation6 + $0xbe8] sm:$0xff]
        %v884 = vld [vmem:[#allocation6 + $0xbf0] sm:$0xff]
        %v885 = vld [vmem:[#allocation6 + $0xbf8] sm:$0xf]
        %v886 = vld [vmem:[#allocation6 + $0xbfc] sm:$0xff]
        %v887 = vld [vmem:[#allocation6 + $0xc04] sm:$0xff]
        %v888 = vld [vmem:[#allocation6 + $0xc0c] sm:$0xff]
        %v889 = vld [vmem:[#allocation6 + $0xc14] sm:$0xff]
        %v890 = vld [vmem:[#allocation6 + $0xc1c] sm:$0xff]
        %v891 = vld [vmem:[#allocation6 + $0xc24] sm:$0xff]
        %v892 = vld [vmem:[#allocation6 + $0xc2c] sm:$0xf]
        %v893 = vld [vmem:[#allocation6 + $0xc30] sm:$0xff]
        %v894 = vld [vmem:[#allocation6 + $0xc38] sm:$0xff]
        %v895 = vld [vmem:[#allocation6 + $0xc40] sm:$0xff]
        %v896 = vld [vmem:[#allocation6 + $0xc48] sm:$0xff]
        %v897 = vld [vmem:[#allocation6 + $0xc50] sm:$0xff]
        %v898 = vld [vmem:[#allocation6 + $0xc58] sm:$0xff]
        %v899 = vld [vmem:[#allocation6 + $0xc60] sm:$0xf]
        %v900 = vld [vmem:[#allocation6 + $0xc64] sm:$0xff]
        %v901 = vld [vmem:[#allocation6 + $0xc6c] sm:$0xff]
        %v902 = vld [vmem:[#allocation6 + $0xc74] sm:$0xff]
        %v903 = vld [vmem:[#allocation6 + $0xc7c] sm:$0xff]
        %v904 = vld [vmem:[#allocation6 + $0xc84] sm:$0xff]
        %v905 = vld [vmem:[#allocation6 + $0xc8c] sm:$0xff]
        %v906 = vld [vmem:[#allocation6 + $0xc94] sm:$0xf]
        %v907 = vld [vmem:[#allocation6 + $0xc98] sm:$0xff]
        %v908 = vld [vmem:[#allocation6 + $0xca0] sm:$0xff]
        %v909 = vld [vmem:[#allocation6 + $0xca8] sm:$0xff]
        %v910 = vld [vmem:[#allocation6 + $0xcb0] sm:$0xff]
        %v911 = vld [vmem:[#allocation6 + $0xcb8] sm:$0xff]
        %v912 = vld [vmem:[#allocation6 + $0xcc0] sm:$0xff]
        %v913 = vld [vmem:[#allocation6 + $0xcc8] sm:$0xf]
        %v914 = vld [vmem:[#allocation6 + $0xccc] sm:$0xff]
        %v915 = vld [vmem:[#allocation6 + $0xcd4] sm:$0xff]
        %v916 = vld [vmem:[#allocation6 + $0xcdc] sm:$0xff]
        %v917 = vld [vmem:[#allocation6 + $0xce4] sm:$0xff]
        %v918 = vld [vmem:[#allocation6 + $0xcec] sm:$0xff]
        %v919 = vld [vmem:[#allocation6 + $0xcf4] sm:$0xff]
        %v920 = vld [vmem:[#allocation6 + $0xcfc] sm:$0xf]
        %v921 = vld [vmem:[#allocation6 + $0xd00] sm:$0xff]
        %v922 = vld [vmem:[#allocation6 + $0xd08] sm:$0xff]
        %v923 = vld [vmem:[#allocation6 + $0xd10] sm:$0xff]
        %v924 = vld [vmem:[#allocation6 + $0xd18] sm:$0xff]
        %v925 = vld [vmem:[#allocation6 + $0xd20] sm:$0xff]
        %v926 = vld [vmem:[#allocation6 + $0xd28] sm:$0xff]
        %v927 = vld [vmem:[#allocation6 + $0xd30] sm:$0xf]
        %v928 = vld [vmem:[#allocation6 + $0xd34] sm:$0xff]
        %v929 = vld [vmem:[#allocation6 + $0xd3c] sm:$0xff]
        %v930 = vld [vmem:[#allocation6 + $0xd44] sm:$0xff]
        %v931 = vld [vmem:[#allocation6 + $0xd4c] sm:$0xff]
        %v932 = vld [vmem:[#allocation6 + $0xd54] sm:$0xff]
        %v933 = vld [vmem:[#allocation6 + $0xd5c] sm:$0xff]
        %v934 = vld [vmem:[#allocation6 + $0xd64] sm:$0xf]
        %v935 = vld [vmem:[#allocation6 + $0xd68] sm:$0xff]
        %v936 = vld [vmem:[#allocation6 + $0xd70] sm:$0xff]
        %v937 = vld [vmem:[#allocation6 + $0xd78] sm:$0xff]
        %v938 = vld [vmem:[#allocation6 + $0xd80] sm:$0xff]
        %v939 = vld [vmem:[#allocation6 + $0xd88] sm:$0xff]
        %v940 = vld [vmem:[#allocation6 + $0xd90] sm:$0xff]
        %v941 = vld [vmem:[#allocation6 + $0xd98] sm:$0xf]
        %v942 = vld [vmem:[#allocation6 + $0xd9c] sm:$0xff]
        %v943 = vld [vmem:[#allocation6 + $0xda4] sm:$0xff]
        %v944 = vld [vmem:[#allocation6 + $0xdac] sm:$0xff]
        %v945 = vld [vmem:[#allocation6 + $0xdb4] sm:$0xff]
        %v946 = vld [vmem:[#allocation6 + $0xdbc] sm:$0xff]
        %v947 = vld [vmem:[#allocation6 + $0xdc4] sm:$0xff]
        %v948 = vld [vmem:[#allocation6 + $0xdcc] sm:$0xf]
        %v949 = vld [vmem:[#allocation6 + $0xdd0] sm:$0xff]
        %v950 = vld [vmem:[#allocation6 + $0xdd8] sm:$0xff]
        %v951 = vld [vmem:[#allocation6 + $0xde0] sm:$0xff]
        %v952 = vld [vmem:[#allocation6 + $0xde8] sm:$0xff]
        %v953 = vld [vmem:[#allocation6 + $0xdf0] sm:$0xff]
        %v954 = vld [vmem:[#allocation6 + $0xdf8] sm:$0xff]
        %v955 = vld [vmem:[#allocation6 + $0xe00] sm:$0xf]
        %v956 = vld [vmem:[#allocation6 + $0xe04] sm:$0xff]
        %v957 = vld [vmem:[#allocation6 + $0xe0c] sm:$0xff]
        %v958 = vld [vmem:[#allocation6 + $0xe14] sm:$0xff]
        %v959 = vld [vmem:[#allocation6 + $0xe1c] sm:$0xff]
        %v960 = vld [vmem:[#allocation6 + $0xe24] sm:$0xff]
        %v961 = vld [vmem:[#allocation6 + $0xe2c] sm:$0xff]
        %v962 = vld [vmem:[#allocation6 + $0xe34] sm:$0xf]
        %v963 = vld [vmem:[#allocation6 + $0xe38] sm:$0xff]
        %v964 = vld [vmem:[#allocation6 + $0xe40] sm:$0xff]
        %v965 = vld [vmem:[#allocation6 + $0xe48] sm:$0xff]
        %v966 = vld [vmem:[#allocation6 + $0xe50] sm:$0xff]
        %v967 = vld [vmem:[#allocation6 + $0xe58] sm:$0xff]
        %v968 = vld [vmem:[#allocation6 + $0xe60] sm:$0xff]
        %v969 = vld [vmem:[#allocation6 + $0xe68] sm:$0xf]
        %v970 = vld [vmem:[#allocation6 + $0xe6c] sm:$0xff]
        %v971 = vld [vmem:[#allocation6 + $0xe74] sm:$0xff]
        %v972 = vld [vmem:[#allocation6 + $0xe7c] sm:$0xff]
        %v973 = vld [vmem:[#allocation6 + $0xe84] sm:$0xff]
        %v974 = vld [vmem:[#allocation6 + $0xe8c] sm:$0xff]
        %v975 = vld [vmem:[#allocation6 + $0xe94] sm:$0xff]
        %v976 = vld [vmem:[#allocation6 + $0xe9c] sm:$0xf]
        %v977 = vld [vmem:[#allocation6 + $0xea0] sm:$0xff]
        %v978 = vld [vmem:[#allocation6 + $0xea8] sm:$0xff]
        %v979 = vld [vmem:[#allocation6 + $0xeb0] sm:$0xff]
        %v980 = vld [vmem:[#allocation6 + $0xeb8] sm:$0xff]
        %v981 = vld [vmem:[#allocation6 + $0xec0] sm:$0xff]
        %v982 = vld [vmem:[#allocation6 + $0xec8] sm:$0xff]
        %v983 = vld [vmem:[#allocation6 + $0xed0] sm:$0xf]
        %v984 = vld [vmem:[#allocation6 + $0xed4] sm:$0xff]
        %v985 = vld [vmem:[#allocation6 + $0xedc] sm:$0xff]
        %v986 = vld [vmem:[#allocation6 + $0xee4] sm:$0xff]
        %v987 = vld [vmem:[#allocation6 + $0xeec] sm:$0xff]
        %v988 = vld [vmem:[#allocation6 + $0xef4] sm:$0xff]
        %v989 = vld [vmem:[#allocation6 + $0xefc] sm:$0xff]
        %v990 = vld [vmem:[#allocation6 + $0xf04] sm:$0xf]
        %v991 = vld [vmem:[#allocation6 + $0xf08] sm:$0xff]
        %v992 = vld [vmem:[#allocation6 + $0xf10] sm:$0xff]
        %v993 = vld [vmem:[#allocation6 + $0xf18] sm:$0xff]
        %v994 = vld [vmem:[#allocation6 + $0xf20] sm:$0xff]
        %v995 = vld [vmem:[#allocation6 + $0xf28] sm:$0xff]
        %v996 = vld [vmem:[#allocation6 + $0xf30] sm:$0xff]
        %v997 = vld [vmem:[#allocation6 + $0xf38] sm:$0xf]
        %v998 = vld [vmem:[#allocation6 + $0xf3c] sm:$0xff]
        %v999 = vld [vmem:[#allocation6 + $0xf44] sm:$0xff]
        %v1000 = vld [vmem:[#allocation6 + $0xf4c] sm:$0xff]
        %v1001 = vld [vmem:[#allocation6 + $0xf54] sm:$0xff]
        %v1002 = vld [vmem:[#allocation6 + $0xf5c] sm:$0xff]
        %v1003 = vld [vmem:[#allocation6 + $0xf64] sm:$0xff]
        %v1004 = vld [vmem:[#allocation6 + $0xf6c] sm:$0xf]
        %v1005 = vld [vmem:[#allocation6 + $0xf70] sm:$0xff]
        %v1006 = vld [vmem:[#allocation6 + $0xf78] sm:$0xff]
        %v1007 = vld [vmem:[#allocation6 + $0xf80] sm:$0xff]
        %v1008 = vld [vmem:[#allocation6 + $0xf88] sm:$0xff]
        %v1009 = vld [vmem:[#allocation6 + $0xf90] sm:$0xff]
        %v1010 = vld [vmem:[#allocation6 + $0xf98] sm:$0xff]
        %v1011 = vld [vmem:[#allocation6 + $0xfa0] sm:$0xf]
        %v1012 = vld [vmem:[#allocation6 + $0xfa4] sm:$0xff]
        %v1013 = vld [vmem:[#allocation6 + $0xfac] sm:$0xff]
        %v1014 = vld [vmem:[#allocation6 + $0xfb4] sm:$0xff]
        %v1015 = vld [vmem:[#allocation6 + $0xfbc] sm:$0xff]
        %v1016 = vld [vmem:[#allocation6 + $0xfc4] sm:$0xff]
        %v1017 = vld [vmem:[#allocation6 + $0xfcc] sm:$0xff]
        %v1018 = vld [vmem:[#allocation6 + $0xfd4] sm:$0xf]
        %v1019 = vld [vmem:[#allocation6 + $0xfd8] sm:$0xff]
        %v1020 = vld [vmem:[#allocation6 + $0xfe0] sm:$0xff]
        %v1021 = vld [vmem:[#allocation6 + $0xfe8] sm:$0xff]
        %v1022 = vld [vmem:[#allocation6 + $0xff0] sm:$0xff]
        %v1023 = vld [vmem:[#allocation6 + $0xff8] sm:$0xff]
        %v1024 = vld [vmem:[#allocation6 + $0x1000] sm:$0xff]
        %v1025 = vld [vmem:[#allocation6 + $0x1008] sm:$0xf]
        %v1026 = vld [vmem:[#allocation6 + $0x100c] sm:$0xff]
        %v1027 = vld [vmem:[#allocation6 + $0x1014] sm:$0xff]
        %v1028 = vld [vmem:[#allocation6 + $0x101c] sm:$0xff]
        %v1029 = vld [vmem:[#allocation6 + $0x1024] sm:$0xff]
        %v1030 = vld [vmem:[#allocation6 + $0x102c] sm:$0xff]
        %v1031 = vld [vmem:[#allocation6 + $0x1034] sm:$0xff]
        %v1032 = vld [vmem:[#allocation6 + $0x103c] sm:$0xf]
        %v1033 = vld [vmem:[#allocation6 + $0x1040] sm:$0xff]
        %v1034 = vld [vmem:[#allocation6 + $0x1048] sm:$0xff]
        %v1035 = vld [vmem:[#allocation6 + $0x1050] sm:$0xff]
        %v1036 = vld [vmem:[#allocation6 + $0x1058] sm:$0xff]
        %v1037 = vld [vmem:[#allocation6 + $0x1060] sm:$0xff]
        %v1038 = vld [vmem:[#allocation6 + $0x1068] sm:$0xff]
        %v1039 = vld [vmem:[#allocation6 + $0x1070] sm:$0xf]
        %v1040 = vld [vmem:[#allocation6 + $0x1074] sm:$0xff]
        %v1041 = vld [vmem:[#allocation6 + $0x107c] sm:$0xff]
        %v1042 = vld [vmem:[#allocation6 + $0x1084] sm:$0xff]
        %v1043 = vld [vmem:[#allocation6 + $0x108c] sm:$0xff]
        %v1044 = vld [vmem:[#allocation6 + $0x1094] sm:$0xff]
        %v1045 = vld [vmem:[#allocation6 + $0x109c] sm:$0xff]
        %v1046 = vld [vmem:[#allocation6 + $0x10a4] sm:$0xf]
        %v1047 = vld [vmem:[#allocation6 + $0x10a8] sm:$0xff]
        %v1048 = vld [vmem:[#allocation6 + $0x10b0] sm:$0xff]
        %v1049 = vld [vmem:[#allocation6 + $0x10b8] sm:$0xff]
        %v1050 = vld [vmem:[#allocation6 + $0x10c0] sm:$0xff]
        %v1051 = vld [vmem:[#allocation6 + $0x10c8] sm:$0xff]
        %v1052 = vld [vmem:[#allocation6 + $0x10d0] sm:$0xff]
        %v1053 = vld [vmem:[#allocation6 + $0x10d8] sm:$0xf]
        %v1054 = vld [vmem:[#allocation6 + $0x10dc] sm:$0xff]
        %v1055 = vld [vmem:[#allocation6 + $0x10e4] sm:$0xff]
        %v1056 = vld [vmem:[#allocation6 + $0x10ec] sm:$0xff]
        %v1057 = vld [vmem:[#allocation6 + $0x10f4] sm:$0xff]
        %v1058 = vld [vmem:[#allocation6 + $0x10fc] sm:$0xff]
        %v1059 = vld [vmem:[#allocation6 + $0x1104] sm:$0xff]
        %v1060 = vld [vmem:[#allocation6 + $0x110c] sm:$0xf]
        %v1061 = vld [vmem:[#allocation6 + $0x1110] sm:$0xff]
        %v1062 = vld [vmem:[#allocation6 + $0x1118] sm:$0xff]
        %v1063 = vld [vmem:[#allocation6 + $0x1120] sm:$0xff]
        %v1064 = vld [vmem:[#allocation6 + $0x1128] sm:$0xff]
        %v1065 = vld [vmem:[#allocation6 + $0x1130] sm:$0xff]
        %v1066 = vld [vmem:[#allocation6 + $0x1138] sm:$0xff]
        %v1067 = vld [vmem:[#allocation6 + $0x1140] sm:$0xf]
        %v1068 = vld [vmem:[#allocation6 + $0x1144] sm:$0xff]
        %v1069 = vld [vmem:[#allocation6 + $0x114c] sm:$0xff]
        %v1070 = vld [vmem:[#allocation6 + $0x1154] sm:$0xff]
        %v1071 = vld [vmem:[#allocation6 + $0x115c] sm:$0xff]
        %v1072 = vld [vmem:[#allocation6 + $0x1164] sm:$0xff]
        %v1073 = vld [vmem:[#allocation6 + $0x116c] sm:$0xff]
        %v1074 = vld [vmem:[#allocation6 + $0x1174] sm:$0xf]
        %v1075 = vld [vmem:[#allocation6 + $0x1178] sm:$0xff]
        %v1076 = vld [vmem:[#allocation6 + $0x1180] sm:$0xff]
        %v1077 = vld [vmem:[#allocation6 + $0x1188] sm:$0xff]
        %v1078 = vld [vmem:[#allocation6 + $0x1190] sm:$0xff]
        %v1079 = vld [vmem:[#allocation6 + $0x1198] sm:$0xff]
        %v1080 = vld [vmem:[#allocation6 + $0x11a0] sm:$0xff]
        %v1081 = vld [vmem:[#allocation6 + $0x11a8] sm:$0xf]
        %v1082 = vld [vmem:[#allocation6 + $0x11ac] sm:$0xff]
        %v1083 = vld [vmem:[#allocation6 + $0x11b4] sm:$0xff]
        %v1084 = vld [vmem:[#allocation6 + $0x11bc] sm:$0xff]
        %v1085 = vld [vmem:[#allocation6 + $0x11c4] sm:$0xff]
        %v1086 = vld [vmem:[#allocation6 + $0x11cc] sm:$0xff]
        %v1087 = vld [vmem:[#allocation6 + $0x11d4] sm:$0xff]
        %v1088 = vld [vmem:[#allocation6 + $0x11dc] sm:$0xf]
        %v1089 = vld [vmem:[#allocation6 + $0x11e0] sm:$0xff]
        %v1090 = vld [vmem:[#allocation6 + $0x11e8] sm:$0xff]
        %v1091 = vld [vmem:[#allocation6 + $0x11f0] sm:$0xff]
        %v1092 = vld [vmem:[#allocation6 + $0x11f8] sm:$0xff]
        %v1093 = vld [vmem:[#allocation6 + $0x1200] sm:$0xff]
        %v1094 = vld [vmem:[#allocation6 + $0x1208] sm:$0xff]
        %v1095 = vld [vmem:[#allocation6 + $0x1210] sm:$0xf]
        %v1096 = vld [vmem:[#allocation6 + $0x1214] sm:$0xff]
        %v1097 = vld [vmem:[#allocation6 + $0x121c] sm:$0xff]
        %v1098 = vld [vmem:[#allocation6 + $0x1224] sm:$0xff]
        %v1099 = vld [vmem:[#allocation6 + $0x122c] sm:$0xff]
        %v1100 = vld [vmem:[#allocation6 + $0x1234] sm:$0xff]
        %v1101 = vld [vmem:[#allocation6 + $0x123c] sm:$0xff]
        %v1102 = vld [vmem:[#allocation6 + $0x1244] sm:$0xf]
        %v1103 = vld [vmem:[#allocation6 + $0x1248] sm:$0xff]
        %v1104 = vld [vmem:[#allocation6 + $0x1250] sm:$0xff]
        %v1105 = vld [vmem:[#allocation6 + $0x1258] sm:$0xff]
        %v1106 = vld [vmem:[#allocation6 + $0x1260] sm:$0xff]
        %v1107 = vld [vmem:[#allocation6 + $0x1268] sm:$0xff]
        %v1108 = vld [vmem:[#allocation6 + $0x1270] sm:$0xff]
        %v1109 = vld [vmem:[#allocation6 + $0x1278] sm:$0xf]
        %v1110 = vld [vmem:[#allocation6 + $0x127c] sm:$0xff]
        %v1111 = vld [vmem:[#allocation6 + $0x1284] sm:$0xff]
        %v1112 = vld [vmem:[#allocation6 + $0x128c] sm:$0xff]
        %v1113 = vld [vmem:[#allocation6 + $0x1294] sm:$0xff]
        %v1114 = vld [vmem:[#allocation6 + $0x129c] sm:$0xff]
        %v1115 = vld [vmem:[#allocation6 + $0x12a4] sm:$0xff]
        %v1116 = vld [vmem:[#allocation6 + $0x12ac] sm:$0xf]
        %v1117 = vld [vmem:[#allocation6 + $0x12b0] sm:$0xff]
        %v1118 = vld [vmem:[#allocation6 + $0x12b8] sm:$0xff]
        %v1119 = vld [vmem:[#allocation6 + $0x12c0] sm:$0xff]
        %v1120 = vld [vmem:[#allocation6 + $0x12c8] sm:$0xff]
        %v1121 = vld [vmem:[#allocation6 + $0x12d0] sm:$0xff]
        %v1122 = vld [vmem:[#allocation6 + $0x12d8] sm:$0xff]
        %v1123 = vld [vmem:[#allocation6 + $0x12e0] sm:$0xf]
        %v1124 = vld [vmem:[#allocation6 + $0x12e4] sm:$0xff]
        %v1125 = vld [vmem:[#allocation6 + $0x12ec] sm:$0xff]
        %v1126 = vld [vmem:[#allocation6 + $0x12f4] sm:$0xff]
        %v1127 = vld [vmem:[#allocation6 + $0x12fc] sm:$0xff]
        %v1128 = vld [vmem:[#allocation6 + $0x1304] sm:$0xff]
        %v1129 = vld [vmem:[#allocation6 + $0x130c] sm:$0xff]
        %v1130 = vld [vmem:[#allocation6 + $0x1314] sm:$0xf]
        %v1131 = vld [vmem:[#allocation6 + $0x1318] sm:$0xff]
        %v1132 = vld [vmem:[#allocation6 + $0x1320] sm:$0xff]
        %v1133 = vld [vmem:[#allocation6 + $0x1328] sm:$0xff]
        %v1134 = vld [vmem:[#allocation6 + $0x1330] sm:$0xff]
        %v1135 = vld [vmem:[#allocation6 + $0x1338] sm:$0xff]
        %v1136 = vld [vmem:[#allocation6 + $0x1340] sm:$0xff]
        %v1137 = vld [vmem:[#allocation6 + $0x1348] sm:$0xf]
        %v1138 = vld [vmem:[#allocation6 + $0x134c] sm:$0xff]
        %v1139 = vld [vmem:[#allocation6 + $0x1354] sm:$0xff]
        %v1140 = vld [vmem:[#allocation6 + $0x135c] sm:$0xff]
        %v1141 = vld [vmem:[#allocation6 + $0x1364] sm:$0xff]
        %v1142 = vld [vmem:[#allocation6 + $0x136c] sm:$0xff]
        %v1143 = vld [vmem:[#allocation6 + $0x1374] sm:$0xff]
        %v1144 = vld [vmem:[#allocation6 + $0x137c] sm:$0xf]
        %v1145 = vld [vmem:[#allocation6 + $0x1380] sm:$0xff]
        %v1146 = vld [vmem:[#allocation6 + $0x1388] sm:$0xff]
        %v1147 = vld [vmem:[#allocation6 + $0x1390] sm:$0xff]
        %v1148 = vld [vmem:[#allocation6 + $0x1398] sm:$0xff]
        %v1149 = vld [vmem:[#allocation6 + $0x13a0] sm:$0xff]
        %v1150 = vld [vmem:[#allocation6 + $0x13a8] sm:$0xff]
        %v1151 = vld [vmem:[#allocation6 + $0x13b0] sm:$0xf]
        %v1152 = vld [vmem:[#allocation6 + $0x13b4] sm:$0xff]
        %v1153 = vld [vmem:[#allocation6 + $0x13bc] sm:$0xff]
        %v1154 = vld [vmem:[#allocation6 + $0x13c4] sm:$0xff]
        %v1155 = vld [vmem:[#allocation6 + $0x13cc] sm:$0xff]
        %v1156 = vld [vmem:[#allocation6 + $0x13d4] sm:$0xff]
        %v1157 = vld [vmem:[#allocation6 + $0x13dc] sm:$0xff]
        %v1158 = vld [vmem:[#allocation6 + $0x13e4] sm:$0xf]
        %v1159 = vld [vmem:[#allocation6 + $0x13e8] sm:$0xff]
        %v1160 = vld [vmem:[#allocation6 + $0x13f0] sm:$0xff]
        %v1161 = vld [vmem:[#allocation6 + $0x13f8] sm:$0xff]
        %v1162 = vld [vmem:[#allocation6 + $0x1400] sm:$0xff]
        %v1163 = vld [vmem:[#allocation6 + $0x1408] sm:$0xff]
        %v1164 = vld [vmem:[#allocation6 + $0x1410] sm:$0xff]
        %v1165 = vld [vmem:[#allocation6 + $0x1418] sm:$0xf]
        %v1166 = vld [vmem:[#allocation6 + $0x141c] sm:$0xff]
        %v1167 = vld [vmem:[#allocation6 + $0x1424] sm:$0xff]
        %v1168 = vld [vmem:[#allocation6 + $0x142c] sm:$0xff]
        %v1169 = vld [vmem:[#allocation6 + $0x1434] sm:$0xff]
        %v1170 = vld [vmem:[#allocation6 + $0x143c] sm:$0xff]
        %v1171 = vld [vmem:[#allocation6 + $0x1444] sm:$0xff]
        %v1172 = vld [vmem:[#allocation6 + $0x144c] sm:$0xf]
        %v1173 = vld [vmem:[#allocation6 + $0x1450] sm:$0xff]
        %v1174 = vld [vmem:[#allocation6 + $0x1458] sm:$0xff]
        %v1175 = vld [vmem:[#allocation6 + $0x1460] sm:$0xff]
        %v1176 = vld [vmem:[#allocation6 + $0x1468] sm:$0xff]
        %v1177 = vld [vmem:[#allocation6 + $0x1470] sm:$0xff]
        %v1178 = vld [vmem:[#allocation6 + $0x1478] sm:$0xff]
        %v1179 = vld [vmem:[#allocation6 + $0x1480] sm:$0xf]
        %v1180 = vld [vmem:[#allocation6 + $0x1484] sm:$0xff]
        %v1181 = vld [vmem:[#allocation6 + $0x148c] sm:$0xff]
        %v1182 = vld [vmem:[#allocation6 + $0x1494] sm:$0xff]
        %v1183 = vld [vmem:[#allocation6 + $0x149c] sm:$0xff]
        %v1184 = vld [vmem:[#allocation6 + $0x14a4] sm:$0xff]
        %v1185 = vld [vmem:[#allocation6 + $0x14ac] sm:$0xff]
        %v1186 = vld [vmem:[#allocation6 + $0x14b4] sm:$0xf]
        %v1187 = vld [vmem:[#allocation6 + $0x14b8] sm:$0xff]
        %v1188 = vld [vmem:[#allocation6 + $0x14c0] sm:$0xff]
        %v1189 = vld [vmem:[#allocation6 + $0x14c8] sm:$0xff]
        %v1190 = vld [vmem:[#allocation6 + $0x14d0] sm:$0xff]
        %v1191 = vld [vmem:[#allocation6 + $0x14d8] sm:$0xff]
        %v1192 = vld [vmem:[#allocation6 + $0x14e0] sm:$0xff]
        %v1193 = vld [vmem:[#allocation6 + $0x14e8] sm:$0xf]
        %v1194 = vld [vmem:[#allocation6 + $0x14ec] sm:$0xff]
        %v1195 = vld [vmem:[#allocation6 + $0x14f4] sm:$0xff]
        %v1196 = vld [vmem:[#allocation6 + $0x14fc] sm:$0xff]
        %v1197 = vld [vmem:[#allocation6 + $0x1504] sm:$0xff]
        %v1198 = vld [vmem:[#allocation6 + $0x150c] sm:$0xff]
        %v1199 = vld [vmem:[#allocation6 + $0x1514] sm:$0xff]
        %v1200 = vld [vmem:[#allocation6 + $0x151c] sm:$0xf]
        %v1201 = vld [vmem:[#allocation6 + $0x1520] sm:$0xff]
        %v1202 = vld [vmem:[#allocation6 + $0x1528] sm:$0xff]
        %v1203 = vld [vmem:[#allocation6 + $0x1530] sm:$0xff]
        %v1204 = vld [vmem:[#allocation6 + $0x1538] sm:$0xff]
        %v1205 = vld [vmem:[#allocation6 + $0x1540] sm:$0xff]
        %v1206 = vld [vmem:[#allocation6 + $0x1548] sm:$0xff]
        %v1207 = vld [vmem:[#allocation6 + $0x1550] sm:$0xf]
        %v1208 = vld [vmem:[#allocation6 + $0x1554] sm:$0xff]
        %v1209 = vld [vmem:[#allocation6 + $0x155c] sm:$0xff]
        %v1210 = vld [vmem:[#allocation6 + $0x1564] sm:$0xff]
        %v1211 = vld [vmem:[#allocation6 + $0x156c] sm:$0xff]
        %v1212 = vld [vmem:[#allocation6 + $0x1574] sm:$0xff]
        %v1213 = vld [vmem:[#allocation6 + $0x157c] sm:$0xff]
        %v1214 = vld [vmem:[#allocation6 + $0x1584] sm:$0xf]
        %v1215 = vld [vmem:[#allocation6 + $0x1588] sm:$0xff]
        %v1216 = vld [vmem:[#allocation6 + $0x1590] sm:$0xff]
        %v1217 = vld [vmem:[#allocation6 + $0x1598] sm:$0xff]
        %v1218 = vld [vmem:[#allocation6 + $0x15a0] sm:$0xff]
        %v1219 = vld [vmem:[#allocation6 + $0x15a8] sm:$0xff]
        %v1220 = vld [vmem:[#allocation6 + $0x15b0] sm:$0xff]
        %v1221 = vld [vmem:[#allocation6 + $0x15b8] sm:$0xf]
        %v1222 = vld [vmem:[#allocation6 + $0x15bc] sm:$0xff]
        %v1223 = vld [vmem:[#allocation6 + $0x15c4] sm:$0xff]
        %v1224 = vld [vmem:[#allocation6 + $0x15cc] sm:$0xff]
        %v1225 = vld [vmem:[#allocation6 + $0x15d4] sm:$0xff]
        %v1226 = vld [vmem:[#allocation6 + $0x15dc] sm:$0xff]
        %v1227 = vld [vmem:[#allocation6 + $0x15e4] sm:$0xff]
        %v1228 = vld [vmem:[#allocation6 + $0x15ec] sm:$0xf]
        %v1229 = vld [vmem:[#allocation6 + $0x15f0] sm:$0xff]
        %v1230 = vld [vmem:[#allocation6 + $0x15f8] sm:$0xff]
        %v1231 = vld [vmem:[#allocation6 + $0x1600] sm:$0xff]
        %v1232 = vld [vmem:[#allocation6 + $0x1608] sm:$0xff]
        %v1233 = vld [vmem:[#allocation6 + $0x1610] sm:$0xff]
        %v1234 = vld [vmem:[#allocation6 + $0x1618] sm:$0xff]
        %v1235 = vld [vmem:[#allocation6 + $0x1620] sm:$0xf]
        %v1236 = vld [vmem:[#allocation6 + $0x1624] sm:$0xff]
        %v1237 = vld [vmem:[#allocation6 + $0x162c] sm:$0xff]
        %v1238 = vld [vmem:[#allocation6 + $0x1634] sm:$0xff]
        %v1239 = vld [vmem:[#allocation6 + $0x163c] sm:$0xff]
        %v1240 = vld [vmem:[#allocation6 + $0x1644] sm:$0xff]
        %v1241 = vld [vmem:[#allocation6 + $0x164c] sm:$0xff]
        %v1242 = vld [vmem:[#allocation6 + $0x1654] sm:$0xf]
        %v1243 = vld [vmem:[#allocation6 + $0x1658] sm:$0xff]
        %v1244 = vld [vmem:[#allocation6 + $0x1660] sm:$0xff]
        %v1245 = vld [vmem:[#allocation6 + $0x1668] sm:$0xff]
        %v1246 = vld [vmem:[#allocation6 + $0x1670] sm:$0xff]
        %v1247 = vld [vmem:[#allocation6 + $0x1678] sm:$0xff]
        %v1248 = vld [vmem:[#allocation6 + $0x1680] sm:$0xff]
        %v1249 = vld [vmem:[#allocation6 + $0x1688] sm:$0xf]
        %v1250 = vld [vmem:[#allocation6 + $0x168c] sm:$0xff]
        %v1251 = vld [vmem:[#allocation6 + $0x1694] sm:$0xff]
        %v1252 = vld [vmem:[#allocation6 + $0x169c] sm:$0xff]
        %v1253 = vld [vmem:[#allocation6 + $0x16a4] sm:$0xff]
        %v1254 = vld [vmem:[#allocation6 + $0x16ac] sm:$0xff]
        %v1255 = vld [vmem:[#allocation6 + $0x16b4] sm:$0xff]
        %v1256 = vld [vmem:[#allocation6 + $0x16bc] sm:$0xf]
        %v1257 = vld [vmem:[#allocation6 + $0x16c0] sm:$0xff]
        %v1258 = vld [vmem:[#allocation6 + $0x16c8] sm:$0xff]
        %v1259 = vld [vmem:[#allocation6 + $0x16d0] sm:$0xff]
        %v1260 = vld [vmem:[#allocation6 + $0x16d8] sm:$0xff]
        %v1261 = vld [vmem:[#allocation6 + $0x16e0] sm:$0xff]
        %v1262 = vld [vmem:[#allocation6 + $0x16e8] sm:$0xff]
        %v1263 = vld [vmem:[#allocation6 + $0x16f0] sm:$0xf]
        %v1264 = vld [vmem:[#allocation6 + $0x16f4] sm:$0xff]
        %v1265 = vld [vmem:[#allocation6 + $0x16fc] sm:$0xff]
        %v1266 = vld [vmem:[#allocation6 + $0x1704] sm:$0xff]
        %v1267 = vld [vmem:[#allocation6 + $0x170c] sm:$0xff]
        %v1268 = vld [vmem:[#allocation6 + $0x1714] sm:$0xff]
        %v1269 = vld [vmem:[#allocation6 + $0x171c] sm:$0xff]
        %v1270 = vld [vmem:[#allocation6 + $0x1724] sm:$0xf]
        %v1271 = vld [vmem:[#allocation6 + $0x1728] sm:$0xff]
        %v1272 = vld [vmem:[#allocation6 + $0x1730] sm:$0xff]
        %v1273 = vld [vmem:[#allocation6 + $0x1738] sm:$0xff]
        %v1274 = vld [vmem:[#allocation6 + $0x1740] sm:$0xff]
        %v1275 = vld [vmem:[#allocation6 + $0x1748] sm:$0xff]
        %v1276 = vld [vmem:[#allocation6 + $0x1750] sm:$0xff]
        %v1277 = vld [vmem:[#allocation6 + $0x1758] sm:$0xf]
        %v1278 = vld [vmem:[#allocation6 + $0x175c] sm:$0xff]
        %v1279 = vld [vmem:[#allocation6 + $0x1764] sm:$0xff]
        %v1280 = vld [vmem:[#allocation6 + $0x176c] sm:$0xff]
        %v1281 = vld [vmem:[#allocation6 + $0x1774] sm:$0xff]
        %v1282 = vld [vmem:[#allocation6 + $0x177c] sm:$0xff]
        %v1283 = vld [vmem:[#allocation6 + $0x1784] sm:$0xff]
        %v1284 = vld [vmem:[#allocation6 + $0x178c] sm:$0xf]
        %v1285 = vld [vmem:[#allocation6 + $0x1790] sm:$0xff]
        %v1286 = vld [vmem:[#allocation6 + $0x1798] sm:$0xff]
        %v1287 = vld [vmem:[#allocation6 + $0x17a0] sm:$0xff]
        %v1288 = vld [vmem:[#allocation6 + $0x17a8] sm:$0xff]
        %v1289 = vld [vmem:[#allocation6 + $0x17b0] sm:$0xff]
        %v1290 = vld [vmem:[#allocation6 + $0x17b8] sm:$0xff]
        %v1291 = vld [vmem:[#allocation6 + $0x17c0] sm:$0xf]
        %v1292 = vld [vmem:[#allocation6 + $0x17c4] sm:$0xff]
        %v1293 = vld [vmem:[#allocation6 + $0x17cc] sm:$0xff]
        %v1294 = vld [vmem:[#allocation6 + $0x17d4] sm:$0xff]
        %v1295 = vld [vmem:[#allocation6 + $0x17dc] sm:$0xff]
        %v1296 = vld [vmem:[#allocation6 + $0x17e4] sm:$0xff]
        %v1297 = vld [vmem:[#allocation6 + $0x17ec] sm:$0xff]
        %v1298 = vld [vmem:[#allocation6 + $0x17f4] sm:$0xf]
        %v1299 = vld [vmem:[#allocation6 + $0x17f8] sm:$0xff]
        %v1300 = vld [vmem:[#allocation6 + $0x1800] sm:$0xff]
        %v1301 = vld [vmem:[#allocation6 + $0x1808] sm:$0xff]
        %v1302 = vld [vmem:[#allocation6 + $0x1810] sm:$0xff]
        %v1303 = vld [vmem:[#allocation6 + $0x1818] sm:$0xff]
        %v1304 = vld [vmem:[#allocation6 + $0x1820] sm:$0xff]
        %v1305 = vld [vmem:[#allocation6 + $0x1828] sm:$0xf]
        %v1306 = vld [vmem:[#allocation6 + $0x182c] sm:$0xff]
        %v1307 = vld [vmem:[#allocation6 + $0x1834] sm:$0xff]
        %v1308 = vld [vmem:[#allocation6 + $0x183c] sm:$0xff]
        %v1309 = vld [vmem:[#allocation6 + $0x1844] sm:$0xff]
        %v1310 = vld [vmem:[#allocation6 + $0x184c] sm:$0xff]
        %v1311 = vld [vmem:[#allocation6 + $0x1854] sm:$0xff]
        %v1312 = vld [vmem:[#allocation6 + $0x185c] sm:$0xf]
        %v1313 = vld [vmem:[#allocation6 + $0x1860] sm:$0xff]
        %v1314 = vld [vmem:[#allocation6 + $0x1868] sm:$0xff]
        %v1315 = vld [vmem:[#allocation6 + $0x1870] sm:$0xff]
        %v1316 = vld [vmem:[#allocation6 + $0x1878] sm:$0xff]
        %v1317 = vld [vmem:[#allocation6 + $0x1880] sm:$0xff]
        %v1318 = vld [vmem:[#allocation6 + $0x1888] sm:$0xff]
        %v1319 = vld [vmem:[#allocation6 + $0x1890] sm:$0xf]
        %v1320 = vld [vmem:[#allocation6 + $0x1894] sm:$0xff]
        %v1321 = vld [vmem:[#allocation6 + $0x189c] sm:$0xff]
        %v1322 = vld [vmem:[#allocation6 + $0x18a4] sm:$0xff]
        %v1323 = vld [vmem:[#allocation6 + $0x18ac] sm:$0xff]
        %v1324 = vld [vmem:[#allocation6 + $0x18b4] sm:$0xff]
        %v1325 = vld [vmem:[#allocation6 + $0x18bc] sm:$0xff]
        %v1326 = vld [vmem:[#allocation6 + $0x18c4] sm:$0xf]
        %v1327 = vld [vmem:[#allocation6 + $0x18c8] sm:$0xff]
        %v1328 = vld [vmem:[#allocation6 + $0x18d0] sm:$0xff]
        %v1329 = vld [vmem:[#allocation6 + $0x18d8] sm:$0xff]
        %v1330 = vld [vmem:[#allocation6 + $0x18e0] sm:$0xff]
        %v1331 = vld [vmem:[#allocation6 + $0x18e8] sm:$0xff]
        %v1332 = vld [vmem:[#allocation6 + $0x18f0] sm:$0xff]
        %v1333 = vld [vmem:[#allocation6 + $0x18f8] sm:$0xf]
        %v1334 = vld [vmem:[#allocation6 + $0x18fc] sm:$0xff]
        %v1335 = vld [vmem:[#allocation6 + $0x1904] sm:$0xff]
        %v1336 = vld [vmem:[#allocation6 + $0x190c] sm:$0xff]
        %v1337 = vld [vmem:[#allocation6 + $0x1914] sm:$0xff]
        %v1338 = vld [vmem:[#allocation6 + $0x191c] sm:$0xff]
        %v1339 = vld [vmem:[#allocation6 + $0x1924] sm:$0xff]
        %v1340 = vld [vmem:[#allocation6 + $0x192c] sm:$0xf]
        %v1341 = vld [vmem:[#allocation6 + $0x1930] sm:$0xff]
        %v1342 = vld [vmem:[#allocation6 + $0x1938] sm:$0xff]
        %v1343 = vld [vmem:[#allocation6 + $0x1940] sm:$0xff]
        %v1344 = vld [vmem:[#allocation6 + $0x1948] sm:$0xff]
        %v1345 = vld [vmem:[#allocation6 + $0x1950] sm:$0xff]
        %v1346 = vld [vmem:[#allocation6 + $0x1958] sm:$0xff]
        %v1347 = vld [vmem:[#allocation6 + $0x1960] sm:$0xf]
        %v1348 = vld [vmem:[#allocation6 + $0x1964] sm:$0xff]
        %v1349 = vld [vmem:[#allocation6 + $0x196c] sm:$0xff]
        %v1350 = vld [vmem:[#allocation6 + $0x1974] sm:$0xff]
        %v1351 = vld [vmem:[#allocation6 + $0x197c] sm:$0xff]
        %v1352 = vld [vmem:[#allocation6 + $0x1984] sm:$0xff]
        %v1353 = vld [vmem:[#allocation6 + $0x198c] sm:$0xff]
        %v1354 = vld [vmem:[#allocation6 + $0x1994] sm:$0xf]
        %v1355 = vld [vmem:[#allocation6 + $0x1998] sm:$0xff]
        %v1356 = vld [vmem:[#allocation6 + $0x19a0] sm:$0xff]
        %v1357 = vld [vmem:[#allocation6 + $0x19a8] sm:$0xff]
        %v1358 = vld [vmem:[#allocation6 + $0x19b0] sm:$0xff]
        %v1359 = vld [vmem:[#allocation6 + $0x19b8] sm:$0xff]
        %v1360 = vld [vmem:[#allocation6 + $0x19c0] sm:$0xff]
        %v1361 = vld [vmem:[#allocation6 + $0x19c8] sm:$0xf]
        %v1362 = vld [vmem:[#allocation6 + $0x19cc] sm:$0xff]
        %v1363 = vld [vmem:[#allocation6 + $0x19d4] sm:$0xff]
        %v1364 = vld [vmem:[#allocation6 + $0x19dc] sm:$0xff]
        %v1365 = vld [vmem:[#allocation6 + $0x19e4] sm:$0xff]
        %v1366 = vld [vmem:[#allocation6 + $0x19ec] sm:$0xff]
        %v1367 = vld [vmem:[#allocation6 + $0x19f4] sm:$0xff]
        %v1368 = vld [vmem:[#allocation6 + $0x19fc] sm:$0xf]
        %v1369 = vld [vmem:[#allocation6 + $0x1a00] sm:$0xff]
        %v1370 = vld [vmem:[#allocation6 + $0x1a08] sm:$0xff]
        %v1371 = vld [vmem:[#allocation6 + $0x1a10] sm:$0xff]
        %v1372 = vld [vmem:[#allocation6 + $0x1a18] sm:$0xff]
        %v1373 = vld [vmem:[#allocation6 + $0x1a20] sm:$0xff]
        %v1374 = vld [vmem:[#allocation6 + $0x1a28] sm:$0xff]
        %v1375 = vld [vmem:[#allocation6 + $0x1a30] sm:$0xf]
        %v1376 = vld [vmem:[#allocation6 + $0x1a34] sm:$0xff]
        %v1377 = vld [vmem:[#allocation6 + $0x1a3c] sm:$0xff]
        %v1378 = vld [vmem:[#allocation6 + $0x1a44] sm:$0xff]
        %v1379 = vld [vmem:[#allocation6 + $0x1a4c] sm:$0xff]
        %v1380 = vld [vmem:[#allocation6 + $0x1a54] sm:$0xff]
        %v1381 = vld [vmem:[#allocation6 + $0x1a5c] sm:$0xff]
        %v1382 = vld [vmem:[#allocation6 + $0x1a64] sm:$0xf]
        %v1383 = vld [vmem:[#allocation6 + $0x1a68] sm:$0xff]
        %v1384 = vld [vmem:[#allocation6 + $0x1a70] sm:$0xff]
        %v1385 = vld [vmem:[#allocation6 + $0x1a78] sm:$0xff]
        %v1386 = vld [vmem:[#allocation6 + $0x1a80] sm:$0xff]
        %v1387 = vld [vmem:[#allocation6 + $0x1a88] sm:$0xff]
        %v1388 = vld [vmem:[#allocation6 + $0x1a90] sm:$0xff]
        %v1389 = vld [vmem:[#allocation6 + $0x1a98] sm:$0xf]
        %v1390 = vld [vmem:[#allocation6 + $0x1a9c] sm:$0xff]
        %v1391 = vld [vmem:[#allocation6 + $0x1aa4] sm:$0xff]
        %v1392 = vld [vmem:[#allocation6 + $0x1aac] sm:$0xff]
        %v1393 = vld [vmem:[#allocation6 + $0x1ab4] sm:$0xff]
        %v1394 = vld [vmem:[#allocation6 + $0x1abc] sm:$0xff]
        %v1395 = vld [vmem:[#allocation6 + $0x1ac4] sm:$0xff]
        %v1396 = vld [vmem:[#allocation6 + $0x1acc] sm:$0xf]
        %v1397 = vld [vmem:[#allocation6 + $0x1ad0] sm:$0xff]
        %v1398 = vld [vmem:[#allocation6 + $0x1ad8] sm:$0xff]
        %v1399 = vld [vmem:[#allocation6 + $0x1ae0] sm:$0xff]
        %v1400 = vld [vmem:[#allocation6 + $0x1ae8] sm:$0xff]
        %v1401 = vld [vmem:[#allocation6 + $0x1af0] sm:$0xff]
        %v1402 = vld [vmem:[#allocation6 + $0x1af8] sm:$0xff]
        %v1403 = vld [vmem:[#allocation6 + $0x1b00] sm:$0xf]
        %v1404 = vld [vmem:[#allocation6 + $0x1b04] sm:$0xff]
        %v1405 = vld [vmem:[#allocation6 + $0x1b0c] sm:$0xff]
        %v1406 = vld [vmem:[#allocation6 + $0x1b14] sm:$0xff]
        %v1407 = vld [vmem:[#allocation6 + $0x1b1c] sm:$0xff]
        %v1408 = vld [vmem:[#allocation6 + $0x1b24] sm:$0xff]
        %v1409 = vld [vmem:[#allocation6 + $0x1b2c] sm:$0xff]
        %v1410 = vld [vmem:[#allocation6 + $0x1b34] sm:$0xf]
        %v1411 = vld [vmem:[#allocation6 + $0x1b38] sm:$0xff]
        %v1412 = vld [vmem:[#allocation6 + $0x1b40] sm:$0xff]
        %v1413 = vld [vmem:[#allocation6 + $0x1b48] sm:$0xff]
        %v1414 = vld [vmem:[#allocation6 + $0x1b50] sm:$0xff]
        %v1415 = vld [vmem:[#allocation6 + $0x1b58] sm:$0xff]
        %v1416 = vld [vmem:[#allocation6 + $0x1b60] sm:$0xff]
        %v1417 = vld [vmem:[#allocation6 + $0x1b68] sm:$0xf]
        %v1418 = vld [vmem:[#allocation6 + $0x1b6c] sm:$0xff]
        %v1419 = vld [vmem:[#allocation6 + $0x1b74] sm:$0xff]
        %v1420 = vld [vmem:[#allocation6 + $0x1b7c] sm:$0xff]
        %v1421 = vld [vmem:[#allocation6 + $0x1b84] sm:$0xff]
        %v1422 = vld [vmem:[#allocation6 + $0x1b8c] sm:$0xff]
        %v1423 = vld [vmem:[#allocation6 + $0x1b94] sm:$0xff]
        %v1424 = vld [vmem:[#allocation6 + $0x1b9c] sm:$0xf]
        %v1425 = vld [vmem:[#allocation6 + $0x1ba0] sm:$0xff]
        %v1426 = vld [vmem:[#allocation6 + $0x1ba8] sm:$0xff]
        %v1427 = vld [vmem:[#allocation6 + $0x1bb0] sm:$0xff]
        %v1428 = vld [vmem:[#allocation6 + $0x1bb8] sm:$0xff]
        %v1429 = vld [vmem:[#allocation6 + $0x1bc0] sm:$0xff]
        %v1430 = vld [vmem:[#allocation6 + $0x1bc8] sm:$0xff]
        %v1431 = vld [vmem:[#allocation6 + $0x1bd0] sm:$0xf]
        %v1432 = vld [vmem:[#allocation6 + $0x1bd4] sm:$0xff]
        %v1433 = vld [vmem:[#allocation6 + $0x1bdc] sm:$0xff]
        %v1434 = vld [vmem:[#allocation6 + $0x1be4] sm:$0xff]
        %v1435 = vld [vmem:[#allocation6 + $0x1bec] sm:$0xff]
        %v1436 = vld [vmem:[#allocation6 + $0x1bf4] sm:$0xff]
        %v1437 = vld [vmem:[#allocation6 + $0x1bfc] sm:$0xff]
        %v1438 = vld [vmem:[#allocation6 + $0x1c04] sm:$0xf]
        %v1439 = vld [vmem:[#allocation6 + $0x1c08] sm:$0xff]
        %v1440 = vld [vmem:[#allocation6 + $0x1c10] sm:$0xff]
        %v1441 = vld [vmem:[#allocation6 + $0x1c18] sm:$0xff]
        %v1442 = vld [vmem:[#allocation6 + $0x1c20] sm:$0xff]
        %v1443 = vld [vmem:[#allocation6 + $0x1c28] sm:$0xff]
        %v1444 = vld [vmem:[#allocation6 + $0x1c30] sm:$0xff]
        %v1445 = vld [vmem:[#allocation6 + $0x1c38] sm:$0xf]
        %v1446 = vld [vmem:[#allocation6 + $0x1c3c] sm:$0xff]
        %v1447 = vld [vmem:[#allocation6 + $0x1c44] sm:$0xff]
        %v1448 = vld [vmem:[#allocation6 + $0x1c4c] sm:$0xff]
        %v1449 = vld [vmem:[#allocation6 + $0x1c54] sm:$0xff]
        %v1450 = vld [vmem:[#allocation6 + $0x1c5c] sm:$0xff]
        %v1451 = vld [vmem:[#allocation6 + $0x1c64] sm:$0xff]
        %v1452 = vld [vmem:[#allocation6 + $0x1c6c] sm:$0xf]
        %v1453 = vld [vmem:[#allocation6 + $0x1c70] sm:$0xff]
        %v1454 = vld [vmem:[#allocation6 + $0x1c78] sm:$0xff]
        %v1455 = vld [vmem:[#allocation6 + $0x1c80] sm:$0xff]
        %v1456 = vld [vmem:[#allocation6 + $0x1c88] sm:$0xff]
        %v1457 = vld [vmem:[#allocation6 + $0x1c90] sm:$0xff]
        %v1458 = vld [vmem:[#allocation6 + $0x1c98] sm:$0xff]
        %v1459 = vld [vmem:[#allocation6 + $0x1ca0] sm:$0xf]
        %v1460 = vld [vmem:[#allocation6 + $0x1ca4] sm:$0xff]
        %v1461 = vld [vmem:[#allocation6 + $0x1cac] sm:$0xff]
        %v1462 = vld [vmem:[#allocation6 + $0x1cb4] sm:$0xff]
        %v1463 = vld [vmem:[#allocation6 + $0x1cbc] sm:$0xff]
        %v1464 = vld [vmem:[#allocation6 + $0x1cc4] sm:$0xff]
        %v1465 = vld [vmem:[#allocation6 + $0x1ccc] sm:$0xff]
        %v1466 = vld [vmem:[#allocation6 + $0x1cd4] sm:$0xf]
        %v1467 = vld [vmem:[#allocation6 + $0x1cd8] sm:$0xff]
        %v1468 = vld [vmem:[#allocation6 + $0x1ce0] sm:$0xff]
        %v1469 = vld [vmem:[#allocation6 + $0x1ce8] sm:$0xff]
        %v1470 = vld [vmem:[#allocation6 + $0x1cf0] sm:$0xff]
        %v1471 = vld [vmem:[#allocation6 + $0x1cf8] sm:$0xff]
        %v1472 = vld [vmem:[#allocation6 + $0x1d00] sm:$0xff]
        %v1473 = vld [vmem:[#allocation6 + $0x1d08] sm:$0xf]
        %v1474 = vld [vmem:[#allocation6 + $0x1d0c] sm:$0xff]
        %v1475 = vld [vmem:[#allocation6 + $0x1d14] sm:$0xff]
        %v1476 = vld [vmem:[#allocation6 + $0x1d1c] sm:$0xff]
        %v1477 = vld [vmem:[#allocation6 + $0x1d24] sm:$0xff]
        %v1478 = vld [vmem:[#allocation6 + $0x1d2c] sm:$0xff]
        %v1479 = vld [vmem:[#allocation6 + $0x1d34] sm:$0xff]
        %v1480 = vld [vmem:[#allocation6 + $0x1d3c] sm:$0xf]
        %v1481 = vld [vmem:[#allocation6 + $0x1d40] sm:$0xff]
        %v1482 = vld [vmem:[#allocation6 + $0x1d48] sm:$0xff]
        %v1483 = vld [vmem:[#allocation6 + $0x1d50] sm:$0xff]
        %v1484 = vld [vmem:[#allocation6 + $0x1d58] sm:$0xff]
        %v1485 = vld [vmem:[#allocation6 + $0x1d60] sm:$0xff]
        %v1486 = vld [vmem:[#allocation6 + $0x1d68] sm:$0xff]
        %v1487 = vld [vmem:[#allocation6 + $0x1d70] sm:$0xf]
        %v1488 = vld [vmem:[#allocation6 + $0x1d74] sm:$0xff]
        %v1489 = vld [vmem:[#allocation6 + $0x1d7c] sm:$0xff]
        %v1490 = vld [vmem:[#allocation6 + $0x1d84] sm:$0xff]
        %v1491 = vld [vmem:[#allocation6 + $0x1d8c] sm:$0xff]
        %v1492 = vld [vmem:[#allocation6 + $0x1d94] sm:$0xff]
        %v1493 = vld [vmem:[#allocation6 + $0x1d9c] sm:$0xff]
        %v1494 = vld [vmem:[#allocation6 + $0x1da4] sm:$0xf]
        %v1495 = vld [vmem:[#allocation6 + $0x1da8] sm:$0xff]
        %v1496 = vld [vmem:[#allocation6 + $0x1db0] sm:$0xff]
        %v1497 = vld [vmem:[#allocation6 + $0x1db8] sm:$0xff]
        %v1498 = vld [vmem:[#allocation6 + $0x1dc0] sm:$0xff]
        %v1499 = vld [vmem:[#allocation6 + $0x1dc8] sm:$0xff]
        %v1500 = vld [vmem:[#allocation6 + $0x1dd0] sm:$0xff]
        %v1501 = vld [vmem:[#allocation6 + $0x1dd8] sm:$0xf]
        %v1502 = vld [vmem:[#allocation6 + $0x1ddc] sm:$0xff]
        %v1503 = vld [vmem:[#allocation6 + $0x1de4] sm:$0xff]
        %v1504 = vld [vmem:[#allocation6 + $0x1dec] sm:$0xff]
        %v1505 = vld [vmem:[#allocation6 + $0x1df4] sm:$0xff]
        %v1506 = vld [vmem:[#allocation6 + $0x1dfc] sm:$0xff]
        %v1507 = vld [vmem:[#allocation6 + $0x1e04] sm:$0xff]
        %v1508 = vld [vmem:[#allocation6 + $0x1e0c] sm:$0xf]
        %v1509 = vld [vmem:[#allocation6 + $0x1e10] sm:$0xff]
        %v1510 = vld [vmem:[#allocation6 + $0x1e18] sm:$0xff]
        %v1511 = vld [vmem:[#allocation6 + $0x1e20] sm:$0xff]
        %v1512 = vld [vmem:[#allocation6 + $0x1e28] sm:$0xff]
        %v1513 = vld [vmem:[#allocation6 + $0x1e30] sm:$0xff]
        %v1514 = vld [vmem:[#allocation6 + $0x1e38] sm:$0xff]
        %v1515 = vld [vmem:[#allocation6 + $0x1e40] sm:$0xf]
        %v1516 = vld [vmem:[#allocation6 + $0x1e44] sm:$0xff]
        %v1517 = vld [vmem:[#allocation6 + $0x1e4c] sm:$0xff]
        %v1518 = vld [vmem:[#allocation6 + $0x1e54] sm:$0xff]
        %v1519 = vld [vmem:[#allocation6 + $0x1e5c] sm:$0xff]
        %v1520 = vld [vmem:[#allocation6 + $0x1e64] sm:$0xff]
        %v1521 = vld [vmem:[#allocation6 + $0x1e6c] sm:$0xff]
        %v1522 = vld [vmem:[#allocation6 + $0x1e74] sm:$0xf]
        %v1523 = vld [vmem:[#allocation6 + $0x1e78] sm:$0xff]
        %v1524 = vld [vmem:[#allocation6 + $0x1e80] sm:$0xff]
        %v1525 = vld [vmem:[#allocation6 + $0x1e88] sm:$0xff]
        %v1526 = vld [vmem:[#allocation6 + $0x1e90] sm:$0xff]
        %v1527 = vld [vmem:[#allocation6 + $0x1e98] sm:$0xff]
        %v1528 = vld [vmem:[#allocation6 + $0x1ea0] sm:$0xff]
        %v1529 = vld [vmem:[#allocation6 + $0x1ea8] sm:$0xf]
        %v1530 = vld [vmem:[#allocation6 + $0x1eac] sm:$0xff]
        %v1531 = vld [vmem:[#allocation6 + $0x1eb4] sm:$0xff]
        %v1532 = vld [vmem:[#allocation6 + $0x1ebc] sm:$0xff]
        %v1533 = vld [vmem:[#allocation6 + $0x1ec4] sm:$0xff]
        %v1534 = vld [vmem:[#allocation6 + $0x1ecc] sm:$0xff]
        %v1535 = vld [vmem:[#allocation6 + $0x1ed4] sm:$0xff]
        %v1536 = vld [vmem:[#allocation6 + $0x1edc] sm:$0xf]
        %v1537 = vld [vmem:[#allocation6 + $0x1ee0] sm:$0xff]
        %v1538 = vld [vmem:[#allocation6 + $0x1ee8] sm:$0xff]
        %v1539 = vld [vmem:[#allocation6 + $0x1ef0] sm:$0xff]
        %v1540 = vld [vmem:[#allocation6 + $0x1ef8] sm:$0xff]
        %v1541 = vld [vmem:[#allocation6 + $0x1f00] sm:$0xff]
        %v1542 = vld [vmem:[#allocation6 + $0x1f08] sm:$0xff]
        %v1543 = vld [vmem:[#allocation6 + $0x1f10] sm:$0xf]
        %v1544 = vld [vmem:[#allocation6 + $0x1f14] sm:$0xff]
        %v1545 = vld [vmem:[#allocation6 + $0x1f1c] sm:$0xff]
        %v1546 = vld [vmem:[#allocation6 + $0x1f24] sm:$0xff]
        %v1547 = vld [vmem:[#allocation6 + $0x1f2c] sm:$0xff]
        %v1548 = vld [vmem:[#allocation6 + $0x1f34] sm:$0xff]
        %v1549 = vld [vmem:[#allocation6 + $0x1f3c] sm:$0xff]
        %v1550 = vld [vmem:[#allocation6 + $0x1f44] sm:$0xf]
        %v1551 = vld [vmem:[#allocation6 + $0x1f48] sm:$0xff]
        %v1552 = vld [vmem:[#allocation6 + $0x1f50] sm:$0xff]
        %v1553 = vld [vmem:[#allocation6 + $0x1f58] sm:$0xff]
        %v1554 = vld [vmem:[#allocation6 + $0x1f60] sm:$0xff]
        %v1555 = vld [vmem:[#allocation6 + $0x1f68] sm:$0xff]
        %v1556 = vld [vmem:[#allocation6 + $0x1f70] sm:$0xff]
        %v1557 = vld [vmem:[#allocation6 + $0x1f78] sm:$0xf]
        %v1558 = vld [vmem:[#allocation6 + $0x1f7c] sm:$0xff]
        %v1559 = vld [vmem:[#allocation6 + $0x1f84] sm:$0xff]
        %v1560 = vld [vmem:[#allocation6 + $0x1f8c] sm:$0xff]
        %v1561 = vld [vmem:[#allocation6 + $0x1f94] sm:$0xff]
        %v1562 = vld [vmem:[#allocation6 + $0x1f9c] sm:$0xff]
        %v1563 = vld [vmem:[#allocation6 + $0x1fa4] sm:$0xff]
        %v1564 = vld [vmem:[#allocation6 + $0x1fac] sm:$0xf]
        %v1565 = vld [vmem:[#allocation6 + $0x1fb0] sm:$0xff]
        %v1566 = vld [vmem:[#allocation6 + $0x1fb8] sm:$0xff]
        %v1567 = vld [vmem:[#allocation6 + $0x1fc0] sm:$0xff]
        %v1568 = vld [vmem:[#allocation6 + $0x1fc8] sm:$0xff]
        %v1569 = vld [vmem:[#allocation6 + $0x1fd0] sm:$0xff]
        %v1570 = vld [vmem:[#allocation6 + $0x1fd8] sm:$0xff]
        %v1571 = vld [vmem:[#allocation6 + $0x1fe0] sm:$0xf]
        %v1572 = vld [vmem:[#allocation6 + $0x1fe4] sm:$0xff]
        %v1573 = vld [vmem:[#allocation6 + $0x1fec] sm:$0xff]
        %v1574 = vld [vmem:[#allocation6 + $0x1ff4] sm:$0xff]
        %v1575 = vld [vmem:[#allocation6 + $0x1ffc] sm:$0xff]
        %v1576 = vld [vmem:[#allocation6 + $0x2004] sm:$0xff]
        %v1577 = vld [vmem:[#allocation6 + $0x200c] sm:$0xff]
        %v1578 = vld [vmem:[#allocation6 + $0x2014] sm:$0xf]
        %v1579 = vld [vmem:[#allocation6 + $0x2018] sm:$0xff]
        %v1580 = vld [vmem:[#allocation6 + $0x2020] sm:$0xff]
        %v1581 = vld [vmem:[#allocation6 + $0x2028] sm:$0xff]
        %v1582 = vld [vmem:[#allocation6 + $0x2030] sm:$0xff]
        %v1583 = vld [vmem:[#allocation6 + $0x2038] sm:$0xff]
        %v1584 = vld [vmem:[#allocation6 + $0x2040] sm:$0xff]
        %v1585 = vld [vmem:[#allocation6 + $0x2048] sm:$0xf]
        %v1586 = vld [vmem:[#allocation6 + $0x204c] sm:$0xff]
        %v1587 = vld [vmem:[#allocation6 + $0x2054] sm:$0xff]
        %v1588 = vld [vmem:[#allocation6 + $0x205c] sm:$0xff]
        %v1589 = vld [vmem:[#allocation6 + $0x2064] sm:$0xff]
        %v1590 = vld [vmem:[#allocation6 + $0x206c] sm:$0xff]
        %v1591 = vld [vmem:[#allocation6 + $0x2074] sm:$0xff]
        %v1592 = vld [vmem:[#allocation6 + $0x207c] sm:$0xf]
        %v1593 = vld [vmem:[#allocation6 + $0x2080] sm:$0xff]
        %v1594 = vld [vmem:[#allocation6 + $0x2088] sm:$0xff]
        %v1595 = vld [vmem:[#allocation6 + $0x2090] sm:$0xff]
        %v1596 = vld [vmem:[#allocation6 + $0x2098] sm:$0xff]
        %v1597 = vld [vmem:[#allocation6 + $0x20a0] sm:$0xff]
        %v1598 = vld [vmem:[#allocation6 + $0x20a8] sm:$0xff]
        %v1599 = vld [vmem:[#allocation6 + $0x20b0] sm:$0xf]
        %v1600 = vld [vmem:[#allocation6 + $0x20b4] sm:$0xff]
        %v1601 = vld [vmem:[#allocation6 + $0x20bc] sm:$0xff]
        %v1602 = vld [vmem:[#allocation6 + $0x20c4] sm:$0xff]
        %v1603 = vld [vmem:[#allocation6 + $0x20cc] sm:$0xff]
        %v1604 = vld [vmem:[#allocation6 + $0x20d4] sm:$0xff]
        %v1605 = vld [vmem:[#allocation6 + $0x20dc] sm:$0xff]
        %v1606 = vld [vmem:[#allocation6 + $0x20e4] sm:$0xf]
        %v1607 = vld [vmem:[#allocation6 + $0x20e8] sm:$0xff]
        %v1608 = vld [vmem:[#allocation6 + $0x20f0] sm:$0xff]
        %v1609 = vld [vmem:[#allocation6 + $0x20f8] sm:$0xff]
        %v1610 = vld [vmem:[#allocation6 + $0x2100] sm:$0xff]
        %v1611 = vld [vmem:[#allocation6 + $0x2108] sm:$0xff]
        %v1612 = vld [vmem:[#allocation6 + $0x2110] sm:$0xff]
        %v1613 = vld [vmem:[#allocation6 + $0x2118] sm:$0xf]
        %v1614 = vld [vmem:[#allocation6 + $0x211c] sm:$0xff]
        %v1615 = vld [vmem:[#allocation6 + $0x2124] sm:$0xff]
        %v1616 = vld [vmem:[#allocation6 + $0x212c] sm:$0xff]
        %v1617 = vld [vmem:[#allocation6 + $0x2134] sm:$0xff]
        %v1618 = vld [vmem:[#allocation6 + $0x213c] sm:$0xff]
        %v1619 = vld [vmem:[#allocation6 + $0x2144] sm:$0xff]
        %v1620 = vld [vmem:[#allocation6 + $0x214c] sm:$0xf]
        %v1621 = vld [vmem:[#allocation6 + $0x2150] sm:$0xff]
        %v1622 = vld [vmem:[#allocation6 + $0x2158] sm:$0xff]
        %v1623 = vld [vmem:[#allocation6 + $0x2160] sm:$0xff]
        %v1624 = vld [vmem:[#allocation6 + $0x2168] sm:$0xff]
        %v1625 = vld [vmem:[#allocation6 + $0x2170] sm:$0xff]
        %v1626 = vld [vmem:[#allocation6 + $0x2178] sm:$0xff]
        %v1627 = vld [vmem:[#allocation6 + $0x2180] sm:$0xf]
        %v1628 = vld [vmem:[#allocation6 + $0x2184] sm:$0xff]
        %v1629 = vld [vmem:[#allocation6 + $0x218c] sm:$0xff]
        %v1630 = vld [vmem:[#allocation6 + $0x2194] sm:$0xff]
        %v1631 = vld [vmem:[#allocation6 + $0x219c] sm:$0xff]
        %v1632 = vld [vmem:[#allocation6 + $0x21a4] sm:$0xff]
        %v1633 = vld [vmem:[#allocation6 + $0x21ac] sm:$0xff]
        %v1634 = vld [vmem:[#allocation6 + $0x21b4] sm:$0xf]
        %v1635 = vld [vmem:[#allocation6 + $0x21b8] sm:$0xff]
        %v1636 = vld [vmem:[#allocation6 + $0x21c0] sm:$0xff]
        %v1637 = vld [vmem:[#allocation6 + $0x21c8] sm:$0xff]
        %v1638 = vld [vmem:[#allocation6 + $0x21d0] sm:$0xff]
        %v1639 = vld [vmem:[#allocation6 + $0x21d8] sm:$0xff]
        %v1640 = vld [vmem:[#allocation6 + $0x21e0] sm:$0xff]
        %v1641 = vld [vmem:[#allocation6 + $0x21e8] sm:$0xf]
        %v1642 = vld [vmem:[#allocation6 + $0x21ec] sm:$0xff]
        %v1643 = vld [vmem:[#allocation6 + $0x21f4] sm:$0xff]
        %v1644 = vld [vmem:[#allocation6 + $0x21fc] sm:$0xff]
        %v1645 = vld [vmem:[#allocation6 + $0x2204] sm:$0xff]
        %v1646 = vld [vmem:[#allocation6 + $0x220c] sm:$0xff]
        %v1647 = vld [vmem:[#allocation6 + $0x2214] sm:$0xff]
        %v1648 = vld [vmem:[#allocation6 + $0x221c] sm:$0xf]
        %v1649 = vld [vmem:[#allocation6 + $0x2220] sm:$0xff]
        %v1650 = vld [vmem:[#allocation6 + $0x2228] sm:$0xff]
        %v1651 = vld [vmem:[#allocation6 + $0x2230] sm:$0xff]
        %v1652 = vld [vmem:[#allocation6 + $0x2238] sm:$0xff]
        %v1653 = vld [vmem:[#allocation6 + $0x2240] sm:$0xff]
        %v1654 = vld [vmem:[#allocation6 + $0x2248] sm:$0xff]
        %v1655 = vld [vmem:[#allocation6 + $0x2250] sm:$0xf]
        %v1656 = vld [vmem:[#allocation6 + $0x2254] sm:$0xff]
        %v1657 = vld [vmem:[#allocation6 + $0x225c] sm:$0xff]
        %v1658 = vld [vmem:[#allocation6 + $0x2264] sm:$0xff]
        %v1659 = vld [vmem:[#allocation6 + $0x226c] sm:$0xff]
        %v1660 = vld [vmem:[#allocation6 + $0x2274] sm:$0xff]
        %v1661 = vld [vmem:[#allocation6 + $0x227c] sm:$0xff]
        %v1662 = vld [vmem:[#allocation6 + $0x2284] sm:$0xf]
        %v1663 = vld [vmem:[#allocation6 + $0x2288] sm:$0xff]
        %v1664 = vld [vmem:[#allocation6 + $0x2290] sm:$0xff]
        %v1665 = vld [vmem:[#allocation6 + $0x2298] sm:$0xff]
        %v1666 = vld [vmem:[#allocation6 + $0x22a0] sm:$0xff]
        %v1667 = vld [vmem:[#allocation6 + $0x22a8] sm:$0xff]
        %v1668 = vld [vmem:[#allocation6 + $0x22b0] sm:$0xff]
        %v1669 = vld [vmem:[#allocation6 + $0x22b8] sm:$0xf]
        %v1670 = vld [vmem:[#allocation6 + $0x22bc] sm:$0xff]
        %v1671 = vld [vmem:[#allocation6 + $0x22c4] sm:$0xff]
        %v1672 = vld [vmem:[#allocation6 + $0x22cc] sm:$0xff]
        %v1673 = vld [vmem:[#allocation6 + $0x22d4] sm:$0xff]
        %v1674 = vld [vmem:[#allocation6 + $0x22dc] sm:$0xff]
        %v1675 = vld [vmem:[#allocation6 + $0x22e4] sm:$0xff]
        %v1676 = vld [vmem:[#allocation6 + $0x22ec] sm:$0xf]
        %v1677 = vld [vmem:[#allocation6 + $0x22f0] sm:$0xff]
        %v1678 = vld [vmem:[#allocation6 + $0x22f8] sm:$0xff]
        %v1679 = vld [vmem:[#allocation6 + $0x2300] sm:$0xff]
        %v1680 = vld [vmem:[#allocation6 + $0x2308] sm:$0xff]
        %v1681 = vld [vmem:[#allocation6 + $0x2310] sm:$0xff]
        %v1682 = vld [vmem:[#allocation6 + $0x2318] sm:$0xff]
        %v1683 = vld [vmem:[#allocation6 + $0x2320] sm:$0xf]
        %v1684 = vld [vmem:[#allocation6 + $0x2324] sm:$0xff]
        %v1685 = vld [vmem:[#allocation6 + $0x232c] sm:$0xff]
        %v1686 = vld [vmem:[#allocation6 + $0x2334] sm:$0xff]
        %v1687 = vld [vmem:[#allocation6 + $0x233c] sm:$0xff]
        %v1688 = vld [vmem:[#allocation6 + $0x2344] sm:$0xff]
        %v1689 = vld [vmem:[#allocation6 + $0x234c] sm:$0xff]
        %v1690 = vld [vmem:[#allocation6 + $0x2354] sm:$0xf]
        %v1691 = vld [vmem:[#allocation6 + $0x2358] sm:$0xff]
        %v1692 = vld [vmem:[#allocation6 + $0x2360] sm:$0xff]
        %v1693 = vld [vmem:[#allocation6 + $0x2368] sm:$0xff]
        %v1694 = vld [vmem:[#allocation6 + $0x2370] sm:$0xff]
        %v1695 = vld [vmem:[#allocation6 + $0x2378] sm:$0xff]
        %v1696 = vld [vmem:[#allocation6 + $0x2380] sm:$0xff]
        %v1697 = vld [vmem:[#allocation6 + $0x2388] sm:$0xf]
        %v1698 = vld [vmem:[#allocation6 + $0x238c] sm:$0xff]
        %v1699 = vld [vmem:[#allocation6 + $0x2394] sm:$0xff]
        %v1700 = vld [vmem:[#allocation6 + $0x239c] sm:$0xff]
        %v1701 = vld [vmem:[#allocation6 + $0x23a4] sm:$0xff]
        %v1702 = vld [vmem:[#allocation6 + $0x23ac] sm:$0xff]
        %v1703 = vld [vmem:[#allocation6 + $0x23b4] sm:$0xff]
        %v1704 = vld [vmem:[#allocation6 + $0x23bc] sm:$0xf]
        %v1705 = vld [vmem:[#allocation6 + $0x23c0] sm:$0xff]
        %v1706 = vld [vmem:[#allocation6 + $0x23c8] sm:$0xff]
        %v1707 = vld [vmem:[#allocation6 + $0x23d0] sm:$0xff]
        %v1708 = vld [vmem:[#allocation6 + $0x23d8] sm:$0xff]
        %v1709 = vld [vmem:[#allocation6 + $0x23e0] sm:$0xff]
        %v1710 = vld [vmem:[#allocation6 + $0x23e8] sm:$0xff]
        %v1711 = vld [vmem:[#allocation6 + $0x23f0] sm:$0xf]
        %v1712 = vld [vmem:[#allocation6 + $0x23f4] sm:$0xff]
        %v1713 = vld [vmem:[#allocation6 + $0x23fc] sm:$0xff]
        %v1714 = vld [vmem:[#allocation6 + $0x2404] sm:$0xff]
        %v1715 = vld [vmem:[#allocation6 + $0x240c] sm:$0xff]
        %v1716 = vld [vmem:[#allocation6 + $0x2414] sm:$0xff]
        %v1717 = vld [vmem:[#allocation6 + $0x241c] sm:$0xff]
        %v1718 = vld [vmem:[#allocation6 + $0x2424] sm:$0xf]
        %v1719 = vld [vmem:[#allocation6 + $0x2428] sm:$0xff]
        %v1720 = vld [vmem:[#allocation6 + $0x2430] sm:$0xff]
        %v1721 = vld [vmem:[#allocation6 + $0x2438] sm:$0xff]
        %v1722 = vld [vmem:[#allocation6 + $0x2440] sm:$0xff]
        %v1723 = vld [vmem:[#allocation6 + $0x2448] sm:$0xff]
        %v1724 = vld [vmem:[#allocation6 + $0x2450] sm:$0xff]
        %v1725 = vld [vmem:[#allocation6 + $0x2458] sm:$0xf]
        %v1726 = vld [vmem:[#allocation6 + $0x245c] sm:$0xff]
        %v1727 = vld [vmem:[#allocation6 + $0x2464] sm:$0xff]
        %v1728 = vld [vmem:[#allocation6 + $0x246c] sm:$0xff]
        %v1729 = vld [vmem:[#allocation6 + $0x2474] sm:$0xff]
        %v1730 = vld [vmem:[#allocation6 + $0x247c] sm:$0xff]
        %v1731 = vld [vmem:[#allocation6 + $0x2484] sm:$0xff]
        %v1732 = vld [vmem:[#allocation6 + $0x248c] sm:$0xf]
        %v1733 = vld [vmem:[#allocation6 + $0x2490] sm:$0xff]
        %v1734 = vld [vmem:[#allocation6 + $0x2498] sm:$0xff]
        %v1735 = vld [vmem:[#allocation6 + $0x24a0] sm:$0xff]
        %v1736 = vld [vmem:[#allocation6 + $0x24a8] sm:$0xff]
        %v1737 = vld [vmem:[#allocation6 + $0x24b0] sm:$0xff]
        %v1738 = vld [vmem:[#allocation6 + $0x24b8] sm:$0xff]
        %v1739 = vld [vmem:[#allocation6 + $0x24c0] sm:$0xf]
        %v1740 = vld [vmem:[#allocation6 + $0x24c4] sm:$0xff]
        %v1741 = vld [vmem:[#allocation6 + $0x24cc] sm:$0xff]
        %v1742 = vld [vmem:[#allocation6 + $0x24d4] sm:$0xff]
        %v1743 = vld [vmem:[#allocation6 + $0x24dc] sm:$0xff]
        %v1744 = vld [vmem:[#allocation6 + $0x24e4] sm:$0xff]
        %v1745 = vld [vmem:[#allocation6 + $0x24ec] sm:$0xff]
        %v1746 = vld [vmem:[#allocation6 + $0x24f4] sm:$0xf]
        %v1747 = vld [vmem:[#allocation6 + $0x24f8] sm:$0xff]
        %v1748 = vld [vmem:[#allocation6 + $0x2500] sm:$0xff]
        %v1749 = vld [vmem:[#allocation6 + $0x2508] sm:$0xff]
        %v1750 = vld [vmem:[#allocation6 + $0x2510] sm:$0xff]
        %v1751 = vld [vmem:[#allocation6 + $0x2518] sm:$0xff]
        %v1752 = vld [vmem:[#allocation6 + $0x2520] sm:$0xff]
        %v1753 = vld [vmem:[#allocation6 + $0x2528] sm:$0xf]
        %v1754 = vld [vmem:[#allocation6 + $0x252c] sm:$0xff]
        %v1755 = vld [vmem:[#allocation6 + $0x2534] sm:$0xff]
        %v1756 = vld [vmem:[#allocation6 + $0x253c] sm:$0xff]
        %v1757 = vld [vmem:[#allocation6 + $0x2544] sm:$0xff]
        %v1758 = vld [vmem:[#allocation6 + $0x254c] sm:$0xff]
        %v1759 = vld [vmem:[#allocation6 + $0x2554] sm:$0xff]
        %v1760 = vld [vmem:[#allocation6 + $0x255c] sm:$0xf]
        %v1761 = vld [vmem:[#allocation6 + $0x2560] sm:$0xff]
        %v1762 = vld [vmem:[#allocation6 + $0x2568] sm:$0xff]
        %v1763 = vld [vmem:[#allocation6 + $0x2570] sm:$0xff]
        %v1764 = vld [vmem:[#allocation6 + $0x2578] sm:$0xff]
        %v1765 = vld [vmem:[#allocation6 + $0x2580] sm:$0xff]
        %v1766 = vld [vmem:[#allocation6 + $0x2588] sm:$0xff]
        %v1767 = vld [vmem:[#allocation6 + $0x2590] sm:$0xf]
        %v1768 = vld [vmem:[#allocation6 + $0x2594] sm:$0xff]
        %v1769 = vld [vmem:[#allocation6 + $0x259c] sm:$0xff]
        %v1770 = vld [vmem:[#allocation6 + $0x25a4] sm:$0xff]
        %v1771 = vld [vmem:[#allocation6 + $0x25ac] sm:$0xff]
        %v1772 = vld [vmem:[#allocation6 + $0x25b4] sm:$0xff]
        %v1773 = vld [vmem:[#allocation6 + $0x25bc] sm:$0xff]
        %v1774 = vld [vmem:[#allocation6 + $0x25c4] sm:$0xf]
        %v1775 = vld [vmem:[#allocation6 + $0x25c8] sm:$0xff]
        %v1776 = vld [vmem:[#allocation6 + $0x25d0] sm:$0xff]
        %v1777 = vld [vmem:[#allocation6 + $0x25d8] sm:$0xff]
        %v1778 = vld [vmem:[#allocation6 + $0x25e0] sm:$0xff]
        %v1779 = vld [vmem:[#allocation6 + $0x25e8] sm:$0xff]
        %v1780 = vld [vmem:[#allocation6 + $0x25f0] sm:$0xff]
        %v1781 = vld [vmem:[#allocation6 + $0x25f8] sm:$0xf]
        %v1782 = vld [vmem:[#allocation6 + $0x25fc] sm:$0xff]
        %v1783 = vld [vmem:[#allocation6 + $0x2604] sm:$0xff]
        %v1784 = vld [vmem:[#allocation6 + $0x260c] sm:$0xff]
        %v1785 = vld [vmem:[#allocation6 + $0x2614] sm:$0xff]
        %v1786 = vld [vmem:[#allocation6 + $0x261c] sm:$0xff]
        %v1787 = vld [vmem:[#allocation6 + $0x2624] sm:$0xff]
        %v1788 = vld [vmem:[#allocation6 + $0x262c] sm:$0xf]
        %v1789 = vld [vmem:[#allocation6 + $0x2630] sm:$0xff]
        %v1790 = vld [vmem:[#allocation6 + $0x2638] sm:$0xff]
        %v1791 = vld [vmem:[#allocation6 + $0x2640] sm:$0xff]
        %v1792 = vld [vmem:[#allocation6 + $0x2648] sm:$0xff]
        %v1793 = vld [vmem:[#allocation6 + $0x2650] sm:$0xff]
        %v1794 = vld [vmem:[#allocation6 + $0x2658] sm:$0xff]
        %v1795 = vld [vmem:[#allocation6 + $0x2660] sm:$0xf]
        %v1796 = vld [vmem:[#allocation6 + $0x2664] sm:$0xff]
        %v1797 = vld [vmem:[#allocation6 + $0x266c] sm:$0xff]
        %v1798 = vld [vmem:[#allocation6 + $0x2674] sm:$0xff]
        %v1799 = vld [vmem:[#allocation6 + $0x267c] sm:$0xff]
        %v1800 = vld [vmem:[#allocation6 + $0x2684] sm:$0xff]
        %v1801 = vld [vmem:[#allocation6 + $0x268c] sm:$0xff]
        %v1802 = vld [vmem:[#allocation6 + $0x2694] sm:$0xf]
        %v1803 = vld [vmem:[#allocation6 + $0x2698] sm:$0xff]
        %v1804 = vld [vmem:[#allocation6 + $0x26a0] sm:$0xff]
        %v1805 = vld [vmem:[#allocation6 + $0x26a8] sm:$0xff]
        %v1806 = vld [vmem:[#allocation6 + $0x26b0] sm:$0xff]
        %v1807 = vld [vmem:[#allocation6 + $0x26b8] sm:$0xff]
        %v1808 = vld [vmem:[#allocation6 + $0x26c0] sm:$0xff]
        %v1809 = vld [vmem:[#allocation6 + $0x26c8] sm:$0xf]
        %v1810 = vld [vmem:[#allocation6 + $0x26cc] sm:$0xff]
        %v1811 = vld [vmem:[#allocation6 + $0x26d4] sm:$0xff]
        %v1812 = vld [vmem:[#allocation6 + $0x26dc] sm:$0xff]
        %v1813 = vld [vmem:[#allocation6 + $0x26e4] sm:$0xff]
        %v1814 = vld [vmem:[#allocation6 + $0x26ec] sm:$0xff]
        %v1815 = vld [vmem:[#allocation6 + $0x26f4] sm:$0xff]
        %v1816 = vld [vmem:[#allocation6 + $0x26fc] sm:$0xf]
        %v1817 = vld [vmem:[#allocation8] sm:$0xff]
        %v1818 = vld [vmem:[#allocation8 + $0x8] sm:$0x1f]
        %v1821 = vlaneseq
        %v1822 = vshrl.u32 %v1821, 7
        %v1823 = vsub.s32 0, %v1822
        %v1824 = vrot.slane %v1817, %v1823
        %v1825 = vlaneseq
        %v1826 = vshrl.u32 %v1825, 7
        %v1827 = vsub.s32 1, %v1826
        %v1828 = vrot.slane %v1817, %v1827
        %v1829 = vlaneseq
        %v1830 = vshrl.u32 %v1829, 7
        %v1831 = vsub.s32 2, %v1830
        %v1832 = vrot.slane %v1817, %v1831
        %v1833 = vlaneseq
        %v1834 = vshrl.u32 %v1833, 7
        %v1835 = vsub.s32 3, %v1834
        %v1836 = vrot.slane %v1817, %v1835
        %v1837 = vlaneseq
        %v1838 = vshrl.u32 %v1837, 7
        %v1839 = vsub.s32 4, %v1838
        %v1840 = vrot.slane %v1817, %v1839
        %v1841 = vlaneseq
        %v1842 = vshrl.u32 %v1841, 7
        %v1843 = vsub.s32 5, %v1842
        %v1844 = vrot.slane %v1817, %v1843
        %v1845 = vlaneseq
        %v1846 = vshrl.u32 %v1845, 7
        %v1847 = vsub.s32 6, %v1846
        %v1848 = vrot.slane %v1817, %v1847
        %v1849 = vlaneseq
        %v1850 = vshrl.u32 %v1849, 7
        %v1851 = vsub.s32 7, %v1850
        %v1852 = vrot.slane %v1817, %v1851
        %v1853 = vlaneseq
        %v1854 = vshrl.u32 %v1853, 7
        %v1855 = vsub.s32 0, %v1854
        %v1856 = vrot.slane %v1818, %v1855
        %v1857 = vlaneseq
        %v1858 = vshrl.u32 %v1857, 7
        %v1859 = vsub.s32 1, %v1858
        %v1860 = vrot.slane %v1818, %v1859
        %v1861 = vlaneseq
        %v1862 = vshrl.u32 %v1861, 7
        %v1863 = vsub.s32 2, %v1862
        %v1864 = vrot.slane %v1818, %v1863
        %v1865 = vlaneseq
        %v1866 = vshrl.u32 %v1865, 7
        %v1867 = vsub.s32 3, %v1866
        %v1868 = vrot.slane %v1818, %v1867
        %v1869 = vlaneseq
        %v1870 = vshrl.u32 %v1869, 7
        %v1871 = vsub.s32 4, %v1870
        %v1872 = vrot.slane %v1818, %v1871
        %v1898 = vunpack.c.l.b16 %v461
        %v1899 = vunpack.c.h.b16 %v461
        %v1900 = vunpack.c.l.b16 %v462
        %v1901 = vunpack.c.h.b16 %v462
        %v1902 = vunpack.c.l.b16 %v463
        %v1903 = vunpack.c.h.b16 %v463
        %v1904 = vunpack.c.l.b16 %v464
        %v1905 = vunpack.c.h.b16 %v464
        %v1906 = vunpack.c.l.b16 %v465
        %v1907 = vunpack.c.h.b16 %v465
        %v1908 = vunpack.c.l.b16 %v466
        %v1909 = vunpack.c.h.b16 %v466
        %v1910 = vunpack.c.l.b16 %v467
        %v1911 = vunpack.c.h.b16 %v467
        %v1912 = vunpack.c.l.b16 %v468
        %v1913 = vunpack.c.h.b16 %v468
        %v1914 = vunpack.c.l.b16 %v469
        %v1915 = vunpack.c.h.b16 %v469
        %v1916 = vunpack.c.l.b16 %v470
        %v1917 = vunpack.c.h.b16 %v470
        %v1918 = vunpack.c.l.b16 %v471
        %v1919 = vunpack.c.h.b16 %v471
        %v1920 = vunpack.c.l.b16 %v472
        %v1921 = vunpack.c.h.b16 %v472
        %v1922 = vpack.c.b16 %v1910, %v1898
        %v1923 = vpack.c.b16 %v1911, %v1899
        %v1924 = vpack.c.b16 %v1912, %v1900
        %v1925 = vpack.c.b16 %v1913, %v1901
        %v1926 = vpack.c.b16 %v1914, %v1902
        %v1927 = vpack.c.b16 %v1915, %v1903
        %v1928 = vpack.c.b16 %v1916, %v1904
        %v1929 = vpack.c.b16 %v1917, %v1905
        %v1930 = vpack.c.b16 %v1918, %v1906
        %v1931 = vpack.c.b16 %v1919, %v1907
        %v1932 = vpack.c.b16 %v1920, %v1908
        %v1933 = vpack.c.b16 %v1921, %v1909
        %v3290 = vunpack.c.l.b16 %v473
        %v3291 = vunpack.c.h.b16 %v473
        %v3292 = vunpack.c.l.b16 %v474
        %v3293 = vunpack.c.h.b16 %v474
        %v3294 = vunpack.c.l.b16 %v475
        %v3295 = vunpack.c.h.b16 %v475
        %v3296 = vunpack.c.l.b16 %v476
        %v3297 = vunpack.c.h.b16 %v476
        %v3298 = vunpack.c.l.b16 %v477
        %v3299 = vunpack.c.h.b16 %v477
        %v3300 = vunpack.c.l.b16 %v478
        %v3301 = vunpack.c.h.b16 %v478
        %v3302 = vunpack.c.l.b16 %v479
        %v3303 = vunpack.c.l.b16 %v480
        %v3304 = vunpack.c.h.b16 %v480
        %v3305 = vunpack.c.l.b16 %v481
        %v3306 = vunpack.c.h.b16 %v481
        %v3307 = vunpack.c.l.b16 %v482
        %v3308 = vunpack.c.h.b16 %v482
        %v3309 = vunpack.c.l.b16 %v483
        %v3310 = vunpack.c.h.b16 %v483
        %v3311 = vunpack.c.l.b16 %v484
        %v3312 = vunpack.c.h.b16 %v484
        %v3313 = vunpack.c.l.b16 %v485
        %v3314 = vunpack.c.h.b16 %v485
        %v3315 = vunpack.c.l.b16 %v486
        %v3316 = vunpack.c.l.b16 %v487
        %v3317 = vunpack.c.h.b16 %v487
        %v3318 = vunpack.c.l.b16 %v488
        %v3319 = vunpack.c.h.b16 %v488
        %v3320 = vunpack.c.l.b16 %v489
        %v3321 = vunpack.c.h.b16 %v489
        %v3322 = vunpack.c.l.b16 %v490
        %v3323 = vunpack.c.h.b16 %v490
        %v3324 = vunpack.c.l.b16 %v491
        %v3325 = vunpack.c.h.b16 %v491
        %v3326 = vunpack.c.l.b16 %v492
        %v3327 = vunpack.c.h.b16 %v492
        %v3328 = vunpack.c.l.b16 %v493
        %v3329 = vunpack.c.l.b16 %v494
        %v3330 = vunpack.c.h.b16 %v494
        %v3331 = vunpack.c.l.b16 %v495
        %v3332 = vunpack.c.h.b16 %v495
        %v3333 = vunpack.c.l.b16 %v496
        %v3334 = vunpack.c.h.b16 %v496
        %v3335 = vunpack.c.l.b16 %v497
        %v3336 = vunpack.c.h.b16 %v497
        %v3337 = vunpack.c.l.b16 %v498
        %v3338 = vunpack.c.h.b16 %v498
        %v3339 = vunpack.c.l.b16 %v499
        %v3340 = vunpack.c.h.b16 %v499
        %v3341 = vunpack.c.l.b16 %v500
        %v3342 = vunpack.c.l.b16 %v501
        %v3343 = vunpack.c.h.b16 %v501
        %v3344 = vunpack.c.l.b16 %v502
        %v3345 = vunpack.c.h.b16 %v502
        %v3346 = vunpack.c.l.b16 %v503
        %v3347 = vunpack.c.h.b16 %v503
        %v3348 = vunpack.c.l.b16 %v504
        %v3349 = vunpack.c.h.b16 %v504
        %v3350 = vunpack.c.l.b16 %v505
        %v3351 = vunpack.c.h.b16 %v505
        %v3352 = vunpack.c.l.b16 %v506
        %v3353 = vunpack.c.h.b16 %v506
        %v3354 = vunpack.c.l.b16 %v507
        %v3355 = vunpack.c.l.b16 %v508
        %v3356 = vunpack.c.h.b16 %v508
        %v3357 = vunpack.c.l.b16 %v509
        %v3358 = vunpack.c.h.b16 %v509
        %v3359 = vunpack.c.l.b16 %v510
        %v3360 = vunpack.c.h.b16 %v510
        %v3361 = vunpack.c.l.b16 %v511
        %v3362 = vunpack.c.h.b16 %v511
        %v3363 = vunpack.c.l.b16 %v512
        %v3364 = vunpack.c.h.b16 %v512
        %v3365 = vunpack.c.l.b16 %v513
        %v3366 = vunpack.c.h.b16 %v513
        %v3367 = vunpack.c.l.b16 %v514
        %v3368 = vunpack.c.l.b16 %v515
        %v3369 = vunpack.c.h.b16 %v515
        %v3370 = vunpack.c.l.b16 %v516
        %v3371 = vunpack.c.h.b16 %v516
        %v3372 = vunpack.c.l.b16 %v517
        %v3373 = vunpack.c.h.b16 %v517
        %v3374 = vunpack.c.l.b16 %v518
        %v3375 = vunpack.c.h.b16 %v518
        %v3376 = vunpack.c.l.b16 %v519
        %v3377 = vunpack.c.h.b16 %v519
        %v3378 = vunpack.c.l.b16 %v520
        %v3379 = vunpack.c.h.b16 %v520
        %v3380 = vunpack.c.l.b16 %v521
        %v3381 = vunpack.c.l.b16 %v522
        %v3382 = vunpack.c.h.b16 %v522
        %v3383 = vunpack.c.l.b16 %v523
        %v3384 = vunpack.c.h.b16 %v523
        %v3385 = vunpack.c.l.b16 %v524
        %v3386 = vunpack.c.h.b16 %v524
        %v3387 = vunpack.c.l.b16 %v525
        %v3388 = vunpack.c.h.b16 %v525
        %v3389 = vunpack.c.l.b16 %v526
        %v3390 = vunpack.c.h.b16 %v526
        %v3391 = vunpack.c.l.b16 %v527
        %v3392 = vunpack.c.h.b16 %v527
        %v3393 = vunpack.c.l.b16 %v528
        %v3394 = vunpack.c.l.b16 %v529
        %v3395 = vunpack.c.h.b16 %v529
        %v3396 = vunpack.c.l.b16 %v530
        %v3397 = vunpack.c.h.b16 %v530
        %v3398 = vunpack.c.l.b16 %v531
        %v3399 = vunpack.c.h.b16 %v531
        %v3400 = vunpack.c.l.b16 %v532
        %v3401 = vunpack.c.h.b16 %v532
        %v3402 = vunpack.c.l.b16 %v533
        %v3403 = vunpack.c.h.b16 %v533
        %v3404 = vunpack.c.l.b16 %v534
        %v3405 = vunpack.c.h.b16 %v534
        %v3406 = vunpack.c.l.b16 %v535
        %v3407 = vunpack.c.l.b16 %v536
        %v3408 = vunpack.c.h.b16 %v536
        %v3409 = vunpack.c.l.b16 %v537
        %v3410 = vunpack.c.h.b16 %v537
        %v3411 = vunpack.c.l.b16 %v538
        %v3412 = vunpack.c.h.b16 %v538
        %v3413 = vunpack.c.l.b16 %v539
        %v3414 = vunpack.c.h.b16 %v539
        %v3415 = vunpack.c.l.b16 %v540
        %v3416 = vunpack.c.h.b16 %v540
        %v3417 = vunpack.c.l.b16 %v541
        %v3418 = vunpack.c.h.b16 %v541
        %v3419 = vunpack.c.l.b16 %v542
        %v3420 = vunpack.c.l.b16 %v543
        %v3421 = vunpack.c.h.b16 %v543
        %v3422 = vunpack.c.l.b16 %v544
        %v3423 = vunpack.c.h.b16 %v544
        %v3424 = vunpack.c.l.b16 %v545
        %v3425 = vunpack.c.h.b16 %v545
        %v3426 = vunpack.c.l.b16 %v546
        %v3427 = vunpack.c.h.b16 %v546
        %v3428 = vunpack.c.l.b16 %v547
        %v3429 = vunpack.c.h.b16 %v547
        %v3430 = vunpack.c.l.b16 %v548
        %v3431 = vunpack.c.h.b16 %v548
        %v3432 = vunpack.c.l.b16 %v549
        %v3433 = vunpack.c.l.b16 %v550
        %v3434 = vunpack.c.h.b16 %v550
        %v3435 = vunpack.c.l.b16 %v551
        %v3436 = vunpack.c.h.b16 %v551
        %v3437 = vunpack.c.l.b16 %v552
        %v3438 = vunpack.c.h.b16 %v552
        %v3439 = vunpack.c.l.b16 %v553
        %v3440 = vunpack.c.h.b16 %v553
        %v3441 = vunpack.c.l.b16 %v554
        %v3442 = vunpack.c.h.b16 %v554
        %v3443 = vunpack.c.l.b16 %v555
        %v3444 = vunpack.c.h.b16 %v555
        %v3445 = vunpack.c.l.b16 %v556
        %v3446 = vunpack.c.l.b16 %v557
        %v3447 = vunpack.c.h.b16 %v557
        %v3448 = vunpack.c.l.b16 %v558
        %v3449 = vunpack.c.h.b16 %v558
        %v3450 = vunpack.c.l.b16 %v559
        %v3451 = vunpack.c.h.b16 %v559
        %v3452 = vunpack.c.l.b16 %v560
        %v3453 = vunpack.c.h.b16 %v560
        %v3454 = vunpack.c.l.b16 %v561
        %v3455 = vunpack.c.h.b16 %v561
        %v3456 = vunpack.c.l.b16 %v562
        %v3457 = vunpack.c.h.b16 %v562
        %v3458 = vunpack.c.l.b16 %v563
        %v3459 = vunpack.c.l.b16 %v564
        %v3460 = vunpack.c.h.b16 %v564
        %v3461 = vunpack.c.l.b16 %v565
        %v3462 = vunpack.c.h.b16 %v565
        %v3463 = vunpack.c.l.b16 %v566
        %v3464 = vunpack.c.h.b16 %v566
        %v3465 = vunpack.c.l.b16 %v567
        %v3466 = vunpack.c.h.b16 %v567
        %v3467 = vunpack.c.l.b16 %v568
        %v3468 = vunpack.c.h.b16 %v568
        %v3469 = vunpack.c.l.b16 %v569
        %v3470 = vunpack.c.h.b16 %v569
        %v3471 = vunpack.c.l.b16 %v570
        %v3472 = vunpack.c.l.b16 %v571
        %v3473 = vunpack.c.h.b16 %v571
        %v3474 = vunpack.c.l.b16 %v572
        %v3475 = vunpack.c.h.b16 %v572
        %v3476 = vunpack.c.l.b16 %v573
        %v3477 = vunpack.c.h.b16 %v573
        %v3478 = vunpack.c.l.b16 %v574
        %v3479 = vunpack.c.h.b16 %v574
        %v3480 = vunpack.c.l.b16 %v575
        %v3481 = vunpack.c.h.b16 %v575
        %v3482 = vunpack.c.l.b16 %v576
        %v3483 = vunpack.c.h.b16 %v576
        %v3484 = vunpack.c.l.b16 %v577
        %v3485 = vunpack.c.l.b16 %v578
        %v3486 = vunpack.c.h.b16 %v578
        %v3487 = vunpack.c.l.b16 %v579
        %v3488 = vunpack.c.h.b16 %v579
        %v3489 = vunpack.c.l.b16 %v580
        %v3490 = vunpack.c.h.b16 %v580
        %v3491 = vunpack.c.l.b16 %v581
        %v3492 = vunpack.c.h.b16 %v581
        %v3493 = vunpack.c.l.b16 %v582
        %v3494 = vunpack.c.h.b16 %v582
        %v3495 = vunpack.c.l.b16 %v583
        %v3496 = vunpack.c.h.b16 %v583
        %v3497 = vunpack.c.l.b16 %v584
        %v3498 = vunpack.c.l.b16 %v585
        %v3499 = vunpack.c.h.b16 %v585
        %v3500 = vunpack.c.l.b16 %v586
        %v3501 = vunpack.c.h.b16 %v586
        %v3502 = vunpack.c.l.b16 %v587
        %v3503 = vunpack.c.h.b16 %v587
        %v3504 = vunpack.c.l.b16 %v588
        %v3505 = vunpack.c.h.b16 %v588
        %v3506 = vunpack.c.l.b16 %v589
        %v3507 = vunpack.c.h.b16 %v589
        %v3508 = vunpack.c.l.b16 %v590
        %v3509 = vunpack.c.h.b16 %v590
        %v3510 = vunpack.c.l.b16 %v591
        %v3511 = vunpack.c.l.b16 %v592
        %v3512 = vunpack.c.h.b16 %v592
        %v3513 = vunpack.c.l.b16 %v593
        %v3514 = vunpack.c.h.b16 %v593
        %v3515 = vunpack.c.l.b16 %v594
        %v3516 = vunpack.c.h.b16 %v594
        %v3517 = vunpack.c.l.b16 %v595
        %v3518 = vunpack.c.h.b16 %v595
        %v3519 = vunpack.c.l.b16 %v596
        %v3520 = vunpack.c.h.b16 %v596
        %v3521 = vunpack.c.l.b16 %v597
        %v3522 = vunpack.c.h.b16 %v597
        %v3523 = vunpack.c.l.b16 %v598
        %v3524 = vunpack.c.l.b16 %v599
        %v3525 = vunpack.c.h.b16 %v599
        %v3526 = vunpack.c.l.b16 %v600
        %v3527 = vunpack.c.h.b16 %v600
        %v3528 = vunpack.c.l.b16 %v601
        %v3529 = vunpack.c.h.b16 %v601
        %v3530 = vunpack.c.l.b16 %v602
        %v3531 = vunpack.c.h.b16 %v602
        %v3532 = vunpack.c.l.b16 %v603
        %v3533 = vunpack.c.h.b16 %v603
        %v3534 = vunpack.c.l.b16 %v604
        %v3535 = vunpack.c.h.b16 %v604
        %v3536 = vunpack.c.l.b16 %v605
        %v3537 = vunpack.c.l.b16 %v606
        %v3538 = vunpack.c.h.b16 %v606
        %v3539 = vunpack.c.l.b16 %v607
        %v3540 = vunpack.c.h.b16 %v607
        %v3541 = vunpack.c.l.b16 %v608
        %v3542 = vunpack.c.h.b16 %v608
        %v3543 = vunpack.c.l.b16 %v609
        %v3544 = vunpack.c.h.b16 %v609
        %v3545 = vunpack.c.l.b16 %v610
        %v3546 = vunpack.c.h.b16 %v610
        %v3547 = vunpack.c.l.b16 %v611
        %v3548 = vunpack.c.h.b16 %v611
        %v3549 = vunpack.c.l.b16 %v612
        %v3550 = vunpack.c.l.b16 %v613
        %v3551 = vunpack.c.h.b16 %v613
        %v3552 = vunpack.c.l.b16 %v614
        %v3553 = vunpack.c.h.b16 %v614
        %v3554 = vunpack.c.l.b16 %v615
        %v3555 = vunpack.c.h.b16 %v615
        %v3556 = vunpack.c.l.b16 %v616
        %v3557 = vunpack.c.h.b16 %v616
        %v3558 = vunpack.c.l.b16 %v617
        %v3559 = vunpack.c.h.b16 %v617
        %v3560 = vunpack.c.l.b16 %v618
        %v3561 = vunpack.c.h.b16 %v618
        %v3562 = vunpack.c.l.b16 %v619
        %v3563 = vunpack.c.l.b16 %v620
        %v3564 = vunpack.c.h.b16 %v620
        %v3565 = vunpack.c.l.b16 %v621
        %v3566 = vunpack.c.h.b16 %v621
        %v3567 = vunpack.c.l.b16 %v622
        %v3568 = vunpack.c.h.b16 %v622
        %v3569 = vunpack.c.l.b16 %v623
        %v3570 = vunpack.c.h.b16 %v623
        %v3571 = vunpack.c.l.b16 %v624
        %v3572 = vunpack.c.h.b16 %v624
        %v3573 = vunpack.c.l.b16 %v625
        %v3574 = vunpack.c.h.b16 %v625
        %v3575 = vunpack.c.l.b16 %v626
        %v3576 = vunpack.c.l.b16 %v627
        %v3577 = vunpack.c.h.b16 %v627
        %v3578 = vunpack.c.l.b16 %v628
        %v3579 = vunpack.c.h.b16 %v628
        %v3580 = vunpack.c.l.b16 %v629
        %v3581 = vunpack.c.h.b16 %v629
        %v3582 = vunpack.c.l.b16 %v630
        %v3583 = vunpack.c.h.b16 %v630
        %v3584 = vunpack.c.l.b16 %v631
        %v3585 = vunpack.c.h.b16 %v631
        %v3586 = vunpack.c.l.b16 %v632
        %v3587 = vunpack.c.h.b16 %v632
        %v3588 = vunpack.c.l.b16 %v633
        %v3589 = vunpack.c.l.b16 %v634
        %v3590 = vunpack.c.h.b16 %v634
        %v3591 = vunpack.c.l.b16 %v635
        %v3592 = vunpack.c.h.b16 %v635
        %v3593 = vunpack.c.l.b16 %v636
        %v3594 = vunpack.c.h.b16 %v636
        %v3595 = vunpack.c.l.b16 %v637
        %v3596 = vunpack.c.h.b16 %v637
        %v3597 = vunpack.c.l.b16 %v638
        %v3598 = vunpack.c.h.b16 %v638
        %v3599 = vunpack.c.l.b16 %v639
        %v3600 = vunpack.c.h.b16 %v639
        %v3601 = vunpack.c.l.b16 %v640
        %v3602 = vunpack.c.l.b16 %v641
        %v3603 = vunpack.c.h.b16 %v641
        %v3604 = vunpack.c.l.b16 %v642
        %v3605 = vunpack.c.h.b16 %v642
        %v3606 = vunpack.c.l.b16 %v643
        %v3607 = vunpack.c.h.b16 %v643
        %v3608 = vunpack.c.l.b16 %v644
        %v3609 = vunpack.c.h.b16 %v644
        %v3610 = vunpack.c.l.b16 %v645
        %v3611 = vunpack.c.h.b16 %v645
        %v3612 = vunpack.c.l.b16 %v646
        %v3613 = vunpack.c.h.b16 %v646
        %v3614 = vunpack.c.l.b16 %v647
        %v3615 = vunpack.c.l.b16 %v648
        %v3616 = vunpack.c.h.b16 %v648
        %v3617 = vunpack.c.l.b16 %v649
        %v3618 = vunpack.c.h.b16 %v649
        %v3619 = vunpack.c.l.b16 %v650
        %v3620 = vunpack.c.h.b16 %v650
        %v3621 = vunpack.c.l.b16 %v651
        %v3622 = vunpack.c.h.b16 %v651
        %v3623 = vunpack.c.l.b16 %v652
        %v3624 = vunpack.c.h.b16 %v652
        %v3625 = vunpack.c.l.b16 %v653
        %v3626 = vunpack.c.h.b16 %v653
        %v3627 = vunpack.c.l.b16 %v654
        %v3628 = vunpack.c.l.b16 %v655
        %v3629 = vunpack.c.h.b16 %v655
        %v3630 = vunpack.c.l.b16 %v656
        %v3631 = vunpack.c.h.b16 %v656
        %v3632 = vunpack.c.l.b16 %v657
        %v3633 = vunpack.c.h.b16 %v657
        %v3634 = vunpack.c.l.b16 %v658
        %v3635 = vunpack.c.h.b16 %v658
        %v3636 = vunpack.c.l.b16 %v659
        %v3637 = vunpack.c.h.b16 %v659
        %v3638 = vunpack.c.l.b16 %v660
        %v3639 = vunpack.c.h.b16 %v660
        %v3640 = vunpack.c.l.b16 %v661
        %v3641 = vunpack.c.l.b16 %v662
        %v3642 = vunpack.c.h.b16 %v662
        %v3643 = vunpack.c.l.b16 %v663
        %v3644 = vunpack.c.h.b16 %v663
        %v3645 = vunpack.c.l.b16 %v664
        %v3646 = vunpack.c.h.b16 %v664
        %v3647 = vunpack.c.l.b16 %v665
        %v3648 = vunpack.c.h.b16 %v665
        %v3649 = vunpack.c.l.b16 %v666
        %v3650 = vunpack.c.h.b16 %v666
        %v3651 = vunpack.c.l.b16 %v667
        %v3652 = vunpack.c.h.b16 %v667
        %v3653 = vunpack.c.l.b16 %v668
        %v3654 = vunpack.c.l.b16 %v669
        %v3655 = vunpack.c.h.b16 %v669
        %v3656 = vunpack.c.l.b16 %v670
        %v3657 = vunpack.c.h.b16 %v670
        %v3658 = vunpack.c.l.b16 %v671
        %v3659 = vunpack.c.h.b16 %v671
        %v3660 = vunpack.c.l.b16 %v672
        %v3661 = vunpack.c.h.b16 %v672
        %v3662 = vunpack.c.l.b16 %v673
        %v3663 = vunpack.c.h.b16 %v673
        %v3664 = vunpack.c.l.b16 %v674
        %v3665 = vunpack.c.h.b16 %v674
        %v3666 = vunpack.c.l.b16 %v675
        %v3667 = vunpack.c.l.b16 %v676
        %v3668 = vunpack.c.h.b16 %v676
        %v3669 = vunpack.c.l.b16 %v677
        %v3670 = vunpack.c.h.b16 %v677
        %v3671 = vunpack.c.l.b16 %v678
        %v3672 = vunpack.c.h.b16 %v678
        %v3673 = vunpack.c.l.b16 %v679
        %v3674 = vunpack.c.h.b16 %v679
        %v3675 = vunpack.c.l.b16 %v680
        %v3676 = vunpack.c.h.b16 %v680
        %v3677 = vunpack.c.l.b16 %v681
        %v3678 = vunpack.c.h.b16 %v681
        %v3679 = vunpack.c.l.b16 %v682
        %v3680 = vunpack.c.l.b16 %v683
        %v3681 = vunpack.c.h.b16 %v683
        %v3682 = vunpack.c.l.b16 %v684
        %v3683 = vunpack.c.h.b16 %v684
        %v3684 = vunpack.c.l.b16 %v685
        %v3685 = vunpack.c.h.b16 %v685
        %v3686 = vunpack.c.l.b16 %v686
        %v3687 = vunpack.c.h.b16 %v686
        %v3688 = vunpack.c.l.b16 %v687
        %v3689 = vunpack.c.h.b16 %v687
        %v3690 = vunpack.c.l.b16 %v688
        %v3691 = vunpack.c.h.b16 %v688
        %v3692 = vunpack.c.l.b16 %v689
        %v3693 = vunpack.c.l.b16 %v690
        %v3694 = vunpack.c.h.b16 %v690
        %v3695 = vunpack.c.l.b16 %v691
        %v3696 = vunpack.c.h.b16 %v691
        %v3697 = vunpack.c.l.b16 %v692
        %v3698 = vunpack.c.h.b16 %v692
        %v3699 = vunpack.c.l.b16 %v693
        %v3700 = vunpack.c.h.b16 %v693
        %v3701 = vunpack.c.l.b16 %v694
        %v3702 = vunpack.c.h.b16 %v694
        %v3703 = vunpack.c.l.b16 %v695
        %v3704 = vunpack.c.h.b16 %v695
        %v3705 = vunpack.c.l.b16 %v696
        %v3706 = vunpack.c.l.b16 %v697
        %v3707 = vunpack.c.h.b16 %v697
        %v3708 = vunpack.c.l.b16 %v698
        %v3709 = vunpack.c.h.b16 %v698
        %v3710 = vunpack.c.l.b16 %v699
        %v3711 = vunpack.c.h.b16 %v699
        %v3712 = vunpack.c.l.b16 %v700
        %v3713 = vunpack.c.h.b16 %v700
        %v3714 = vunpack.c.l.b16 %v701
        %v3715 = vunpack.c.h.b16 %v701
        %v3716 = vunpack.c.l.b16 %v702
        %v3717 = vunpack.c.h.b16 %v702
        %v3718 = vunpack.c.l.b16 %v703
        %v3719 = vunpack.c.l.b16 %v704
        %v3720 = vunpack.c.h.b16 %v704
        %v3721 = vunpack.c.l.b16 %v705
        %v3722 = vunpack.c.h.b16 %v705
        %v3723 = vunpack.c.l.b16 %v706
        %v3724 = vunpack.c.h.b16 %v706
        %v3725 = vunpack.c.l.b16 %v707
        %v3726 = vunpack.c.h.b16 %v707
        %v3727 = vunpack.c.l.b16 %v708
        %v3728 = vunpack.c.h.b16 %v708
        %v3729 = vunpack.c.l.b16 %v709
        %v3730 = vunpack.c.h.b16 %v709
        %v3731 = vunpack.c.l.b16 %v710
        %v3732 = vunpack.c.l.b16 %v711
        %v3733 = vunpack.c.h.b16 %v711
        %v3734 = vunpack.c.l.b16 %v712
        %v3735 = vunpack.c.h.b16 %v712
        %v3736 = vunpack.c.l.b16 %v713
        %v3737 = vunpack.c.h.b16 %v713
        %v3738 = vunpack.c.l.b16 %v714
        %v3739 = vunpack.c.h.b16 %v714
        %v3740 = vunpack.c.l.b16 %v715
        %v3741 = vunpack.c.h.b16 %v715
        %v3742 = vunpack.c.l.b16 %v716
        %v3743 = vunpack.c.h.b16 %v716
        %v3744 = vunpack.c.l.b16 %v717
        %v3745 = vunpack.c.l.b16 %v718
        %v3746 = vunpack.c.h.b16 %v718
        %v3747 = vunpack.c.l.b16 %v719
        %v3748 = vunpack.c.h.b16 %v719
        %v3749 = vunpack.c.l.b16 %v720
        %v3750 = vunpack.c.h.b16 %v720
        %v3751 = vunpack.c.l.b16 %v721
        %v3752 = vunpack.c.h.b16 %v721
        %v3753 = vunpack.c.l.b16 %v722
        %v3754 = vunpack.c.h.b16 %v722
        %v3755 = vunpack.c.l.b16 %v723
        %v3756 = vunpack.c.h.b16 %v723
        %v3757 = vunpack.c.l.b16 %v724
        %v3758 = vunpack.c.l.b16 %v725
        %v3759 = vunpack.c.h.b16 %v725
        %v3760 = vunpack.c.l.b16 %v726
        %v3761 = vunpack.c.h.b16 %v726
        %v3762 = vunpack.c.l.b16 %v727
        %v3763 = vunpack.c.h.b16 %v727
        %v3764 = vunpack.c.l.b16 %v728
        %v3765 = vunpack.c.h.b16 %v728
        %v3766 = vunpack.c.l.b16 %v729
        %v3767 = vunpack.c.h.b16 %v729
        %v3768 = vunpack.c.l.b16 %v730
        %v3769 = vunpack.c.h.b16 %v730
        %v3770 = vunpack.c.l.b16 %v731
        %v3771 = vunpack.c.l.b16 %v732
        %v3772 = vunpack.c.h.b16 %v732
        %v3773 = vunpack.c.l.b16 %v733
        %v3774 = vunpack.c.h.b16 %v733
        %v3775 = vunpack.c.l.b16 %v734
        %v3776 = vunpack.c.h.b16 %v734
        %v3777 = vunpack.c.l.b16 %v735
        %v3778 = vunpack.c.h.b16 %v735
        %v3779 = vunpack.c.l.b16 %v736
        %v3780 = vunpack.c.h.b16 %v736
        %v3781 = vunpack.c.l.b16 %v737
        %v3782 = vunpack.c.h.b16 %v737
        %v3783 = vunpack.c.l.b16 %v738
        %v3784 = vunpack.c.l.b16 %v739
        %v3785 = vunpack.c.h.b16 %v739
        %v3786 = vunpack.c.l.b16 %v740
        %v3787 = vunpack.c.h.b16 %v740
        %v3788 = vunpack.c.l.b16 %v741
        %v3789 = vunpack.c.h.b16 %v741
        %v3790 = vunpack.c.l.b16 %v742
        %v3791 = vunpack.c.h.b16 %v742
        %v3792 = vunpack.c.l.b16 %v743
        %v3793 = vunpack.c.h.b16 %v743
        %v3794 = vunpack.c.l.b16 %v744
        %v3795 = vunpack.c.h.b16 %v744
        %v3796 = vunpack.c.l.b16 %v745
        %v3797 = vunpack.c.l.b16 %v746
        %v3798 = vunpack.c.h.b16 %v746
        %v3799 = vunpack.c.l.b16 %v747
        %v3800 = vunpack.c.h.b16 %v747
        %v3801 = vunpack.c.l.b16 %v748
        %v3802 = vunpack.c.h.b16 %v748
        %v3803 = vunpack.c.l.b16 %v749
        %v3804 = vunpack.c.h.b16 %v749
        %v3805 = vunpack.c.l.b16 %v750
        %v3806 = vunpack.c.h.b16 %v750
        %v3807 = vunpack.c.l.b16 %v751
        %v3808 = vunpack.c.h.b16 %v751
        %v3809 = vunpack.c.l.b16 %v752
        %v3810 = vunpack.c.l.b16 %v753
        %v3811 = vunpack.c.h.b16 %v753
        %v3812 = vunpack.c.l.b16 %v754
        %v3813 = vunpack.c.h.b16 %v754
        %v3814 = vunpack.c.l.b16 %v755
        %v3815 = vunpack.c.h.b16 %v755
        %v3816 = vunpack.c.l.b16 %v756
        %v3817 = vunpack.c.h.b16 %v756
        %v3818 = vunpack.c.l.b16 %v757
        %v3819 = vunpack.c.h.b16 %v757
        %v3820 = vunpack.c.l.b16 %v758
        %v3821 = vunpack.c.h.b16 %v758
        %v3822 = vunpack.c.l.b16 %v759
        %v3823 = vunpack.c.l.b16 %v760
        %v3824 = vunpack.c.h.b16 %v760
        %v3825 = vunpack.c.l.b16 %v761
        %v3826 = vunpack.c.h.b16 %v761
        %v3827 = vunpack.c.l.b16 %v762
        %v3828 = vunpack.c.h.b16 %v762
        %v3829 = vunpack.c.l.b16 %v763
        %v3830 = vunpack.c.h.b16 %v763
        %v3831 = vunpack.c.l.b16 %v764
        %v3832 = vunpack.c.h.b16 %v764
        %v3833 = vunpack.c.l.b16 %v765
        %v3834 = vunpack.c.h.b16 %v765
        %v3835 = vunpack.c.l.b16 %v766
        %v3836 = vunpack.c.l.b16 %v767
        %v3837 = vunpack.c.h.b16 %v767
        %v3838 = vunpack.c.l.b16 %v768
        %v3839 = vunpack.c.h.b16 %v768
        %v3840 = vunpack.c.l.b16 %v769
        %v3841 = vunpack.c.h.b16 %v769
        %v3842 = vunpack.c.l.b16 %v770
        %v3843 = vunpack.c.h.b16 %v770
        %v3844 = vunpack.c.l.b16 %v771
        %v3845 = vunpack.c.h.b16 %v771
        %v3846 = vunpack.c.l.b16 %v772
        %v3847 = vunpack.c.h.b16 %v772
        %v3848 = vunpack.c.l.b16 %v773
        %v3849 = vunpack.c.l.b16 %v774
        %v3850 = vunpack.c.h.b16 %v774
        %v3851 = vunpack.c.l.b16 %v775
        %v3852 = vunpack.c.h.b16 %v775
        %v3853 = vunpack.c.l.b16 %v776
        %v3854 = vunpack.c.h.b16 %v776
        %v3855 = vunpack.c.l.b16 %v777
        %v3856 = vunpack.c.h.b16 %v777
        %v3857 = vunpack.c.l.b16 %v778
        %v3858 = vunpack.c.h.b16 %v778
        %v3859 = vunpack.c.l.b16 %v779
        %v3860 = vunpack.c.h.b16 %v779
        %v3861 = vunpack.c.l.b16 %v780
        %v3862 = vunpack.c.l.b16 %v781
        %v3863 = vunpack.c.h.b16 %v781
        %v3864 = vunpack.c.l.b16 %v782
        %v3865 = vunpack.c.h.b16 %v782
        %v3866 = vunpack.c.l.b16 %v783
        %v3867 = vunpack.c.h.b16 %v783
        %v3868 = vunpack.c.l.b16 %v784
        %v3869 = vunpack.c.h.b16 %v784
        %v3870 = vunpack.c.l.b16 %v785
        %v3871 = vunpack.c.h.b16 %v785
        %v3872 = vunpack.c.l.b16 %v786
        %v3873 = vunpack.c.h.b16 %v786
        %v3874 = vunpack.c.l.b16 %v787
        %v3875 = vunpack.c.l.b16 %v788
        %v3876 = vunpack.c.h.b16 %v788
        %v3877 = vunpack.c.l.b16 %v789
        %v3878 = vunpack.c.h.b16 %v789
        %v3879 = vunpack.c.l.b16 %v790
        %v3880 = vunpack.c.h.b16 %v790
        %v3881 = vunpack.c.l.b16 %v791
        %v3882 = vunpack.c.h.b16 %v791
        %v3883 = vunpack.c.l.b16 %v792
        %v3884 = vunpack.c.h.b16 %v792
        %v3885 = vunpack.c.l.b16 %v793
        %v3886 = vunpack.c.h.b16 %v793
        %v3887 = vunpack.c.l.b16 %v794
        %v3888 = vunpack.c.l.b16 %v795
        %v3889 = vunpack.c.h.b16 %v795
        %v3890 = vunpack.c.l.b16 %v796
        %v3891 = vunpack.c.h.b16 %v796
        %v3892 = vunpack.c.l.b16 %v797
        %v3893 = vunpack.c.h.b16 %v797
        %v3894 = vunpack.c.l.b16 %v798
        %v3895 = vunpack.c.h.b16 %v798
        %v3896 = vunpack.c.l.b16 %v799
        %v3897 = vunpack.c.h.b16 %v799
        %v3898 = vunpack.c.l.b16 %v800
        %v3899 = vunpack.c.h.b16 %v800
        %v3900 = vunpack.c.l.b16 %v801
        %v3901 = vunpack.c.l.b16 %v802
        %v3902 = vunpack.c.h.b16 %v802
        %v3903 = vunpack.c.l.b16 %v803
        %v3904 = vunpack.c.h.b16 %v803
        %v3905 = vunpack.c.l.b16 %v804
        %v3906 = vunpack.c.h.b16 %v804
        %v3907 = vunpack.c.l.b16 %v805
        %v3908 = vunpack.c.h.b16 %v805
        %v3909 = vunpack.c.l.b16 %v806
        %v3910 = vunpack.c.h.b16 %v806
        %v3911 = vunpack.c.l.b16 %v807
        %v3912 = vunpack.c.h.b16 %v807
        %v3913 = vunpack.c.l.b16 %v808
        %v3914 = vunpack.c.l.b16 %v809
        %v3915 = vunpack.c.h.b16 %v809
        %v3916 = vunpack.c.l.b16 %v810
        %v3917 = vunpack.c.h.b16 %v810
        %v3918 = vunpack.c.l.b16 %v811
        %v3919 = vunpack.c.h.b16 %v811
        %v3920 = vunpack.c.l.b16 %v812
        %v3921 = vunpack.c.h.b16 %v812
        %v3922 = vunpack.c.l.b16 %v813
        %v3923 = vunpack.c.h.b16 %v813
        %v3924 = vunpack.c.l.b16 %v814
        %v3925 = vunpack.c.h.b16 %v814
        %v3926 = vunpack.c.l.b16 %v815
        %v3927 = vunpack.c.l.b16 %v816
        %v3928 = vunpack.c.h.b16 %v816
        %v3929 = vunpack.c.l.b16 %v817
        %v3930 = vunpack.c.h.b16 %v817
        %v3931 = vunpack.c.l.b16 %v818
        %v3932 = vunpack.c.h.b16 %v818
        %v3933 = vunpack.c.l.b16 %v819
        %v3934 = vunpack.c.h.b16 %v819
        %v3935 = vunpack.c.l.b16 %v820
        %v3936 = vunpack.c.h.b16 %v820
        %v3937 = vunpack.c.l.b16 %v821
        %v3938 = vunpack.c.h.b16 %v821
        %v3939 = vunpack.c.l.b16 %v822
        %v3940 = vunpack.c.l.b16 %v823
        %v3941 = vunpack.c.h.b16 %v823
        %v3942 = vunpack.c.l.b16 %v824
        %v3943 = vunpack.c.h.b16 %v824
        %v3944 = vunpack.c.l.b16 %v825
        %v3945 = vunpack.c.h.b16 %v825
        %v3946 = vunpack.c.l.b16 %v826
        %v3947 = vunpack.c.h.b16 %v826
        %v3948 = vunpack.c.l.b16 %v827
        %v3949 = vunpack.c.h.b16 %v827
        %v3950 = vunpack.c.l.b16 %v828
        %v3951 = vunpack.c.h.b16 %v828
        %v3952 = vunpack.c.l.b16 %v829
        %v3953 = vunpack.c.l.b16 %v830
        %v3954 = vunpack.c.h.b16 %v830
        %v3955 = vunpack.c.l.b16 %v831
        %v3956 = vunpack.c.h.b16 %v831
        %v3957 = vunpack.c.l.b16 %v832
        %v3958 = vunpack.c.h.b16 %v832
        %v3959 = vunpack.c.l.b16 %v833
        %v3960 = vunpack.c.h.b16 %v833
        %v3961 = vunpack.c.l.b16 %v834
        %v3962 = vunpack.c.h.b16 %v834
        %v3963 = vunpack.c.l.b16 %v835
        %v3964 = vunpack.c.h.b16 %v835
        %v3965 = vunpack.c.l.b16 %v836
        %v3966 = vunpack.c.l.b16 %v837
        %v3967 = vunpack.c.h.b16 %v837
        %v3968 = vunpack.c.l.b16 %v838
        %v3969 = vunpack.c.h.b16 %v838
        %v3970 = vunpack.c.l.b16 %v839
        %v3971 = vunpack.c.h.b16 %v839
        %v3972 = vunpack.c.l.b16 %v840
        %v3973 = vunpack.c.h.b16 %v840
        %v3974 = vunpack.c.l.b16 %v841
        %v3975 = vunpack.c.h.b16 %v841
        %v3976 = vunpack.c.l.b16 %v842
        %v3977 = vunpack.c.h.b16 %v842
        %v3978 = vunpack.c.l.b16 %v843
        %v3979 = vunpack.c.l.b16 %v844
        %v3980 = vunpack.c.h.b16 %v844
        %v3981 = vunpack.c.l.b16 %v845
        %v3982 = vunpack.c.h.b16 %v845
        %v3983 = vunpack.c.l.b16 %v846
        %v3984 = vunpack.c.h.b16 %v846
        %v3985 = vunpack.c.l.b16 %v847
        %v3986 = vunpack.c.h.b16 %v847
        %v3987 = vunpack.c.l.b16 %v848
        %v3988 = vunpack.c.h.b16 %v848
        %v3989 = vunpack.c.l.b16 %v849
        %v3990 = vunpack.c.h.b16 %v849
        %v3991 = vunpack.c.l.b16 %v850
        %v3992 = vunpack.c.l.b16 %v851
        %v3993 = vunpack.c.h.b16 %v851
        %v3994 = vunpack.c.l.b16 %v852
        %v3995 = vunpack.c.h.b16 %v852
        %v3996 = vunpack.c.l.b16 %v853
        %v3997 = vunpack.c.h.b16 %v853
        %v3998 = vunpack.c.l.b16 %v854
        %v3999 = vunpack.c.h.b16 %v854
        %v4000 = vunpack.c.l.b16 %v855
        %v4001 = vunpack.c.h.b16 %v855
        %v4002 = vunpack.c.l.b16 %v856
        %v4003 = vunpack.c.h.b16 %v856
        %v4004 = vunpack.c.l.b16 %v857
        %v4005 = vunpack.c.l.b16 %v858
        %v4006 = vunpack.c.h.b16 %v858
        %v4007 = vunpack.c.l.b16 %v859
        %v4008 = vunpack.c.h.b16 %v859
        %v4009 = vunpack.c.l.b16 %v860
        %v4010 = vunpack.c.h.b16 %v860
        %v4011 = vunpack.c.l.b16 %v861
        %v4012 = vunpack.c.h.b16 %v861
        %v4013 = vunpack.c.l.b16 %v862
        %v4014 = vunpack.c.h.b16 %v862
        %v4015 = vunpack.c.l.b16 %v863
        %v4016 = vunpack.c.h.b16 %v863
        %v4017 = vunpack.c.l.b16 %v864
        %v4018 = vunpack.c.l.b16 %v865
        %v4019 = vunpack.c.h.b16 %v865
        %v4020 = vunpack.c.l.b16 %v866
        %v4021 = vunpack.c.h.b16 %v866
        %v4022 = vunpack.c.l.b16 %v867
        %v4023 = vunpack.c.h.b16 %v867
        %v4024 = vunpack.c.l.b16 %v868
        %v4025 = vunpack.c.h.b16 %v868
        %v4026 = vunpack.c.l.b16 %v869
        %v4027 = vunpack.c.h.b16 %v869
        %v4028 = vunpack.c.l.b16 %v870
        %v4029 = vunpack.c.h.b16 %v870
        %v4030 = vunpack.c.l.b16 %v871
        %v4031 = vunpack.c.l.b16 %v872
        %v4032 = vunpack.c.h.b16 %v872
        %v4033 = vunpack.c.l.b16 %v873
        %v4034 = vunpack.c.h.b16 %v873
        %v4035 = vunpack.c.l.b16 %v874
        %v4036 = vunpack.c.h.b16 %v874
        %v4037 = vunpack.c.l.b16 %v875
        %v4038 = vunpack.c.h.b16 %v875
        %v4039 = vunpack.c.l.b16 %v876
        %v4040 = vunpack.c.h.b16 %v876
        %v4041 = vunpack.c.l.b16 %v877
        %v4042 = vunpack.c.h.b16 %v877
        %v4043 = vunpack.c.l.b16 %v878
        %v4044 = vunpack.c.l.b16 %v879
        %v4045 = vunpack.c.h.b16 %v879
        %v4046 = vunpack.c.l.b16 %v880
        %v4047 = vunpack.c.h.b16 %v880
        %v4048 = vunpack.c.l.b16 %v881
        %v4049 = vunpack.c.h.b16 %v881
        %v4050 = vunpack.c.l.b16 %v882
        %v4051 = vunpack.c.h.b16 %v882
        %v4052 = vunpack.c.l.b16 %v883
        %v4053 = vunpack.c.h.b16 %v883
        %v4054 = vunpack.c.l.b16 %v884
        %v4055 = vunpack.c.h.b16 %v884
        %v4056 = vunpack.c.l.b16 %v885
        %v4057 = vunpack.c.l.b16 %v886
        %v4058 = vunpack.c.h.b16 %v886
        %v4059 = vunpack.c.l.b16 %v887
        %v4060 = vunpack.c.h.b16 %v887
        %v4061 = vunpack.c.l.b16 %v888
        %v4062 = vunpack.c.h.b16 %v888
        %v4063 = vunpack.c.l.b16 %v889
        %v4064 = vunpack.c.h.b16 %v889
        %v4065 = vunpack.c.l.b16 %v890
        %v4066 = vunpack.c.h.b16 %v890
        %v4067 = vunpack.c.l.b16 %v891
        %v4068 = vunpack.c.h.b16 %v891
        %v4069 = vunpack.c.l.b16 %v892
        %v4070 = vunpack.c.l.b16 %v893
        %v4071 = vunpack.c.h.b16 %v893
        %v4072 = vunpack.c.l.b16 %v894
        %v4073 = vunpack.c.h.b16 %v894
        %v4074 = vunpack.c.l.b16 %v895
        %v4075 = vunpack.c.h.b16 %v895
        %v4076 = vunpack.c.l.b16 %v896
        %v4077 = vunpack.c.h.b16 %v896
        %v4078 = vunpack.c.l.b16 %v897
        %v4079 = vunpack.c.h.b16 %v897
        %v4080 = vunpack.c.l.b16 %v898
        %v4081 = vunpack.c.h.b16 %v898
        %v4082 = vunpack.c.l.b16 %v899
        %v4083 = vunpack.c.l.b16 %v900
        %v4084 = vunpack.c.h.b16 %v900
        %v4085 = vunpack.c.l.b16 %v901
        %v4086 = vunpack.c.h.b16 %v901
        %v4087 = vunpack.c.l.b16 %v902
        %v4088 = vunpack.c.h.b16 %v902
        %v4089 = vunpack.c.l.b16 %v903
        %v4090 = vunpack.c.h.b16 %v903
        %v4091 = vunpack.c.l.b16 %v904
        %v4092 = vunpack.c.h.b16 %v904
        %v4093 = vunpack.c.l.b16 %v905
        %v4094 = vunpack.c.h.b16 %v905
        %v4095 = vunpack.c.l.b16 %v906
        %v4096 = vunpack.c.l.b16 %v907
        %v4097 = vunpack.c.h.b16 %v907
        %v4098 = vunpack.c.l.b16 %v908
        %v4099 = vunpack.c.h.b16 %v908
        %v4100 = vunpack.c.l.b16 %v909
        %v4101 = vunpack.c.h.b16 %v909
        %v4102 = vunpack.c.l.b16 %v910
        %v4103 = vunpack.c.h.b16 %v910
        %v4104 = vunpack.c.l.b16 %v911
        %v4105 = vunpack.c.h.b16 %v911
        %v4106 = vunpack.c.l.b16 %v912
        %v4107 = vunpack.c.h.b16 %v912
        %v4108 = vunpack.c.l.b16 %v913
        %v4109 = vunpack.c.l.b16 %v914
        %v4110 = vunpack.c.h.b16 %v914
        %v4111 = vunpack.c.l.b16 %v915
        %v4112 = vunpack.c.h.b16 %v915
        %v4113 = vunpack.c.l.b16 %v916
        %v4114 = vunpack.c.h.b16 %v916
        %v4115 = vunpack.c.l.b16 %v917
        %v4116 = vunpack.c.h.b16 %v917
        %v4117 = vunpack.c.l.b16 %v918
        %v4118 = vunpack.c.h.b16 %v918
        %v4119 = vunpack.c.l.b16 %v919
        %v4120 = vunpack.c.h.b16 %v919
        %v4121 = vunpack.c.l.b16 %v920
        %v4122 = vunpack.c.l.b16 %v921
        %v4123 = vunpack.c.h.b16 %v921
        %v4124 = vunpack.c.l.b16 %v922
        %v4125 = vunpack.c.h.b16 %v922
        %v4126 = vunpack.c.l.b16 %v923
        %v4127 = vunpack.c.h.b16 %v923
        %v4128 = vunpack.c.l.b16 %v924
        %v4129 = vunpack.c.h.b16 %v924
        %v4130 = vunpack.c.l.b16 %v925
        %v4131 = vunpack.c.h.b16 %v925
        %v4132 = vunpack.c.l.b16 %v926
        %v4133 = vunpack.c.h.b16 %v926
        %v4134 = vunpack.c.l.b16 %v927
        %v4135 = vunpack.c.l.b16 %v928
        %v4136 = vunpack.c.h.b16 %v928
        %v4137 = vunpack.c.l.b16 %v929
        %v4138 = vunpack.c.h.b16 %v929
        %v4139 = vunpack.c.l.b16 %v930
        %v4140 = vunpack.c.h.b16 %v930
        %v4141 = vunpack.c.l.b16 %v931
        %v4142 = vunpack.c.h.b16 %v931
        %v4143 = vunpack.c.l.b16 %v932
        %v4144 = vunpack.c.h.b16 %v932
        %v4145 = vunpack.c.l.b16 %v933
        %v4146 = vunpack.c.h.b16 %v933
        %v4147 = vunpack.c.l.b16 %v934
        %v4148 = vunpack.c.l.b16 %v935
        %v4149 = vunpack.c.h.b16 %v935
        %v4150 = vunpack.c.l.b16 %v936
        %v4151 = vunpack.c.h.b16 %v936
        %v4152 = vunpack.c.l.b16 %v937
        %v4153 = vunpack.c.h.b16 %v937
        %v4154 = vunpack.c.l.b16 %v938
        %v4155 = vunpack.c.h.b16 %v938
        %v4156 = vunpack.c.l.b16 %v939
        %v4157 = vunpack.c.h.b16 %v939
        %v4158 = vunpack.c.l.b16 %v940
        %v4159 = vunpack.c.h.b16 %v940
        %v4160 = vunpack.c.l.b16 %v941
        %v4161 = vunpack.c.l.b16 %v942
        %v4162 = vunpack.c.h.b16 %v942
        %v4163 = vunpack.c.l.b16 %v943
        %v4164 = vunpack.c.h.b16 %v943
        %v4165 = vunpack.c.l.b16 %v944
        %v4166 = vunpack.c.h.b16 %v944
        %v4167 = vunpack.c.l.b16 %v945
        %v4168 = vunpack.c.h.b16 %v945
        %v4169 = vunpack.c.l.b16 %v946
        %v4170 = vunpack.c.h.b16 %v946
        %v4171 = vunpack.c.l.b16 %v947
        %v4172 = vunpack.c.h.b16 %v947
        %v4173 = vunpack.c.l.b16 %v948
        %v4174 = vunpack.c.l.b16 %v949
        %v4175 = vunpack.c.h.b16 %v949
        %v4176 = vunpack.c.l.b16 %v950
        %v4177 = vunpack.c.h.b16 %v950
        %v4178 = vunpack.c.l.b16 %v951
        %v4179 = vunpack.c.h.b16 %v951
        %v4180 = vunpack.c.l.b16 %v952
        %v4181 = vunpack.c.h.b16 %v952
        %v4182 = vunpack.c.l.b16 %v953
        %v4183 = vunpack.c.h.b16 %v953
        %v4184 = vunpack.c.l.b16 %v954
        %v4185 = vunpack.c.h.b16 %v954
        %v4186 = vunpack.c.l.b16 %v955
        %v4187 = vunpack.c.l.b16 %v956
        %v4188 = vunpack.c.h.b16 %v956
        %v4189 = vunpack.c.l.b16 %v957
        %v4190 = vunpack.c.h.b16 %v957
        %v4191 = vunpack.c.l.b16 %v958
        %v4192 = vunpack.c.h.b16 %v958
        %v4193 = vunpack.c.l.b16 %v959
        %v4194 = vunpack.c.h.b16 %v959
        %v4195 = vunpack.c.l.b16 %v960
        %v4196 = vunpack.c.h.b16 %v960
        %v4197 = vunpack.c.l.b16 %v961
        %v4198 = vunpack.c.h.b16 %v961
        %v4199 = vunpack.c.l.b16 %v962
        %v4200 = vunpack.c.l.b16 %v963
        %v4201 = vunpack.c.h.b16 %v963
        %v4202 = vunpack.c.l.b16 %v964
        %v4203 = vunpack.c.h.b16 %v964
        %v4204 = vunpack.c.l.b16 %v965
        %v4205 = vunpack.c.h.b16 %v965
        %v4206 = vunpack.c.l.b16 %v966
        %v4207 = vunpack.c.h.b16 %v966
        %v4208 = vunpack.c.l.b16 %v967
        %v4209 = vunpack.c.h.b16 %v967
        %v4210 = vunpack.c.l.b16 %v968
        %v4211 = vunpack.c.h.b16 %v968
        %v4212 = vunpack.c.l.b16 %v969
        %v4213 = vunpack.c.l.b16 %v970
        %v4214 = vunpack.c.h.b16 %v970
        %v4215 = vunpack.c.l.b16 %v971
        %v4216 = vunpack.c.h.b16 %v971
        %v4217 = vunpack.c.l.b16 %v972
        %v4218 = vunpack.c.h.b16 %v972
        %v4219 = vunpack.c.l.b16 %v973
        %v4220 = vunpack.c.h.b16 %v973
        %v4221 = vunpack.c.l.b16 %v974
        %v4222 = vunpack.c.h.b16 %v974
        %v4223 = vunpack.c.l.b16 %v975
        %v4224 = vunpack.c.h.b16 %v975
        %v4225 = vunpack.c.l.b16 %v976
        %v4226 = vunpack.c.l.b16 %v977
        %v4227 = vunpack.c.h.b16 %v977
        %v4228 = vunpack.c.l.b16 %v978
        %v4229 = vunpack.c.h.b16 %v978
        %v4230 = vunpack.c.l.b16 %v979
        %v4231 = vunpack.c.h.b16 %v979
        %v4232 = vunpack.c.l.b16 %v980
        %v4233 = vunpack.c.h.b16 %v980
        %v4234 = vunpack.c.l.b16 %v981
        %v4235 = vunpack.c.h.b16 %v981
        %v4236 = vunpack.c.l.b16 %v982
        %v4237 = vunpack.c.h.b16 %v982
        %v4238 = vunpack.c.l.b16 %v983
        %v4239 = vunpack.c.l.b16 %v984
        %v4240 = vunpack.c.h.b16 %v984
        %v4241 = vunpack.c.l.b16 %v985
        %v4242 = vunpack.c.h.b16 %v985
        %v4243 = vunpack.c.l.b16 %v986
        %v4244 = vunpack.c.h.b16 %v986
        %v4245 = vunpack.c.l.b16 %v987
        %v4246 = vunpack.c.h.b16 %v987
        %v4247 = vunpack.c.l.b16 %v988
        %v4248 = vunpack.c.h.b16 %v988
        %v4249 = vunpack.c.l.b16 %v989
        %v4250 = vunpack.c.h.b16 %v989
        %v4251 = vunpack.c.l.b16 %v990
        %v4252 = vunpack.c.l.b16 %v991
        %v4253 = vunpack.c.h.b16 %v991
        %v4254 = vunpack.c.l.b16 %v992
        %v4255 = vunpack.c.h.b16 %v992
        %v4256 = vunpack.c.l.b16 %v993
        %v4257 = vunpack.c.h.b16 %v993
        %v4258 = vunpack.c.l.b16 %v994
        %v4259 = vunpack.c.h.b16 %v994
        %v4260 = vunpack.c.l.b16 %v995
        %v4261 = vunpack.c.h.b16 %v995
        %v4262 = vunpack.c.l.b16 %v996
        %v4263 = vunpack.c.h.b16 %v996
        %v4264 = vunpack.c.l.b16 %v997
        %v4265 = vunpack.c.l.b16 %v998
        %v4266 = vunpack.c.h.b16 %v998
        %v4267 = vunpack.c.l.b16 %v999
        %v4268 = vunpack.c.h.b16 %v999
        %v4269 = vunpack.c.l.b16 %v1000
        %v4270 = vunpack.c.h.b16 %v1000
        %v4271 = vunpack.c.l.b16 %v1001
        %v4272 = vunpack.c.h.b16 %v1001
        %v4273 = vunpack.c.l.b16 %v1002
        %v4274 = vunpack.c.h.b16 %v1002
        %v4275 = vunpack.c.l.b16 %v1003
        %v4276 = vunpack.c.h.b16 %v1003
        %v4277 = vunpack.c.l.b16 %v1004
        %v4278 = vunpack.c.l.b16 %v1005
        %v4279 = vunpack.c.h.b16 %v1005
        %v4280 = vunpack.c.l.b16 %v1006
        %v4281 = vunpack.c.h.b16 %v1006
        %v4282 = vunpack.c.l.b16 %v1007
        %v4283 = vunpack.c.h.b16 %v1007
        %v4284 = vunpack.c.l.b16 %v1008
        %v4285 = vunpack.c.h.b16 %v1008
        %v4286 = vunpack.c.l.b16 %v1009
        %v4287 = vunpack.c.h.b16 %v1009
        %v4288 = vunpack.c.l.b16 %v1010
        %v4289 = vunpack.c.h.b16 %v1010
        %v4290 = vunpack.c.l.b16 %v1011
        %v4291 = vunpack.c.l.b16 %v1012
        %v4292 = vunpack.c.h.b16 %v1012
        %v4293 = vunpack.c.l.b16 %v1013
        %v4294 = vunpack.c.h.b16 %v1013
        %v4295 = vunpack.c.l.b16 %v1014
        %v4296 = vunpack.c.h.b16 %v1014
        %v4297 = vunpack.c.l.b16 %v1015
        %v4298 = vunpack.c.h.b16 %v1015
        %v4299 = vunpack.c.l.b16 %v1016
        %v4300 = vunpack.c.h.b16 %v1016
        %v4301 = vunpack.c.l.b16 %v1017
        %v4302 = vunpack.c.h.b16 %v1017
        %v4303 = vunpack.c.l.b16 %v1018
        %v4304 = vunpack.c.l.b16 %v1019
        %v4305 = vunpack.c.h.b16 %v1019
        %v4306 = vunpack.c.l.b16 %v1020
        %v4307 = vunpack.c.h.b16 %v1020
        %v4308 = vunpack.c.l.b16 %v1021
        %v4309 = vunpack.c.h.b16 %v1021
        %v4310 = vunpack.c.l.b16 %v1022
        %v4311 = vunpack.c.h.b16 %v1022
        %v4312 = vunpack.c.l.b16 %v1023
        %v4313 = vunpack.c.h.b16 %v1023
        %v4314 = vunpack.c.l.b16 %v1024
        %v4315 = vunpack.c.h.b16 %v1024
        %v4316 = vunpack.c.l.b16 %v1025
        %v4317 = vunpack.c.l.b16 %v1026
        %v4318 = vunpack.c.h.b16 %v1026
        %v4319 = vunpack.c.l.b16 %v1027
        %v4320 = vunpack.c.h.b16 %v1027
        %v4321 = vunpack.c.l.b16 %v1028
        %v4322 = vunpack.c.h.b16 %v1028
        %v4323 = vunpack.c.l.b16 %v1029
        %v4324 = vunpack.c.h.b16 %v1029
        %v4325 = vunpack.c.l.b16 %v1030
        %v4326 = vunpack.c.h.b16 %v1030
        %v4327 = vunpack.c.l.b16 %v1031
        %v4328 = vunpack.c.h.b16 %v1031
        %v4329 = vunpack.c.l.b16 %v1032
        %v4330 = vunpack.c.l.b16 %v1033
        %v4331 = vunpack.c.h.b16 %v1033
        %v4332 = vunpack.c.l.b16 %v1034
        %v4333 = vunpack.c.h.b16 %v1034
        %v4334 = vunpack.c.l.b16 %v1035
        %v4335 = vunpack.c.h.b16 %v1035
        %v4336 = vunpack.c.l.b16 %v1036
        %v4337 = vunpack.c.h.b16 %v1036
        %v4338 = vunpack.c.l.b16 %v1037
        %v4339 = vunpack.c.h.b16 %v1037
        %v4340 = vunpack.c.l.b16 %v1038
        %v4341 = vunpack.c.h.b16 %v1038
        %v4342 = vunpack.c.l.b16 %v1039
        %v4343 = vunpack.c.l.b16 %v1040
        %v4344 = vunpack.c.h.b16 %v1040
        %v4345 = vunpack.c.l.b16 %v1041
        %v4346 = vunpack.c.h.b16 %v1041
        %v4347 = vunpack.c.l.b16 %v1042
        %v4348 = vunpack.c.h.b16 %v1042
        %v4349 = vunpack.c.l.b16 %v1043
        %v4350 = vunpack.c.h.b16 %v1043
        %v4351 = vunpack.c.l.b16 %v1044
        %v4352 = vunpack.c.h.b16 %v1044
        %v4353 = vunpack.c.l.b16 %v1045
        %v4354 = vunpack.c.h.b16 %v1045
        %v4355 = vunpack.c.l.b16 %v1046
        %v4356 = vunpack.c.l.b16 %v1047
        %v4357 = vunpack.c.h.b16 %v1047
        %v4358 = vunpack.c.l.b16 %v1048
        %v4359 = vunpack.c.h.b16 %v1048
        %v4360 = vunpack.c.l.b16 %v1049
        %v4361 = vunpack.c.h.b16 %v1049
        %v4362 = vunpack.c.l.b16 %v1050
        %v4363 = vunpack.c.h.b16 %v1050
        %v4364 = vunpack.c.l.b16 %v1051
        %v4365 = vunpack.c.h.b16 %v1051
        %v4366 = vunpack.c.l.b16 %v1052
        %v4367 = vunpack.c.h.b16 %v1052
        %v4368 = vunpack.c.l.b16 %v1053
        %v4369 = vunpack.c.l.b16 %v1054
        %v4370 = vunpack.c.h.b16 %v1054
        %v4371 = vunpack.c.l.b16 %v1055
        %v4372 = vunpack.c.h.b16 %v1055
        %v4373 = vunpack.c.l.b16 %v1056
        %v4374 = vunpack.c.h.b16 %v1056
        %v4375 = vunpack.c.l.b16 %v1057
        %v4376 = vunpack.c.h.b16 %v1057
        %v4377 = vunpack.c.l.b16 %v1058
        %v4378 = vunpack.c.h.b16 %v1058
        %v4379 = vunpack.c.l.b16 %v1059
        %v4380 = vunpack.c.h.b16 %v1059
        %v4381 = vunpack.c.l.b16 %v1060
        %v4382 = vunpack.c.l.b16 %v1061
        %v4383 = vunpack.c.h.b16 %v1061
        %v4384 = vunpack.c.l.b16 %v1062
        %v4385 = vunpack.c.h.b16 %v1062
        %v4386 = vunpack.c.l.b16 %v1063
        %v4387 = vunpack.c.h.b16 %v1063
        %v4388 = vunpack.c.l.b16 %v1064
        %v4389 = vunpack.c.h.b16 %v1064
        %v4390 = vunpack.c.l.b16 %v1065
        %v4391 = vunpack.c.h.b16 %v1065
        %v4392 = vunpack.c.l.b16 %v1066
        %v4393 = vunpack.c.h.b16 %v1066
        %v4394 = vunpack.c.l.b16 %v1067
        %v4395 = vunpack.c.l.b16 %v1068
        %v4396 = vunpack.c.h.b16 %v1068
        %v4397 = vunpack.c.l.b16 %v1069
        %v4398 = vunpack.c.h.b16 %v1069
        %v4399 = vunpack.c.l.b16 %v1070
        %v4400 = vunpack.c.h.b16 %v1070
        %v4401 = vunpack.c.l.b16 %v1071
        %v4402 = vunpack.c.h.b16 %v1071
        %v4403 = vunpack.c.l.b16 %v1072
        %v4404 = vunpack.c.h.b16 %v1072
        %v4405 = vunpack.c.l.b16 %v1073
        %v4406 = vunpack.c.h.b16 %v1073
        %v4407 = vunpack.c.l.b16 %v1074
        %v4408 = vunpack.c.l.b16 %v1075
        %v4409 = vunpack.c.h.b16 %v1075
        %v4410 = vunpack.c.l.b16 %v1076
        %v4411 = vunpack.c.h.b16 %v1076
        %v4412 = vunpack.c.l.b16 %v1077
        %v4413 = vunpack.c.h.b16 %v1077
        %v4414 = vunpack.c.l.b16 %v1078
        %v4415 = vunpack.c.h.b16 %v1078
        %v4416 = vunpack.c.l.b16 %v1079
        %v4417 = vunpack.c.h.b16 %v1079
        %v4418 = vunpack.c.l.b16 %v1080
        %v4419 = vunpack.c.h.b16 %v1080
        %v4420 = vunpack.c.l.b16 %v1081
        %v4421 = vunpack.c.l.b16 %v1082
        %v4422 = vunpack.c.h.b16 %v1082
        %v4423 = vunpack.c.l.b16 %v1083
        %v4424 = vunpack.c.h.b16 %v1083
        %v4425 = vunpack.c.l.b16 %v1084
        %v4426 = vunpack.c.h.b16 %v1084
        %v4427 = vunpack.c.l.b16 %v1085
        %v4428 = vunpack.c.h.b16 %v1085
        %v4429 = vunpack.c.l.b16 %v1086
        %v4430 = vunpack.c.h.b16 %v1086
        %v4431 = vunpack.c.l.b16 %v1087
        %v4432 = vunpack.c.h.b16 %v1087
        %v4433 = vunpack.c.l.b16 %v1088
        %v4434 = vunpack.c.l.b16 %v1089
        %v4435 = vunpack.c.h.b16 %v1089
        %v4436 = vunpack.c.l.b16 %v1090
        %v4437 = vunpack.c.h.b16 %v1090
        %v4438 = vunpack.c.l.b16 %v1091
        %v4439 = vunpack.c.h.b16 %v1091
        %v4440 = vunpack.c.l.b16 %v1092
        %v4441 = vunpack.c.h.b16 %v1092
        %v4442 = vunpack.c.l.b16 %v1093
        %v4443 = vunpack.c.h.b16 %v1093
        %v4444 = vunpack.c.l.b16 %v1094
        %v4445 = vunpack.c.h.b16 %v1094
        %v4446 = vunpack.c.l.b16 %v1095
        %v4447 = vunpack.c.l.b16 %v1096
        %v4448 = vunpack.c.h.b16 %v1096
        %v4449 = vunpack.c.l.b16 %v1097
        %v4450 = vunpack.c.h.b16 %v1097
        %v4451 = vunpack.c.l.b16 %v1098
        %v4452 = vunpack.c.h.b16 %v1098
        %v4453 = vunpack.c.l.b16 %v1099
        %v4454 = vunpack.c.h.b16 %v1099
        %v4455 = vunpack.c.l.b16 %v1100
        %v4456 = vunpack.c.h.b16 %v1100
        %v4457 = vunpack.c.l.b16 %v1101
        %v4458 = vunpack.c.h.b16 %v1101
        %v4459 = vunpack.c.l.b16 %v1102
        %v4460 = vunpack.c.l.b16 %v1103
        %v4461 = vunpack.c.h.b16 %v1103
        %v4462 = vunpack.c.l.b16 %v1104
        %v4463 = vunpack.c.h.b16 %v1104
        %v4464 = vunpack.c.l.b16 %v1105
        %v4465 = vunpack.c.h.b16 %v1105
        %v4466 = vunpack.c.l.b16 %v1106
        %v4467 = vunpack.c.h.b16 %v1106
        %v4468 = vunpack.c.l.b16 %v1107
        %v4469 = vunpack.c.h.b16 %v1107
        %v4470 = vunpack.c.l.b16 %v1108
        %v4471 = vunpack.c.h.b16 %v1108
        %v4472 = vunpack.c.l.b16 %v1109
        %v4473 = vunpack.c.l.b16 %v1110
        %v4474 = vunpack.c.h.b16 %v1110
        %v4475 = vunpack.c.l.b16 %v1111
        %v4476 = vunpack.c.h.b16 %v1111
        %v4477 = vunpack.c.l.b16 %v1112
        %v4478 = vunpack.c.h.b16 %v1112
        %v4479 = vunpack.c.l.b16 %v1113
        %v4480 = vunpack.c.h.b16 %v1113
        %v4481 = vunpack.c.l.b16 %v1114
        %v4482 = vunpack.c.h.b16 %v1114
        %v4483 = vunpack.c.l.b16 %v1115
        %v4484 = vunpack.c.h.b16 %v1115
        %v4485 = vunpack.c.l.b16 %v1116
        %v4486 = vunpack.c.l.b16 %v1117
        %v4487 = vunpack.c.h.b16 %v1117
        %v4488 = vunpack.c.l.b16 %v1118
        %v4489 = vunpack.c.h.b16 %v1118
        %v4490 = vunpack.c.l.b16 %v1119
        %v4491 = vunpack.c.h.b16 %v1119
        %v4492 = vunpack.c.l.b16 %v1120
        %v4493 = vunpack.c.h.b16 %v1120
        %v4494 = vunpack.c.l.b16 %v1121
        %v4495 = vunpack.c.h.b16 %v1121
        %v4496 = vunpack.c.l.b16 %v1122
        %v4497 = vunpack.c.h.b16 %v1122
        %v4498 = vunpack.c.l.b16 %v1123
        %v4499 = vunpack.c.l.b16 %v1124
        %v4500 = vunpack.c.h.b16 %v1124
        %v4501 = vunpack.c.l.b16 %v1125
        %v4502 = vunpack.c.h.b16 %v1125
        %v4503 = vunpack.c.l.b16 %v1126
        %v4504 = vunpack.c.h.b16 %v1126
        %v4505 = vunpack.c.l.b16 %v1127
        %v4506 = vunpack.c.h.b16 %v1127
        %v4507 = vunpack.c.l.b16 %v1128
        %v4508 = vunpack.c.h.b16 %v1128
        %v4509 = vunpack.c.l.b16 %v1129
        %v4510 = vunpack.c.h.b16 %v1129
        %v4511 = vunpack.c.l.b16 %v1130
        %v4512 = vunpack.c.l.b16 %v1131
        %v4513 = vunpack.c.h.b16 %v1131
        %v4514 = vunpack.c.l.b16 %v1132
        %v4515 = vunpack.c.h.b16 %v1132
        %v4516 = vunpack.c.l.b16 %v1133
        %v4517 = vunpack.c.h.b16 %v1133
        %v4518 = vunpack.c.l.b16 %v1134
        %v4519 = vunpack.c.h.b16 %v1134
        %v4520 = vunpack.c.l.b16 %v1135
        %v4521 = vunpack.c.h.b16 %v1135
        %v4522 = vunpack.c.l.b16 %v1136
        %v4523 = vunpack.c.h.b16 %v1136
        %v4524 = vunpack.c.l.b16 %v1137
        %v4525 = vunpack.c.l.b16 %v1138
        %v4526 = vunpack.c.h.b16 %v1138
        %v4527 = vunpack.c.l.b16 %v1139
        %v4528 = vunpack.c.h.b16 %v1139
        %v4529 = vunpack.c.l.b16 %v1140
        %v4530 = vunpack.c.h.b16 %v1140
        %v4531 = vunpack.c.l.b16 %v1141
        %v4532 = vunpack.c.h.b16 %v1141
        %v4533 = vunpack.c.l.b16 %v1142
        %v4534 = vunpack.c.h.b16 %v1142
        %v4535 = vunpack.c.l.b16 %v1143
        %v4536 = vunpack.c.h.b16 %v1143
        %v4537 = vunpack.c.l.b16 %v1144
        %v4538 = vunpack.c.l.b16 %v1145
        %v4539 = vunpack.c.h.b16 %v1145
        %v4540 = vunpack.c.l.b16 %v1146
        %v4541 = vunpack.c.h.b16 %v1146
        %v4542 = vunpack.c.l.b16 %v1147
        %v4543 = vunpack.c.h.b16 %v1147
        %v4544 = vunpack.c.l.b16 %v1148
        %v4545 = vunpack.c.h.b16 %v1148
        %v4546 = vunpack.c.l.b16 %v1149
        %v4547 = vunpack.c.h.b16 %v1149
        %v4548 = vunpack.c.l.b16 %v1150
        %v4549 = vunpack.c.h.b16 %v1150
        %v4550 = vunpack.c.l.b16 %v1151
        %v4551 = vunpack.c.l.b16 %v1152
        %v4552 = vunpack.c.h.b16 %v1152
        %v4553 = vunpack.c.l.b16 %v1153
        %v4554 = vunpack.c.h.b16 %v1153
        %v4555 = vunpack.c.l.b16 %v1154
        %v4556 = vunpack.c.h.b16 %v1154
        %v4557 = vunpack.c.l.b16 %v1155
        %v4558 = vunpack.c.h.b16 %v1155
        %v4559 = vunpack.c.l.b16 %v1156
        %v4560 = vunpack.c.h.b16 %v1156
        %v4561 = vunpack.c.l.b16 %v1157
        %v4562 = vunpack.c.h.b16 %v1157
        %v4563 = vunpack.c.l.b16 %v1158
        %v4564 = vunpack.c.l.b16 %v1159
        %v4565 = vunpack.c.h.b16 %v1159
        %v4566 = vunpack.c.l.b16 %v1160
        %v4567 = vunpack.c.h.b16 %v1160
        %v4568 = vunpack.c.l.b16 %v1161
        %v4569 = vunpack.c.h.b16 %v1161
        %v4570 = vunpack.c.l.b16 %v1162
        %v4571 = vunpack.c.h.b16 %v1162
        %v4572 = vunpack.c.l.b16 %v1163
        %v4573 = vunpack.c.h.b16 %v1163
        %v4574 = vunpack.c.l.b16 %v1164
        %v4575 = vunpack.c.h.b16 %v1164
        %v4576 = vunpack.c.l.b16 %v1165
        %v4577 = vunpack.c.l.b16 %v1166
        %v4578 = vunpack.c.h.b16 %v1166
        %v4579 = vunpack.c.l.b16 %v1167
        %v4580 = vunpack.c.h.b16 %v1167
        %v4581 = vunpack.c.l.b16 %v1168
        %v4582 = vunpack.c.h.b16 %v1168
        %v4583 = vunpack.c.l.b16 %v1169
        %v4584 = vunpack.c.h.b16 %v1169
        %v4585 = vunpack.c.l.b16 %v1170
        %v4586 = vunpack.c.h.b16 %v1170
        %v4587 = vunpack.c.l.b16 %v1171
        %v4588 = vunpack.c.h.b16 %v1171
        %v4589 = vunpack.c.l.b16 %v1172
        %v4590 = vunpack.c.l.b16 %v1173
        %v4591 = vunpack.c.h.b16 %v1173
        %v4592 = vunpack.c.l.b16 %v1174
        %v4593 = vunpack.c.h.b16 %v1174
        %v4594 = vunpack.c.l.b16 %v1175
        %v4595 = vunpack.c.h.b16 %v1175
        %v4596 = vunpack.c.l.b16 %v1176
        %v4597 = vunpack.c.h.b16 %v1176
        %v4598 = vunpack.c.l.b16 %v1177
        %v4599 = vunpack.c.h.b16 %v1177
        %v4600 = vunpack.c.l.b16 %v1178
        %v4601 = vunpack.c.h.b16 %v1178
        %v4602 = vunpack.c.l.b16 %v1179
        %v4603 = vunpack.c.l.b16 %v1180
        %v4604 = vunpack.c.h.b16 %v1180
        %v4605 = vunpack.c.l.b16 %v1181
        %v4606 = vunpack.c.h.b16 %v1181
        %v4607 = vunpack.c.l.b16 %v1182
        %v4608 = vunpack.c.h.b16 %v1182
        %v4609 = vunpack.c.l.b16 %v1183
        %v4610 = vunpack.c.h.b16 %v1183
        %v4611 = vunpack.c.l.b16 %v1184
        %v4612 = vunpack.c.h.b16 %v1184
        %v4613 = vunpack.c.l.b16 %v1185
        %v4614 = vunpack.c.h.b16 %v1185
        %v4615 = vunpack.c.l.b16 %v1186
        %v4616 = vunpack.c.l.b16 %v1187
        %v4617 = vunpack.c.h.b16 %v1187
        %v4618 = vunpack.c.l.b16 %v1188
        %v4619 = vunpack.c.h.b16 %v1188
        %v4620 = vunpack.c.l.b16 %v1189
        %v4621 = vunpack.c.h.b16 %v1189
        %v4622 = vunpack.c.l.b16 %v1190
        %v4623 = vunpack.c.h.b16 %v1190
        %v4624 = vunpack.c.l.b16 %v1191
        %v4625 = vunpack.c.h.b16 %v1191
        %v4626 = vunpack.c.l.b16 %v1192
        %v4627 = vunpack.c.h.b16 %v1192
        %v4628 = vunpack.c.l.b16 %v1193
        %v4629 = vunpack.c.l.b16 %v1194
        %v4630 = vunpack.c.h.b16 %v1194
        %v4631 = vunpack.c.l.b16 %v1195
        %v4632 = vunpack.c.h.b16 %v1195
        %v4633 = vunpack.c.l.b16 %v1196
        %v4634 = vunpack.c.h.b16 %v1196
        %v4635 = vunpack.c.l.b16 %v1197
        %v4636 = vunpack.c.h.b16 %v1197
        %v4637 = vunpack.c.l.b16 %v1198
        %v4638 = vunpack.c.h.b16 %v1198
        %v4639 = vunpack.c.l.b16 %v1199
        %v4640 = vunpack.c.h.b16 %v1199
        %v4641 = vunpack.c.l.b16 %v1200
        %v4642 = vunpack.c.l.b16 %v1201
        %v4643 = vunpack.c.h.b16 %v1201
        %v4644 = vunpack.c.l.b16 %v1202
        %v4645 = vunpack.c.h.b16 %v1202
        %v4646 = vunpack.c.l.b16 %v1203
        %v4647 = vunpack.c.h.b16 %v1203
        %v4648 = vunpack.c.l.b16 %v1204
        %v4649 = vunpack.c.h.b16 %v1204
        %v4650 = vunpack.c.l.b16 %v1205
        %v4651 = vunpack.c.h.b16 %v1205
        %v4652 = vunpack.c.l.b16 %v1206
        %v4653 = vunpack.c.h.b16 %v1206
        %v4654 = vunpack.c.l.b16 %v1207
        %v4655 = vunpack.c.l.b16 %v1208
        %v4656 = vunpack.c.h.b16 %v1208
        %v4657 = vunpack.c.l.b16 %v1209
        %v4658 = vunpack.c.h.b16 %v1209
        %v4659 = vunpack.c.l.b16 %v1210
        %v4660 = vunpack.c.h.b16 %v1210
        %v4661 = vunpack.c.l.b16 %v1211
        %v4662 = vunpack.c.h.b16 %v1211
        %v4663 = vunpack.c.l.b16 %v1212
        %v4664 = vunpack.c.h.b16 %v1212
        %v4665 = vunpack.c.l.b16 %v1213
        %v4666 = vunpack.c.h.b16 %v1213
        %v4667 = vunpack.c.l.b16 %v1214
        %v4668 = vunpack.c.l.b16 %v1215
        %v4669 = vunpack.c.h.b16 %v1215
        %v4670 = vunpack.c.l.b16 %v1216
        %v4671 = vunpack.c.h.b16 %v1216
        %v4672 = vunpack.c.l.b16 %v1217
        %v4673 = vunpack.c.h.b16 %v1217
        %v4674 = vunpack.c.l.b16 %v1218
        %v4675 = vunpack.c.h.b16 %v1218
        %v4676 = vunpack.c.l.b16 %v1219
        %v4677 = vunpack.c.h.b16 %v1219
        %v4678 = vunpack.c.l.b16 %v1220
        %v4679 = vunpack.c.h.b16 %v1220
        %v4680 = vunpack.c.l.b16 %v1221
        %v4681 = vunpack.c.l.b16 %v1222
        %v4682 = vunpack.c.h.b16 %v1222
        %v4683 = vunpack.c.l.b16 %v1223
        %v4684 = vunpack.c.h.b16 %v1223
        %v4685 = vunpack.c.l.b16 %v1224
        %v4686 = vunpack.c.h.b16 %v1224
        %v4687 = vunpack.c.l.b16 %v1225
        %v4688 = vunpack.c.h.b16 %v1225
        %v4689 = vunpack.c.l.b16 %v1226
        %v4690 = vunpack.c.h.b16 %v1226
        %v4691 = vunpack.c.l.b16 %v1227
        %v4692 = vunpack.c.h.b16 %v1227
        %v4693 = vunpack.c.l.b16 %v1228
        %v4694 = vunpack.c.l.b16 %v1229
        %v4695 = vunpack.c.h.b16 %v1229
        %v4696 = vunpack.c.l.b16 %v1230
        %v4697 = vunpack.c.h.b16 %v1230
        %v4698 = vunpack.c.l.b16 %v1231
        %v4699 = vunpack.c.h.b16 %v1231
        %v4700 = vunpack.c.l.b16 %v1232
        %v4701 = vunpack.c.h.b16 %v1232
        %v4702 = vunpack.c.l.b16 %v1233
        %v4703 = vunpack.c.h.b16 %v1233
        %v4704 = vunpack.c.l.b16 %v1234
        %v4705 = vunpack.c.h.b16 %v1234
        %v4706 = vunpack.c.l.b16 %v1235
        %v4707 = vunpack.c.l.b16 %v1236
        %v4708 = vunpack.c.h.b16 %v1236
        %v4709 = vunpack.c.l.b16 %v1237
        %v4710 = vunpack.c.h.b16 %v1237
        %v4711 = vunpack.c.l.b16 %v1238
        %v4712 = vunpack.c.h.b16 %v1238
        %v4713 = vunpack.c.l.b16 %v1239
        %v4714 = vunpack.c.h.b16 %v1239
        %v4715 = vunpack.c.l.b16 %v1240
        %v4716 = vunpack.c.h.b16 %v1240
        %v4717 = vunpack.c.l.b16 %v1241
        %v4718 = vunpack.c.h.b16 %v1241
        %v4719 = vunpack.c.l.b16 %v1242
        %v4720 = vunpack.c.l.b16 %v1243
        %v4721 = vunpack.c.h.b16 %v1243
        %v4722 = vunpack.c.l.b16 %v1244
        %v4723 = vunpack.c.h.b16 %v1244
        %v4724 = vunpack.c.l.b16 %v1245
        %v4725 = vunpack.c.h.b16 %v1245
        %v4726 = vunpack.c.l.b16 %v1246
        %v4727 = vunpack.c.h.b16 %v1246
        %v4728 = vunpack.c.l.b16 %v1247
        %v4729 = vunpack.c.h.b16 %v1247
        %v4730 = vunpack.c.l.b16 %v1248
        %v4731 = vunpack.c.h.b16 %v1248
        %v4732 = vunpack.c.l.b16 %v1249
        %v4733 = vunpack.c.l.b16 %v1250
        %v4734 = vunpack.c.h.b16 %v1250
        %v4735 = vunpack.c.l.b16 %v1251
        %v4736 = vunpack.c.h.b16 %v1251
        %v4737 = vunpack.c.l.b16 %v1252
        %v4738 = vunpack.c.h.b16 %v1252
        %v4739 = vunpack.c.l.b16 %v1253
        %v4740 = vunpack.c.h.b16 %v1253
        %v4741 = vunpack.c.l.b16 %v1254
        %v4742 = vunpack.c.h.b16 %v1254
        %v4743 = vunpack.c.l.b16 %v1255
        %v4744 = vunpack.c.h.b16 %v1255
        %v4745 = vunpack.c.l.b16 %v1256
        %v4746 = vunpack.c.l.b16 %v1257
        %v4747 = vunpack.c.h.b16 %v1257
        %v4748 = vunpack.c.l.b16 %v1258
        %v4749 = vunpack.c.h.b16 %v1258
        %v4750 = vunpack.c.l.b16 %v1259
        %v4751 = vunpack.c.h.b16 %v1259
        %v4752 = vunpack.c.l.b16 %v1260
        %v4753 = vunpack.c.h.b16 %v1260
        %v4754 = vunpack.c.l.b16 %v1261
        %v4755 = vunpack.c.h.b16 %v1261
        %v4756 = vunpack.c.l.b16 %v1262
        %v4757 = vunpack.c.h.b16 %v1262
        %v4758 = vunpack.c.l.b16 %v1263
        %v4759 = vunpack.c.l.b16 %v1264
        %v4760 = vunpack.c.h.b16 %v1264
        %v4761 = vunpack.c.l.b16 %v1265
        %v4762 = vunpack.c.h.b16 %v1265
        %v4763 = vunpack.c.l.b16 %v1266
        %v4764 = vunpack.c.h.b16 %v1266
        %v4765 = vunpack.c.l.b16 %v1267
        %v4766 = vunpack.c.h.b16 %v1267
        %v4767 = vunpack.c.l.b16 %v1268
        %v4768 = vunpack.c.h.b16 %v1268
        %v4769 = vunpack.c.l.b16 %v1269
        %v4770 = vunpack.c.h.b16 %v1269
        %v4771 = vunpack.c.l.b16 %v1270
        %v4772 = vunpack.c.l.b16 %v1271
        %v4773 = vunpack.c.h.b16 %v1271
        %v4774 = vunpack.c.l.b16 %v1272
        %v4775 = vunpack.c.h.b16 %v1272
        %v4776 = vunpack.c.l.b16 %v1273
        %v4777 = vunpack.c.h.b16 %v1273
        %v4778 = vunpack.c.l.b16 %v1274
        %v4779 = vunpack.c.h.b16 %v1274
        %v4780 = vunpack.c.l.b16 %v1275
        %v4781 = vunpack.c.h.b16 %v1275
        %v4782 = vunpack.c.l.b16 %v1276
        %v4783 = vunpack.c.h.b16 %v1276
        %v4784 = vunpack.c.l.b16 %v1277
        %v4785 = vunpack.c.l.b16 %v1278
        %v4786 = vunpack.c.h.b16 %v1278
        %v4787 = vunpack.c.l.b16 %v1279
        %v4788 = vunpack.c.h.b16 %v1279
        %v4789 = vunpack.c.l.b16 %v1280
        %v4790 = vunpack.c.h.b16 %v1280
        %v4791 = vunpack.c.l.b16 %v1281
        %v4792 = vunpack.c.h.b16 %v1281
        %v4793 = vunpack.c.l.b16 %v1282
        %v4794 = vunpack.c.h.b16 %v1282
        %v4795 = vunpack.c.l.b16 %v1283
        %v4796 = vunpack.c.h.b16 %v1283
        %v4797 = vunpack.c.l.b16 %v1284
        %v4798 = vunpack.c.l.b16 %v1285
        %v4799 = vunpack.c.h.b16 %v1285
        %v4800 = vunpack.c.l.b16 %v1286
        %v4801 = vunpack.c.h.b16 %v1286
        %v4802 = vunpack.c.l.b16 %v1287
        %v4803 = vunpack.c.h.b16 %v1287
        %v4804 = vunpack.c.l.b16 %v1288
        %v4805 = vunpack.c.h.b16 %v1288
        %v4806 = vunpack.c.l.b16 %v1289
        %v4807 = vunpack.c.h.b16 %v1289
        %v4808 = vunpack.c.l.b16 %v1290
        %v4809 = vunpack.c.h.b16 %v1290
        %v4810 = vunpack.c.l.b16 %v1291
        %v4811 = vunpack.c.l.b16 %v1292
        %v4812 = vunpack.c.h.b16 %v1292
        %v4813 = vunpack.c.l.b16 %v1293
        %v4814 = vunpack.c.h.b16 %v1293
        %v4815 = vunpack.c.l.b16 %v1294
        %v4816 = vunpack.c.h.b16 %v1294
        %v4817 = vunpack.c.l.b16 %v1295
        %v4818 = vunpack.c.h.b16 %v1295
        %v4819 = vunpack.c.l.b16 %v1296
        %v4820 = vunpack.c.h.b16 %v1296
        %v4821 = vunpack.c.l.b16 %v1297
        %v4822 = vunpack.c.h.b16 %v1297
        %v4823 = vunpack.c.l.b16 %v1298
        %v4824 = vunpack.c.l.b16 %v1299
        %v4825 = vunpack.c.h.b16 %v1299
        %v4826 = vunpack.c.l.b16 %v1300
        %v4827 = vunpack.c.h.b16 %v1300
        %v4828 = vunpack.c.l.b16 %v1301
        %v4829 = vunpack.c.h.b16 %v1301
        %v4830 = vunpack.c.l.b16 %v1302
        %v4831 = vunpack.c.h.b16 %v1302
        %v4832 = vunpack.c.l.b16 %v1303
        %v4833 = vunpack.c.h.b16 %v1303
        %v4834 = vunpack.c.l.b16 %v1304
        %v4835 = vunpack.c.h.b16 %v1304
        %v4836 = vunpack.c.l.b16 %v1305
        %v4837 = vunpack.c.l.b16 %v1306
        %v4838 = vunpack.c.h.b16 %v1306
        %v4839 = vunpack.c.l.b16 %v1307
        %v4840 = vunpack.c.h.b16 %v1307
        %v4841 = vunpack.c.l.b16 %v1308
        %v4842 = vunpack.c.h.b16 %v1308
        %v4843 = vunpack.c.l.b16 %v1309
        %v4844 = vunpack.c.h.b16 %v1309
        %v4845 = vunpack.c.l.b16 %v1310
        %v4846 = vunpack.c.h.b16 %v1310
        %v4847 = vunpack.c.l.b16 %v1311
        %v4848 = vunpack.c.h.b16 %v1311
        %v4849 = vunpack.c.l.b16 %v1312
        %v4850 = vunpack.c.l.b16 %v1313
        %v4851 = vunpack.c.h.b16 %v1313
        %v4852 = vunpack.c.l.b16 %v1314
        %v4853 = vunpack.c.h.b16 %v1314
        %v4854 = vunpack.c.l.b16 %v1315
        %v4855 = vunpack.c.h.b16 %v1315
        %v4856 = vunpack.c.l.b16 %v1316
        %v4857 = vunpack.c.h.b16 %v1316
        %v4858 = vunpack.c.l.b16 %v1317
        %v4859 = vunpack.c.h.b16 %v1317
        %v4860 = vunpack.c.l.b16 %v1318
        %v4861 = vunpack.c.h.b16 %v1318
        %v4862 = vunpack.c.l.b16 %v1319
        %v4863 = vunpack.c.l.b16 %v1320
        %v4864 = vunpack.c.h.b16 %v1320
        %v4865 = vunpack.c.l.b16 %v1321
        %v4866 = vunpack.c.h.b16 %v1321
        %v4867 = vunpack.c.l.b16 %v1322
        %v4868 = vunpack.c.h.b16 %v1322
        %v4869 = vunpack.c.l.b16 %v1323
        %v4870 = vunpack.c.h.b16 %v1323
        %v4871 = vunpack.c.l.b16 %v1324
        %v4872 = vunpack.c.h.b16 %v1324
        %v4873 = vunpack.c.l.b16 %v1325
        %v4874 = vunpack.c.h.b16 %v1325
        %v4875 = vunpack.c.l.b16 %v1326
        %v4876 = vunpack.c.l.b16 %v1327
        %v4877 = vunpack.c.h.b16 %v1327
        %v4878 = vunpack.c.l.b16 %v1328
        %v4879 = vunpack.c.h.b16 %v1328
        %v4880 = vunpack.c.l.b16 %v1329
        %v4881 = vunpack.c.h.b16 %v1329
        %v4882 = vunpack.c.l.b16 %v1330
        %v4883 = vunpack.c.h.b16 %v1330
        %v4884 = vunpack.c.l.b16 %v1331
        %v4885 = vunpack.c.h.b16 %v1331
        %v4886 = vunpack.c.l.b16 %v1332
        %v4887 = vunpack.c.h.b16 %v1332
        %v4888 = vunpack.c.l.b16 %v1333
        %v4889 = vunpack.c.l.b16 %v1334
        %v4890 = vunpack.c.h.b16 %v1334
        %v4891 = vunpack.c.l.b16 %v1335
        %v4892 = vunpack.c.h.b16 %v1335
        %v4893 = vunpack.c.l.b16 %v1336
        %v4894 = vunpack.c.h.b16 %v1336
        %v4895 = vunpack.c.l.b16 %v1337
        %v4896 = vunpack.c.h.b16 %v1337
        %v4897 = vunpack.c.l.b16 %v1338
        %v4898 = vunpack.c.h.b16 %v1338
        %v4899 = vunpack.c.l.b16 %v1339
        %v4900 = vunpack.c.h.b16 %v1339
        %v4901 = vunpack.c.l.b16 %v1340
        %v4902 = vunpack.c.l.b16 %v1341
        %v4903 = vunpack.c.h.b16 %v1341
        %v4904 = vunpack.c.l.b16 %v1342
        %v4905 = vunpack.c.h.b16 %v1342
        %v4906 = vunpack.c.l.b16 %v1343
        %v4907 = vunpack.c.h.b16 %v1343
        %v4908 = vunpack.c.l.b16 %v1344
        %v4909 = vunpack.c.h.b16 %v1344
        %v4910 = vunpack.c.l.b16 %v1345
        %v4911 = vunpack.c.h.b16 %v1345
        %v4912 = vunpack.c.l.b16 %v1346
        %v4913 = vunpack.c.h.b16 %v1346
        %v4914 = vunpack.c.l.b16 %v1347
        %v4915 = vunpack.c.l.b16 %v1348
        %v4916 = vunpack.c.h.b16 %v1348
        %v4917 = vunpack.c.l.b16 %v1349
        %v4918 = vunpack.c.h.b16 %v1349
        %v4919 = vunpack.c.l.b16 %v1350
        %v4920 = vunpack.c.h.b16 %v1350
        %v4921 = vunpack.c.l.b16 %v1351
        %v4922 = vunpack.c.h.b16 %v1351
        %v4923 = vunpack.c.l.b16 %v1352
        %v4924 = vunpack.c.h.b16 %v1352
        %v4925 = vunpack.c.l.b16 %v1353
        %v4926 = vunpack.c.h.b16 %v1353
        %v4927 = vunpack.c.l.b16 %v1354
        %v4928 = vunpack.c.l.b16 %v1355
        %v4929 = vunpack.c.h.b16 %v1355
        %v4930 = vunpack.c.l.b16 %v1356
        %v4931 = vunpack.c.h.b16 %v1356
        %v4932 = vunpack.c.l.b16 %v1357
        %v4933 = vunpack.c.h.b16 %v1357
        %v4934 = vunpack.c.l.b16 %v1358
        %v4935 = vunpack.c.h.b16 %v1358
        %v4936 = vunpack.c.l.b16 %v1359
        %v4937 = vunpack.c.h.b16 %v1359
        %v4938 = vunpack.c.l.b16 %v1360
        %v4939 = vunpack.c.h.b16 %v1360
        %v4940 = vunpack.c.l.b16 %v1361
        %v4941 = vunpack.c.l.b16 %v1362
        %v4942 = vunpack.c.h.b16 %v1362
        %v4943 = vunpack.c.l.b16 %v1363
        %v4944 = vunpack.c.h.b16 %v1363
        %v4945 = vunpack.c.l.b16 %v1364
        %v4946 = vunpack.c.h.b16 %v1364
        %v4947 = vunpack.c.l.b16 %v1365
        %v4948 = vunpack.c.h.b16 %v1365
        %v4949 = vunpack.c.l.b16 %v1366
        %v4950 = vunpack.c.h.b16 %v1366
        %v4951 = vunpack.c.l.b16 %v1367
        %v4952 = vunpack.c.h.b16 %v1367
        %v4953 = vunpack.c.l.b16 %v1368
        %v4954 = vunpack.c.l.b16 %v1369
        %v4955 = vunpack.c.h.b16 %v1369
        %v4956 = vunpack.c.l.b16 %v1370
        %v4957 = vunpack.c.h.b16 %v1370
        %v4958 = vunpack.c.l.b16 %v1371
        %v4959 = vunpack.c.h.b16 %v1371
        %v4960 = vunpack.c.l.b16 %v1372
        %v4961 = vunpack.c.h.b16 %v1372
        %v4962 = vunpack.c.l.b16 %v1373
        %v4963 = vunpack.c.h.b16 %v1373
        %v4964 = vunpack.c.l.b16 %v1374
        %v4965 = vunpack.c.h.b16 %v1374
        %v4966 = vunpack.c.l.b16 %v1375
        %v4967 = vunpack.c.l.b16 %v1376
        %v4968 = vunpack.c.h.b16 %v1376
        %v4969 = vunpack.c.l.b16 %v1377
        %v4970 = vunpack.c.h.b16 %v1377
        %v4971 = vunpack.c.l.b16 %v1378
        %v4972 = vunpack.c.h.b16 %v1378
        %v4973 = vunpack.c.l.b16 %v1379
        %v4974 = vunpack.c.h.b16 %v1379
        %v4975 = vunpack.c.l.b16 %v1380
        %v4976 = vunpack.c.h.b16 %v1380
        %v4977 = vunpack.c.l.b16 %v1381
        %v4978 = vunpack.c.h.b16 %v1381
        %v4979 = vunpack.c.l.b16 %v1382
        %v4980 = vunpack.c.l.b16 %v1383
        %v4981 = vunpack.c.h.b16 %v1383
        %v4982 = vunpack.c.l.b16 %v1384
        %v4983 = vunpack.c.h.b16 %v1384
        %v4984 = vunpack.c.l.b16 %v1385
        %v4985 = vunpack.c.h.b16 %v1385
        %v4986 = vunpack.c.l.b16 %v1386
        %v4987 = vunpack.c.h.b16 %v1386
        %v4988 = vunpack.c.l.b16 %v1387
        %v4989 = vunpack.c.h.b16 %v1387
        %v4990 = vunpack.c.l.b16 %v1388
        %v4991 = vunpack.c.h.b16 %v1388
        %v4992 = vunpack.c.l.b16 %v1389
        %v4993 = vunpack.c.l.b16 %v1390
        %v4994 = vunpack.c.h.b16 %v1390
        %v4995 = vunpack.c.l.b16 %v1391
        %v4996 = vunpack.c.h.b16 %v1391
        %v4997 = vunpack.c.l.b16 %v1392
        %v4998 = vunpack.c.h.b16 %v1392
        %v4999 = vunpack.c.l.b16 %v1393
        %v5000 = vunpack.c.h.b16 %v1393
        %v5001 = vunpack.c.l.b16 %v1394
        %v5002 = vunpack.c.h.b16 %v1394
        %v5003 = vunpack.c.l.b16 %v1395
        %v5004 = vunpack.c.h.b16 %v1395
        %v5005 = vunpack.c.l.b16 %v1396
        %v5006 = vunpack.c.l.b16 %v1397
        %v5007 = vunpack.c.h.b16 %v1397
        %v5008 = vunpack.c.l.b16 %v1398
        %v5009 = vunpack.c.h.b16 %v1398
        %v5010 = vunpack.c.l.b16 %v1399
        %v5011 = vunpack.c.h.b16 %v1399
        %v5012 = vunpack.c.l.b16 %v1400
        %v5013 = vunpack.c.h.b16 %v1400
        %v5014 = vunpack.c.l.b16 %v1401
        %v5015 = vunpack.c.h.b16 %v1401
        %v5016 = vunpack.c.l.b16 %v1402
        %v5017 = vunpack.c.h.b16 %v1402
        %v5018 = vunpack.c.l.b16 %v1403
        %v5019 = vunpack.c.l.b16 %v1404
        %v5020 = vunpack.c.h.b16 %v1404
        %v5021 = vunpack.c.l.b16 %v1405
        %v5022 = vunpack.c.h.b16 %v1405
        %v5023 = vunpack.c.l.b16 %v1406
        %v5024 = vunpack.c.h.b16 %v1406
        %v5025 = vunpack.c.l.b16 %v1407
        %v5026 = vunpack.c.h.b16 %v1407
        %v5027 = vunpack.c.l.b16 %v1408
        %v5028 = vunpack.c.h.b16 %v1408
        %v5029 = vunpack.c.l.b16 %v1409
        %v5030 = vunpack.c.h.b16 %v1409
        %v5031 = vunpack.c.l.b16 %v1410
        %v5032 = vunpack.c.l.b16 %v1411
        %v5033 = vunpack.c.h.b16 %v1411
        %v5034 = vunpack.c.l.b16 %v1412
        %v5035 = vunpack.c.h.b16 %v1412
        %v5036 = vunpack.c.l.b16 %v1413
        %v5037 = vunpack.c.h.b16 %v1413
        %v5038 = vunpack.c.l.b16 %v1414
        %v5039 = vunpack.c.h.b16 %v1414
        %v5040 = vunpack.c.l.b16 %v1415
        %v5041 = vunpack.c.h.b16 %v1415
        %v5042 = vunpack.c.l.b16 %v1416
        %v5043 = vunpack.c.h.b16 %v1416
        %v5044 = vunpack.c.l.b16 %v1417
        %v5045 = vunpack.c.l.b16 %v1418
        %v5046 = vunpack.c.h.b16 %v1418
        %v5047 = vunpack.c.l.b16 %v1419
        %v5048 = vunpack.c.h.b16 %v1419
        %v5049 = vunpack.c.l.b16 %v1420
        %v5050 = vunpack.c.h.b16 %v1420
        %v5051 = vunpack.c.l.b16 %v1421
        %v5052 = vunpack.c.h.b16 %v1421
        %v5053 = vunpack.c.l.b16 %v1422
        %v5054 = vunpack.c.h.b16 %v1422
        %v5055 = vunpack.c.l.b16 %v1423
        %v5056 = vunpack.c.h.b16 %v1423
        %v5057 = vunpack.c.l.b16 %v1424
        %v5058 = vunpack.c.l.b16 %v1425
        %v5059 = vunpack.c.h.b16 %v1425
        %v5060 = vunpack.c.l.b16 %v1426
        %v5061 = vunpack.c.h.b16 %v1426
        %v5062 = vunpack.c.l.b16 %v1427
        %v5063 = vunpack.c.h.b16 %v1427
        %v5064 = vunpack.c.l.b16 %v1428
        %v5065 = vunpack.c.h.b16 %v1428
        %v5066 = vunpack.c.l.b16 %v1429
        %v5067 = vunpack.c.h.b16 %v1429
        %v5068 = vunpack.c.l.b16 %v1430
        %v5069 = vunpack.c.h.b16 %v1430
        %v5070 = vunpack.c.l.b16 %v1431
        %v5071 = vunpack.c.l.b16 %v1432
        %v5072 = vunpack.c.h.b16 %v1432
        %v5073 = vunpack.c.l.b16 %v1433
        %v5074 = vunpack.c.h.b16 %v1433
        %v5075 = vunpack.c.l.b16 %v1434
        %v5076 = vunpack.c.h.b16 %v1434
        %v5077 = vunpack.c.l.b16 %v1435
        %v5078 = vunpack.c.h.b16 %v1435
        %v5079 = vunpack.c.l.b16 %v1436
        %v5080 = vunpack.c.h.b16 %v1436
        %v5081 = vunpack.c.l.b16 %v1437
        %v5082 = vunpack.c.h.b16 %v1437
        %v5083 = vunpack.c.l.b16 %v1438
        %v5084 = vunpack.c.l.b16 %v1439
        %v5085 = vunpack.c.h.b16 %v1439
        %v5086 = vunpack.c.l.b16 %v1440
        %v5087 = vunpack.c.h.b16 %v1440
        %v5088 = vunpack.c.l.b16 %v1441
        %v5089 = vunpack.c.h.b16 %v1441
        %v5090 = vunpack.c.l.b16 %v1442
        %v5091 = vunpack.c.h.b16 %v1442
        %v5092 = vunpack.c.l.b16 %v1443
        %v5093 = vunpack.c.h.b16 %v1443
        %v5094 = vunpack.c.l.b16 %v1444
        %v5095 = vunpack.c.h.b16 %v1444
        %v5096 = vunpack.c.l.b16 %v1445
        %v5097 = vunpack.c.l.b16 %v1446
        %v5098 = vunpack.c.h.b16 %v1446
        %v5099 = vunpack.c.l.b16 %v1447
        %v5100 = vunpack.c.h.b16 %v1447
        %v5101 = vunpack.c.l.b16 %v1448
        %v5102 = vunpack.c.h.b16 %v1448
        %v5103 = vunpack.c.l.b16 %v1449
        %v5104 = vunpack.c.h.b16 %v1449
        %v5105 = vunpack.c.l.b16 %v1450
        %v5106 = vunpack.c.h.b16 %v1450
        %v5107 = vunpack.c.l.b16 %v1451
        %v5108 = vunpack.c.h.b16 %v1451
        %v5109 = vunpack.c.l.b16 %v1452
        %v5110 = vunpack.c.l.b16 %v1453
        %v5111 = vunpack.c.h.b16 %v1453
        %v5112 = vunpack.c.l.b16 %v1454
        %v5113 = vunpack.c.h.b16 %v1454
        %v5114 = vunpack.c.l.b16 %v1455
        %v5115 = vunpack.c.h.b16 %v1455
        %v5116 = vunpack.c.l.b16 %v1456
        %v5117 = vunpack.c.h.b16 %v1456
        %v5118 = vunpack.c.l.b16 %v1457
        %v5119 = vunpack.c.h.b16 %v1457
        %v5120 = vunpack.c.l.b16 %v1458
        %v5121 = vunpack.c.h.b16 %v1458
        %v5122 = vunpack.c.l.b16 %v1459
        %v5123 = vunpack.c.l.b16 %v1460
        %v5124 = vunpack.c.h.b16 %v1460
        %v5125 = vunpack.c.l.b16 %v1461
        %v5126 = vunpack.c.h.b16 %v1461
        %v5127 = vunpack.c.l.b16 %v1462
        %v5128 = vunpack.c.h.b16 %v1462
        %v5129 = vunpack.c.l.b16 %v1463
        %v5130 = vunpack.c.h.b16 %v1463
        %v5131 = vunpack.c.l.b16 %v1464
        %v5132 = vunpack.c.h.b16 %v1464
        %v5133 = vunpack.c.l.b16 %v1465
        %v5134 = vunpack.c.h.b16 %v1465
        %v5135 = vunpack.c.l.b16 %v1466
        %v5136 = vunpack.c.l.b16 %v1467
        %v5137 = vunpack.c.h.b16 %v1467
        %v5138 = vunpack.c.l.b16 %v1468
        %v5139 = vunpack.c.h.b16 %v1468
        %v5140 = vunpack.c.l.b16 %v1469
        %v5141 = vunpack.c.h.b16 %v1469
        %v5142 = vunpack.c.l.b16 %v1470
        %v5143 = vunpack.c.h.b16 %v1470
        %v5144 = vunpack.c.l.b16 %v1471
        %v5145 = vunpack.c.h.b16 %v1471
        %v5146 = vunpack.c.l.b16 %v1472
        %v5147 = vunpack.c.h.b16 %v1472
        %v5148 = vunpack.c.l.b16 %v1473
        %v5149 = vunpack.c.l.b16 %v1474
        %v5150 = vunpack.c.h.b16 %v1474
        %v5151 = vunpack.c.l.b16 %v1475
        %v5152 = vunpack.c.h.b16 %v1475
        %v5153 = vunpack.c.l.b16 %v1476
        %v5154 = vunpack.c.h.b16 %v1476
        %v5155 = vunpack.c.l.b16 %v1477
        %v5156 = vunpack.c.h.b16 %v1477
        %v5157 = vunpack.c.l.b16 %v1478
        %v5158 = vunpack.c.h.b16 %v1478
        %v5159 = vunpack.c.l.b16 %v1479
        %v5160 = vunpack.c.h.b16 %v1479
        %v5161 = vunpack.c.l.b16 %v1480
        %v5162 = vunpack.c.l.b16 %v1481
        %v5163 = vunpack.c.h.b16 %v1481
        %v5164 = vunpack.c.l.b16 %v1482
        %v5165 = vunpack.c.h.b16 %v1482
        %v5166 = vunpack.c.l.b16 %v1483
        %v5167 = vunpack.c.h.b16 %v1483
        %v5168 = vunpack.c.l.b16 %v1484
        %v5169 = vunpack.c.h.b16 %v1484
        %v5170 = vunpack.c.l.b16 %v1485
        %v5171 = vunpack.c.h.b16 %v1485
        %v5172 = vunpack.c.l.b16 %v1486
        %v5173 = vunpack.c.h.b16 %v1486
        %v5174 = vunpack.c.l.b16 %v1487
        %v5175 = vunpack.c.l.b16 %v1488
        %v5176 = vunpack.c.h.b16 %v1488
        %v5177 = vunpack.c.l.b16 %v1489
        %v5178 = vunpack.c.h.b16 %v1489
        %v5179 = vunpack.c.l.b16 %v1490
        %v5180 = vunpack.c.h.b16 %v1490
        %v5181 = vunpack.c.l.b16 %v1491
        %v5182 = vunpack.c.h.b16 %v1491
        %v5183 = vunpack.c.l.b16 %v1492
        %v5184 = vunpack.c.h.b16 %v1492
        %v5185 = vunpack.c.l.b16 %v1493
        %v5186 = vunpack.c.h.b16 %v1493
        %v5187 = vunpack.c.l.b16 %v1494
        %v5188 = vunpack.c.l.b16 %v1495
        %v5189 = vunpack.c.h.b16 %v1495
        %v5190 = vunpack.c.l.b16 %v1496
        %v5191 = vunpack.c.h.b16 %v1496
        %v5192 = vunpack.c.l.b16 %v1497
        %v5193 = vunpack.c.h.b16 %v1497
        %v5194 = vunpack.c.l.b16 %v1498
        %v5195 = vunpack.c.h.b16 %v1498
        %v5196 = vunpack.c.l.b16 %v1499
        %v5197 = vunpack.c.h.b16 %v1499
        %v5198 = vunpack.c.l.b16 %v1500
        %v5199 = vunpack.c.h.b16 %v1500
        %v5200 = vunpack.c.l.b16 %v1501
        %v5201 = vunpack.c.l.b16 %v1502
        %v5202 = vunpack.c.h.b16 %v1502
        %v5203 = vunpack.c.l.b16 %v1503
        %v5204 = vunpack.c.h.b16 %v1503
        %v5205 = vunpack.c.l.b16 %v1504
        %v5206 = vunpack.c.h.b16 %v1504
        %v5207 = vunpack.c.l.b16 %v1505
        %v5208 = vunpack.c.h.b16 %v1505
        %v5209 = vunpack.c.l.b16 %v1506
        %v5210 = vunpack.c.h.b16 %v1506
        %v5211 = vunpack.c.l.b16 %v1507
        %v5212 = vunpack.c.h.b16 %v1507
        %v5213 = vunpack.c.l.b16 %v1508
        %v5214 = vunpack.c.l.b16 %v1509
        %v5215 = vunpack.c.h.b16 %v1509
        %v5216 = vunpack.c.l.b16 %v1510
        %v5217 = vunpack.c.h.b16 %v1510
        %v5218 = vunpack.c.l.b16 %v1511
        %v5219 = vunpack.c.h.b16 %v1511
        %v5220 = vunpack.c.l.b16 %v1512
        %v5221 = vunpack.c.h.b16 %v1512
        %v5222 = vunpack.c.l.b16 %v1513
        %v5223 = vunpack.c.h.b16 %v1513
        %v5224 = vunpack.c.l.b16 %v1514
        %v5225 = vunpack.c.h.b16 %v1514
        %v5226 = vunpack.c.l.b16 %v1515
        %v5227 = vunpack.c.l.b16 %v1516
        %v5228 = vunpack.c.h.b16 %v1516
        %v5229 = vunpack.c.l.b16 %v1517
        %v5230 = vunpack.c.h.b16 %v1517
        %v5231 = vunpack.c.l.b16 %v1518
        %v5232 = vunpack.c.h.b16 %v1518
        %v5233 = vunpack.c.l.b16 %v1519
        %v5234 = vunpack.c.h.b16 %v1519
        %v5235 = vunpack.c.l.b16 %v1520
        %v5236 = vunpack.c.h.b16 %v1520
        %v5237 = vunpack.c.l.b16 %v1521
        %v5238 = vunpack.c.h.b16 %v1521
        %v5239 = vunpack.c.l.b16 %v1522
        %v5240 = vunpack.c.l.b16 %v1523
        %v5241 = vunpack.c.h.b16 %v1523
        %v5242 = vunpack.c.l.b16 %v1524
        %v5243 = vunpack.c.h.b16 %v1524
        %v5244 = vunpack.c.l.b16 %v1525
        %v5245 = vunpack.c.h.b16 %v1525
        %v5246 = vunpack.c.l.b16 %v1526
        %v5247 = vunpack.c.h.b16 %v1526
        %v5248 = vunpack.c.l.b16 %v1527
        %v5249 = vunpack.c.h.b16 %v1527
        %v5250 = vunpack.c.l.b16 %v1528
        %v5251 = vunpack.c.h.b16 %v1528
        %v5252 = vunpack.c.l.b16 %v1529
        %v5253 = vunpack.c.l.b16 %v1530
        %v5254 = vunpack.c.h.b16 %v1530
        %v5255 = vunpack.c.l.b16 %v1531
        %v5256 = vunpack.c.h.b16 %v1531
        %v5257 = vunpack.c.l.b16 %v1532
        %v5258 = vunpack.c.h.b16 %v1532
        %v5259 = vunpack.c.l.b16 %v1533
        %v5260 = vunpack.c.h.b16 %v1533
        %v5261 = vunpack.c.l.b16 %v1534
        %v5262 = vunpack.c.h.b16 %v1534
        %v5263 = vunpack.c.l.b16 %v1535
        %v5264 = vunpack.c.h.b16 %v1535
        %v5265 = vunpack.c.l.b16 %v1536
        %v5266 = vunpack.c.l.b16 %v1537
        %v5267 = vunpack.c.h.b16 %v1537
        %v5268 = vunpack.c.l.b16 %v1538
        %v5269 = vunpack.c.h.b16 %v1538
        %v5270 = vunpack.c.l.b16 %v1539
        %v5271 = vunpack.c.h.b16 %v1539
        %v5272 = vunpack.c.l.b16 %v1540
        %v5273 = vunpack.c.h.b16 %v1540
        %v5274 = vunpack.c.l.b16 %v1541
        %v5275 = vunpack.c.h.b16 %v1541
        %v5276 = vunpack.c.l.b16 %v1542
        %v5277 = vunpack.c.h.b16 %v1542
        %v5278 = vunpack.c.l.b16 %v1543
        %v5279 = vunpack.c.l.b16 %v1544
        %v5280 = vunpack.c.h.b16 %v1544
        %v5281 = vunpack.c.l.b16 %v1545
        %v5282 = vunpack.c.h.b16 %v1545
        %v5283 = vunpack.c.l.b16 %v1546
        %v5284 = vunpack.c.h.b16 %v1546
        %v5285 = vunpack.c.l.b16 %v1547
        %v5286 = vunpack.c.h.b16 %v1547
        %v5287 = vunpack.c.l.b16 %v1548
        %v5288 = vunpack.c.h.b16 %v1548
        %v5289 = vunpack.c.l.b16 %v1549
        %v5290 = vunpack.c.h.b16 %v1549
        %v5291 = vunpack.c.l.b16 %v1550
        %v5292 = vunpack.c.l.b16 %v1551
        %v5293 = vunpack.c.h.b16 %v1551
        %v5294 = vunpack.c.l.b16 %v1552
        %v5295 = vunpack.c.h.b16 %v1552
        %v5296 = vunpack.c.l.b16 %v1553
        %v5297 = vunpack.c.h.b16 %v1553
        %v5298 = vunpack.c.l.b16 %v1554
        %v5299 = vunpack.c.h.b16 %v1554
        %v5300 = vunpack.c.l.b16 %v1555
        %v5301 = vunpack.c.h.b16 %v1555
        %v5302 = vunpack.c.l.b16 %v1556
        %v5303 = vunpack.c.h.b16 %v1556
        %v5304 = vunpack.c.l.b16 %v1557
        %v5305 = vunpack.c.l.b16 %v1558
        %v5306 = vunpack.c.h.b16 %v1558
        %v5307 = vunpack.c.l.b16 %v1559
        %v5308 = vunpack.c.h.b16 %v1559
        %v5309 = vunpack.c.l.b16 %v1560
        %v5310 = vunpack.c.h.b16 %v1560
        %v5311 = vunpack.c.l.b16 %v1561
        %v5312 = vunpack.c.h.b16 %v1561
        %v5313 = vunpack.c.l.b16 %v1562
        %v5314 = vunpack.c.h.b16 %v1562
        %v5315 = vunpack.c.l.b16 %v1563
        %v5316 = vunpack.c.h.b16 %v1563
        %v5317 = vunpack.c.l.b16 %v1564
        %v5318 = vunpack.c.l.b16 %v1565
        %v5319 = vunpack.c.h.b16 %v1565
        %v5320 = vunpack.c.l.b16 %v1566
        %v5321 = vunpack.c.h.b16 %v1566
        %v5322 = vunpack.c.l.b16 %v1567
        %v5323 = vunpack.c.h.b16 %v1567
        %v5324 = vunpack.c.l.b16 %v1568
        %v5325 = vunpack.c.h.b16 %v1568
        %v5326 = vunpack.c.l.b16 %v1569
        %v5327 = vunpack.c.h.b16 %v1569
        %v5328 = vunpack.c.l.b16 %v1570
        %v5329 = vunpack.c.h.b16 %v1570
        %v5330 = vunpack.c.l.b16 %v1571
        %v5331 = vunpack.c.l.b16 %v1572
        %v5332 = vunpack.c.h.b16 %v1572
        %v5333 = vunpack.c.l.b16 %v1573
        %v5334 = vunpack.c.h.b16 %v1573
        %v5335 = vunpack.c.l.b16 %v1574
        %v5336 = vunpack.c.h.b16 %v1574
        %v5337 = vunpack.c.l.b16 %v1575
        %v5338 = vunpack.c.h.b16 %v1575
        %v5339 = vunpack.c.l.b16 %v1576
        %v5340 = vunpack.c.h.b16 %v1576
        %v5341 = vunpack.c.l.b16 %v1577
        %v5342 = vunpack.c.h.b16 %v1577
        %v5343 = vunpack.c.l.b16 %v1578
        %v5344 = vunpack.c.l.b16 %v1579
        %v5345 = vunpack.c.h.b16 %v1579
        %v5346 = vunpack.c.l.b16 %v1580
        %v5347 = vunpack.c.h.b16 %v1580
        %v5348 = vunpack.c.l.b16 %v1581
        %v5349 = vunpack.c.h.b16 %v1581
        %v5350 = vunpack.c.l.b16 %v1582
        %v5351 = vunpack.c.h.b16 %v1582
        %v5352 = vunpack.c.l.b16 %v1583
        %v5353 = vunpack.c.h.b16 %v1583
        %v5354 = vunpack.c.l.b16 %v1584
        %v5355 = vunpack.c.h.b16 %v1584
        %v5356 = vunpack.c.l.b16 %v1585
        %v5357 = vunpack.c.l.b16 %v1586
        %v5358 = vunpack.c.h.b16 %v1586
        %v5359 = vunpack.c.l.b16 %v1587
        %v5360 = vunpack.c.h.b16 %v1587
        %v5361 = vunpack.c.l.b16 %v1588
        %v5362 = vunpack.c.h.b16 %v1588
        %v5363 = vunpack.c.l.b16 %v1589
        %v5364 = vunpack.c.h.b16 %v1589
        %v5365 = vunpack.c.l.b16 %v1590
        %v5366 = vunpack.c.h.b16 %v1590
        %v5367 = vunpack.c.l.b16 %v1591
        %v5368 = vunpack.c.h.b16 %v1591
        %v5369 = vunpack.c.l.b16 %v1592
        %v5370 = vunpack.c.l.b16 %v1593
        %v5371 = vunpack.c.h.b16 %v1593
        %v5372 = vunpack.c.l.b16 %v1594
        %v5373 = vunpack.c.h.b16 %v1594
        %v5374 = vunpack.c.l.b16 %v1595
        %v5375 = vunpack.c.h.b16 %v1595
        %v5376 = vunpack.c.l.b16 %v1596
        %v5377 = vunpack.c.h.b16 %v1596
        %v5378 = vunpack.c.l.b16 %v1597
        %v5379 = vunpack.c.h.b16 %v1597
        %v5380 = vunpack.c.l.b16 %v1598
        %v5381 = vunpack.c.h.b16 %v1598
        %v5382 = vunpack.c.l.b16 %v1599
        %v5383 = vunpack.c.l.b16 %v1600
        %v5384 = vunpack.c.h.b16 %v1600
        %v5385 = vunpack.c.l.b16 %v1601
        %v5386 = vunpack.c.h.b16 %v1601
        %v5387 = vunpack.c.l.b16 %v1602
        %v5388 = vunpack.c.h.b16 %v1602
        %v5389 = vunpack.c.l.b16 %v1603
        %v5390 = vunpack.c.h.b16 %v1603
        %v5391 = vunpack.c.l.b16 %v1604
        %v5392 = vunpack.c.h.b16 %v1604
        %v5393 = vunpack.c.l.b16 %v1605
        %v5394 = vunpack.c.h.b16 %v1605
        %v5395 = vunpack.c.l.b16 %v1606
        %v5396 = vunpack.c.l.b16 %v1607
        %v5397 = vunpack.c.h.b16 %v1607
        %v5398 = vunpack.c.l.b16 %v1608
        %v5399 = vunpack.c.h.b16 %v1608
        %v5400 = vunpack.c.l.b16 %v1609
        %v5401 = vunpack.c.h.b16 %v1609
        %v5402 = vunpack.c.l.b16 %v1610
        %v5403 = vunpack.c.h.b16 %v1610
        %v5404 = vunpack.c.l.b16 %v1611
        %v5405 = vunpack.c.h.b16 %v1611
        %v5406 = vunpack.c.l.b16 %v1612
        %v5407 = vunpack.c.h.b16 %v1612
        %v5408 = vunpack.c.l.b16 %v1613
        %v5409 = vunpack.c.l.b16 %v1614
        %v5410 = vunpack.c.h.b16 %v1614
        %v5411 = vunpack.c.l.b16 %v1615
        %v5412 = vunpack.c.h.b16 %v1615
        %v5413 = vunpack.c.l.b16 %v1616
        %v5414 = vunpack.c.h.b16 %v1616
        %v5415 = vunpack.c.l.b16 %v1617
        %v5416 = vunpack.c.h.b16 %v1617
        %v5417 = vunpack.c.l.b16 %v1618
        %v5418 = vunpack.c.h.b16 %v1618
        %v5419 = vunpack.c.l.b16 %v1619
        %v5420 = vunpack.c.h.b16 %v1619
        %v5421 = vunpack.c.l.b16 %v1620
        %v5422 = vunpack.c.l.b16 %v1621
        %v5423 = vunpack.c.h.b16 %v1621
        %v5424 = vunpack.c.l.b16 %v1622
        %v5425 = vunpack.c.h.b16 %v1622
        %v5426 = vunpack.c.l.b16 %v1623
        %v5427 = vunpack.c.h.b16 %v1623
        %v5428 = vunpack.c.l.b16 %v1624
        %v5429 = vunpack.c.h.b16 %v1624
        %v5430 = vunpack.c.l.b16 %v1625
        %v5431 = vunpack.c.h.b16 %v1625
        %v5432 = vunpack.c.l.b16 %v1626
        %v5433 = vunpack.c.h.b16 %v1626
        %v5434 = vunpack.c.l.b16 %v1627
        %v5435 = vunpack.c.l.b16 %v1628
        %v5436 = vunpack.c.h.b16 %v1628
        %v5437 = vunpack.c.l.b16 %v1629
        %v5438 = vunpack.c.h.b16 %v1629
        %v5439 = vunpack.c.l.b16 %v1630
        %v5440 = vunpack.c.h.b16 %v1630
        %v5441 = vunpack.c.l.b16 %v1631
        %v5442 = vunpack.c.h.b16 %v1631
        %v5443 = vunpack.c.l.b16 %v1632
        %v5444 = vunpack.c.h.b16 %v1632
        %v5445 = vunpack.c.l.b16 %v1633
        %v5446 = vunpack.c.h.b16 %v1633
        %v5447 = vunpack.c.l.b16 %v1634
        %v5448 = vunpack.c.l.b16 %v1635
        %v5449 = vunpack.c.h.b16 %v1635
        %v5450 = vunpack.c.l.b16 %v1636
        %v5451 = vunpack.c.h.b16 %v1636
        %v5452 = vunpack.c.l.b16 %v1637
        %v5453 = vunpack.c.h.b16 %v1637
        %v5454 = vunpack.c.l.b16 %v1638
        %v5455 = vunpack.c.h.b16 %v1638
        %v5456 = vunpack.c.l.b16 %v1639
        %v5457 = vunpack.c.h.b16 %v1639
        %v5458 = vunpack.c.l.b16 %v1640
        %v5459 = vunpack.c.h.b16 %v1640
        %v5460 = vunpack.c.l.b16 %v1641
        %v5461 = vunpack.c.l.b16 %v1642
        %v5462 = vunpack.c.h.b16 %v1642
        %v5463 = vunpack.c.l.b16 %v1643
        %v5464 = vunpack.c.h.b16 %v1643
        %v5465 = vunpack.c.l.b16 %v1644
        %v5466 = vunpack.c.h.b16 %v1644
        %v5467 = vunpack.c.l.b16 %v1645
        %v5468 = vunpack.c.h.b16 %v1645
        %v5469 = vunpack.c.l.b16 %v1646
        %v5470 = vunpack.c.h.b16 %v1646
        %v5471 = vunpack.c.l.b16 %v1647
        %v5472 = vunpack.c.h.b16 %v1647
        %v5473 = vunpack.c.l.b16 %v1648
        %v5474 = vunpack.c.l.b16 %v1649
        %v5475 = vunpack.c.h.b16 %v1649
        %v5476 = vunpack.c.l.b16 %v1650
        %v5477 = vunpack.c.h.b16 %v1650
        %v5478 = vunpack.c.l.b16 %v1651
        %v5479 = vunpack.c.h.b16 %v1651
        %v5480 = vunpack.c.l.b16 %v1652
        %v5481 = vunpack.c.h.b16 %v1652
        %v5482 = vunpack.c.l.b16 %v1653
        %v5483 = vunpack.c.h.b16 %v1653
        %v5484 = vunpack.c.l.b16 %v1654
        %v5485 = vunpack.c.h.b16 %v1654
        %v5486 = vunpack.c.l.b16 %v1655
        %v5487 = vunpack.c.l.b16 %v1656
        %v5488 = vunpack.c.h.b16 %v1656
        %v5489 = vunpack.c.l.b16 %v1657
        %v5490 = vunpack.c.h.b16 %v1657
        %v5491 = vunpack.c.l.b16 %v1658
        %v5492 = vunpack.c.h.b16 %v1658
        %v5493 = vunpack.c.l.b16 %v1659
        %v5494 = vunpack.c.h.b16 %v1659
        %v5495 = vunpack.c.l.b16 %v1660
        %v5496 = vunpack.c.h.b16 %v1660
        %v5497 = vunpack.c.l.b16 %v1661
        %v5498 = vunpack.c.h.b16 %v1661
        %v5499 = vunpack.c.l.b16 %v1662
        %v5500 = vunpack.c.l.b16 %v1663
        %v5501 = vunpack.c.h.b16 %v1663
        %v5502 = vunpack.c.l.b16 %v1664
        %v5503 = vunpack.c.h.b16 %v1664
        %v5504 = vunpack.c.l.b16 %v1665
        %v5505 = vunpack.c.h.b16 %v1665
        %v5506 = vunpack.c.l.b16 %v1666
        %v5507 = vunpack.c.h.b16 %v1666
        %v5508 = vunpack.c.l.b16 %v1667
        %v5509 = vunpack.c.h.b16 %v1667
        %v5510 = vunpack.c.l.b16 %v1668
        %v5511 = vunpack.c.h.b16 %v1668
        %v5512 = vunpack.c.l.b16 %v1669
        %v5513 = vunpack.c.l.b16 %v1670
        %v5514 = vunpack.c.h.b16 %v1670
        %v5515 = vunpack.c.l.b16 %v1671
        %v5516 = vunpack.c.h.b16 %v1671
        %v5517 = vunpack.c.l.b16 %v1672
        %v5518 = vunpack.c.h.b16 %v1672
        %v5519 = vunpack.c.l.b16 %v1673
        %v5520 = vunpack.c.h.b16 %v1673
        %v5521 = vunpack.c.l.b16 %v1674
        %v5522 = vunpack.c.h.b16 %v1674
        %v5523 = vunpack.c.l.b16 %v1675
        %v5524 = vunpack.c.h.b16 %v1675
        %v5525 = vunpack.c.l.b16 %v1676
        %v5526 = vunpack.c.l.b16 %v1677
        %v5527 = vunpack.c.h.b16 %v1677
        %v5528 = vunpack.c.l.b16 %v1678
        %v5529 = vunpack.c.h.b16 %v1678
        %v5530 = vunpack.c.l.b16 %v1679
        %v5531 = vunpack.c.h.b16 %v1679
        %v5532 = vunpack.c.l.b16 %v1680
        %v5533 = vunpack.c.h.b16 %v1680
        %v5534 = vunpack.c.l.b16 %v1681
        %v5535 = vunpack.c.h.b16 %v1681
        %v5536 = vunpack.c.l.b16 %v1682
        %v5537 = vunpack.c.h.b16 %v1682
        %v5538 = vunpack.c.l.b16 %v1683
        %v5539 = vunpack.c.l.b16 %v1684
        %v5540 = vunpack.c.h.b16 %v1684
        %v5541 = vunpack.c.l.b16 %v1685
        %v5542 = vunpack.c.h.b16 %v1685
        %v5543 = vunpack.c.l.b16 %v1686
        %v5544 = vunpack.c.h.b16 %v1686
        %v5545 = vunpack.c.l.b16 %v1687
        %v5546 = vunpack.c.h.b16 %v1687
        %v5547 = vunpack.c.l.b16 %v1688
        %v5548 = vunpack.c.h.b16 %v1688
        %v5549 = vunpack.c.l.b16 %v1689
        %v5550 = vunpack.c.h.b16 %v1689
        %v5551 = vunpack.c.l.b16 %v1690
        %v5552 = vunpack.c.l.b16 %v1691
        %v5553 = vunpack.c.h.b16 %v1691
        %v5554 = vunpack.c.l.b16 %v1692
        %v5555 = vunpack.c.h.b16 %v1692
        %v5556 = vunpack.c.l.b16 %v1693
        %v5557 = vunpack.c.h.b16 %v1693
        %v5558 = vunpack.c.l.b16 %v1694
        %v5559 = vunpack.c.h.b16 %v1694
        %v5560 = vunpack.c.l.b16 %v1695
        %v5561 = vunpack.c.h.b16 %v1695
        %v5562 = vunpack.c.l.b16 %v1696
        %v5563 = vunpack.c.h.b16 %v1696
        %v5564 = vunpack.c.l.b16 %v1697
        %v5565 = vunpack.c.l.b16 %v1698
        %v5566 = vunpack.c.h.b16 %v1698
        %v5567 = vunpack.c.l.b16 %v1699
        %v5568 = vunpack.c.h.b16 %v1699
        %v5569 = vunpack.c.l.b16 %v1700
        %v5570 = vunpack.c.h.b16 %v1700
        %v5571 = vunpack.c.l.b16 %v1701
        %v5572 = vunpack.c.h.b16 %v1701
        %v5573 = vunpack.c.l.b16 %v1702
        %v5574 = vunpack.c.h.b16 %v1702
        %v5575 = vunpack.c.l.b16 %v1703
        %v5576 = vunpack.c.h.b16 %v1703
        %v5577 = vunpack.c.l.b16 %v1704
        %v5578 = vunpack.c.l.b16 %v1705
        %v5579 = vunpack.c.h.b16 %v1705
        %v5580 = vunpack.c.l.b16 %v1706
        %v5581 = vunpack.c.h.b16 %v1706
        %v5582 = vunpack.c.l.b16 %v1707
        %v5583 = vunpack.c.h.b16 %v1707
        %v5584 = vunpack.c.l.b16 %v1708
        %v5585 = vunpack.c.h.b16 %v1708
        %v5586 = vunpack.c.l.b16 %v1709
        %v5587 = vunpack.c.h.b16 %v1709
        %v5588 = vunpack.c.l.b16 %v1710
        %v5589 = vunpack.c.h.b16 %v1710
        %v5590 = vunpack.c.l.b16 %v1711
        %v5591 = vunpack.c.l.b16 %v1712
        %v5592 = vunpack.c.h.b16 %v1712
        %v5593 = vunpack.c.l.b16 %v1713
        %v5594 = vunpack.c.h.b16 %v1713
        %v5595 = vunpack.c.l.b16 %v1714
        %v5596 = vunpack.c.h.b16 %v1714
        %v5597 = vunpack.c.l.b16 %v1715
        %v5598 = vunpack.c.h.b16 %v1715
        %v5599 = vunpack.c.l.b16 %v1716
        %v5600 = vunpack.c.h.b16 %v1716
        %v5601 = vunpack.c.l.b16 %v1717
        %v5602 = vunpack.c.h.b16 %v1717
        %v5603 = vunpack.c.l.b16 %v1718
        %v5604 = vunpack.c.l.b16 %v1719
        %v5605 = vunpack.c.h.b16 %v1719
        %v5606 = vunpack.c.l.b16 %v1720
        %v5607 = vunpack.c.h.b16 %v1720
        %v5608 = vunpack.c.l.b16 %v1721
        %v5609 = vunpack.c.h.b16 %v1721
        %v5610 = vunpack.c.l.b16 %v1722
        %v5611 = vunpack.c.h.b16 %v1722
        %v5612 = vunpack.c.l.b16 %v1723
        %v5613 = vunpack.c.h.b16 %v1723
        %v5614 = vunpack.c.l.b16 %v1724
        %v5615 = vunpack.c.h.b16 %v1724
        %v5616 = vunpack.c.l.b16 %v1725
        %v5617 = vunpack.c.l.b16 %v1726
        %v5618 = vunpack.c.h.b16 %v1726
        %v5619 = vunpack.c.l.b16 %v1727
        %v5620 = vunpack.c.h.b16 %v1727
        %v5621 = vunpack.c.l.b16 %v1728
        %v5622 = vunpack.c.h.b16 %v1728
        %v5623 = vunpack.c.l.b16 %v1729
        %v5624 = vunpack.c.h.b16 %v1729
        %v5625 = vunpack.c.l.b16 %v1730
        %v5626 = vunpack.c.h.b16 %v1730
        %v5627 = vunpack.c.l.b16 %v1731
        %v5628 = vunpack.c.h.b16 %v1731
        %v5629 = vunpack.c.l.b16 %v1732
        %v5630 = vunpack.c.l.b16 %v1733
        %v5631 = vunpack.c.h.b16 %v1733
        %v5632 = vunpack.c.l.b16 %v1734
        %v5633 = vunpack.c.h.b16 %v1734
        %v5634 = vunpack.c.l.b16 %v1735
        %v5635 = vunpack.c.h.b16 %v1735
        %v5636 = vunpack.c.l.b16 %v1736
        %v5637 = vunpack.c.h.b16 %v1736
        %v5638 = vunpack.c.l.b16 %v1737
        %v5639 = vunpack.c.h.b16 %v1737
        %v5640 = vunpack.c.l.b16 %v1738
        %v5641 = vunpack.c.h.b16 %v1738
        %v5642 = vunpack.c.l.b16 %v1739
        %v5643 = vunpack.c.l.b16 %v1740
        %v5644 = vunpack.c.h.b16 %v1740
        %v5645 = vunpack.c.l.b16 %v1741
        %v5646 = vunpack.c.h.b16 %v1741
        %v5647 = vunpack.c.l.b16 %v1742
        %v5648 = vunpack.c.h.b16 %v1742
        %v5649 = vunpack.c.l.b16 %v1743
        %v5650 = vunpack.c.h.b16 %v1743
        %v5651 = vunpack.c.l.b16 %v1744
        %v5652 = vunpack.c.h.b16 %v1744
        %v5653 = vunpack.c.l.b16 %v1745
        %v5654 = vunpack.c.h.b16 %v1745
        %v5655 = vunpack.c.l.b16 %v1746
        %v5656 = vunpack.c.l.b16 %v1747
        %v5657 = vunpack.c.h.b16 %v1747
        %v5658 = vunpack.c.l.b16 %v1748
        %v5659 = vunpack.c.h.b16 %v1748
        %v5660 = vunpack.c.l.b16 %v1749
        %v5661 = vunpack.c.h.b16 %v1749
        %v5662 = vunpack.c.l.b16 %v1750
        %v5663 = vunpack.c.h.b16 %v1750
        %v5664 = vunpack.c.l.b16 %v1751
        %v5665 = vunpack.c.h.b16 %v1751
        %v5666 = vunpack.c.l.b16 %v1752
        %v5667 = vunpack.c.h.b16 %v1752
        %v5668 = vunpack.c.l.b16 %v1753
        %v5669 = vunpack.c.l.b16 %v1754
        %v5670 = vunpack.c.h.b16 %v1754
        %v5671 = vunpack.c.l.b16 %v1755
        %v5672 = vunpack.c.h.b16 %v1755
        %v5673 = vunpack.c.l.b16 %v1756
        %v5674 = vunpack.c.h.b16 %v1756
        %v5675 = vunpack.c.l.b16 %v1757
        %v5676 = vunpack.c.h.b16 %v1757
        %v5677 = vunpack.c.l.b16 %v1758
        %v5678 = vunpack.c.h.b16 %v1758
        %v5679 = vunpack.c.l.b16 %v1759
        %v5680 = vunpack.c.h.b16 %v1759
        %v5681 = vunpack.c.l.b16 %v1760
        %v5682 = vunpack.c.l.b16 %v1761
        %v5683 = vunpack.c.h.b16 %v1761
        %v5684 = vunpack.c.l.b16 %v1762
        %v5685 = vunpack.c.h.b16 %v1762
        %v5686 = vunpack.c.l.b16 %v1763
        %v5687 = vunpack.c.h.b16 %v1763
        %v5688 = vunpack.c.l.b16 %v1764
        %v5689 = vunpack.c.h.b16 %v1764
        %v5690 = vunpack.c.l.b16 %v1765
        %v5691 = vunpack.c.h.b16 %v1765
        %v5692 = vunpack.c.l.b16 %v1766
        %v5693 = vunpack.c.h.b16 %v1766
        %v5694 = vunpack.c.l.b16 %v1767
        %v5695 = vunpack.c.l.b16 %v1768
        %v5696 = vunpack.c.h.b16 %v1768
        %v5697 = vunpack.c.l.b16 %v1769
        %v5698 = vunpack.c.h.b16 %v1769
        %v5699 = vunpack.c.l.b16 %v1770
        %v5700 = vunpack.c.h.b16 %v1770
        %v5701 = vunpack.c.l.b16 %v1771
        %v5702 = vunpack.c.h.b16 %v1771
        %v5703 = vunpack.c.l.b16 %v1772
        %v5704 = vunpack.c.h.b16 %v1772
        %v5705 = vunpack.c.l.b16 %v1773
        %v5706 = vunpack.c.h.b16 %v1773
        %v5707 = vunpack.c.l.b16 %v1774
        %v5708 = vunpack.c.l.b16 %v1775
        %v5709 = vunpack.c.h.b16 %v1775
        %v5710 = vunpack.c.l.b16 %v1776
        %v5711 = vunpack.c.h.b16 %v1776
        %v5712 = vunpack.c.l.b16 %v1777
        %v5713 = vunpack.c.h.b16 %v1777
        %v5714 = vunpack.c.l.b16 %v1778
        %v5715 = vunpack.c.h.b16 %v1778
        %v5716 = vunpack.c.l.b16 %v1779
        %v5717 = vunpack.c.h.b16 %v1779
        %v5718 = vunpack.c.l.b16 %v1780
        %v5719 = vunpack.c.h.b16 %v1780
        %v5720 = vunpack.c.l.b16 %v1781
        %v5721 = vunpack.c.l.b16 %v1782
        %v5722 = vunpack.c.h.b16 %v1782
        %v5723 = vunpack.c.l.b16 %v1783
        %v5724 = vunpack.c.h.b16 %v1783
        %v5725 = vunpack.c.l.b16 %v1784
        %v5726 = vunpack.c.h.b16 %v1784
        %v5727 = vunpack.c.l.b16 %v1785
        %v5728 = vunpack.c.h.b16 %v1785
        %v5729 = vunpack.c.l.b16 %v1786
        %v5730 = vunpack.c.h.b16 %v1786
        %v5731 = vunpack.c.l.b16 %v1787
        %v5732 = vunpack.c.h.b16 %v1787
        %v5733 = vunpack.c.l.b16 %v1788
        %v5734 = vunpack.c.l.b16 %v1789
        %v5735 = vunpack.c.h.b16 %v1789
        %v5736 = vunpack.c.l.b16 %v1790
        %v5737 = vunpack.c.h.b16 %v1790
        %v5738 = vunpack.c.l.b16 %v1791
        %v5739 = vunpack.c.h.b16 %v1791
        %v5740 = vunpack.c.l.b16 %v1792
        %v5741 = vunpack.c.h.b16 %v1792
        %v5742 = vunpack.c.l.b16 %v1793
        %v5743 = vunpack.c.h.b16 %v1793
        %v5744 = vunpack.c.l.b16 %v1794
        %v5745 = vunpack.c.h.b16 %v1794
        %v5746 = vunpack.c.l.b16 %v1795
        %v5747 = vunpack.c.l.b16 %v1796
        %v5748 = vunpack.c.h.b16 %v1796
        %v5749 = vunpack.c.l.b16 %v1797
        %v5750 = vunpack.c.h.b16 %v1797
        %v5751 = vunpack.c.l.b16 %v1798
        %v5752 = vunpack.c.h.b16 %v1798
        %v5753 = vunpack.c.l.b16 %v1799
        %v5754 = vunpack.c.h.b16 %v1799
        %v5755 = vunpack.c.l.b16 %v1800
        %v5756 = vunpack.c.h.b16 %v1800
        %v5757 = vunpack.c.l.b16 %v1801
        %v5758 = vunpack.c.h.b16 %v1801
        %v5759 = vunpack.c.l.b16 %v1802
        %v5760 = vunpack.c.l.b16 %v1803
        %v5761 = vunpack.c.h.b16 %v1803
        %v5762 = vunpack.c.l.b16 %v1804
        %v5763 = vunpack.c.h.b16 %v1804
        %v5764 = vunpack.c.l.b16 %v1805
        %v5765 = vunpack.c.h.b16 %v1805
        %v5766 = vunpack.c.l.b16 %v1806
        %v5767 = vunpack.c.h.b16 %v1806
        %v5768 = vunpack.c.l.b16 %v1807
        %v5769 = vunpack.c.h.b16 %v1807
        %v5770 = vunpack.c.l.b16 %v1808
        %v5771 = vunpack.c.h.b16 %v1808
        %v5772 = vunpack.c.l.b16 %v1809
        %v5773 = vunpack.c.l.b16 %v1810
        %v5774 = vunpack.c.h.b16 %v1810
        %v5775 = vunpack.c.l.b16 %v1811
        %v5776 = vunpack.c.h.b16 %v1811
        %v5777 = vunpack.c.l.b16 %v1812
        %v5778 = vunpack.c.h.b16 %v1812
        %v5779 = vunpack.c.l.b16 %v1813
        %v5780 = vunpack.c.h.b16 %v1813
        %v5781 = vunpack.c.l.b16 %v1814
        %v5782 = vunpack.c.h.b16 %v1814
        %v5783 = vunpack.c.l.b16 %v1815
        %v5784 = vunpack.c.h.b16 %v1815
        %v5785 = vunpack.c.l.b16 %v1816
        %v5786 = vpack.c.b16 %v3303, %v3290
        %v5787 = vpack.c.b16 %v3304, %v3291
        %v5788 = vpack.c.b16 %v3305, %v3292
        %v5789 = vpack.c.b16 %v3306, %v3293
        %v5790 = vpack.c.b16 %v3307, %v3294
        %v5791 = vpack.c.b16 %v3308, %v3295
        %v5792 = vpack.c.b16 %v3309, %v3296
        %v5793 = vpack.c.b16 %v3310, %v3297
        %v5794 = vpack.c.b16 %v3311, %v3298
        %v5795 = vpack.c.b16 %v3312, %v3299
        %v5796 = vpack.c.b16 %v3313, %v3300
        %v5797 = vpack.c.b16 %v3314, %v3301
        %v5798 = vpack.c.b16 %v3315, %v3302
        %v5799 = vpack.c.b16 %v3329, %v3316
        %v5800 = vpack.c.b16 %v3330, %v3317
        %v5801 = vpack.c.b16 %v3331, %v3318
        %v5802 = vpack.c.b16 %v3332, %v3319
        %v5803 = vpack.c.b16 %v3333, %v3320
        %v5804 = vpack.c.b16 %v3334, %v3321
        %v5805 = vpack.c.b16 %v3335, %v3322
        %v5806 = vpack.c.b16 %v3336, %v3323
        %v5807 = vpack.c.b16 %v3337, %v3324
        %v5808 = vpack.c.b16 %v3338, %v3325
        %v5809 = vpack.c.b16 %v3339, %v3326
        %v5810 = vpack.c.b16 %v3340, %v3327
        %v5811 = vpack.c.b16 %v3341, %v3328
        %v5812 = vpack.c.b16 %v3355, %v3342
        %v5813 = vpack.c.b16 %v3356, %v3343
        %v5814 = vpack.c.b16 %v3357, %v3344
        %v5815 = vpack.c.b16 %v3358, %v3345
        %v5816 = vpack.c.b16 %v3359, %v3346
        %v5817 = vpack.c.b16 %v3360, %v3347
        %v5818 = vpack.c.b16 %v3361, %v3348
        %v5819 = vpack.c.b16 %v3362, %v3349
        %v5820 = vpack.c.b16 %v3363, %v3350
        %v5821 = vpack.c.b16 %v3364, %v3351
        %v5822 = vpack.c.b16 %v3365, %v3352
        %v5823 = vpack.c.b16 %v3366, %v3353
        %v5824 = vpack.c.b16 %v3367, %v3354
        %v5825 = vpack.c.b16 %v3381, %v3368
        %v5826 = vpack.c.b16 %v3382, %v3369
        %v5827 = vpack.c.b16 %v3383, %v3370
        %v5828 = vpack.c.b16 %v3384, %v3371
        %v5829 = vpack.c.b16 %v3385, %v3372
        %v5830 = vpack.c.b16 %v3386, %v3373
        %v5831 = vpack.c.b16 %v3387, %v3374
        %v5832 = vpack.c.b16 %v3388, %v3375
        %v5833 = vpack.c.b16 %v3389, %v3376
        %v5834 = vpack.c.b16 %v3390, %v3377
        %v5835 = vpack.c.b16 %v3391, %v3378
        %v5836 = vpack.c.b16 %v3392, %v3379
        %v5837 = vpack.c.b16 %v3393, %v3380
        %v5838 = vpack.c.b16 %v3407, %v3394
        %v5839 = vpack.c.b16 %v3408, %v3395
        %v5840 = vpack.c.b16 %v3409, %v3396
        %v5841 = vpack.c.b16 %v3410, %v3397
        %v5842 = vpack.c.b16 %v3411, %v3398
        %v5843 = vpack.c.b16 %v3412, %v3399
        %v5844 = vpack.c.b16 %v3413, %v3400
        %v5845 = vpack.c.b16 %v3414, %v3401
        %v5846 = vpack.c.b16 %v3415, %v3402
        %v5847 = vpack.c.b16 %v3416, %v3403
        %v5848 = vpack.c.b16 %v3417, %v3404
        %v5849 = vpack.c.b16 %v3418, %v3405
        %v5850 = vpack.c.b16 %v3419, %v3406
        %v5851 = vpack.c.b16 %v3433, %v3420
        %v5852 = vpack.c.b16 %v3434, %v3421
        %v5853 = vpack.c.b16 %v3435, %v3422
        %v5854 = vpack.c.b16 %v3436, %v3423
        %v5855 = vpack.c.b16 %v3437, %v3424
        %v5856 = vpack.c.b16 %v3438, %v3425
        %v5857 = vpack.c.b16 %v3439, %v3426
        %v5858 = vpack.c.b16 %v3440, %v3427
        %v5859 = vpack.c.b16 %v3441, %v3428
        %v5860 = vpack.c.b16 %v3442, %v3429
        %v5861 = vpack.c.b16 %v3443, %v3430
        %v5862 = vpack.c.b16 %v3444, %v3431
        %v5863 = vpack.c.b16 %v3445, %v3432
        %v5864 = vpack.c.b16 %v3459, %v3446
        %v5865 = vpack.c.b16 %v3460, %v3447
        %v5866 = vpack.c.b16 %v3461, %v3448
        %v5867 = vpack.c.b16 %v3462, %v3449
        %v5868 = vpack.c.b16 %v3463, %v3450
        %v5869 = vpack.c.b16 %v3464, %v3451
        %v5870 = vpack.c.b16 %v3465, %v3452
        %v5871 = vpack.c.b16 %v3466, %v3453
        %v5872 = vpack.c.b16 %v3467, %v3454
        %v5873 = vpack.c.b16 %v3468, %v3455
        %v5874 = vpack.c.b16 %v3469, %v3456
        %v5875 = vpack.c.b16 %v3470, %v3457
        %v5876 = vpack.c.b16 %v3471, %v3458
        %v5877 = vpack.c.b16 %v3485, %v3472
        %v5878 = vpack.c.b16 %v3486, %v3473
        %v5879 = vpack.c.b16 %v3487, %v3474
        %v5880 = vpack.c.b16 %v3488, %v3475
        %v5881 = vpack.c.b16 %v3489, %v3476
        %v5882 = vpack.c.b16 %v3490, %v3477
        %v5883 = vpack.c.b16 %v3491, %v3478
        %v5884 = vpack.c.b16 %v3492, %v3479
        %v5885 = vpack.c.b16 %v3493, %v3480
        %v5886 = vpack.c.b16 %v3494, %v3481
        %v5887 = vpack.c.b16 %v3495, %v3482
        %v5888 = vpack.c.b16 %v3496, %v3483
        %v5889 = vpack.c.b16 %v3497, %v3484
        %v5890 = vpack.c.b16 %v3511, %v3498
        %v5891 = vpack.c.b16 %v3512, %v3499
        %v5892 = vpack.c.b16 %v3513, %v3500
        %v5893 = vpack.c.b16 %v3514, %v3501
        %v5894 = vpack.c.b16 %v3515, %v3502
        %v5895 = vpack.c.b16 %v3516, %v3503
        %v5896 = vpack.c.b16 %v3517, %v3504
        %v5897 = vpack.c.b16 %v3518, %v3505
        %v5898 = vpack.c.b16 %v3519, %v3506
        %v5899 = vpack.c.b16 %v3520, %v3507
        %v5900 = vpack.c.b16 %v3521, %v3508
        %v5901 = vpack.c.b16 %v3522, %v3509
        %v5902 = vpack.c.b16 %v3523, %v3510
        %v5903 = vpack.c.b16 %v3537, %v3524
        %v5904 = vpack.c.b16 %v3538, %v3525
        %v5905 = vpack.c.b16 %v3539, %v3526
        %v5906 = vpack.c.b16 %v3540, %v3527
        %v5907 = vpack.c.b16 %v3541, %v3528
        %v5908 = vpack.c.b16 %v3542, %v3529
        %v5909 = vpack.c.b16 %v3543, %v3530
        %v5910 = vpack.c.b16 %v3544, %v3531
        %v5911 = vpack.c.b16 %v3545, %v3532
        %v5912 = vpack.c.b16 %v3546, %v3533
        %v5913 = vpack.c.b16 %v3547, %v3534
        %v5914 = vpack.c.b16 %v3548, %v3535
        %v5915 = vpack.c.b16 %v3549, %v3536
        %v5916 = vpack.c.b16 %v3563, %v3550
        %v5917 = vpack.c.b16 %v3564, %v3551
        %v5918 = vpack.c.b16 %v3565, %v3552
        %v5919 = vpack.c.b16 %v3566, %v3553
        %v5920 = vpack.c.b16 %v3567, %v3554
        %v5921 = vpack.c.b16 %v3568, %v3555
        %v5922 = vpack.c.b16 %v3569, %v3556
        %v5923 = vpack.c.b16 %v3570, %v3557
        %v5924 = vpack.c.b16 %v3571, %v3558
        %v5925 = vpack.c.b16 %v3572, %v3559
        %v5926 = vpack.c.b16 %v3573, %v3560
        %v5927 = vpack.c.b16 %v3574, %v3561
        %v5928 = vpack.c.b16 %v3575, %v3562
        %v5929 = vpack.c.b16 %v3589, %v3576
        %v5930 = vpack.c.b16 %v3590, %v3577
        %v5931 = vpack.c.b16 %v3591, %v3578
        %v5932 = vpack.c.b16 %v3592, %v3579
        %v5933 = vpack.c.b16 %v3593, %v3580
        %v5934 = vpack.c.b16 %v3594, %v3581
        %v5935 = vpack.c.b16 %v3595, %v3582
        %v5936 = vpack.c.b16 %v3596, %v3583
        %v5937 = vpack.c.b16 %v3597, %v3584
        %v5938 = vpack.c.b16 %v3598, %v3585
        %v5939 = vpack.c.b16 %v3599, %v3586
        %v5940 = vpack.c.b16 %v3600, %v3587
        %v5941 = vpack.c.b16 %v3601, %v3588
        %v5942 = vpack.c.b16 %v3615, %v3602
        %v5943 = vpack.c.b16 %v3616, %v3603
        %v5944 = vpack.c.b16 %v3617, %v3604
        %v5945 = vpack.c.b16 %v3618, %v3605
        %v5946 = vpack.c.b16 %v3619, %v3606
        %v5947 = vpack.c.b16 %v3620, %v3607
        %v5948 = vpack.c.b16 %v3621, %v3608
        %v5949 = vpack.c.b16 %v3622, %v3609
        %v5950 = vpack.c.b16 %v3623, %v3610
        %v5951 = vpack.c.b16 %v3624, %v3611
        %v5952 = vpack.c.b16 %v3625, %v3612
        %v5953 = vpack.c.b16 %v3626, %v3613
        %v5954 = vpack.c.b16 %v3627, %v3614
        %v5955 = vpack.c.b16 %v3641, %v3628
        %v5956 = vpack.c.b16 %v3642, %v3629
        %v5957 = vpack.c.b16 %v3643, %v3630
        %v5958 = vpack.c.b16 %v3644, %v3631
        %v5959 = vpack.c.b16 %v3645, %v3632
        %v5960 = vpack.c.b16 %v3646, %v3633
        %v5961 = vpack.c.b16 %v3647, %v3634
        %v5962 = vpack.c.b16 %v3648, %v3635
        %v5963 = vpack.c.b16 %v3649, %v3636
        %v5964 = vpack.c.b16 %v3650, %v3637
        %v5965 = vpack.c.b16 %v3651, %v3638
        %v5966 = vpack.c.b16 %v3652, %v3639
        %v5967 = vpack.c.b16 %v3653, %v3640
        %v5968 = vpack.c.b16 %v3667, %v3654
        %v5969 = vpack.c.b16 %v3668, %v3655
        %v5970 = vpack.c.b16 %v3669, %v3656
        %v5971 = vpack.c.b16 %v3670, %v3657
        %v5972 = vpack.c.b16 %v3671, %v3658
        %v5973 = vpack.c.b16 %v3672, %v3659
        %v5974 = vpack.c.b16 %v3673, %v3660
        %v5975 = vpack.c.b16 %v3674, %v3661
        %v5976 = vpack.c.b16 %v3675, %v3662
        %v5977 = vpack.c.b16 %v3676, %v3663
        %v5978 = vpack.c.b16 %v3677, %v3664
        %v5979 = vpack.c.b16 %v3678, %v3665
        %v5980 = vpack.c.b16 %v3679, %v3666
        %v5981 = vpack.c.b16 %v3693, %v3680
        %v5982 = vpack.c.b16 %v3694, %v3681
        %v5983 = vpack.c.b16 %v3695, %v3682
        %v5984 = vpack.c.b16 %v3696, %v3683
        %v5985 = vpack.c.b16 %v3697, %v3684
        %v5986 = vpack.c.b16 %v3698, %v3685
        %v5987 = vpack.c.b16 %v3699, %v3686
        %v5988 = vpack.c.b16 %v3700, %v3687
        %v5989 = vpack.c.b16 %v3701, %v3688
        %v5990 = vpack.c.b16 %v3702, %v3689
        %v5991 = vpack.c.b16 %v3703, %v3690
        %v5992 = vpack.c.b16 %v3704, %v3691
        %v5993 = vpack.c.b16 %v3705, %v3692
        %v5994 = vpack.c.b16 %v3719, %v3706
        %v5995 = vpack.c.b16 %v3720, %v3707
        %v5996 = vpack.c.b16 %v3721, %v3708
        %v5997 = vpack.c.b16 %v3722, %v3709
        %v5998 = vpack.c.b16 %v3723, %v3710
        %v5999 = vpack.c.b16 %v3724, %v3711
        %v6000 = vpack.c.b16 %v3725, %v3712
        %v6001 = vpack.c.b16 %v3726, %v3713
        %v6002 = vpack.c.b16 %v3727, %v3714
        %v6003 = vpack.c.b16 %v3728, %v3715
        %v6004 = vpack.c.b16 %v3729, %v3716
        %v6005 = vpack.c.b16 %v3730, %v3717
        %v6006 = vpack.c.b16 %v3731, %v3718
        %v6007 = vpack.c.b16 %v3745, %v3732
        %v6008 = vpack.c.b16 %v3746, %v3733
        %v6009 = vpack.c.b16 %v3747, %v3734
        %v6010 = vpack.c.b16 %v3748, %v3735
        %v6011 = vpack.c.b16 %v3749, %v3736
        %v6012 = vpack.c.b16 %v3750, %v3737
        %v6013 = vpack.c.b16 %v3751, %v3738
        %v6014 = vpack.c.b16 %v3752, %v3739
        %v6015 = vpack.c.b16 %v3753, %v3740
        %v6016 = vpack.c.b16 %v3754, %v3741
        %v6017 = vpack.c.b16 %v3755, %v3742
        %v6018 = vpack.c.b16 %v3756, %v3743
        %v6019 = vpack.c.b16 %v3757, %v3744
        %v6020 = vpack.c.b16 %v3771, %v3758
        %v6021 = vpack.c.b16 %v3772, %v3759
        %v6022 = vpack.c.b16 %v3773, %v3760
        %v6023 = vpack.c.b16 %v3774, %v3761
        %v6024 = vpack.c.b16 %v3775, %v3762
        %v6025 = vpack.c.b16 %v3776, %v3763
        %v6026 = vpack.c.b16 %v3777, %v3764
        %v6027 = vpack.c.b16 %v3778, %v3765
        %v6028 = vpack.c.b16 %v3779, %v3766
        %v6029 = vpack.c.b16 %v3780, %v3767
        %v6030 = vpack.c.b16 %v3781, %v3768
        %v6031 = vpack.c.b16 %v3782, %v3769
        %v6032 = vpack.c.b16 %v3783, %v3770
        %v6033 = vpack.c.b16 %v3797, %v3784
        %v6034 = vpack.c.b16 %v3798, %v3785
        %v6035 = vpack.c.b16 %v3799, %v3786
        %v6036 = vpack.c.b16 %v3800, %v3787
        %v6037 = vpack.c.b16 %v3801, %v3788
        %v6038 = vpack.c.b16 %v3802, %v3789
        %v6039 = vpack.c.b16 %v3803, %v3790
        %v6040 = vpack.c.b16 %v3804, %v3791
        %v6041 = vpack.c.b16 %v3805, %v3792
        %v6042 = vpack.c.b16 %v3806, %v3793
        %v6043 = vpack.c.b16 %v3807, %v3794
        %v6044 = vpack.c.b16 %v3808, %v3795
        %v6045 = vpack.c.b16 %v3809, %v3796
        %v6046 = vpack.c.b16 %v3823, %v3810
        %v6047 = vpack.c.b16 %v3824, %v3811
        %v6048 = vpack.c.b16 %v3825, %v3812
        %v6049 = vpack.c.b16 %v3826, %v3813
        %v6050 = vpack.c.b16 %v3827, %v3814
        %v6051 = vpack.c.b16 %v3828, %v3815
        %v6052 = vpack.c.b16 %v3829, %v3816
        %v6053 = vpack.c.b16 %v3830, %v3817
        %v6054 = vpack.c.b16 %v3831, %v3818
        %v6055 = vpack.c.b16 %v3832, %v3819
        %v6056 = vpack.c.b16 %v3833, %v3820
        %v6057 = vpack.c.b16 %v3834, %v3821
        %v6058 = vpack.c.b16 %v3835, %v3822
        %v6059 = vpack.c.b16 %v3849, %v3836
        %v6060 = vpack.c.b16 %v3850, %v3837
        %v6061 = vpack.c.b16 %v3851, %v3838
        %v6062 = vpack.c.b16 %v3852, %v3839
        %v6063 = vpack.c.b16 %v3853, %v3840
        %v6064 = vpack.c.b16 %v3854, %v3841
        %v6065 = vpack.c.b16 %v3855, %v3842
        %v6066 = vpack.c.b16 %v3856, %v3843
        %v6067 = vpack.c.b16 %v3857, %v3844
        %v6068 = vpack.c.b16 %v3858, %v3845
        %v6069 = vpack.c.b16 %v3859, %v3846
        %v6070 = vpack.c.b16 %v3860, %v3847
        %v6071 = vpack.c.b16 %v3861, %v3848
        %v6072 = vpack.c.b16 %v3875, %v3862
        %v6073 = vpack.c.b16 %v3876, %v3863
        %v6074 = vpack.c.b16 %v3877, %v3864
        %v6075 = vpack.c.b16 %v3878, %v3865
        %v6076 = vpack.c.b16 %v3879, %v3866
        %v6077 = vpack.c.b16 %v3880, %v3867
        %v6078 = vpack.c.b16 %v3881, %v3868
        %v6079 = vpack.c.b16 %v3882, %v3869
        %v6080 = vpack.c.b16 %v3883, %v3870
        %v6081 = vpack.c.b16 %v3884, %v3871
        %v6082 = vpack.c.b16 %v3885, %v3872
        %v6083 = vpack.c.b16 %v3886, %v3873
        %v6084 = vpack.c.b16 %v3887, %v3874
        %v6085 = vpack.c.b16 %v3901, %v3888
        %v6086 = vpack.c.b16 %v3902, %v3889
        %v6087 = vpack.c.b16 %v3903, %v3890
        %v6088 = vpack.c.b16 %v3904, %v3891
        %v6089 = vpack.c.b16 %v3905, %v3892
        %v6090 = vpack.c.b16 %v3906, %v3893
        %v6091 = vpack.c.b16 %v3907, %v3894
        %v6092 = vpack.c.b16 %v3908, %v3895
        %v6093 = vpack.c.b16 %v3909, %v3896
        %v6094 = vpack.c.b16 %v3910, %v3897
        %v6095 = vpack.c.b16 %v3911, %v3898
        %v6096 = vpack.c.b16 %v3912, %v3899
        %v6097 = vpack.c.b16 %v3913, %v3900
        %v6098 = vpack.c.b16 %v3927, %v3914
        %v6099 = vpack.c.b16 %v3928, %v3915
        %v6100 = vpack.c.b16 %v3929, %v3916
        %v6101 = vpack.c.b16 %v3930, %v3917
        %v6102 = vpack.c.b16 %v3931, %v3918
        %v6103 = vpack.c.b16 %v3932, %v3919
        %v6104 = vpack.c.b16 %v3933, %v3920
        %v6105 = vpack.c.b16 %v3934, %v3921
        %v6106 = vpack.c.b16 %v3935, %v3922
        %v6107 = vpack.c.b16 %v3936, %v3923
        %v6108 = vpack.c.b16 %v3937, %v3924
        %v6109 = vpack.c.b16 %v3938, %v3925
        %v6110 = vpack.c.b16 %v3939, %v3926
        %v6111 = vpack.c.b16 %v3953, %v3940
        %v6112 = vpack.c.b16 %v3954, %v3941
        %v6113 = vpack.c.b16 %v3955, %v3942
        %v6114 = vpack.c.b16 %v3956, %v3943
        %v6115 = vpack.c.b16 %v3957, %v3944
        %v6116 = vpack.c.b16 %v3958, %v3945
        %v6117 = vpack.c.b16 %v3959, %v3946
        %v6118 = vpack.c.b16 %v3960, %v3947
        %v6119 = vpack.c.b16 %v3961, %v3948
        %v6120 = vpack.c.b16 %v3962, %v3949
        %v6121 = vpack.c.b16 %v3963, %v3950
        %v6122 = vpack.c.b16 %v3964, %v3951
        %v6123 = vpack.c.b16 %v3965, %v3952
        %v6124 = vpack.c.b16 %v3979, %v3966
        %v6125 = vpack.c.b16 %v3980, %v3967
        %v6126 = vpack.c.b16 %v3981, %v3968
        %v6127 = vpack.c.b16 %v3982, %v3969
        %v6128 = vpack.c.b16 %v3983, %v3970
        %v6129 = vpack.c.b16 %v3984, %v3971
        %v6130 = vpack.c.b16 %v3985, %v3972
        %v6131 = vpack.c.b16 %v3986, %v3973
        %v6132 = vpack.c.b16 %v3987, %v3974
        %v6133 = vpack.c.b16 %v3988, %v3975
        %v6134 = vpack.c.b16 %v3989, %v3976
        %v6135 = vpack.c.b16 %v3990, %v3977
        %v6136 = vpack.c.b16 %v3991, %v3978
        %v6137 = vpack.c.b16 %v4005, %v3992
        %v6138 = vpack.c.b16 %v4006, %v3993
        %v6139 = vpack.c.b16 %v4007, %v3994
        %v6140 = vpack.c.b16 %v4008, %v3995
        %v6141 = vpack.c.b16 %v4009, %v3996
        %v6142 = vpack.c.b16 %v4010, %v3997
        %v6143 = vpack.c.b16 %v4011, %v3998
        %v6144 = vpack.c.b16 %v4012, %v3999
        %v6145 = vpack.c.b16 %v4013, %v4000
        %v6146 = vpack.c.b16 %v4014, %v4001
        %v6147 = vpack.c.b16 %v4015, %v4002
        %v6148 = vpack.c.b16 %v4016, %v4003
        %v6149 = vpack.c.b16 %v4017, %v4004
        %v6150 = vpack.c.b16 %v4031, %v4018
        %v6151 = vpack.c.b16 %v4032, %v4019
        %v6152 = vpack.c.b16 %v4033, %v4020
        %v6153 = vpack.c.b16 %v4034, %v4021
        %v6154 = vpack.c.b16 %v4035, %v4022
        %v6155 = vpack.c.b16 %v4036, %v4023
        %v6156 = vpack.c.b16 %v4037, %v4024
        %v6157 = vpack.c.b16 %v4038, %v4025
        %v6158 = vpack.c.b16 %v4039, %v4026
        %v6159 = vpack.c.b16 %v4040, %v4027
        %v6160 = vpack.c.b16 %v4041, %v4028
        %v6161 = vpack.c.b16 %v4042, %v4029
        %v6162 = vpack.c.b16 %v4043, %v4030
        %v6163 = vpack.c.b16 %v4057, %v4044
        %v6164 = vpack.c.b16 %v4058, %v4045
        %v6165 = vpack.c.b16 %v4059, %v4046
        %v6166 = vpack.c.b16 %v4060, %v4047
        %v6167 = vpack.c.b16 %v4061, %v4048
        %v6168 = vpack.c.b16 %v4062, %v4049
        %v6169 = vpack.c.b16 %v4063, %v4050
        %v6170 = vpack.c.b16 %v4064, %v4051
        %v6171 = vpack.c.b16 %v4065, %v4052
        %v6172 = vpack.c.b16 %v4066, %v4053
        %v6173 = vpack.c.b16 %v4067, %v4054
        %v6174 = vpack.c.b16 %v4068, %v4055
        %v6175 = vpack.c.b16 %v4069, %v4056
        %v6176 = vpack.c.b16 %v4083, %v4070
        %v6177 = vpack.c.b16 %v4084, %v4071
        %v6178 = vpack.c.b16 %v4085, %v4072
        %v6179 = vpack.c.b16 %v4086, %v4073
        %v6180 = vpack.c.b16 %v4087, %v4074
        %v6181 = vpack.c.b16 %v4088, %v4075
        %v6182 = vpack.c.b16 %v4089, %v4076
        %v6183 = vpack.c.b16 %v4090, %v4077
        %v6184 = vpack.c.b16 %v4091, %v4078
        %v6185 = vpack.c.b16 %v4092, %v4079
        %v6186 = vpack.c.b16 %v4093, %v4080
        %v6187 = vpack.c.b16 %v4094, %v4081
        %v6188 = vpack.c.b16 %v4095, %v4082
        %v6189 = vpack.c.b16 %v4109, %v4096
        %v6190 = vpack.c.b16 %v4110, %v4097
        %v6191 = vpack.c.b16 %v4111, %v4098
        %v6192 = vpack.c.b16 %v4112, %v4099
        %v6193 = vpack.c.b16 %v4113, %v4100
        %v6194 = vpack.c.b16 %v4114, %v4101
        %v6195 = vpack.c.b16 %v4115, %v4102
        %v6196 = vpack.c.b16 %v4116, %v4103
        %v6197 = vpack.c.b16 %v4117, %v4104
        %v6198 = vpack.c.b16 %v4118, %v4105
        %v6199 = vpack.c.b16 %v4119, %v4106
        %v6200 = vpack.c.b16 %v4120, %v4107
        %v6201 = vpack.c.b16 %v4121, %v4108
        %v6202 = vpack.c.b16 %v4135, %v4122
        %v6203 = vpack.c.b16 %v4136, %v4123
        %v6204 = vpack.c.b16 %v4137, %v4124
        %v6205 = vpack.c.b16 %v4138, %v4125
        %v6206 = vpack.c.b16 %v4139, %v4126
        %v6207 = vpack.c.b16 %v4140, %v4127
        %v6208 = vpack.c.b16 %v4141, %v4128
        %v6209 = vpack.c.b16 %v4142, %v4129
        %v6210 = vpack.c.b16 %v4143, %v4130
        %v6211 = vpack.c.b16 %v4144, %v4131
        %v6212 = vpack.c.b16 %v4145, %v4132
        %v6213 = vpack.c.b16 %v4146, %v4133
        %v6214 = vpack.c.b16 %v4147, %v4134
        %v6215 = vpack.c.b16 %v4161, %v4148
        %v6216 = vpack.c.b16 %v4162, %v4149
        %v6217 = vpack.c.b16 %v4163, %v4150
        %v6218 = vpack.c.b16 %v4164, %v4151
        %v6219 = vpack.c.b16 %v4165, %v4152
        %v6220 = vpack.c.b16 %v4166, %v4153
        %v6221 = vpack.c.b16 %v4167, %v4154
        %v6222 = vpack.c.b16 %v4168, %v4155
        %v6223 = vpack.c.b16 %v4169, %v4156
        %v6224 = vpack.c.b16 %v4170, %v4157
        %v6225 = vpack.c.b16 %v4171, %v4158
        %v6226 = vpack.c.b16 %v4172, %v4159
        %v6227 = vpack.c.b16 %v4173, %v4160
        %v6228 = vpack.c.b16 %v4187, %v4174
        %v6229 = vpack.c.b16 %v4188, %v4175
        %v6230 = vpack.c.b16 %v4189, %v4176
        %v6231 = vpack.c.b16 %v4190, %v4177
        %v6232 = vpack.c.b16 %v4191, %v4178
        %v6233 = vpack.c.b16 %v4192, %v4179
        %v6234 = vpack.c.b16 %v4193, %v4180
        %v6235 = vpack.c.b16 %v4194, %v4181
        %v6236 = vpack.c.b16 %v4195, %v4182
        %v6237 = vpack.c.b16 %v4196, %v4183
        %v6238 = vpack.c.b16 %v4197, %v4184
        %v6239 = vpack.c.b16 %v4198, %v4185
        %v6240 = vpack.c.b16 %v4199, %v4186
        %v6241 = vpack.c.b16 %v4213, %v4200
        %v6242 = vpack.c.b16 %v4214, %v4201
        %v6243 = vpack.c.b16 %v4215, %v4202
        %v6244 = vpack.c.b16 %v4216, %v4203
        %v6245 = vpack.c.b16 %v4217, %v4204
        %v6246 = vpack.c.b16 %v4218, %v4205
        %v6247 = vpack.c.b16 %v4219, %v4206
        %v6248 = vpack.c.b16 %v4220, %v4207
        %v6249 = vpack.c.b16 %v4221, %v4208
        %v6250 = vpack.c.b16 %v4222, %v4209
        %v6251 = vpack.c.b16 %v4223, %v4210
        %v6252 = vpack.c.b16 %v4224, %v4211
        %v6253 = vpack.c.b16 %v4225, %v4212
        %v6254 = vpack.c.b16 %v4239, %v4226
        %v6255 = vpack.c.b16 %v4240, %v4227
        %v6256 = vpack.c.b16 %v4241, %v4228
        %v6257 = vpack.c.b16 %v4242, %v4229
        %v6258 = vpack.c.b16 %v4243, %v4230
        %v6259 = vpack.c.b16 %v4244, %v4231
        %v6260 = vpack.c.b16 %v4245, %v4232
        %v6261 = vpack.c.b16 %v4246, %v4233
        %v6262 = vpack.c.b16 %v4247, %v4234
        %v6263 = vpack.c.b16 %v4248, %v4235
        %v6264 = vpack.c.b16 %v4249, %v4236
        %v6265 = vpack.c.b16 %v4250, %v4237
        %v6266 = vpack.c.b16 %v4251, %v4238
        %v6267 = vpack.c.b16 %v4265, %v4252
        %v6268 = vpack.c.b16 %v4266, %v4253
        %v6269 = vpack.c.b16 %v4267, %v4254
        %v6270 = vpack.c.b16 %v4268, %v4255
        %v6271 = vpack.c.b16 %v4269, %v4256
        %v6272 = vpack.c.b16 %v4270, %v4257
        %v6273 = vpack.c.b16 %v4271, %v4258
        %v6274 = vpack.c.b16 %v4272, %v4259
        %v6275 = vpack.c.b16 %v4273, %v4260
        %v6276 = vpack.c.b16 %v4274, %v4261
        %v6277 = vpack.c.b16 %v4275, %v4262
        %v6278 = vpack.c.b16 %v4276, %v4263
        %v6279 = vpack.c.b16 %v4277, %v4264
        %v6280 = vpack.c.b16 %v4291, %v4278
        %v6281 = vpack.c.b16 %v4292, %v4279
        %v6282 = vpack.c.b16 %v4293, %v4280
        %v6283 = vpack.c.b16 %v4294, %v4281
        %v6284 = vpack.c.b16 %v4295, %v4282
        %v6285 = vpack.c.b16 %v4296, %v4283
        %v6286 = vpack.c.b16 %v4297, %v4284
        %v6287 = vpack.c.b16 %v4298, %v4285
        %v6288 = vpack.c.b16 %v4299, %v4286
        %v6289 = vpack.c.b16 %v4300, %v4287
        %v6290 = vpack.c.b16 %v4301, %v4288
        %v6291 = vpack.c.b16 %v4302, %v4289
        %v6292 = vpack.c.b16 %v4303, %v4290
        %v6293 = vpack.c.b16 %v4317, %v4304
        %v6294 = vpack.c.b16 %v4318, %v4305
        %v6295 = vpack.c.b16 %v4319, %v4306
        %v6296 = vpack.c.b16 %v4320, %v4307
        %v6297 = vpack.c.b16 %v4321, %v4308
        %v6298 = vpack.c.b16 %v4322, %v4309
        %v6299 = vpack.c.b16 %v4323, %v4310
        %v6300 = vpack.c.b16 %v4324, %v4311
        %v6301 = vpack.c.b16 %v4325, %v4312
        %v6302 = vpack.c.b16 %v4326, %v4313
        %v6303 = vpack.c.b16 %v4327, %v4314
        %v6304 = vpack.c.b16 %v4328, %v4315
        %v6305 = vpack.c.b16 %v4329, %v4316
        %v6306 = vpack.c.b16 %v4343, %v4330
        %v6307 = vpack.c.b16 %v4344, %v4331
        %v6308 = vpack.c.b16 %v4345, %v4332
        %v6309 = vpack.c.b16 %v4346, %v4333
        %v6310 = vpack.c.b16 %v4347, %v4334
        %v6311 = vpack.c.b16 %v4348, %v4335
        %v6312 = vpack.c.b16 %v4349, %v4336
        %v6313 = vpack.c.b16 %v4350, %v4337
        %v6314 = vpack.c.b16 %v4351, %v4338
        %v6315 = vpack.c.b16 %v4352, %v4339
        %v6316 = vpack.c.b16 %v4353, %v4340
        %v6317 = vpack.c.b16 %v4354, %v4341
        %v6318 = vpack.c.b16 %v4355, %v4342
        %v6319 = vpack.c.b16 %v4369, %v4356
        %v6320 = vpack.c.b16 %v4370, %v4357
        %v6321 = vpack.c.b16 %v4371, %v4358
        %v6322 = vpack.c.b16 %v4372, %v4359
        %v6323 = vpack.c.b16 %v4373, %v4360
        %v6324 = vpack.c.b16 %v4374, %v4361
        %v6325 = vpack.c.b16 %v4375, %v4362
        %v6326 = vpack.c.b16 %v4376, %v4363
        %v6327 = vpack.c.b16 %v4377, %v4364
        %v6328 = vpack.c.b16 %v4378, %v4365
        %v6329 = vpack.c.b16 %v4379, %v4366
        %v6330 = vpack.c.b16 %v4380, %v4367
        %v6331 = vpack.c.b16 %v4381, %v4368
        %v6332 = vpack.c.b16 %v4395, %v4382
        %v6333 = vpack.c.b16 %v4396, %v4383
        %v6334 = vpack.c.b16 %v4397, %v4384
        %v6335 = vpack.c.b16 %v4398, %v4385
        %v6336 = vpack.c.b16 %v4399, %v4386
        %v6337 = vpack.c.b16 %v4400, %v4387
        %v6338 = vpack.c.b16 %v4401, %v4388
        %v6339 = vpack.c.b16 %v4402, %v4389
        %v6340 = vpack.c.b16 %v4403, %v4390
        %v6341 = vpack.c.b16 %v4404, %v4391
        %v6342 = vpack.c.b16 %v4405, %v4392
        %v6343 = vpack.c.b16 %v4406, %v4393
        %v6344 = vpack.c.b16 %v4407, %v4394
        %v6345 = vpack.c.b16 %v4421, %v4408
        %v6346 = vpack.c.b16 %v4422, %v4409
        %v6347 = vpack.c.b16 %v4423, %v4410
        %v6348 = vpack.c.b16 %v4424, %v4411
        %v6349 = vpack.c.b16 %v4425, %v4412
        %v6350 = vpack.c.b16 %v4426, %v4413
        %v6351 = vpack.c.b16 %v4427, %v4414
        %v6352 = vpack.c.b16 %v4428, %v4415
        %v6353 = vpack.c.b16 %v4429, %v4416
        %v6354 = vpack.c.b16 %v4430, %v4417
        %v6355 = vpack.c.b16 %v4431, %v4418
        %v6356 = vpack.c.b16 %v4432, %v4419
        %v6357 = vpack.c.b16 %v4433, %v4420
        %v6358 = vpack.c.b16 %v4447, %v4434
        %v6359 = vpack.c.b16 %v4448, %v4435
        %v6360 = vpack.c.b16 %v4449, %v4436
        %v6361 = vpack.c.b16 %v4450, %v4437
        %v6362 = vpack.c.b16 %v4451, %v4438
        %v6363 = vpack.c.b16 %v4452, %v4439
        %v6364 = vpack.c.b16 %v4453, %v4440
        %v6365 = vpack.c.b16 %v4454, %v4441
        %v6366 = vpack.c.b16 %v4455, %v4442
        %v6367 = vpack.c.b16 %v4456, %v4443
        %v6368 = vpack.c.b16 %v4457, %v4444
        %v6369 = vpack.c.b16 %v4458, %v4445
        %v6370 = vpack.c.b16 %v4459, %v4446
        %v6371 = vpack.c.b16 %v4473, %v4460
        %v6372 = vpack.c.b16 %v4474, %v4461
        %v6373 = vpack.c.b16 %v4475, %v4462
        %v6374 = vpack.c.b16 %v4476, %v4463
        %v6375 = vpack.c.b16 %v4477, %v4464
        %v6376 = vpack.c.b16 %v4478, %v4465
        %v6377 = vpack.c.b16 %v4479, %v4466
        %v6378 = vpack.c.b16 %v4480, %v4467
        %v6379 = vpack.c.b16 %v4481, %v4468
        %v6380 = vpack.c.b16 %v4482, %v4469
        %v6381 = vpack.c.b16 %v4483, %v4470
        %v6382 = vpack.c.b16 %v4484, %v4471
        %v6383 = vpack.c.b16 %v4485, %v4472
        %v6384 = vpack.c.b16 %v4499, %v4486
        %v6385 = vpack.c.b16 %v4500, %v4487
        %v6386 = vpack.c.b16 %v4501, %v4488
        %v6387 = vpack.c.b16 %v4502, %v4489
        %v6388 = vpack.c.b16 %v4503, %v4490
        %v6389 = vpack.c.b16 %v4504, %v4491
        %v6390 = vpack.c.b16 %v4505, %v4492
        %v6391 = vpack.c.b16 %v4506, %v4493
        %v6392 = vpack.c.b16 %v4507, %v4494
        %v6393 = vpack.c.b16 %v4508, %v4495
        %v6394 = vpack.c.b16 %v4509, %v4496
        %v6395 = vpack.c.b16 %v4510, %v4497
        %v6396 = vpack.c.b16 %v4511, %v4498
        %v6397 = vpack.c.b16 %v4525, %v4512
        %v6398 = vpack.c.b16 %v4526, %v4513
        %v6399 = vpack.c.b16 %v4527, %v4514
        %v6400 = vpack.c.b16 %v4528, %v4515
        %v6401 = vpack.c.b16 %v4529, %v4516
        %v6402 = vpack.c.b16 %v4530, %v4517
        %v6403 = vpack.c.b16 %v4531, %v4518
        %v6404 = vpack.c.b16 %v4532, %v4519
        %v6405 = vpack.c.b16 %v4533, %v4520
        %v6406 = vpack.c.b16 %v4534, %v4521
        %v6407 = vpack.c.b16 %v4535, %v4522
        %v6408 = vpack.c.b16 %v4536, %v4523
        %v6409 = vpack.c.b16 %v4537, %v4524
        %v6410 = vpack.c.b16 %v4551, %v4538
        %v6411 = vpack.c.b16 %v4552, %v4539
        %v6412 = vpack.c.b16 %v4553, %v4540
        %v6413 = vpack.c.b16 %v4554, %v4541
        %v6414 = vpack.c.b16 %v4555, %v4542
        %v6415 = vpack.c.b16 %v4556, %v4543
        %v6416 = vpack.c.b16 %v4557, %v4544
        %v6417 = vpack.c.b16 %v4558, %v4545
        %v6418 = vpack.c.b16 %v4559, %v4546
        %v6419 = vpack.c.b16 %v4560, %v4547
        %v6420 = vpack.c.b16 %v4561, %v4548
        %v6421 = vpack.c.b16 %v4562, %v4549
        %v6422 = vpack.c.b16 %v4563, %v4550
        %v6423 = vpack.c.b16 %v4577, %v4564
        %v6424 = vpack.c.b16 %v4578, %v4565
        %v6425 = vpack.c.b16 %v4579, %v4566
        %v6426 = vpack.c.b16 %v4580, %v4567
        %v6427 = vpack.c.b16 %v4581, %v4568
        %v6428 = vpack.c.b16 %v4582, %v4569
        %v6429 = vpack.c.b16 %v4583, %v4570
        %v6430 = vpack.c.b16 %v4584, %v4571
        %v6431 = vpack.c.b16 %v4585, %v4572
        %v6432 = vpack.c.b16 %v4586, %v4573
        %v6433 = vpack.c.b16 %v4587, %v4574
        %v6434 = vpack.c.b16 %v4588, %v4575
        %v6435 = vpack.c.b16 %v4589, %v4576
        %v6436 = vpack.c.b16 %v4603, %v4590
        %v6437 = vpack.c.b16 %v4604, %v4591
        %v6438 = vpack.c.b16 %v4605, %v4592
        %v6439 = vpack.c.b16 %v4606, %v4593
        %v6440 = vpack.c.b16 %v4607, %v4594
        %v6441 = vpack.c.b16 %v4608, %v4595
        %v6442 = vpack.c.b16 %v4609, %v4596
        %v6443 = vpack.c.b16 %v4610, %v4597
        %v6444 = vpack.c.b16 %v4611, %v4598
        %v6445 = vpack.c.b16 %v4612, %v4599
        %v6446 = vpack.c.b16 %v4613, %v4600
        %v6447 = vpack.c.b16 %v4614, %v4601
        %v6448 = vpack.c.b16 %v4615, %v4602
        %v6449 = vpack.c.b16 %v4629, %v4616
        %v6450 = vpack.c.b16 %v4630, %v4617
        %v6451 = vpack.c.b16 %v4631, %v4618
        %v6452 = vpack.c.b16 %v4632, %v4619
        %v6453 = vpack.c.b16 %v4633, %v4620
        %v6454 = vpack.c.b16 %v4634, %v4621
        %v6455 = vpack.c.b16 %v4635, %v4622
        %v6456 = vpack.c.b16 %v4636, %v4623
        %v6457 = vpack.c.b16 %v4637, %v4624
        %v6458 = vpack.c.b16 %v4638, %v4625
        %v6459 = vpack.c.b16 %v4639, %v4626
        %v6460 = vpack.c.b16 %v4640, %v4627
        %v6461 = vpack.c.b16 %v4641, %v4628
        %v6462 = vpack.c.b16 %v4655, %v4642
        %v6463 = vpack.c.b16 %v4656, %v4643
        %v6464 = vpack.c.b16 %v4657, %v4644
        %v6465 = vpack.c.b16 %v4658, %v4645
        %v6466 = vpack.c.b16 %v4659, %v4646
        %v6467 = vpack.c.b16 %v4660, %v4647
        %v6468 = vpack.c.b16 %v4661, %v4648
        %v6469 = vpack.c.b16 %v4662, %v4649
        %v6470 = vpack.c.b16 %v4663, %v4650
        %v6471 = vpack.c.b16 %v4664, %v4651
        %v6472 = vpack.c.b16 %v4665, %v4652
        %v6473 = vpack.c.b16 %v4666, %v4653
        %v6474 = vpack.c.b16 %v4667, %v4654
        %v6475 = vpack.c.b16 %v4681, %v4668
        %v6476 = vpack.c.b16 %v4682, %v4669
        %v6477 = vpack.c.b16 %v4683, %v4670
        %v6478 = vpack.c.b16 %v4684, %v4671
        %v6479 = vpack.c.b16 %v4685, %v4672
        %v6480 = vpack.c.b16 %v4686, %v4673
        %v6481 = vpack.c.b16 %v4687, %v4674
        %v6482 = vpack.c.b16 %v4688, %v4675
        %v6483 = vpack.c.b16 %v4689, %v4676
        %v6484 = vpack.c.b16 %v4690, %v4677
        %v6485 = vpack.c.b16 %v4691, %v4678
        %v6486 = vpack.c.b16 %v4692, %v4679
        %v6487 = vpack.c.b16 %v4693, %v4680
        %v6488 = vpack.c.b16 %v4707, %v4694
        %v6489 = vpack.c.b16 %v4708, %v4695
        %v6490 = vpack.c.b16 %v4709, %v4696
        %v6491 = vpack.c.b16 %v4710, %v4697
        %v6492 = vpack.c.b16 %v4711, %v4698
        %v6493 = vpack.c.b16 %v4712, %v4699
        %v6494 = vpack.c.b16 %v4713, %v4700
        %v6495 = vpack.c.b16 %v4714, %v4701
        %v6496 = vpack.c.b16 %v4715, %v4702
        %v6497 = vpack.c.b16 %v4716, %v4703
        %v6498 = vpack.c.b16 %v4717, %v4704
        %v6499 = vpack.c.b16 %v4718, %v4705
        %v6500 = vpack.c.b16 %v4719, %v4706
        %v6501 = vpack.c.b16 %v4733, %v4720
        %v6502 = vpack.c.b16 %v4734, %v4721
        %v6503 = vpack.c.b16 %v4735, %v4722
        %v6504 = vpack.c.b16 %v4736, %v4723
        %v6505 = vpack.c.b16 %v4737, %v4724
        %v6506 = vpack.c.b16 %v4738, %v4725
        %v6507 = vpack.c.b16 %v4739, %v4726
        %v6508 = vpack.c.b16 %v4740, %v4727
        %v6509 = vpack.c.b16 %v4741, %v4728
        %v6510 = vpack.c.b16 %v4742, %v4729
        %v6511 = vpack.c.b16 %v4743, %v4730
        %v6512 = vpack.c.b16 %v4744, %v4731
        %v6513 = vpack.c.b16 %v4745, %v4732
        %v6514 = vpack.c.b16 %v4759, %v4746
        %v6515 = vpack.c.b16 %v4760, %v4747
        %v6516 = vpack.c.b16 %v4761, %v4748
        %v6517 = vpack.c.b16 %v4762, %v4749
        %v6518 = vpack.c.b16 %v4763, %v4750
        %v6519 = vpack.c.b16 %v4764, %v4751
        %v6520 = vpack.c.b16 %v4765, %v4752
        %v6521 = vpack.c.b16 %v4766, %v4753
        %v6522 = vpack.c.b16 %v4767, %v4754
        %v6523 = vpack.c.b16 %v4768, %v4755
        %v6524 = vpack.c.b16 %v4769, %v4756
        %v6525 = vpack.c.b16 %v4770, %v4757
        %v6526 = vpack.c.b16 %v4771, %v4758
        %v6527 = vpack.c.b16 %v4785, %v4772
        %v6528 = vpack.c.b16 %v4786, %v4773
        %v6529 = vpack.c.b16 %v4787, %v4774
        %v6530 = vpack.c.b16 %v4788, %v4775
        %v6531 = vpack.c.b16 %v4789, %v4776
        %v6532 = vpack.c.b16 %v4790, %v4777
        %v6533 = vpack.c.b16 %v4791, %v4778
        %v6534 = vpack.c.b16 %v4792, %v4779
        %v6535 = vpack.c.b16 %v4793, %v4780
        %v6536 = vpack.c.b16 %v4794, %v4781
        %v6537 = vpack.c.b16 %v4795, %v4782
        %v6538 = vpack.c.b16 %v4796, %v4783
        %v6539 = vpack.c.b16 %v4797, %v4784
        %v6540 = vpack.c.b16 %v4811, %v4798
        %v6541 = vpack.c.b16 %v4812, %v4799
        %v6542 = vpack.c.b16 %v4813, %v4800
        %v6543 = vpack.c.b16 %v4814, %v4801
        %v6544 = vpack.c.b16 %v4815, %v4802
        %v6545 = vpack.c.b16 %v4816, %v4803
        %v6546 = vpack.c.b16 %v4817, %v4804
        %v6547 = vpack.c.b16 %v4818, %v4805
        %v6548 = vpack.c.b16 %v4819, %v4806
        %v6549 = vpack.c.b16 %v4820, %v4807
        %v6550 = vpack.c.b16 %v4821, %v4808
        %v6551 = vpack.c.b16 %v4822, %v4809
        %v6552 = vpack.c.b16 %v4823, %v4810
        %v6553 = vpack.c.b16 %v4837, %v4824
        %v6554 = vpack.c.b16 %v4838, %v4825
        %v6555 = vpack.c.b16 %v4839, %v4826
        %v6556 = vpack.c.b16 %v4840, %v4827
        %v6557 = vpack.c.b16 %v4841, %v4828
        %v6558 = vpack.c.b16 %v4842, %v4829
        %v6559 = vpack.c.b16 %v4843, %v4830
        %v6560 = vpack.c.b16 %v4844, %v4831
        %v6561 = vpack.c.b16 %v4845, %v4832
        %v6562 = vpack.c.b16 %v4846, %v4833
        %v6563 = vpack.c.b16 %v4847, %v4834
        %v6564 = vpack.c.b16 %v4848, %v4835
        %v6565 = vpack.c.b16 %v4849, %v4836
        %v6566 = vpack.c.b16 %v4863, %v4850
        %v6567 = vpack.c.b16 %v4864, %v4851
        %v6568 = vpack.c.b16 %v4865, %v4852
        %v6569 = vpack.c.b16 %v4866, %v4853
        %v6570 = vpack.c.b16 %v4867, %v4854
        %v6571 = vpack.c.b16 %v4868, %v4855
        %v6572 = vpack.c.b16 %v4869, %v4856
        %v6573 = vpack.c.b16 %v4870, %v4857
        %v6574 = vpack.c.b16 %v4871, %v4858
        %v6575 = vpack.c.b16 %v4872, %v4859
        %v6576 = vpack.c.b16 %v4873, %v4860
        %v6577 = vpack.c.b16 %v4874, %v4861
        %v6578 = vpack.c.b16 %v4875, %v4862
        %v6579 = vpack.c.b16 %v4889, %v4876
        %v6580 = vpack.c.b16 %v4890, %v4877
        %v6581 = vpack.c.b16 %v4891, %v4878
        %v6582 = vpack.c.b16 %v4892, %v4879
        %v6583 = vpack.c.b16 %v4893, %v4880
        %v6584 = vpack.c.b16 %v4894, %v4881
        %v6585 = vpack.c.b16 %v4895, %v4882
        %v6586 = vpack.c.b16 %v4896, %v4883
        %v6587 = vpack.c.b16 %v4897, %v4884
        %v6588 = vpack.c.b16 %v4898, %v4885
        %v6589 = vpack.c.b16 %v4899, %v4886
        %v6590 = vpack.c.b16 %v4900, %v4887
        %v6591 = vpack.c.b16 %v4901, %v4888
        %v6592 = vpack.c.b16 %v4915, %v4902
        %v6593 = vpack.c.b16 %v4916, %v4903
        %v6594 = vpack.c.b16 %v4917, %v4904
        %v6595 = vpack.c.b16 %v4918, %v4905
        %v6596 = vpack.c.b16 %v4919, %v4906
        %v6597 = vpack.c.b16 %v4920, %v4907
        %v6598 = vpack.c.b16 %v4921, %v4908
        %v6599 = vpack.c.b16 %v4922, %v4909
        %v6600 = vpack.c.b16 %v4923, %v4910
        %v6601 = vpack.c.b16 %v4924, %v4911
        %v6602 = vpack.c.b16 %v4925, %v4912
        %v6603 = vpack.c.b16 %v4926, %v4913
        %v6604 = vpack.c.b16 %v4927, %v4914
        %v6605 = vpack.c.b16 %v4941, %v4928
        %v6606 = vpack.c.b16 %v4942, %v4929
        %v6607 = vpack.c.b16 %v4943, %v4930
        %v6608 = vpack.c.b16 %v4944, %v4931
        %v6609 = vpack.c.b16 %v4945, %v4932
        %v6610 = vpack.c.b16 %v4946, %v4933
        %v6611 = vpack.c.b16 %v4947, %v4934
        %v6612 = vpack.c.b16 %v4948, %v4935
        %v6613 = vpack.c.b16 %v4949, %v4936
        %v6614 = vpack.c.b16 %v4950, %v4937
        %v6615 = vpack.c.b16 %v4951, %v4938
        %v6616 = vpack.c.b16 %v4952, %v4939
        %v6617 = vpack.c.b16 %v4953, %v4940
        %v6618 = vpack.c.b16 %v4967, %v4954
        %v6619 = vpack.c.b16 %v4968, %v4955
        %v6620 = vpack.c.b16 %v4969, %v4956
        %v6621 = vpack.c.b16 %v4970, %v4957
        %v6622 = vpack.c.b16 %v4971, %v4958
        %v6623 = vpack.c.b16 %v4972, %v4959
        %v6624 = vpack.c.b16 %v4973, %v4960
        %v6625 = vpack.c.b16 %v4974, %v4961
        %v6626 = vpack.c.b16 %v4975, %v4962
        %v6627 = vpack.c.b16 %v4976, %v4963
        %v6628 = vpack.c.b16 %v4977, %v4964
        %v6629 = vpack.c.b16 %v4978, %v4965
        %v6630 = vpack.c.b16 %v4979, %v4966
        %v6631 = vpack.c.b16 %v4993, %v4980
        %v6632 = vpack.c.b16 %v4994, %v4981
        %v6633 = vpack.c.b16 %v4995, %v4982
        %v6634 = vpack.c.b16 %v4996, %v4983
        %v6635 = vpack.c.b16 %v4997, %v4984
        %v6636 = vpack.c.b16 %v4998, %v4985
        %v6637 = vpack.c.b16 %v4999, %v4986
        %v6638 = vpack.c.b16 %v5000, %v4987
        %v6639 = vpack.c.b16 %v5001, %v4988
        %v6640 = vpack.c.b16 %v5002, %v4989
        %v6641 = vpack.c.b16 %v5003, %v4990
        %v6642 = vpack.c.b16 %v5004, %v4991
        %v6643 = vpack.c.b16 %v5005, %v4992
        %v6644 = vpack.c.b16 %v5019, %v5006
        %v6645 = vpack.c.b16 %v5020, %v5007
        %v6646 = vpack.c.b16 %v5021, %v5008
        %v6647 = vpack.c.b16 %v5022, %v5009
        %v6648 = vpack.c.b16 %v5023, %v5010
        %v6649 = vpack.c.b16 %v5024, %v5011
        %v6650 = vpack.c.b16 %v5025, %v5012
        %v6651 = vpack.c.b16 %v5026, %v5013
        %v6652 = vpack.c.b16 %v5027, %v5014
        %v6653 = vpack.c.b16 %v5028, %v5015
        %v6654 = vpack.c.b16 %v5029, %v5016
        %v6655 = vpack.c.b16 %v5030, %v5017
        %v6656 = vpack.c.b16 %v5031, %v5018
        %v6657 = vpack.c.b16 %v5045, %v5032
        %v6658 = vpack.c.b16 %v5046, %v5033
        %v6659 = vpack.c.b16 %v5047, %v5034
        %v6660 = vpack.c.b16 %v5048, %v5035
        %v6661 = vpack.c.b16 %v5049, %v5036
        %v6662 = vpack.c.b16 %v5050, %v5037
        %v6663 = vpack.c.b16 %v5051, %v5038
        %v6664 = vpack.c.b16 %v5052, %v5039
        %v6665 = vpack.c.b16 %v5053, %v5040
        %v6666 = vpack.c.b16 %v5054, %v5041
        %v6667 = vpack.c.b16 %v5055, %v5042
        %v6668 = vpack.c.b16 %v5056, %v5043
        %v6669 = vpack.c.b16 %v5057, %v5044
        %v6670 = vpack.c.b16 %v5071, %v5058
        %v6671 = vpack.c.b16 %v5072, %v5059
        %v6672 = vpack.c.b16 %v5073, %v5060
        %v6673 = vpack.c.b16 %v5074, %v5061
        %v6674 = vpack.c.b16 %v5075, %v5062
        %v6675 = vpack.c.b16 %v5076, %v5063
        %v6676 = vpack.c.b16 %v5077, %v5064
        %v6677 = vpack.c.b16 %v5078, %v5065
        %v6678 = vpack.c.b16 %v5079, %v5066
        %v6679 = vpack.c.b16 %v5080, %v5067
        %v6680 = vpack.c.b16 %v5081, %v5068
        %v6681 = vpack.c.b16 %v5082, %v5069
        %v6682 = vpack.c.b16 %v5083, %v5070
        %v6683 = vpack.c.b16 %v5097, %v5084
        %v6684 = vpack.c.b16 %v5098, %v5085
        %v6685 = vpack.c.b16 %v5099, %v5086
        %v6686 = vpack.c.b16 %v5100, %v5087
        %v6687 = vpack.c.b16 %v5101, %v5088
        %v6688 = vpack.c.b16 %v5102, %v5089
        %v6689 = vpack.c.b16 %v5103, %v5090
        %v6690 = vpack.c.b16 %v5104, %v5091
        %v6691 = vpack.c.b16 %v5105, %v5092
        %v6692 = vpack.c.b16 %v5106, %v5093
        %v6693 = vpack.c.b16 %v5107, %v5094
        %v6694 = vpack.c.b16 %v5108, %v5095
        %v6695 = vpack.c.b16 %v5109, %v5096
        %v6696 = vpack.c.b16 %v5123, %v5110
        %v6697 = vpack.c.b16 %v5124, %v5111
        %v6698 = vpack.c.b16 %v5125, %v5112
        %v6699 = vpack.c.b16 %v5126, %v5113
        %v6700 = vpack.c.b16 %v5127, %v5114
        %v6701 = vpack.c.b16 %v5128, %v5115
        %v6702 = vpack.c.b16 %v5129, %v5116
        %v6703 = vpack.c.b16 %v5130, %v5117
        %v6704 = vpack.c.b16 %v5131, %v5118
        %v6705 = vpack.c.b16 %v5132, %v5119
        %v6706 = vpack.c.b16 %v5133, %v5120
        %v6707 = vpack.c.b16 %v5134, %v5121
        %v6708 = vpack.c.b16 %v5135, %v5122
        %v6709 = vpack.c.b16 %v5149, %v5136
        %v6710 = vpack.c.b16 %v5150, %v5137
        %v6711 = vpack.c.b16 %v5151, %v5138
        %v6712 = vpack.c.b16 %v5152, %v5139
        %v6713 = vpack.c.b16 %v5153, %v5140
        %v6714 = vpack.c.b16 %v5154, %v5141
        %v6715 = vpack.c.b16 %v5155, %v5142
        %v6716 = vpack.c.b16 %v5156, %v5143
        %v6717 = vpack.c.b16 %v5157, %v5144
        %v6718 = vpack.c.b16 %v5158, %v5145
        %v6719 = vpack.c.b16 %v5159, %v5146
        %v6720 = vpack.c.b16 %v5160, %v5147
        %v6721 = vpack.c.b16 %v5161, %v5148
        %v6722 = vpack.c.b16 %v5175, %v5162
        %v6723 = vpack.c.b16 %v5176, %v5163
        %v6724 = vpack.c.b16 %v5177, %v5164
        %v6725 = vpack.c.b16 %v5178, %v5165
        %v6726 = vpack.c.b16 %v5179, %v5166
        %v6727 = vpack.c.b16 %v5180, %v5167
        %v6728 = vpack.c.b16 %v5181, %v5168
        %v6729 = vpack.c.b16 %v5182, %v5169
        %v6730 = vpack.c.b16 %v5183, %v5170
        %v6731 = vpack.c.b16 %v5184, %v5171
        %v6732 = vpack.c.b16 %v5185, %v5172
        %v6733 = vpack.c.b16 %v5186, %v5173
        %v6734 = vpack.c.b16 %v5187, %v5174
        %v6735 = vpack.c.b16 %v5201, %v5188
        %v6736 = vpack.c.b16 %v5202, %v5189
        %v6737 = vpack.c.b16 %v5203, %v5190
        %v6738 = vpack.c.b16 %v5204, %v5191
        %v6739 = vpack.c.b16 %v5205, %v5192
        %v6740 = vpack.c.b16 %v5206, %v5193
        %v6741 = vpack.c.b16 %v5207, %v5194
        %v6742 = vpack.c.b16 %v5208, %v5195
        %v6743 = vpack.c.b16 %v5209, %v5196
        %v6744 = vpack.c.b16 %v5210, %v5197
        %v6745 = vpack.c.b16 %v5211, %v5198
        %v6746 = vpack.c.b16 %v5212, %v5199
        %v6747 = vpack.c.b16 %v5213, %v5200
        %v6748 = vpack.c.b16 %v5227, %v5214
        %v6749 = vpack.c.b16 %v5228, %v5215
        %v6750 = vpack.c.b16 %v5229, %v5216
        %v6751 = vpack.c.b16 %v5230, %v5217
        %v6752 = vpack.c.b16 %v5231, %v5218
        %v6753 = vpack.c.b16 %v5232, %v5219
        %v6754 = vpack.c.b16 %v5233, %v5220
        %v6755 = vpack.c.b16 %v5234, %v5221
        %v6756 = vpack.c.b16 %v5235, %v5222
        %v6757 = vpack.c.b16 %v5236, %v5223
        %v6758 = vpack.c.b16 %v5237, %v5224
        %v6759 = vpack.c.b16 %v5238, %v5225
        %v6760 = vpack.c.b16 %v5239, %v5226
        %v6761 = vpack.c.b16 %v5253, %v5240
        %v6762 = vpack.c.b16 %v5254, %v5241
        %v6763 = vpack.c.b16 %v5255, %v5242
        %v6764 = vpack.c.b16 %v5256, %v5243
        %v6765 = vpack.c.b16 %v5257, %v5244
        %v6766 = vpack.c.b16 %v5258, %v5245
        %v6767 = vpack.c.b16 %v5259, %v5246
        %v6768 = vpack.c.b16 %v5260, %v5247
        %v6769 = vpack.c.b16 %v5261, %v5248
        %v6770 = vpack.c.b16 %v5262, %v5249
        %v6771 = vpack.c.b16 %v5263, %v5250
        %v6772 = vpack.c.b16 %v5264, %v5251
        %v6773 = vpack.c.b16 %v5265, %v5252
        %v6774 = vpack.c.b16 %v5279, %v5266
        %v6775 = vpack.c.b16 %v5280, %v5267
        %v6776 = vpack.c.b16 %v5281, %v5268
        %v6777 = vpack.c.b16 %v5282, %v5269
        %v6778 = vpack.c.b16 %v5283, %v5270
        %v6779 = vpack.c.b16 %v5284, %v5271
        %v6780 = vpack.c.b16 %v5285, %v5272
        %v6781 = vpack.c.b16 %v5286, %v5273
        %v6782 = vpack.c.b16 %v5287, %v5274
        %v6783 = vpack.c.b16 %v5288, %v5275
        %v6784 = vpack.c.b16 %v5289, %v5276
        %v6785 = vpack.c.b16 %v5290, %v5277
        %v6786 = vpack.c.b16 %v5291, %v5278
        %v6787 = vpack.c.b16 %v5305, %v5292
        %v6788 = vpack.c.b16 %v5306, %v5293
        %v6789 = vpack.c.b16 %v5307, %v5294
        %v6790 = vpack.c.b16 %v5308, %v5295
        %v6791 = vpack.c.b16 %v5309, %v5296
        %v6792 = vpack.c.b16 %v5310, %v5297
        %v6793 = vpack.c.b16 %v5311, %v5298
        %v6794 = vpack.c.b16 %v5312, %v5299
        %v6795 = vpack.c.b16 %v5313, %v5300
        %v6796 = vpack.c.b16 %v5314, %v5301
        %v6797 = vpack.c.b16 %v5315, %v5302
        %v6798 = vpack.c.b16 %v5316, %v5303
        %v6799 = vpack.c.b16 %v5317, %v5304
        %v6800 = vpack.c.b16 %v5331, %v5318
        %v6801 = vpack.c.b16 %v5332, %v5319
        %v6802 = vpack.c.b16 %v5333, %v5320
        %v6803 = vpack.c.b16 %v5334, %v5321
        %v6804 = vpack.c.b16 %v5335, %v5322
        %v6805 = vpack.c.b16 %v5336, %v5323
        %v6806 = vpack.c.b16 %v5337, %v5324
        %v6807 = vpack.c.b16 %v5338, %v5325
        %v6808 = vpack.c.b16 %v5339, %v5326
        %v6809 = vpack.c.b16 %v5340, %v5327
        %v6810 = vpack.c.b16 %v5341, %v5328
        %v6811 = vpack.c.b16 %v5342, %v5329
        %v6812 = vpack.c.b16 %v5343, %v5330
        %v6813 = vpack.c.b16 %v5357, %v5344
        %v6814 = vpack.c.b16 %v5358, %v5345
        %v6815 = vpack.c.b16 %v5359, %v5346
        %v6816 = vpack.c.b16 %v5360, %v5347
        %v6817 = vpack.c.b16 %v5361, %v5348
        %v6818 = vpack.c.b16 %v5362, %v5349
        %v6819 = vpack.c.b16 %v5363, %v5350
        %v6820 = vpack.c.b16 %v5364, %v5351
        %v6821 = vpack.c.b16 %v5365, %v5352
        %v6822 = vpack.c.b16 %v5366, %v5353
        %v6823 = vpack.c.b16 %v5367, %v5354
        %v6824 = vpack.c.b16 %v5368, %v5355
        %v6825 = vpack.c.b16 %v5369, %v5356
        %v6826 = vpack.c.b16 %v5383, %v5370
        %v6827 = vpack.c.b16 %v5384, %v5371
        %v6828 = vpack.c.b16 %v5385, %v5372
        %v6829 = vpack.c.b16 %v5386, %v5373
        %v6830 = vpack.c.b16 %v5387, %v5374
        %v6831 = vpack.c.b16 %v5388, %v5375
        %v6832 = vpack.c.b16 %v5389, %v5376
        %v6833 = vpack.c.b16 %v5390, %v5377
        %v6834 = vpack.c.b16 %v5391, %v5378
        %v6835 = vpack.c.b16 %v5392, %v5379
        %v6836 = vpack.c.b16 %v5393, %v5380
        %v6837 = vpack.c.b16 %v5394, %v5381
        %v6838 = vpack.c.b16 %v5395, %v5382
        %v6839 = vpack.c.b16 %v5409, %v5396
        %v6840 = vpack.c.b16 %v5410, %v5397
        %v6841 = vpack.c.b16 %v5411, %v5398
        %v6842 = vpack.c.b16 %v5412, %v5399
        %v6843 = vpack.c.b16 %v5413, %v5400
        %v6844 = vpack.c.b16 %v5414, %v5401
        %v6845 = vpack.c.b16 %v5415, %v5402
        %v6846 = vpack.c.b16 %v5416, %v5403
        %v6847 = vpack.c.b16 %v5417, %v5404
        %v6848 = vpack.c.b16 %v5418, %v5405
        %v6849 = vpack.c.b16 %v5419, %v5406
        %v6850 = vpack.c.b16 %v5420, %v5407
        %v6851 = vpack.c.b16 %v5421, %v5408
        %v6852 = vpack.c.b16 %v5435, %v5422
        %v6853 = vpack.c.b16 %v5436, %v5423
        %v6854 = vpack.c.b16 %v5437, %v5424
        %v6855 = vpack.c.b16 %v5438, %v5425
        %v6856 = vpack.c.b16 %v5439, %v5426
        %v6857 = vpack.c.b16 %v5440, %v5427
        %v6858 = vpack.c.b16 %v5441, %v5428
        %v6859 = vpack.c.b16 %v5442, %v5429
        %v6860 = vpack.c.b16 %v5443, %v5430
        %v6861 = vpack.c.b16 %v5444, %v5431
        %v6862 = vpack.c.b16 %v5445, %v5432
        %v6863 = vpack.c.b16 %v5446, %v5433
        %v6864 = vpack.c.b16 %v5447, %v5434
        %v6865 = vpack.c.b16 %v5461, %v5448
        %v6866 = vpack.c.b16 %v5462, %v5449
        %v6867 = vpack.c.b16 %v5463, %v5450
        %v6868 = vpack.c.b16 %v5464, %v5451
        %v6869 = vpack.c.b16 %v5465, %v5452
        %v6870 = vpack.c.b16 %v5466, %v5453
        %v6871 = vpack.c.b16 %v5467, %v5454
        %v6872 = vpack.c.b16 %v5468, %v5455
        %v6873 = vpack.c.b16 %v5469, %v5456
        %v6874 = vpack.c.b16 %v5470, %v5457
        %v6875 = vpack.c.b16 %v5471, %v5458
        %v6876 = vpack.c.b16 %v5472, %v5459
        %v6877 = vpack.c.b16 %v5473, %v5460
        %v6878 = vpack.c.b16 %v5487, %v5474
        %v6879 = vpack.c.b16 %v5488, %v5475
        %v6880 = vpack.c.b16 %v5489, %v5476
        %v6881 = vpack.c.b16 %v5490, %v5477
        %v6882 = vpack.c.b16 %v5491, %v5478
        %v6883 = vpack.c.b16 %v5492, %v5479
        %v6884 = vpack.c.b16 %v5493, %v5480
        %v6885 = vpack.c.b16 %v5494, %v5481
        %v6886 = vpack.c.b16 %v5495, %v5482
        %v6887 = vpack.c.b16 %v5496, %v5483
        %v6888 = vpack.c.b16 %v5497, %v5484
        %v6889 = vpack.c.b16 %v5498, %v5485
        %v6890 = vpack.c.b16 %v5499, %v5486
        %v6891 = vpack.c.b16 %v5513, %v5500
        %v6892 = vpack.c.b16 %v5514, %v5501
        %v6893 = vpack.c.b16 %v5515, %v5502
        %v6894 = vpack.c.b16 %v5516, %v5503
        %v6895 = vpack.c.b16 %v5517, %v5504
        %v6896 = vpack.c.b16 %v5518, %v5505
        %v6897 = vpack.c.b16 %v5519, %v5506
        %v6898 = vpack.c.b16 %v5520, %v5507
        %v6899 = vpack.c.b16 %v5521, %v5508
        %v6900 = vpack.c.b16 %v5522, %v5509
        %v6901 = vpack.c.b16 %v5523, %v5510
        %v6902 = vpack.c.b16 %v5524, %v5511
        %v6903 = vpack.c.b16 %v5525, %v5512
        %v6904 = vpack.c.b16 %v5539, %v5526
        %v6905 = vpack.c.b16 %v5540, %v5527
        %v6906 = vpack.c.b16 %v5541, %v5528
        %v6907 = vpack.c.b16 %v5542, %v5529
        %v6908 = vpack.c.b16 %v5543, %v5530
        %v6909 = vpack.c.b16 %v5544, %v5531
        %v6910 = vpack.c.b16 %v5545, %v5532
        %v6911 = vpack.c.b16 %v5546, %v5533
        %v6912 = vpack.c.b16 %v5547, %v5534
        %v6913 = vpack.c.b16 %v5548, %v5535
        %v6914 = vpack.c.b16 %v5549, %v5536
        %v6915 = vpack.c.b16 %v5550, %v5537
        %v6916 = vpack.c.b16 %v5551, %v5538
        %v6917 = vpack.c.b16 %v5565, %v5552
        %v6918 = vpack.c.b16 %v5566, %v5553
        %v6919 = vpack.c.b16 %v5567, %v5554
        %v6920 = vpack.c.b16 %v5568, %v5555
        %v6921 = vpack.c.b16 %v5569, %v5556
        %v6922 = vpack.c.b16 %v5570, %v5557
        %v6923 = vpack.c.b16 %v5571, %v5558
        %v6924 = vpack.c.b16 %v5572, %v5559
        %v6925 = vpack.c.b16 %v5573, %v5560
        %v6926 = vpack.c.b16 %v5574, %v5561
        %v6927 = vpack.c.b16 %v5575, %v5562
        %v6928 = vpack.c.b16 %v5576, %v5563
        %v6929 = vpack.c.b16 %v5577, %v5564
        %v6930 = vpack.c.b16 %v5591, %v5578
        %v6931 = vpack.c.b16 %v5592, %v5579
        %v6932 = vpack.c.b16 %v5593, %v5580
        %v6933 = vpack.c.b16 %v5594, %v5581
        %v6934 = vpack.c.b16 %v5595, %v5582
        %v6935 = vpack.c.b16 %v5596, %v5583
        %v6936 = vpack.c.b16 %v5597, %v5584
        %v6937 = vpack.c.b16 %v5598, %v5585
        %v6938 = vpack.c.b16 %v5599, %v5586
        %v6939 = vpack.c.b16 %v5600, %v5587
        %v6940 = vpack.c.b16 %v5601, %v5588
        %v6941 = vpack.c.b16 %v5602, %v5589
        %v6942 = vpack.c.b16 %v5603, %v5590
        %v6943 = vpack.c.b16 %v5617, %v5604
        %v6944 = vpack.c.b16 %v5618, %v5605
        %v6945 = vpack.c.b16 %v5619, %v5606
        %v6946 = vpack.c.b16 %v5620, %v5607
        %v6947 = vpack.c.b16 %v5621, %v5608
        %v6948 = vpack.c.b16 %v5622, %v5609
        %v6949 = vpack.c.b16 %v5623, %v5610
        %v6950 = vpack.c.b16 %v5624, %v5611
        %v6951 = vpack.c.b16 %v5625, %v5612
        %v6952 = vpack.c.b16 %v5626, %v5613
        %v6953 = vpack.c.b16 %v5627, %v5614
        %v6954 = vpack.c.b16 %v5628, %v5615
        %v6955 = vpack.c.b16 %v5629, %v5616
        %v6956 = vpack.c.b16 %v5643, %v5630
        %v6957 = vpack.c.b16 %v5644, %v5631
        %v6958 = vpack.c.b16 %v5645, %v5632
        %v6959 = vpack.c.b16 %v5646, %v5633
        %v6960 = vpack.c.b16 %v5647, %v5634
        %v6961 = vpack.c.b16 %v5648, %v5635
        %v6962 = vpack.c.b16 %v5649, %v5636
        %v6963 = vpack.c.b16 %v5650, %v5637
        %v6964 = vpack.c.b16 %v5651, %v5638
        %v6965 = vpack.c.b16 %v5652, %v5639
        %v6966 = vpack.c.b16 %v5653, %v5640
        %v6967 = vpack.c.b16 %v5654, %v5641
        %v6968 = vpack.c.b16 %v5655, %v5642
        %v6969 = vpack.c.b16 %v5669, %v5656
        %v6970 = vpack.c.b16 %v5670, %v5657
        %v6971 = vpack.c.b16 %v5671, %v5658
        %v6972 = vpack.c.b16 %v5672, %v5659
        %v6973 = vpack.c.b16 %v5673, %v5660
        %v6974 = vpack.c.b16 %v5674, %v5661
        %v6975 = vpack.c.b16 %v5675, %v5662
        %v6976 = vpack.c.b16 %v5676, %v5663
        %v6977 = vpack.c.b16 %v5677, %v5664
        %v6978 = vpack.c.b16 %v5678, %v5665
        %v6979 = vpack.c.b16 %v5679, %v5666
        %v6980 = vpack.c.b16 %v5680, %v5667
        %v6981 = vpack.c.b16 %v5681, %v5668
        %v6982 = vpack.c.b16 %v5695, %v5682
        %v6983 = vpack.c.b16 %v5696, %v5683
        %v6984 = vpack.c.b16 %v5697, %v5684
        %v6985 = vpack.c.b16 %v5698, %v5685
        %v6986 = vpack.c.b16 %v5699, %v5686
        %v6987 = vpack.c.b16 %v5700, %v5687
        %v6988 = vpack.c.b16 %v5701, %v5688
        %v6989 = vpack.c.b16 %v5702, %v5689
        %v6990 = vpack.c.b16 %v5703, %v5690
        %v6991 = vpack.c.b16 %v5704, %v5691
        %v6992 = vpack.c.b16 %v5705, %v5692
        %v6993 = vpack.c.b16 %v5706, %v5693
        %v6994 = vpack.c.b16 %v5707, %v5694
        %v6995 = vpack.c.b16 %v5721, %v5708
        %v6996 = vpack.c.b16 %v5722, %v5709
        %v6997 = vpack.c.b16 %v5723, %v5710
        %v6998 = vpack.c.b16 %v5724, %v5711
        %v6999 = vpack.c.b16 %v5725, %v5712
        %v7000 = vpack.c.b16 %v5726, %v5713
        %v7001 = vpack.c.b16 %v5727, %v5714
        %v7002 = vpack.c.b16 %v5728, %v5715
        %v7003 = vpack.c.b16 %v5729, %v5716
        %v7004 = vpack.c.b16 %v5730, %v5717
        %v7005 = vpack.c.b16 %v5731, %v5718
        %v7006 = vpack.c.b16 %v5732, %v5719
        %v7007 = vpack.c.b16 %v5733, %v5720
        %v7008 = vpack.c.b16 %v5747, %v5734
        %v7009 = vpack.c.b16 %v5748, %v5735
        %v7010 = vpack.c.b16 %v5749, %v5736
        %v7011 = vpack.c.b16 %v5750, %v5737
        %v7012 = vpack.c.b16 %v5751, %v5738
        %v7013 = vpack.c.b16 %v5752, %v5739
        %v7014 = vpack.c.b16 %v5753, %v5740
        %v7015 = vpack.c.b16 %v5754, %v5741
        %v7016 = vpack.c.b16 %v5755, %v5742
        %v7017 = vpack.c.b16 %v5756, %v5743
        %v7018 = vpack.c.b16 %v5757, %v5744
        %v7019 = vpack.c.b16 %v5758, %v5745
        %v7020 = vpack.c.b16 %v5759, %v5746
        %v7021 = vpack.c.b16 %v5773, %v5760
        %v7022 = vpack.c.b16 %v5774, %v5761
        %v7023 = vpack.c.b16 %v5775, %v5762
        %v7024 = vpack.c.b16 %v5776, %v5763
        %v7025 = vpack.c.b16 %v5777, %v5764
        %v7026 = vpack.c.b16 %v5778, %v5765
        %v7027 = vpack.c.b16 %v5779, %v5766
        %v7028 = vpack.c.b16 %v5780, %v5767
        %v7029 = vpack.c.b16 %v5781, %v5768
        %v7030 = vpack.c.b16 %v5782, %v5769
        %v7031 = vpack.c.b16 %v5783, %v5770
        %v7032 = vpack.c.b16 %v5784, %v5771
        %v7033 = vpack.c.b16 %v5785, %v5772
        %8282 = vmatprep.subr.bf16.mxu0 %v5878
        %8283 = vmatpush1.bf16.msra.mxu0 %v5877
        %8284 = vmatprep.subr.bf16.mxu0 %v5865
        %8285 = vmatpush1.bf16.msra.mxu0 %v5864
        %8286 = vmatprep.subr.bf16.mxu0 %v5852
        %8287 = vmatpush1.bf16.msra.mxu0 %v5851
        %8288 = vmatprep.subr.bf16.mxu0 %v5839
        %8289 = vmatpush1.bf16.msra.mxu0 %v5838
        %8290 = vmatprep.subr.bf16.mxu0 %v5826
        %8291 = vmatpush1.bf16.msra.mxu0 %v5825
        %8292 = vmatprep.subr.bf16.mxu0 %v5813
        %8293 = vmatpush1.bf16.msra.mxu0 %v5812
        %8294 = vmatprep.subr.bf16.mxu0 %v5800
        %8295 = vmatpush1.bf16.msra.mxu0 %v5799
        %8296 = vmatprep.subr.bf16.mxu0 %v5787
        %8297 = vmatpush1.bf16.msra.mxu0 %v5786
        %8298 = vmatprep.subr.bf16.mxu0 %v5982
        %8299 = vmatpush2.bf16.msra.mxu0 %v5981
        %8300 = vmatprep.subr.bf16.mxu0 %v5969
        %8301 = vmatpush2.bf16.msra.mxu0 %v5968
        %8302 = vmatprep.subr.bf16.mxu0 %v5956
        %8303 = vmatpush2.bf16.msra.mxu0 %v5955
        %8304 = vmatprep.subr.bf16.mxu0 %v5943
        %8305 = vmatpush2.bf16.msra.mxu0 %v5942
        %8306 = vmatprep.subr.bf16.mxu0 %v5930
        %8307 = vmatpush2.bf16.msra.mxu0 %v5929
        %8308 = vmatprep.subr.bf16.mxu0 %v5917
        %8309 = vmatpush2.bf16.msra.mxu0 %v5916
        %8310 = vmatprep.subr.bf16.mxu0 %v5904
        %8311 = vmatpush2.bf16.msra.mxu0 %v5903
        %8312 = vmatprep.subr.bf16.mxu0 %v5891
        %8313 = vmatpush2.bf16.msra.mxu0 %v5890
        %8314 = vmatprep.mubr.bf16.mxu0 %v1923
        %8315 = vmatmul.mubr.bf16.gmra.mxu0 %v1922
        %v8316 = vpop.f32.mrf.mxu0
        %v8317 = vadd.f32 %v1824, %v8316
        %v8318 = vpop.f32.mrf.mxu0
        %v8319 = vadd.f32 %v1828, %v8318
        %v8320 = vpop.f32.mrf.mxu0
        %v8321 = vadd.f32 %v1824, %v8320
        %v8322 = vpop.f32.mrf.mxu0
        %v8323 = vadd.f32 %v1828, %v8322
        %8324 = vdwg.mxu0
        %8325 = vmatprep.subr.bf16.mxu0 %v6086
        %8326 = vmatpush1.bf16.msra.mxu0 %v6085
        %8327 = vmatprep.subr.bf16.mxu0 %v6073
        %8328 = vmatpush1.bf16.msra.mxu0 %v6072
        %8329 = vmatprep.subr.bf16.mxu0 %v6060
        %8330 = vmatpush1.bf16.msra.mxu0 %v6059
        %8331 = vmatprep.subr.bf16.mxu0 %v6047
        %8332 = vmatpush1.bf16.msra.mxu0 %v6046
        %8333 = vmatprep.subr.bf16.mxu0 %v6034
        %8334 = vmatpush1.bf16.msra.mxu0 %v6033
        %8335 = vmatprep.subr.bf16.mxu0 %v6021
        %8336 = vmatpush1.bf16.msra.mxu0 %v6020
        %8337 = vmatprep.subr.bf16.mxu0 %v6008
        %8338 = vmatpush1.bf16.msra.mxu0 %v6007
        %8339 = vmatprep.subr.bf16.mxu0 %v5995
        %8340 = vmatpush1.bf16.msra.mxu0 %v5994
        %8341 = vmatprep.subr.bf16.mxu0 %v6190
        %8342 = vmatpush2.bf16.msra.mxu0 %v6189
        %8343 = vmatprep.subr.bf16.mxu0 %v6177
        %8344 = vmatpush2.bf16.msra.mxu0 %v6176
        %8345 = vmatprep.subr.bf16.mxu0 %v6164
        %8346 = vmatpush2.bf16.msra.mxu0 %v6163
        %8347 = vmatprep.subr.bf16.mxu0 %v6151
        %8348 = vmatpush2.bf16.msra.mxu0 %v6150
        %8349 = vmatprep.subr.bf16.mxu0 %v6138
        %8350 = vmatpush2.bf16.msra.mxu0 %v6137
        %8351 = vmatprep.subr.bf16.mxu0 %v6125
        %8352 = vmatpush2.bf16.msra.mxu0 %v6124
        %8353 = vmatprep.subr.bf16.mxu0 %v6112
        %8354 = vmatpush2.bf16.msra.mxu0 %v6111
        %8355 = vmatprep.subr.bf16.mxu0 %v6099
        %8356 = vmatpush2.bf16.msra.mxu0 %v6098
        %8357 = vmatprep.mubr.bf16.mxu0 %v1925
        %8358 = vmatmul.mubr.bf16.gmra.mxu0 %v1924
        %v8359 = vpop.f32.mrf.mxu0
        %v8360 = vadd.f32 %v8317, %v8359
        %v8361 = vpop.f32.mrf.mxu0
        %v8362 = vadd.f32 %v8319, %v8361
        %v8363 = vpop.f32.mrf.mxu0
        %v8364 = vadd.f32 %v8321, %v8363
        %v8365 = vpop.f32.mrf.mxu0
        %v8366 = vadd.f32 %v8323, %v8365
        %8367 = vdwg.mxu0
        %8368 = vmatprep.subr.bf16.mxu0 %v6294
        %8369 = vmatpush1.bf16.msra.mxu0 %v6293
        %8370 = vmatprep.subr.bf16.mxu0 %v6281
        %8371 = vmatpush1.bf16.msra.mxu0 %v6280
        %8372 = vmatprep.subr.bf16.mxu0 %v6268
        %8373 = vmatpush1.bf16.msra.mxu0 %v6267
        %8374 = vmatprep.subr.bf16.mxu0 %v6255
        %8375 = vmatpush1.bf16.msra.mxu0 %v6254
        %8376 = vmatprep.subr.bf16.mxu0 %v6242
        %8377 = vmatpush1.bf16.msra.mxu0 %v6241
        %8378 = vmatprep.subr.bf16.mxu0 %v6229
        %8379 = vmatpush1.bf16.msra.mxu0 %v6228
        %8380 = vmatprep.subr.bf16.mxu0 %v6216
        %8381 = vmatpush1.bf16.msra.mxu0 %v6215
        %8382 = vmatprep.subr.bf16.mxu0 %v6203
        %8383 = vmatpush1.bf16.msra.mxu0 %v6202
        %8384 = vmatprep.subr.bf16.mxu0 %v6398
        %8385 = vmatpush2.bf16.msra.mxu0 %v6397
        %8386 = vmatprep.subr.bf16.mxu0 %v6385
        %8387 = vmatpush2.bf16.msra.mxu0 %v6384
        %8388 = vmatprep.subr.bf16.mxu0 %v6372
        %8389 = vmatpush2.bf16.msra.mxu0 %v6371
        %8390 = vmatprep.subr.bf16.mxu0 %v6359
        %8391 = vmatpush2.bf16.msra.mxu0 %v6358
        %8392 = vmatprep.subr.bf16.mxu0 %v6346
        %8393 = vmatpush2.bf16.msra.mxu0 %v6345
        %8394 = vmatprep.subr.bf16.mxu0 %v6333
        %8395 = vmatpush2.bf16.msra.mxu0 %v6332
        %8396 = vmatprep.subr.bf16.mxu0 %v6320
        %8397 = vmatpush2.bf16.msra.mxu0 %v6319
        %8398 = vmatprep.subr.bf16.mxu0 %v6307
        %8399 = vmatpush2.bf16.msra.mxu0 %v6306
        %8400 = vmatprep.mubr.bf16.mxu0 %v1927
        %8401 = vmatmul.mubr.bf16.gmra.mxu0 %v1926
        %v8402 = vpop.f32.mrf.mxu0
        %v8403 = vadd.f32 %v8360, %v8402
        %v8404 = vpop.f32.mrf.mxu0
        %v8405 = vadd.f32 %v8362, %v8404
        %v8406 = vpop.f32.mrf.mxu0
        %v8407 = vadd.f32 %v8364, %v8406
        %v8408 = vpop.f32.mrf.mxu0
        %v8409 = vadd.f32 %v8366, %v8408
        %8410 = vdwg.mxu0
        %8411 = vmatprep.subr.bf16.mxu0 %v6502
        %8412 = vmatpush1.bf16.msra.mxu0 %v6501
        %8413 = vmatprep.subr.bf16.mxu0 %v6489
        %8414 = vmatpush1.bf16.msra.mxu0 %v6488
        %8415 = vmatprep.subr.bf16.mxu0 %v6476
        %8416 = vmatpush1.bf16.msra.mxu0 %v6475
        %8417 = vmatprep.subr.bf16.mxu0 %v6463
        %8418 = vmatpush1.bf16.msra.mxu0 %v6462
        %8419 = vmatprep.subr.bf16.mxu0 %v6450
        %8420 = vmatpush1.bf16.msra.mxu0 %v6449
        %8421 = vmatprep.subr.bf16.mxu0 %v6437
        %8422 = vmatpush1.bf16.msra.mxu0 %v6436
        %8423 = vmatprep.subr.bf16.mxu0 %v6424
        %8424 = vmatpush1.bf16.msra.mxu0 %v6423
        %8425 = vmatprep.subr.bf16.mxu0 %v6411
        %8426 = vmatpush1.bf16.msra.mxu0 %v6410
        %8427 = vmatprep.subr.bf16.mxu0 %v6606
        %8428 = vmatpush2.bf16.msra.mxu0 %v6605
        %8429 = vmatprep.subr.bf16.mxu0 %v6593
        %8430 = vmatpush2.bf16.msra.mxu0 %v6592
        %8431 = vmatprep.subr.bf16.mxu0 %v6580
        %8432 = vmatpush2.bf16.msra.mxu0 %v6579
        %8433 = vmatprep.subr.bf16.mxu0 %v6567
        %8434 = vmatpush2.bf16.msra.mxu0 %v6566
        %8435 = vmatprep.subr.bf16.mxu0 %v6554
        %8436 = vmatpush2.bf16.msra.mxu0 %v6553
        %8437 = vmatprep.subr.bf16.mxu0 %v6541
        %8438 = vmatpush2.bf16.msra.mxu0 %v6540
        %8439 = vmatprep.subr.bf16.mxu0 %v6528
        %8440 = vmatpush2.bf16.msra.mxu0 %v6527
        %8441 = vmatprep.subr.bf16.mxu0 %v6515
        %8442 = vmatpush2.bf16.msra.mxu0 %v6514
        %8443 = vmatprep.mubr.bf16.mxu0 %v1929
        %8444 = vmatmul.mubr.bf16.gmra.mxu0 %v1928
        %v8445 = vpop.f32.mrf.mxu0
        %v8446 = vadd.f32 %v8403, %v8445
        %v8447 = vpop.f32.mrf.mxu0
        %v8448 = vadd.f32 %v8405, %v8447
        %v8449 = vpop.f32.mrf.mxu0
        %v8450 = vadd.f32 %v8407, %v8449
        %v8451 = vpop.f32.mrf.mxu0
        %v8452 = vadd.f32 %v8409, %v8451
        %8453 = vdwg.mxu0
        %8454 = vmatprep.subr.bf16.mxu0 %v6710
        %8455 = vmatpush1.bf16.msra.mxu0 %v6709
        %8456 = vmatprep.subr.bf16.mxu0 %v6697
        %8457 = vmatpush1.bf16.msra.mxu0 %v6696
        %8458 = vmatprep.subr.bf16.mxu0 %v6684
        %8459 = vmatpush1.bf16.msra.mxu0 %v6683
        %8460 = vmatprep.subr.bf16.mxu0 %v6671
        %8461 = vmatpush1.bf16.msra.mxu0 %v6670
        %8462 = vmatprep.subr.bf16.mxu0 %v6658
        %8463 = vmatpush1.bf16.msra.mxu0 %v6657
        %8464 = vmatprep.subr.bf16.mxu0 %v6645
        %8465 = vmatpush1.bf16.msra.mxu0 %v6644
        %8466 = vmatprep.subr.bf16.mxu0 %v6632
        %8467 = vmatpush1.bf16.msra.mxu0 %v6631
        %8468 = vmatprep.subr.bf16.mxu0 %v6619
        %8469 = vmatpush1.bf16.msra.mxu0 %v6618
        %8470 = vmatprep.subr.bf16.mxu0 %v6814
        %8471 = vmatpush2.bf16.msra.mxu0 %v6813
        %8472 = vmatprep.subr.bf16.mxu0 %v6801
        %8473 = vmatpush2.bf16.msra.mxu0 %v6800
        %8474 = vmatprep.subr.bf16.mxu0 %v6788
        %8475 = vmatpush2.bf16.msra.mxu0 %v6787
        %8476 = vmatprep.subr.bf16.mxu0 %v6775
        %8477 = vmatpush2.bf16.msra.mxu0 %v6774
        %8478 = vmatprep.subr.bf16.mxu0 %v6762
        %8479 = vmatpush2.bf16.msra.mxu0 %v6761
        %8480 = vmatprep.subr.bf16.mxu0 %v6749
        %8481 = vmatpush2.bf16.msra.mxu0 %v6748
        %8482 = vmatprep.subr.bf16.mxu0 %v6736
        %8483 = vmatpush2.bf16.msra.mxu0 %v6735
        %8484 = vmatprep.subr.bf16.mxu0 %v6723
        %8485 = vmatpush2.bf16.msra.mxu0 %v6722
        %8486 = vmatprep.mubr.bf16.mxu0 %v1931
        %8487 = vmatmul.mubr.bf16.gmra.mxu0 %v1930
        %v8488 = vpop.f32.mrf.mxu0
        %v8489 = vadd.f32 %v8446, %v8488
        %v8490 = vpop.f32.mrf.mxu0
        %v8491 = vadd.f32 %v8448, %v8490
        %v8492 = vpop.f32.mrf.mxu0
        %v8493 = vadd.f32 %v8450, %v8492
        %v8494 = vpop.f32.mrf.mxu0
        %v8495 = vadd.f32 %v8452, %v8494
        %8496 = vdwg.mxu0
        %8497 = vmatprep.subr.bf16.mxu0 %v6918
        %8498 = vmatpush1.bf16.msra.mxu0 %v6917
        %8499 = vmatprep.subr.bf16.mxu0 %v6905
        %8500 = vmatpush1.bf16.msra.mxu0 %v6904
        %8501 = vmatprep.subr.bf16.mxu0 %v6892
        %8502 = vmatpush1.bf16.msra.mxu0 %v6891
        %8503 = vmatprep.subr.bf16.mxu0 %v6879
        %8504 = vmatpush1.bf16.msra.mxu0 %v6878
        %8505 = vmatprep.subr.bf16.mxu0 %v6866
        %8506 = vmatpush1.bf16.msra.mxu0 %v6865
        %8507 = vmatprep.subr.bf16.mxu0 %v6853
        %8508 = vmatpush1.bf16.msra.mxu0 %v6852
        %8509 = vmatprep.subr.bf16.mxu0 %v6840
        %8510 = vmatpush1.bf16.msra.mxu0 %v6839
        %8511 = vmatprep.subr.bf16.mxu0 %v6827
        %8512 = vmatpush1.bf16.msra.mxu0 %v6826
        %8513 = vmatprep.subr.bf16.mxu0 %v7022
        %8514 = vmatpush2.bf16.msra.mxu0 %v7021
        %8515 = vmatprep.subr.bf16.mxu0 %v7009
        %8516 = vmatpush2.bf16.msra.mxu0 %v7008
        %8517 = vmatprep.subr.bf16.mxu0 %v6996
        %8518 = vmatpush2.bf16.msra.mxu0 %v6995
        %8519 = vmatprep.subr.bf16.mxu0 %v6983
        %8520 = vmatpush2.bf16.msra.mxu0 %v6982
        %8521 = vmatprep.subr.bf16.mxu0 %v6970
        %8522 = vmatpush2.bf16.msra.mxu0 %v6969
        %8523 = vmatprep.subr.bf16.mxu0 %v6957
        %8524 = vmatpush2.bf16.msra.mxu0 %v6956
        %8525 = vmatprep.subr.bf16.mxu0 %v6944
        %8526 = vmatpush2.bf16.msra.mxu0 %v6943
        %8527 = vmatprep.subr.bf16.mxu0 %v6931
        %8528 = vmatpush2.bf16.msra.mxu0 %v6930
        %8529 = vmatprep.mubr.bf16.mxu0 %v1933
        %8530 = vmatmul.mubr.bf16.gmra.mxu0 %v1932
        %v8531 = vpop.f32.mrf.mxu0
        %v8532 = vadd.f32 %v8489, %v8531
        %v8533 = vpop.f32.mrf.mxu0
        %v8534 = vadd.f32 %v8491, %v8533
        %v8535 = vpop.f32.mrf.mxu0
        %v8536 = vadd.f32 %v8493, %v8535
        %v8537 = vpop.f32.mrf.mxu0
        %v8538 = vadd.f32 %v8495, %v8537
        %8539 = vdwg.mxu0
        %8540 = vmatprep.subr.bf16.mxu0 %v5880
        %8541 = vmatpush1.bf16.msra.mxu0 %v5879
        %8542 = vmatprep.subr.bf16.mxu0 %v5867
        %8543 = vmatpush1.bf16.msra.mxu0 %v5866
        %8544 = vmatprep.subr.bf16.mxu0 %v5854
        %8545 = vmatpush1.bf16.msra.mxu0 %v5853
        %8546 = vmatprep.subr.bf16.mxu0 %v5841
        %8547 = vmatpush1.bf16.msra.mxu0 %v5840
        %8548 = vmatprep.subr.bf16.mxu0 %v5828
        %8549 = vmatpush1.bf16.msra.mxu0 %v5827
        %8550 = vmatprep.subr.bf16.mxu0 %v5815
        %8551 = vmatpush1.bf16.msra.mxu0 %v5814
        %8552 = vmatprep.subr.bf16.mxu0 %v5802
        %8553 = vmatpush1.bf16.msra.mxu0 %v5801
        %8554 = vmatprep.subr.bf16.mxu0 %v5789
        %8555 = vmatpush1.bf16.msra.mxu0 %v5788
        %8556 = vmatprep.subr.bf16.mxu0 %v5984
        %8557 = vmatpush2.bf16.msra.mxu0 %v5983
        %8558 = vmatprep.subr.bf16.mxu0 %v5971
        %8559 = vmatpush2.bf16.msra.mxu0 %v5970
        %8560 = vmatprep.subr.bf16.mxu0 %v5958
        %8561 = vmatpush2.bf16.msra.mxu0 %v5957
        %8562 = vmatprep.subr.bf16.mxu0 %v5945
        %8563 = vmatpush2.bf16.msra.mxu0 %v5944
        %8564 = vmatprep.subr.bf16.mxu0 %v5932
        %8565 = vmatpush2.bf16.msra.mxu0 %v5931
        %8566 = vmatprep.subr.bf16.mxu0 %v5919
        %8567 = vmatpush2.bf16.msra.mxu0 %v5918
        %8568 = vmatprep.subr.bf16.mxu0 %v5906
        %8569 = vmatpush2.bf16.msra.mxu0 %v5905
        %8570 = vmatprep.subr.bf16.mxu0 %v5893
        %8571 = vmatpush2.bf16.msra.mxu0 %v5892
        %8572 = vmatprep.mubr.bf16.mxu0 %v1923
        %8573 = vmatmul.mubr.bf16.gmra.mxu0 %v1922
        %v8574 = vpop.f32.mrf.mxu0
        %v8575 = vadd.f32 %v1832, %v8574
        %v8576 = vpop.f32.mrf.mxu0
        %v8577 = vadd.f32 %v1836, %v8576
        %v8578 = vpop.f32.mrf.mxu0
        %v8579 = vadd.f32 %v1832, %v8578
        %v8580 = vpop.f32.mrf.mxu0
        %v8581 = vadd.f32 %v1836, %v8580
        %8582 = vdwg.mxu0
        %8583 = vmatprep.subr.bf16.mxu0 %v6088
        %8584 = vmatpush1.bf16.msra.mxu0 %v6087
        %8585 = vmatprep.subr.bf16.mxu0 %v6075
        %8586 = vmatpush1.bf16.msra.mxu0 %v6074
        %8587 = vmatprep.subr.bf16.mxu0 %v6062
        %8588 = vmatpush1.bf16.msra.mxu0 %v6061
        %8589 = vmatprep.subr.bf16.mxu0 %v6049
        %8590 = vmatpush1.bf16.msra.mxu0 %v6048
        %8591 = vmatprep.subr.bf16.mxu0 %v6036
        %8592 = vmatpush1.bf16.msra.mxu0 %v6035
        %8593 = vmatprep.subr.bf16.mxu0 %v6023
        %8594 = vmatpush1.bf16.msra.mxu0 %v6022
        %8595 = vmatprep.subr.bf16.mxu0 %v6010
        %8596 = vmatpush1.bf16.msra.mxu0 %v6009
        %8597 = vmatprep.subr.bf16.mxu0 %v5997
        %8598 = vmatpush1.bf16.msra.mxu0 %v5996
        %8599 = vmatprep.subr.bf16.mxu0 %v6192
        %8600 = vmatpush2.bf16.msra.mxu0 %v6191
        %8601 = vmatprep.subr.bf16.mxu0 %v6179
        %8602 = vmatpush2.bf16.msra.mxu0 %v6178
        %8603 = vmatprep.subr.bf16.mxu0 %v6166
        %8604 = vmatpush2.bf16.msra.mxu0 %v6165
        %8605 = vmatprep.subr.bf16.mxu0 %v6153
        %8606 = vmatpush2.bf16.msra.mxu0 %v6152
        %8607 = vmatprep.subr.bf16.mxu0 %v6140
        %8608 = vmatpush2.bf16.msra.mxu0 %v6139
        %8609 = vmatprep.subr.bf16.mxu0 %v6127
        %8610 = vmatpush2.bf16.msra.mxu0 %v6126
        %8611 = vmatprep.subr.bf16.mxu0 %v6114
        %8612 = vmatpush2.bf16.msra.mxu0 %v6113
        %8613 = vmatprep.subr.bf16.mxu0 %v6101
        %8614 = vmatpush2.bf16.msra.mxu0 %v6100
        %8615 = vmatprep.mubr.bf16.mxu0 %v1925
        %8616 = vmatmul.mubr.bf16.gmra.mxu0 %v1924
        %v8617 = vpop.f32.mrf.mxu0
        %v8618 = vadd.f32 %v8575, %v8617
        %v8619 = vpop.f32.mrf.mxu0
        %v8620 = vadd.f32 %v8577, %v8619
        %v8621 = vpop.f32.mrf.mxu0
        %v8622 = vadd.f32 %v8579, %v8621
        %v8623 = vpop.f32.mrf.mxu0
        %v8624 = vadd.f32 %v8581, %v8623
        %8625 = vdwg.mxu0
        %8626 = vmatprep.subr.bf16.mxu0 %v6296
        %8627 = vmatpush1.bf16.msra.mxu0 %v6295
        %8628 = vmatprep.subr.bf16.mxu0 %v6283
        %8629 = vmatpush1.bf16.msra.mxu0 %v6282
        %8630 = vmatprep.subr.bf16.mxu0 %v6270
        %8631 = vmatpush1.bf16.msra.mxu0 %v6269
        %8632 = vmatprep.subr.bf16.mxu0 %v6257
        %8633 = vmatpush1.bf16.msra.mxu0 %v6256
        %8634 = vmatprep.subr.bf16.mxu0 %v6244
        %8635 = vmatpush1.bf16.msra.mxu0 %v6243
        %8636 = vmatprep.subr.bf16.mxu0 %v6231
        %8637 = vmatpush1.bf16.msra.mxu0 %v6230
        %8638 = vmatprep.subr.bf16.mxu0 %v6218
        %8639 = vmatpush1.bf16.msra.mxu0 %v6217
        %8640 = vmatprep.subr.bf16.mxu0 %v6205
        %8641 = vmatpush1.bf16.msra.mxu0 %v6204
        %8642 = vmatprep.subr.bf16.mxu0 %v6400
        %8643 = vmatpush2.bf16.msra.mxu0 %v6399
        %8644 = vmatprep.subr.bf16.mxu0 %v6387
        %8645 = vmatpush2.bf16.msra.mxu0 %v6386
        %8646 = vmatprep.subr.bf16.mxu0 %v6374
        %8647 = vmatpush2.bf16.msra.mxu0 %v6373
        %8648 = vmatprep.subr.bf16.mxu0 %v6361
        %8649 = vmatpush2.bf16.msra.mxu0 %v6360
        %8650 = vmatprep.subr.bf16.mxu0 %v6348
        %8651 = vmatpush2.bf16.msra.mxu0 %v6347
        %8652 = vmatprep.subr.bf16.mxu0 %v6335
        %8653 = vmatpush2.bf16.msra.mxu0 %v6334
        %8654 = vmatprep.subr.bf16.mxu0 %v6322
        %8655 = vmatpush2.bf16.msra.mxu0 %v6321
        %8656 = vmatprep.subr.bf16.mxu0 %v6309
        %8657 = vmatpush2.bf16.msra.mxu0 %v6308
        %8658 = vmatprep.mubr.bf16.mxu0 %v1927
        %8659 = vmatmul.mubr.bf16.gmra.mxu0 %v1926
        %v8660 = vpop.f32.mrf.mxu0
        %v8661 = vadd.f32 %v8618, %v8660
        %v8662 = vpop.f32.mrf.mxu0
        %v8663 = vadd.f32 %v8620, %v8662
        %v8664 = vpop.f32.mrf.mxu0
        %v8665 = vadd.f32 %v8622, %v8664
        %v8666 = vpop.f32.mrf.mxu0
        %v8667 = vadd.f32 %v8624, %v8666
        %8668 = vdwg.mxu0
        %8669 = vmatprep.subr.bf16.mxu0 %v6504
        %8670 = vmatpush1.bf16.msra.mxu0 %v6503
        %8671 = vmatprep.subr.bf16.mxu0 %v6491
        %8672 = vmatpush1.bf16.msra.mxu0 %v6490
        %8673 = vmatprep.subr.bf16.mxu0 %v6478
        %8674 = vmatpush1.bf16.msra.mxu0 %v6477
        %8675 = vmatprep.subr.bf16.mxu0 %v6465
        %8676 = vmatpush1.bf16.msra.mxu0 %v6464
        %8677 = vmatprep.subr.bf16.mxu0 %v6452
        %8678 = vmatpush1.bf16.msra.mxu0 %v6451
        %8679 = vmatprep.subr.bf16.mxu0 %v6439
        %8680 = vmatpush1.bf16.msra.mxu0 %v6438
        %8681 = vmatprep.subr.bf16.mxu0 %v6426
        %8682 = vmatpush1.bf16.msra.mxu0 %v6425
        %8683 = vmatprep.subr.bf16.mxu0 %v6413
        %8684 = vmatpush1.bf16.msra.mxu0 %v6412
        %8685 = vmatprep.subr.bf16.mxu0 %v6608
        %8686 = vmatpush2.bf16.msra.mxu0 %v6607
        %8687 = vmatprep.subr.bf16.mxu0 %v6595
        %8688 = vmatpush2.bf16.msra.mxu0 %v6594
        %8689 = vmatprep.subr.bf16.mxu0 %v6582
        %8690 = vmatpush2.bf16.msra.mxu0 %v6581
        %8691 = vmatprep.subr.bf16.mxu0 %v6569
        %8692 = vmatpush2.bf16.msra.mxu0 %v6568
        %8693 = vmatprep.subr.bf16.mxu0 %v6556
        %8694 = vmatpush2.bf16.msra.mxu0 %v6555
        %8695 = vmatprep.subr.bf16.mxu0 %v6543
        %8696 = vmatpush2.bf16.msra.mxu0 %v6542
        %8697 = vmatprep.subr.bf16.mxu0 %v6530
        %8698 = vmatpush2.bf16.msra.mxu0 %v6529
        %8699 = vmatprep.subr.bf16.mxu0 %v6517
        %8700 = vmatpush2.bf16.msra.mxu0 %v6516
        %8701 = vmatprep.mubr.bf16.mxu0 %v1929
        %8702 = vmatmul.mubr.bf16.gmra.mxu0 %v1928
        %v8703 = vpop.f32.mrf.mxu0
        %v8704 = vadd.f32 %v8661, %v8703
        %v8705 = vpop.f32.mrf.mxu0
        %v8706 = vadd.f32 %v8663, %v8705
        %v8707 = vpop.f32.mrf.mxu0
        %v8708 = vadd.f32 %v8665, %v8707
        %v8709 = vpop.f32.mrf.mxu0
        %v8710 = vadd.f32 %v8667, %v8709
        %8711 = vdwg.mxu0
        %8712 = vmatprep.subr.bf16.mxu0 %v6712
        %8713 = vmatpush1.bf16.msra.mxu0 %v6711
        %8714 = vmatprep.subr.bf16.mxu0 %v6699
        %8715 = vmatpush1.bf16.msra.mxu0 %v6698
        %8716 = vmatprep.subr.bf16.mxu0 %v6686
        %8717 = vmatpush1.bf16.msra.mxu0 %v6685
        %8718 = vmatprep.subr.bf16.mxu0 %v6673
        %8719 = vmatpush1.bf16.msra.mxu0 %v6672
        %8720 = vmatprep.subr.bf16.mxu0 %v6660
        %8721 = vmatpush1.bf16.msra.mxu0 %v6659
        %8722 = vmatprep.subr.bf16.mxu0 %v6647
        %8723 = vmatpush1.bf16.msra.mxu0 %v6646
        %8724 = vmatprep.subr.bf16.mxu0 %v6634
        %8725 = vmatpush1.bf16.msra.mxu0 %v6633
        %8726 = vmatprep.subr.bf16.mxu0 %v6621
        %8727 = vmatpush1.bf16.msra.mxu0 %v6620
        %8728 = vmatprep.subr.bf16.mxu0 %v6816
        %8729 = vmatpush2.bf16.msra.mxu0 %v6815
        %8730 = vmatprep.subr.bf16.mxu0 %v6803
        %8731 = vmatpush2.bf16.msra.mxu0 %v6802
        %8732 = vmatprep.subr.bf16.mxu0 %v6790
        %8733 = vmatpush2.bf16.msra.mxu0 %v6789
        %8734 = vmatprep.subr.bf16.mxu0 %v6777
        %8735 = vmatpush2.bf16.msra.mxu0 %v6776
        %8736 = vmatprep.subr.bf16.mxu0 %v6764
        %8737 = vmatpush2.bf16.msra.mxu0 %v6763
        %8738 = vmatprep.subr.bf16.mxu0 %v6751
        %8739 = vmatpush2.bf16.msra.mxu0 %v6750
        %8740 = vmatprep.subr.bf16.mxu0 %v6738
        %8741 = vmatpush2.bf16.msra.mxu0 %v6737
        %8742 = vmatprep.subr.bf16.mxu0 %v6725
        %8743 = vmatpush2.bf16.msra.mxu0 %v6724
        %8744 = vmatprep.mubr.bf16.mxu0 %v1931
        %8745 = vmatmul.mubr.bf16.gmra.mxu0 %v1930
        %v8746 = vpop.f32.mrf.mxu0
        %v8747 = vadd.f32 %v8704, %v8746
        %v8748 = vpop.f32.mrf.mxu0
        %v8749 = vadd.f32 %v8706, %v8748
        %v8750 = vpop.f32.mrf.mxu0
        %v8751 = vadd.f32 %v8708, %v8750
        %v8752 = vpop.f32.mrf.mxu0
        %v8753 = vadd.f32 %v8710, %v8752
        %8754 = vdwg.mxu0
        %8755 = vmatprep.subr.bf16.mxu0 %v6920
        %8756 = vmatpush1.bf16.msra.mxu0 %v6919
        %8757 = vmatprep.subr.bf16.mxu0 %v6907
        %8758 = vmatpush1.bf16.msra.mxu0 %v6906
        %8759 = vmatprep.subr.bf16.mxu0 %v6894
        %8760 = vmatpush1.bf16.msra.mxu0 %v6893
        %8761 = vmatprep.subr.bf16.mxu0 %v6881
        %8762 = vmatpush1.bf16.msra.mxu0 %v6880
        %8763 = vmatprep.subr.bf16.mxu0 %v6868
        %8764 = vmatpush1.bf16.msra.mxu0 %v6867
        %8765 = vmatprep.subr.bf16.mxu0 %v6855
        %8766 = vmatpush1.bf16.msra.mxu0 %v6854
        %8767 = vmatprep.subr.bf16.mxu0 %v6842
        %8768 = vmatpush1.bf16.msra.mxu0 %v6841
        %8769 = vmatprep.subr.bf16.mxu0 %v6829
        %8770 = vmatpush1.bf16.msra.mxu0 %v6828
        %8771 = vmatprep.subr.bf16.mxu0 %v7024
        %8772 = vmatpush2.bf16.msra.mxu0 %v7023
        %8773 = vmatprep.subr.bf16.mxu0 %v7011
        %8774 = vmatpush2.bf16.msra.mxu0 %v7010
        %8775 = vmatprep.subr.bf16.mxu0 %v6998
        %8776 = vmatpush2.bf16.msra.mxu0 %v6997
        %8777 = vmatprep.subr.bf16.mxu0 %v6985
        %8778 = vmatpush2.bf16.msra.mxu0 %v6984
        %8779 = vmatprep.subr.bf16.mxu0 %v6972
        %8780 = vmatpush2.bf16.msra.mxu0 %v6971
        %8781 = vmatprep.subr.bf16.mxu0 %v6959
        %8782 = vmatpush2.bf16.msra.mxu0 %v6958
        %8783 = vmatprep.subr.bf16.mxu0 %v6946
        %8784 = vmatpush2.bf16.msra.mxu0 %v6945
        %8785 = vmatprep.subr.bf16.mxu0 %v6933
        %8786 = vmatpush2.bf16.msra.mxu0 %v6932
        %8787 = vmatprep.mubr.bf16.mxu0 %v1933
        %8788 = vmatmul.mubr.bf16.gmra.mxu0 %v1932
        %v8789 = vpop.f32.mrf.mxu0
        %v8790 = vadd.f32 %v8747, %v8789
        %v8791 = vpop.f32.mrf.mxu0
        %v8792 = vadd.f32 %v8749, %v8791
        %v8793 = vpop.f32.mrf.mxu0
        %v8794 = vadd.f32 %v8751, %v8793
        %v8795 = vpop.f32.mrf.mxu0
        %v8796 = vadd.f32 %v8753, %v8795
        %8797 = vdwg.mxu0
        %8798 = vmatprep.subr.bf16.mxu0 %v5882
        %8799 = vmatpush1.bf16.msra.mxu0 %v5881
        %8800 = vmatprep.subr.bf16.mxu0 %v5869
        %8801 = vmatpush1.bf16.msra.mxu0 %v5868
        %8802 = vmatprep.subr.bf16.mxu0 %v5856
        %8803 = vmatpush1.bf16.msra.mxu0 %v5855
        %8804 = vmatprep.subr.bf16.mxu0 %v5843
        %8805 = vmatpush1.bf16.msra.mxu0 %v5842
        %8806 = vmatprep.subr.bf16.mxu0 %v5830
        %8807 = vmatpush1.bf16.msra.mxu0 %v5829
        %8808 = vmatprep.subr.bf16.mxu0 %v5817
        %8809 = vmatpush1.bf16.msra.mxu0 %v5816
        %8810 = vmatprep.subr.bf16.mxu0 %v5804
        %8811 = vmatpush1.bf16.msra.mxu0 %v5803
        %8812 = vmatprep.subr.bf16.mxu0 %v5791
        %8813 = vmatpush1.bf16.msra.mxu0 %v5790
        %8814 = vmatprep.subr.bf16.mxu0 %v5986
        %8815 = vmatpush2.bf16.msra.mxu0 %v5985
        %8816 = vmatprep.subr.bf16.mxu0 %v5973
        %8817 = vmatpush2.bf16.msra.mxu0 %v5972
        %8818 = vmatprep.subr.bf16.mxu0 %v5960
        %8819 = vmatpush2.bf16.msra.mxu0 %v5959
        %8820 = vmatprep.subr.bf16.mxu0 %v5947
        %8821 = vmatpush2.bf16.msra.mxu0 %v5946
        %8822 = vmatprep.subr.bf16.mxu0 %v5934
        %8823 = vmatpush2.bf16.msra.mxu0 %v5933
        %8824 = vmatprep.subr.bf16.mxu0 %v5921
        %8825 = vmatpush2.bf16.msra.mxu0 %v5920
        %8826 = vmatprep.subr.bf16.mxu0 %v5908
        %8827 = vmatpush2.bf16.msra.mxu0 %v5907
        %8828 = vmatprep.subr.bf16.mxu0 %v5895
        %8829 = vmatpush2.bf16.msra.mxu0 %v5894
        %8830 = vmatprep.mubr.bf16.mxu0 %v1923
        %8831 = vmatmul.mubr.bf16.gmra.mxu0 %v1922
        %v8832 = vpop.f32.mrf.mxu0
        %v8833 = vadd.f32 %v1840, %v8832
        %v8834 = vpop.f32.mrf.mxu0
        %v8835 = vadd.f32 %v1844, %v8834
        %v8836 = vpop.f32.mrf.mxu0
        %v8837 = vadd.f32 %v1840, %v8836
        %v8838 = vpop.f32.mrf.mxu0
        %v8839 = vadd.f32 %v1844, %v8838
        %8840 = vdwg.mxu0
        %8841 = vmatprep.subr.bf16.mxu0 %v6090
        %8842 = vmatpush1.bf16.msra.mxu0 %v6089
        %8843 = vmatprep.subr.bf16.mxu0 %v6077
        %8844 = vmatpush1.bf16.msra.mxu0 %v6076
        %8845 = vmatprep.subr.bf16.mxu0 %v6064
        %8846 = vmatpush1.bf16.msra.mxu0 %v6063
        %8847 = vmatprep.subr.bf16.mxu0 %v6051
        %8848 = vmatpush1.bf16.msra.mxu0 %v6050
        %8849 = vmatprep.subr.bf16.mxu0 %v6038
        %8850 = vmatpush1.bf16.msra.mxu0 %v6037
        %8851 = vmatprep.subr.bf16.mxu0 %v6025
        %8852 = vmatpush1.bf16.msra.mxu0 %v6024
        %8853 = vmatprep.subr.bf16.mxu0 %v6012
        %8854 = vmatpush1.bf16.msra.mxu0 %v6011
        %8855 = vmatprep.subr.bf16.mxu0 %v5999
        %8856 = vmatpush1.bf16.msra.mxu0 %v5998
        %8857 = vmatprep.subr.bf16.mxu0 %v6194
        %8858 = vmatpush2.bf16.msra.mxu0 %v6193
        %8859 = vmatprep.subr.bf16.mxu0 %v6181
        %8860 = vmatpush2.bf16.msra.mxu0 %v6180
        %8861 = vmatprep.subr.bf16.mxu0 %v6168
        %8862 = vmatpush2.bf16.msra.mxu0 %v6167
        %8863 = vmatprep.subr.bf16.mxu0 %v6155
        %8864 = vmatpush2.bf16.msra.mxu0 %v6154
        %8865 = vmatprep.subr.bf16.mxu0 %v6142
        %8866 = vmatpush2.bf16.msra.mxu0 %v6141
        %8867 = vmatprep.subr.bf16.mxu0 %v6129
        %8868 = vmatpush2.bf16.msra.mxu0 %v6128
        %8869 = vmatprep.subr.bf16.mxu0 %v6116
        %8870 = vmatpush2.bf16.msra.mxu0 %v6115
        %8871 = vmatprep.subr.bf16.mxu0 %v6103
        %8872 = vmatpush2.bf16.msra.mxu0 %v6102
        %8873 = vmatprep.mubr.bf16.mxu0 %v1925
        %8874 = vmatmul.mubr.bf16.gmra.mxu0 %v1924
        %v8875 = vpop.f32.mrf.mxu0
        %v8876 = vadd.f32 %v8833, %v8875
        %v8877 = vpop.f32.mrf.mxu0
        %v8878 = vadd.f32 %v8835, %v8877
        %v8879 = vpop.f32.mrf.mxu0
        %v8880 = vadd.f32 %v8837, %v8879
        %v8881 = vpop.f32.mrf.mxu0
        %v8882 = vadd.f32 %v8839, %v8881
        %8883 = vdwg.mxu0
        %8884 = vmatprep.subr.bf16.mxu0 %v6298
        %8885 = vmatpush1.bf16.msra.mxu0 %v6297
        %8886 = vmatprep.subr.bf16.mxu0 %v6285
        %8887 = vmatpush1.bf16.msra.mxu0 %v6284
        %8888 = vmatprep.subr.bf16.mxu0 %v6272
        %8889 = vmatpush1.bf16.msra.mxu0 %v6271
        %8890 = vmatprep.subr.bf16.mxu0 %v6259
        %8891 = vmatpush1.bf16.msra.mxu0 %v6258
        %8892 = vmatprep.subr.bf16.mxu0 %v6246
        %8893 = vmatpush1.bf16.msra.mxu0 %v6245
        %8894 = vmatprep.subr.bf16.mxu0 %v6233
        %8895 = vmatpush1.bf16.msra.mxu0 %v6232
        %8896 = vmatprep.subr.bf16.mxu0 %v6220
        %8897 = vmatpush1.bf16.msra.mxu0 %v6219
        %8898 = vmatprep.subr.bf16.mxu0 %v6207
        %8899 = vmatpush1.bf16.msra.mxu0 %v6206
        %8900 = vmatprep.subr.bf16.mxu0 %v6402
        %8901 = vmatpush2.bf16.msra.mxu0 %v6401
        %8902 = vmatprep.subr.bf16.mxu0 %v6389
        %8903 = vmatpush2.bf16.msra.mxu0 %v6388
        %8904 = vmatprep.subr.bf16.mxu0 %v6376
        %8905 = vmatpush2.bf16.msra.mxu0 %v6375
        %8906 = vmatprep.subr.bf16.mxu0 %v6363
        %8907 = vmatpush2.bf16.msra.mxu0 %v6362
        %8908 = vmatprep.subr.bf16.mxu0 %v6350
        %8909 = vmatpush2.bf16.msra.mxu0 %v6349
        %8910 = vmatprep.subr.bf16.mxu0 %v6337
        %8911 = vmatpush2.bf16.msra.mxu0 %v6336
        %8912 = vmatprep.subr.bf16.mxu0 %v6324
        %8913 = vmatpush2.bf16.msra.mxu0 %v6323
        %8914 = vmatprep.subr.bf16.mxu0 %v6311
        %8915 = vmatpush2.bf16.msra.mxu0 %v6310
        %8916 = vmatprep.mubr.bf16.mxu0 %v1927
        %8917 = vmatmul.mubr.bf16.gmra.mxu0 %v1926
        %v8918 = vpop.f32.mrf.mxu0
        %v8919 = vadd.f32 %v8876, %v8918
        %v8920 = vpop.f32.mrf.mxu0
        %v8921 = vadd.f32 %v8878, %v8920
        %v8922 = vpop.f32.mrf.mxu0
        %v8923 = vadd.f32 %v8880, %v8922
        %v8924 = vpop.f32.mrf.mxu0
        %v8925 = vadd.f32 %v8882, %v8924
        %8926 = vdwg.mxu0
        %8927 = vmatprep.subr.bf16.mxu0 %v6506
        %8928 = vmatpush1.bf16.msra.mxu0 %v6505
        %8929 = vmatprep.subr.bf16.mxu0 %v6493
        %8930 = vmatpush1.bf16.msra.mxu0 %v6492
        %8931 = vmatprep.subr.bf16.mxu0 %v6480
        %8932 = vmatpush1.bf16.msra.mxu0 %v6479
        %8933 = vmatprep.subr.bf16.mxu0 %v6467
        %8934 = vmatpush1.bf16.msra.mxu0 %v6466
        %8935 = vmatprep.subr.bf16.mxu0 %v6454
        %8936 = vmatpush1.bf16.msra.mxu0 %v6453
        %8937 = vmatprep.subr.bf16.mxu0 %v6441
        %8938 = vmatpush1.bf16.msra.mxu0 %v6440
        %8939 = vmatprep.subr.bf16.mxu0 %v6428
        %8940 = vmatpush1.bf16.msra.mxu0 %v6427
        %8941 = vmatprep.subr.bf16.mxu0 %v6415
        %8942 = vmatpush1.bf16.msra.mxu0 %v6414
        %8943 = vmatprep.subr.bf16.mxu0 %v6610
        %8944 = vmatpush2.bf16.msra.mxu0 %v6609
        %8945 = vmatprep.subr.bf16.mxu0 %v6597
        %8946 = vmatpush2.bf16.msra.mxu0 %v6596
        %8947 = vmatprep.subr.bf16.mxu0 %v6584
        %8948 = vmatpush2.bf16.msra.mxu0 %v6583
        %8949 = vmatprep.subr.bf16.mxu0 %v6571
        %8950 = vmatpush2.bf16.msra.mxu0 %v6570
        %8951 = vmatprep.subr.bf16.mxu0 %v6558
        %8952 = vmatpush2.bf16.msra.mxu0 %v6557
        %8953 = vmatprep.subr.bf16.mxu0 %v6545
        %8954 = vmatpush2.bf16.msra.mxu0 %v6544
        %8955 = vmatprep.subr.bf16.mxu0 %v6532
        %8956 = vmatpush2.bf16.msra.mxu0 %v6531
        %8957 = vmatprep.subr.bf16.mxu0 %v6519
        %8958 = vmatpush2.bf16.msra.mxu0 %v6518
        %8959 = vmatprep.mubr.bf16.mxu0 %v1929
        %8960 = vmatmul.mubr.bf16.gmra.mxu0 %v1928
        %v8961 = vpop.f32.mrf.mxu0
        %v8962 = vadd.f32 %v8919, %v8961
        %v8963 = vpop.f32.mrf.mxu0
        %v8964 = vadd.f32 %v8921, %v8963
        %v8965 = vpop.f32.mrf.mxu0
        %v8966 = vadd.f32 %v8923, %v8965
        %v8967 = vpop.f32.mrf.mxu0
        %v8968 = vadd.f32 %v8925, %v8967
        %8969 = vdwg.mxu0
        %8970 = vmatprep.subr.bf16.mxu0 %v6714
        %8971 = vmatpush1.bf16.msra.mxu0 %v6713
        %8972 = vmatprep.subr.bf16.mxu0 %v6701
        %8973 = vmatpush1.bf16.msra.mxu0 %v6700
        %8974 = vmatprep.subr.bf16.mxu0 %v6688
        %8975 = vmatpush1.bf16.msra.mxu0 %v6687
        %8976 = vmatprep.subr.bf16.mxu0 %v6675
        %8977 = vmatpush1.bf16.msra.mxu0 %v6674
        %8978 = vmatprep.subr.bf16.mxu0 %v6662
        %8979 = vmatpush1.bf16.msra.mxu0 %v6661
        %8980 = vmatprep.subr.bf16.mxu0 %v6649
        %8981 = vmatpush1.bf16.msra.mxu0 %v6648
        %8982 = vmatprep.subr.bf16.mxu0 %v6636
        %8983 = vmatpush1.bf16.msra.mxu0 %v6635
        %8984 = vmatprep.subr.bf16.mxu0 %v6623
        %8985 = vmatpush1.bf16.msra.mxu0 %v6622
        %8986 = vmatprep.subr.bf16.mxu0 %v6818
        %8987 = vmatpush2.bf16.msra.mxu0 %v6817
        %8988 = vmatprep.subr.bf16.mxu0 %v6805
        %8989 = vmatpush2.bf16.msra.mxu0 %v6804
        %8990 = vmatprep.subr.bf16.mxu0 %v6792
        %8991 = vmatpush2.bf16.msra.mxu0 %v6791
        %8992 = vmatprep.subr.bf16.mxu0 %v6779
        %8993 = vmatpush2.bf16.msra.mxu0 %v6778
        %8994 = vmatprep.subr.bf16.mxu0 %v6766
        %8995 = vmatpush2.bf16.msra.mxu0 %v6765
        %8996 = vmatprep.subr.bf16.mxu0 %v6753
        %8997 = vmatpush2.bf16.msra.mxu0 %v6752
        %8998 = vmatprep.subr.bf16.mxu0 %v6740
        %8999 = vmatpush2.bf16.msra.mxu0 %v6739
        %9000 = vmatprep.subr.bf16.mxu0 %v6727
        %9001 = vmatpush2.bf16.msra.mxu0 %v6726
        %9002 = vmatprep.mubr.bf16.mxu0 %v1931
        %9003 = vmatmul.mubr.bf16.gmra.mxu0 %v1930
        %v9004 = vpop.f32.mrf.mxu0
        %v9005 = vadd.f32 %v8962, %v9004
        %v9006 = vpop.f32.mrf.mxu0
        %v9007 = vadd.f32 %v8964, %v9006
        %v9008 = vpop.f32.mrf.mxu0
        %v9009 = vadd.f32 %v8966, %v9008
        %v9010 = vpop.f32.mrf.mxu0
        %v9011 = vadd.f32 %v8968, %v9010
        %9012 = vdwg.mxu0
        %9013 = vmatprep.subr.bf16.mxu0 %v6922
        %9014 = vmatpush1.bf16.msra.mxu0 %v6921
        %9015 = vmatprep.subr.bf16.mxu0 %v6909
        %9016 = vmatpush1.bf16.msra.mxu0 %v6908
        %9017 = vmatprep.subr.bf16.mxu0 %v6896
        %9018 = vmatpush1.bf16.msra.mxu0 %v6895
        %9019 = vmatprep.subr.bf16.mxu0 %v6883
        %9020 = vmatpush1.bf16.msra.mxu0 %v6882
        %9021 = vmatprep.subr.bf16.mxu0 %v6870
        %9022 = vmatpush1.bf16.msra.mxu0 %v6869
        %9023 = vmatprep.subr.bf16.mxu0 %v6857
        %9024 = vmatpush1.bf16.msra.mxu0 %v6856
        %9025 = vmatprep.subr.bf16.mxu0 %v6844
        %9026 = vmatpush1.bf16.msra.mxu0 %v6843
        %9027 = vmatprep.subr.bf16.mxu0 %v6831
        %9028 = vmatpush1.bf16.msra.mxu0 %v6830
        %9029 = vmatprep.subr.bf16.mxu0 %v7026
        %9030 = vmatpush2.bf16.msra.mxu0 %v7025
        %9031 = vmatprep.subr.bf16.mxu0 %v7013
        %9032 = vmatpush2.bf16.msra.mxu0 %v7012
        %9033 = vmatprep.subr.bf16.mxu0 %v7000
        %9034 = vmatpush2.bf16.msra.mxu0 %v6999
        %9035 = vmatprep.subr.bf16.mxu0 %v6987
        %9036 = vmatpush2.bf16.msra.mxu0 %v6986
        %9037 = vmatprep.subr.bf16.mxu0 %v6974
        %9038 = vmatpush2.bf16.msra.mxu0 %v6973
        %9039 = vmatprep.subr.bf16.mxu0 %v6961
        %9040 = vmatpush2.bf16.msra.mxu0 %v6960
        %9041 = vmatprep.subr.bf16.mxu0 %v6948
        %9042 = vmatpush2.bf16.msra.mxu0 %v6947
        %9043 = vmatprep.subr.bf16.mxu0 %v6935
        %9044 = vmatpush2.bf16.msra.mxu0 %v6934
        %9045 = vmatprep.mubr.bf16.mxu0 %v1933
        %9046 = vmatmul.mubr.bf16.gmra.mxu0 %v1932
        %v9047 = vpop.f32.mrf.mxu0
        %v9048 = vadd.f32 %v9005, %v9047
        %v9049 = vpop.f32.mrf.mxu0
        %v9050 = vadd.f32 %v9007, %v9049
        %v9051 = vpop.f32.mrf.mxu0
        %v9052 = vadd.f32 %v9009, %v9051
        %v9053 = vpop.f32.mrf.mxu0
        %v9054 = vadd.f32 %v9011, %v9053
        %9055 = vdwg.mxu0
        %9056 = vmatprep.subr.bf16.mxu0 %v5884
        %9057 = vmatpush1.bf16.msra.mxu0 %v5883
        %9058 = vmatprep.subr.bf16.mxu0 %v5871
        %9059 = vmatpush1.bf16.msra.mxu0 %v5870
        %9060 = vmatprep.subr.bf16.mxu0 %v5858
        %9061 = vmatpush1.bf16.msra.mxu0 %v5857
        %9062 = vmatprep.subr.bf16.mxu0 %v5845
        %9063 = vmatpush1.bf16.msra.mxu0 %v5844
        %9064 = vmatprep.subr.bf16.mxu0 %v5832
        %9065 = vmatpush1.bf16.msra.mxu0 %v5831
        %9066 = vmatprep.subr.bf16.mxu0 %v5819
        %9067 = vmatpush1.bf16.msra.mxu0 %v5818
        %9068 = vmatprep.subr.bf16.mxu0 %v5806
        %9069 = vmatpush1.bf16.msra.mxu0 %v5805
        %9070 = vmatprep.subr.bf16.mxu0 %v5793
        %9071 = vmatpush1.bf16.msra.mxu0 %v5792
        %9072 = vmatprep.subr.bf16.mxu0 %v5988
        %9073 = vmatpush2.bf16.msra.mxu0 %v5987
        %9074 = vmatprep.subr.bf16.mxu0 %v5975
        %9075 = vmatpush2.bf16.msra.mxu0 %v5974
        %9076 = vmatprep.subr.bf16.mxu0 %v5962
        %9077 = vmatpush2.bf16.msra.mxu0 %v5961
        %9078 = vmatprep.subr.bf16.mxu0 %v5949
        %9079 = vmatpush2.bf16.msra.mxu0 %v5948
        %9080 = vmatprep.subr.bf16.mxu0 %v5936
        %9081 = vmatpush2.bf16.msra.mxu0 %v5935
        %9082 = vmatprep.subr.bf16.mxu0 %v5923
        %9083 = vmatpush2.bf16.msra.mxu0 %v5922
        %9084 = vmatprep.subr.bf16.mxu0 %v5910
        %9085 = vmatpush2.bf16.msra.mxu0 %v5909
        %9086 = vmatprep.subr.bf16.mxu0 %v5897
        %9087 = vmatpush2.bf16.msra.mxu0 %v5896
        %9088 = vmatprep.mubr.bf16.mxu0 %v1923
        %9089 = vmatmul.mubr.bf16.gmra.mxu0 %v1922
        %v9090 = vpop.f32.mrf.mxu0
        %v9091 = vadd.f32 %v1848, %v9090
        %v9092 = vpop.f32.mrf.mxu0
        %v9093 = vadd.f32 %v1852, %v9092
        %v9094 = vpop.f32.mrf.mxu0
        %v9095 = vadd.f32 %v1848, %v9094
        %v9096 = vpop.f32.mrf.mxu0
        %v9097 = vadd.f32 %v1852, %v9096
        %9098 = vdwg.mxu0
        %9099 = vmatprep.subr.bf16.mxu0 %v6092
        %9100 = vmatpush1.bf16.msra.mxu0 %v6091
        %9101 = vmatprep.subr.bf16.mxu0 %v6079
        %9102 = vmatpush1.bf16.msra.mxu0 %v6078
        %9103 = vmatprep.subr.bf16.mxu0 %v6066
        %9104 = vmatpush1.bf16.msra.mxu0 %v6065
        %9105 = vmatprep.subr.bf16.mxu0 %v6053
        %9106 = vmatpush1.bf16.msra.mxu0 %v6052
        %9107 = vmatprep.subr.bf16.mxu0 %v6040
        %9108 = vmatpush1.bf16.msra.mxu0 %v6039
        %9109 = vmatprep.subr.bf16.mxu0 %v6027
        %9110 = vmatpush1.bf16.msra.mxu0 %v6026
        %9111 = vmatprep.subr.bf16.mxu0 %v6014
        %9112 = vmatpush1.bf16.msra.mxu0 %v6013
        %9113 = vmatprep.subr.bf16.mxu0 %v6001
        %9114 = vmatpush1.bf16.msra.mxu0 %v6000
        %9115 = vmatprep.subr.bf16.mxu0 %v6196
        %9116 = vmatpush2.bf16.msra.mxu0 %v6195
        %9117 = vmatprep.subr.bf16.mxu0 %v6183
        %9118 = vmatpush2.bf16.msra.mxu0 %v6182
        %9119 = vmatprep.subr.bf16.mxu0 %v6170
        %9120 = vmatpush2.bf16.msra.mxu0 %v6169
        %9121 = vmatprep.subr.bf16.mxu0 %v6157
        %9122 = vmatpush2.bf16.msra.mxu0 %v6156
        %9123 = vmatprep.subr.bf16.mxu0 %v6144
        %9124 = vmatpush2.bf16.msra.mxu0 %v6143
        %9125 = vmatprep.subr.bf16.mxu0 %v6131
        %9126 = vmatpush2.bf16.msra.mxu0 %v6130
        %9127 = vmatprep.subr.bf16.mxu0 %v6118
        %9128 = vmatpush2.bf16.msra.mxu0 %v6117
        %9129 = vmatprep.subr.bf16.mxu0 %v6105
        %9130 = vmatpush2.bf16.msra.mxu0 %v6104
        %9131 = vmatprep.mubr.bf16.mxu0 %v1925
        %9132 = vmatmul.mubr.bf16.gmra.mxu0 %v1924
        %v9133 = vpop.f32.mrf.mxu0
        %v9134 = vadd.f32 %v9091, %v9133
        %v9135 = vpop.f32.mrf.mxu0
        %v9136 = vadd.f32 %v9093, %v9135
        %v9137 = vpop.f32.mrf.mxu0
        %v9138 = vadd.f32 %v9095, %v9137
        %v9139 = vpop.f32.mrf.mxu0
        %v9140 = vadd.f32 %v9097, %v9139
        %9141 = vdwg.mxu0
        %9142 = vmatprep.subr.bf16.mxu0 %v6300
        %9143 = vmatpush1.bf16.msra.mxu0 %v6299
        %9144 = vmatprep.subr.bf16.mxu0 %v6287
        %9145 = vmatpush1.bf16.msra.mxu0 %v6286
        %9146 = vmatprep.subr.bf16.mxu0 %v6274
        %9147 = vmatpush1.bf16.msra.mxu0 %v6273
        %9148 = vmatprep.subr.bf16.mxu0 %v6261
        %9149 = vmatpush1.bf16.msra.mxu0 %v6260
        %9150 = vmatprep.subr.bf16.mxu0 %v6248
        %9151 = vmatpush1.bf16.msra.mxu0 %v6247
        %9152 = vmatprep.subr.bf16.mxu0 %v6235
        %9153 = vmatpush1.bf16.msra.mxu0 %v6234
        %9154 = vmatprep.subr.bf16.mxu0 %v6222
        %9155 = vmatpush1.bf16.msra.mxu0 %v6221
        %9156 = vmatprep.subr.bf16.mxu0 %v6209
        %9157 = vmatpush1.bf16.msra.mxu0 %v6208
        %9158 = vmatprep.subr.bf16.mxu0 %v6404
        %9159 = vmatpush2.bf16.msra.mxu0 %v6403
        %9160 = vmatprep.subr.bf16.mxu0 %v6391
        %9161 = vmatpush2.bf16.msra.mxu0 %v6390
        %9162 = vmatprep.subr.bf16.mxu0 %v6378
        %9163 = vmatpush2.bf16.msra.mxu0 %v6377
        %9164 = vmatprep.subr.bf16.mxu0 %v6365
        %9165 = vmatpush2.bf16.msra.mxu0 %v6364
        %9166 = vmatprep.subr.bf16.mxu0 %v6352
        %9167 = vmatpush2.bf16.msra.mxu0 %v6351
        %9168 = vmatprep.subr.bf16.mxu0 %v6339
        %9169 = vmatpush2.bf16.msra.mxu0 %v6338
        %9170 = vmatprep.subr.bf16.mxu0 %v6326
        %9171 = vmatpush2.bf16.msra.mxu0 %v6325
        %9172 = vmatprep.subr.bf16.mxu0 %v6313
        %9173 = vmatpush2.bf16.msra.mxu0 %v6312
        %9174 = vmatprep.mubr.bf16.mxu0 %v1927
        %9175 = vmatmul.mubr.bf16.gmra.mxu0 %v1926
        %v9176 = vpop.f32.mrf.mxu0
        %v9177 = vadd.f32 %v9134, %v9176
        %v9178 = vpop.f32.mrf.mxu0
        %v9179 = vadd.f32 %v9136, %v9178
        %v9180 = vpop.f32.mrf.mxu0
        %v9181 = vadd.f32 %v9138, %v9180
        %v9182 = vpop.f32.mrf.mxu0
        %v9183 = vadd.f32 %v9140, %v9182
        %9184 = vdwg.mxu0
        %9185 = vmatprep.subr.bf16.mxu0 %v6508
        %9186 = vmatpush1.bf16.msra.mxu0 %v6507
        %9187 = vmatprep.subr.bf16.mxu0 %v6495
        %9188 = vmatpush1.bf16.msra.mxu0 %v6494
        %9189 = vmatprep.subr.bf16.mxu0 %v6482
        %9190 = vmatpush1.bf16.msra.mxu0 %v6481
        %9191 = vmatprep.subr.bf16.mxu0 %v6469
        %9192 = vmatpush1.bf16.msra.mxu0 %v6468
        %9193 = vmatprep.subr.bf16.mxu0 %v6456
        %9194 = vmatpush1.bf16.msra.mxu0 %v6455
        %9195 = vmatprep.subr.bf16.mxu0 %v6443
        %9196 = vmatpush1.bf16.msra.mxu0 %v6442
        %9197 = vmatprep.subr.bf16.mxu0 %v6430
        %9198 = vmatpush1.bf16.msra.mxu0 %v6429
        %9199 = vmatprep.subr.bf16.mxu0 %v6417
        %9200 = vmatpush1.bf16.msra.mxu0 %v6416
        %9201 = vmatprep.subr.bf16.mxu0 %v6612
        %9202 = vmatpush2.bf16.msra.mxu0 %v6611
        %9203 = vmatprep.subr.bf16.mxu0 %v6599
        %9204 = vmatpush2.bf16.msra.mxu0 %v6598
        %9205 = vmatprep.subr.bf16.mxu0 %v6586
        %9206 = vmatpush2.bf16.msra.mxu0 %v6585
        %9207 = vmatprep.subr.bf16.mxu0 %v6573
        %9208 = vmatpush2.bf16.msra.mxu0 %v6572
        %9209 = vmatprep.subr.bf16.mxu0 %v6560
        %9210 = vmatpush2.bf16.msra.mxu0 %v6559
        %9211 = vmatprep.subr.bf16.mxu0 %v6547
        %9212 = vmatpush2.bf16.msra.mxu0 %v6546
        %9213 = vmatprep.subr.bf16.mxu0 %v6534
        %9214 = vmatpush2.bf16.msra.mxu0 %v6533
        %9215 = vmatprep.subr.bf16.mxu0 %v6521
        %9216 = vmatpush2.bf16.msra.mxu0 %v6520
        %9217 = vmatprep.mubr.bf16.mxu0 %v1929
        %9218 = vmatmul.mubr.bf16.gmra.mxu0 %v1928
        %v9219 = vpop.f32.mrf.mxu0
        %v9220 = vadd.f32 %v9177, %v9219
        %v9221 = vpop.f32.mrf.mxu0
        %v9222 = vadd.f32 %v9179, %v9221
        %v9223 = vpop.f32.mrf.mxu0
        %v9224 = vadd.f32 %v9181, %v9223
        %v9225 = vpop.f32.mrf.mxu0
        %v9226 = vadd.f32 %v9183, %v9225
        %9227 = vdwg.mxu0
        %9228 = vmatprep.subr.bf16.mxu0 %v6716
        %9229 = vmatpush1.bf16.msra.mxu0 %v6715
        %9230 = vmatprep.subr.bf16.mxu0 %v6703
        %9231 = vmatpush1.bf16.msra.mxu0 %v6702
        %9232 = vmatprep.subr.bf16.mxu0 %v6690
        %9233 = vmatpush1.bf16.msra.mxu0 %v6689
        %9234 = vmatprep.subr.bf16.mxu0 %v6677
        %9235 = vmatpush1.bf16.msra.mxu0 %v6676
        %9236 = vmatprep.subr.bf16.mxu0 %v6664
        %9237 = vmatpush1.bf16.msra.mxu0 %v6663
        %9238 = vmatprep.subr.bf16.mxu0 %v6651
        %9239 = vmatpush1.bf16.msra.mxu0 %v6650
        %9240 = vmatprep.subr.bf16.mxu0 %v6638
        %9241 = vmatpush1.bf16.msra.mxu0 %v6637
        %9242 = vmatprep.subr.bf16.mxu0 %v6625
        %9243 = vmatpush1.bf16.msra.mxu0 %v6624
        %9244 = vmatprep.subr.bf16.mxu0 %v6820
        %9245 = vmatpush2.bf16.msra.mxu0 %v6819
        %9246 = vmatprep.subr.bf16.mxu0 %v6807
        %9247 = vmatpush2.bf16.msra.mxu0 %v6806
        %9248 = vmatprep.subr.bf16.mxu0 %v6794
        %9249 = vmatpush2.bf16.msra.mxu0 %v6793
        %9250 = vmatprep.subr.bf16.mxu0 %v6781
        %9251 = vmatpush2.bf16.msra.mxu0 %v6780
        %9252 = vmatprep.subr.bf16.mxu0 %v6768
        %9253 = vmatpush2.bf16.msra.mxu0 %v6767
        %9254 = vmatprep.subr.bf16.mxu0 %v6755
        %9255 = vmatpush2.bf16.msra.mxu0 %v6754
        %9256 = vmatprep.subr.bf16.mxu0 %v6742
        %9257 = vmatpush2.bf16.msra.mxu0 %v6741
        %9258 = vmatprep.subr.bf16.mxu0 %v6729
        %9259 = vmatpush2.bf16.msra.mxu0 %v6728
        %9260 = vmatprep.mubr.bf16.mxu0 %v1931
        %9261 = vmatmul.mubr.bf16.gmra.mxu0 %v1930
        %v9262 = vpop.f32.mrf.mxu0
        %v9263 = vadd.f32 %v9220, %v9262
        %v9264 = vpop.f32.mrf.mxu0
        %v9265 = vadd.f32 %v9222, %v9264
        %v9266 = vpop.f32.mrf.mxu0
        %v9267 = vadd.f32 %v9224, %v9266
        %v9268 = vpop.f32.mrf.mxu0
        %v9269 = vadd.f32 %v9226, %v9268
        %9270 = vdwg.mxu0
        %9271 = vmatprep.subr.bf16.mxu0 %v6924
        %9272 = vmatpush1.bf16.msra.mxu0 %v6923
        %9273 = vmatprep.subr.bf16.mxu0 %v6911
        %9274 = vmatpush1.bf16.msra.mxu0 %v6910
        %9275 = vmatprep.subr.bf16.mxu0 %v6898
        %9276 = vmatpush1.bf16.msra.mxu0 %v6897
        %9277 = vmatprep.subr.bf16.mxu0 %v6885
        %9278 = vmatpush1.bf16.msra.mxu0 %v6884
        %9279 = vmatprep.subr.bf16.mxu0 %v6872
        %9280 = vmatpush1.bf16.msra.mxu0 %v6871
        %9281 = vmatprep.subr.bf16.mxu0 %v6859
        %9282 = vmatpush1.bf16.msra.mxu0 %v6858
        %9283 = vmatprep.subr.bf16.mxu0 %v6846
        %9284 = vmatpush1.bf16.msra.mxu0 %v6845
        %9285 = vmatprep.subr.bf16.mxu0 %v6833
        %9286 = vmatpush1.bf16.msra.mxu0 %v6832
        %9287 = vmatprep.subr.bf16.mxu0 %v7028
        %9288 = vmatpush2.bf16.msra.mxu0 %v7027
        %9289 = vmatprep.subr.bf16.mxu0 %v7015
        %9290 = vmatpush2.bf16.msra.mxu0 %v7014
        %9291 = vmatprep.subr.bf16.mxu0 %v7002
        %9292 = vmatpush2.bf16.msra.mxu0 %v7001
        %9293 = vmatprep.subr.bf16.mxu0 %v6989
        %9294 = vmatpush2.bf16.msra.mxu0 %v6988
        %9295 = vmatprep.subr.bf16.mxu0 %v6976
        %9296 = vmatpush2.bf16.msra.mxu0 %v6975
        %9297 = vmatprep.subr.bf16.mxu0 %v6963
        %9298 = vmatpush2.bf16.msra.mxu0 %v6962
        %9299 = vmatprep.subr.bf16.mxu0 %v6950
        %9300 = vmatpush2.bf16.msra.mxu0 %v6949
        %9301 = vmatprep.subr.bf16.mxu0 %v6937
        %9302 = vmatpush2.bf16.msra.mxu0 %v6936
        %9303 = vmatprep.mubr.bf16.mxu0 %v1933
        %9304 = vmatmul.mubr.bf16.gmra.mxu0 %v1932
        %v9305 = vpop.f32.mrf.mxu0
        %v9306 = vadd.f32 %v9263, %v9305
        %v9307 = vpop.f32.mrf.mxu0
        %v9308 = vadd.f32 %v9265, %v9307
        %v9309 = vpop.f32.mrf.mxu0
        %v9310 = vadd.f32 %v9267, %v9309
        %v9311 = vpop.f32.mrf.mxu0
        %v9312 = vadd.f32 %v9269, %v9311
        %9313 = vdwg.mxu0
        %9314 = vmatprep.subr.bf16.mxu0 %v5886
        %9315 = vmatpush1.bf16.msra.mxu0 %v5885
        %9316 = vmatprep.subr.bf16.mxu0 %v5873
        %9317 = vmatpush1.bf16.msra.mxu0 %v5872
        %9318 = vmatprep.subr.bf16.mxu0 %v5860
        %9319 = vmatpush1.bf16.msra.mxu0 %v5859
        %9320 = vmatprep.subr.bf16.mxu0 %v5847
        %9321 = vmatpush1.bf16.msra.mxu0 %v5846
        %9322 = vmatprep.subr.bf16.mxu0 %v5834
        %9323 = vmatpush1.bf16.msra.mxu0 %v5833
        %9324 = vmatprep.subr.bf16.mxu0 %v5821
        %9325 = vmatpush1.bf16.msra.mxu0 %v5820
        %9326 = vmatprep.subr.bf16.mxu0 %v5808
        %9327 = vmatpush1.bf16.msra.mxu0 %v5807
        %9328 = vmatprep.subr.bf16.mxu0 %v5795
        %9329 = vmatpush1.bf16.msra.mxu0 %v5794
        %9330 = vmatprep.subr.bf16.mxu0 %v5990
        %9331 = vmatpush2.bf16.msra.mxu0 %v5989
        %9332 = vmatprep.subr.bf16.mxu0 %v5977
        %9333 = vmatpush2.bf16.msra.mxu0 %v5976
        %9334 = vmatprep.subr.bf16.mxu0 %v5964
        %9335 = vmatpush2.bf16.msra.mxu0 %v5963
        %9336 = vmatprep.subr.bf16.mxu0 %v5951
        %9337 = vmatpush2.bf16.msra.mxu0 %v5950
        %9338 = vmatprep.subr.bf16.mxu0 %v5938
        %9339 = vmatpush2.bf16.msra.mxu0 %v5937
        %9340 = vmatprep.subr.bf16.mxu0 %v5925
        %9341 = vmatpush2.bf16.msra.mxu0 %v5924
        %9342 = vmatprep.subr.bf16.mxu0 %v5912
        %9343 = vmatpush2.bf16.msra.mxu0 %v5911
        %9344 = vmatprep.subr.bf16.mxu0 %v5899
        %9345 = vmatpush2.bf16.msra.mxu0 %v5898
        %9346 = vmatprep.mubr.bf16.mxu0 %v1923
        %9347 = vmatmul.mubr.bf16.gmra.mxu0 %v1922
        %v9348 = vpop.f32.mrf.mxu0
        %v9349 = vadd.f32 %v1856, %v9348
        %v9350 = vpop.f32.mrf.mxu0
        %v9351 = vadd.f32 %v1860, %v9350
        %v9352 = vpop.f32.mrf.mxu0
        %v9353 = vadd.f32 %v1856, %v9352
        %v9354 = vpop.f32.mrf.mxu0
        %v9355 = vadd.f32 %v1860, %v9354
        %9356 = vdwg.mxu0
        %9357 = vmatprep.subr.bf16.mxu0 %v6094
        %9358 = vmatpush1.bf16.msra.mxu0 %v6093
        %9359 = vmatprep.subr.bf16.mxu0 %v6081
        %9360 = vmatpush1.bf16.msra.mxu0 %v6080
        %9361 = vmatprep.subr.bf16.mxu0 %v6068
        %9362 = vmatpush1.bf16.msra.mxu0 %v6067
        %9363 = vmatprep.subr.bf16.mxu0 %v6055
        %9364 = vmatpush1.bf16.msra.mxu0 %v6054
        %9365 = vmatprep.subr.bf16.mxu0 %v6042
        %9366 = vmatpush1.bf16.msra.mxu0 %v6041
        %9367 = vmatprep.subr.bf16.mxu0 %v6029
        %9368 = vmatpush1.bf16.msra.mxu0 %v6028
        %9369 = vmatprep.subr.bf16.mxu0 %v6016
        %9370 = vmatpush1.bf16.msra.mxu0 %v6015
        %9371 = vmatprep.subr.bf16.mxu0 %v6003
        %9372 = vmatpush1.bf16.msra.mxu0 %v6002
        %9373 = vmatprep.subr.bf16.mxu0 %v6198
        %9374 = vmatpush2.bf16.msra.mxu0 %v6197
        %9375 = vmatprep.subr.bf16.mxu0 %v6185
        %9376 = vmatpush2.bf16.msra.mxu0 %v6184
        %9377 = vmatprep.subr.bf16.mxu0 %v6172
        %9378 = vmatpush2.bf16.msra.mxu0 %v6171
        %9379 = vmatprep.subr.bf16.mxu0 %v6159
        %9380 = vmatpush2.bf16.msra.mxu0 %v6158
        %9381 = vmatprep.subr.bf16.mxu0 %v6146
        %9382 = vmatpush2.bf16.msra.mxu0 %v6145
        %9383 = vmatprep.subr.bf16.mxu0 %v6133
        %9384 = vmatpush2.bf16.msra.mxu0 %v6132
        %9385 = vmatprep.subr.bf16.mxu0 %v6120
        %9386 = vmatpush2.bf16.msra.mxu0 %v6119
        %9387 = vmatprep.subr.bf16.mxu0 %v6107
        %9388 = vmatpush2.bf16.msra.mxu0 %v6106
        %9389 = vmatprep.mubr.bf16.mxu0 %v1925
        %9390 = vmatmul.mubr.bf16.gmra.mxu0 %v1924
        %v9391 = vpop.f32.mrf.mxu0
        %v9392 = vadd.f32 %v9349, %v9391
        %v9393 = vpop.f32.mrf.mxu0
        %v9394 = vadd.f32 %v9351, %v9393
        %v9395 = vpop.f32.mrf.mxu0
        %v9396 = vadd.f32 %v9353, %v9395
        %v9397 = vpop.f32.mrf.mxu0
        %v9398 = vadd.f32 %v9355, %v9397
        %9399 = vdwg.mxu0
        %9400 = vmatprep.subr.bf16.mxu0 %v6302
        %9401 = vmatpush1.bf16.msra.mxu0 %v6301
        %9402 = vmatprep.subr.bf16.mxu0 %v6289
        %9403 = vmatpush1.bf16.msra.mxu0 %v6288
        %9404 = vmatprep.subr.bf16.mxu0 %v6276
        %9405 = vmatpush1.bf16.msra.mxu0 %v6275
        %9406 = vmatprep.subr.bf16.mxu0 %v6263
        %9407 = vmatpush1.bf16.msra.mxu0 %v6262
        %9408 = vmatprep.subr.bf16.mxu0 %v6250
        %9409 = vmatpush1.bf16.msra.mxu0 %v6249
        %9410 = vmatprep.subr.bf16.mxu0 %v6237
        %9411 = vmatpush1.bf16.msra.mxu0 %v6236
        %9412 = vmatprep.subr.bf16.mxu0 %v6224
        %9413 = vmatpush1.bf16.msra.mxu0 %v6223
        %9414 = vmatprep.subr.bf16.mxu0 %v6211
        %9415 = vmatpush1.bf16.msra.mxu0 %v6210
        %9416 = vmatprep.subr.bf16.mxu0 %v6406
        %9417 = vmatpush2.bf16.msra.mxu0 %v6405
        %9418 = vmatprep.subr.bf16.mxu0 %v6393
        %9419 = vmatpush2.bf16.msra.mxu0 %v6392
        %9420 = vmatprep.subr.bf16.mxu0 %v6380
        %9421 = vmatpush2.bf16.msra.mxu0 %v6379
        %9422 = vmatprep.subr.bf16.mxu0 %v6367
        %9423 = vmatpush2.bf16.msra.mxu0 %v6366
        %9424 = vmatprep.subr.bf16.mxu0 %v6354
        %9425 = vmatpush2.bf16.msra.mxu0 %v6353
        %9426 = vmatprep.subr.bf16.mxu0 %v6341
        %9427 = vmatpush2.bf16.msra.mxu0 %v6340
        %9428 = vmatprep.subr.bf16.mxu0 %v6328
        %9429 = vmatpush2.bf16.msra.mxu0 %v6327
        %9430 = vmatprep.subr.bf16.mxu0 %v6315
        %9431 = vmatpush2.bf16.msra.mxu0 %v6314
        %9432 = vmatprep.mubr.bf16.mxu0 %v1927
        %9433 = vmatmul.mubr.bf16.gmra.mxu0 %v1926
        %v9434 = vpop.f32.mrf.mxu0
        %v9435 = vadd.f32 %v9392, %v9434
        %v9436 = vpop.f32.mrf.mxu0
        %v9437 = vadd.f32 %v9394, %v9436
        %v9438 = vpop.f32.mrf.mxu0
        %v9439 = vadd.f32 %v9396, %v9438
        %v9440 = vpop.f32.mrf.mxu0
        %v9441 = vadd.f32 %v9398, %v9440
        %9442 = vdwg.mxu0
        %9443 = vmatprep.subr.bf16.mxu0 %v6510
        %9444 = vmatpush1.bf16.msra.mxu0 %v6509
        %9445 = vmatprep.subr.bf16.mxu0 %v6497
        %9446 = vmatpush1.bf16.msra.mxu0 %v6496
        %9447 = vmatprep.subr.bf16.mxu0 %v6484
        %9448 = vmatpush1.bf16.msra.mxu0 %v6483
        %9449 = vmatprep.subr.bf16.mxu0 %v6471
        %9450 = vmatpush1.bf16.msra.mxu0 %v6470
        %9451 = vmatprep.subr.bf16.mxu0 %v6458
        %9452 = vmatpush1.bf16.msra.mxu0 %v6457
        %9453 = vmatprep.subr.bf16.mxu0 %v6445
        %9454 = vmatpush1.bf16.msra.mxu0 %v6444
        %9455 = vmatprep.subr.bf16.mxu0 %v6432
        %9456 = vmatpush1.bf16.msra.mxu0 %v6431
        %9457 = vmatprep.subr.bf16.mxu0 %v6419
        %9458 = vmatpush1.bf16.msra.mxu0 %v6418
        %9459 = vmatprep.subr.bf16.mxu0 %v6614
        %9460 = vmatpush2.bf16.msra.mxu0 %v6613
        %9461 = vmatprep.subr.bf16.mxu0 %v6601
        %9462 = vmatpush2.bf16.msra.mxu0 %v6600
        %9463 = vmatprep.subr.bf16.mxu0 %v6588
        %9464 = vmatpush2.bf16.msra.mxu0 %v6587
        %9465 = vmatprep.subr.bf16.mxu0 %v6575
        %9466 = vmatpush2.bf16.msra.mxu0 %v6574
        %9467 = vmatprep.subr.bf16.mxu0 %v6562
        %9468 = vmatpush2.bf16.msra.mxu0 %v6561
        %9469 = vmatprep.subr.bf16.mxu0 %v6549
        %9470 = vmatpush2.bf16.msra.mxu0 %v6548
        %9471 = vmatprep.subr.bf16.mxu0 %v6536
        %9472 = vmatpush2.bf16.msra.mxu0 %v6535
        %9473 = vmatprep.subr.bf16.mxu0 %v6523
        %9474 = vmatpush2.bf16.msra.mxu0 %v6522
        %9475 = vmatprep.mubr.bf16.mxu0 %v1929
        %9476 = vmatmul.mubr.bf16.gmra.mxu0 %v1928
        %v9477 = vpop.f32.mrf.mxu0
        %v9478 = vadd.f32 %v9435, %v9477
        %v9479 = vpop.f32.mrf.mxu0
        %v9480 = vadd.f32 %v9437, %v9479
        %v9481 = vpop.f32.mrf.mxu0
        %v9482 = vadd.f32 %v9439, %v9481
        %v9483 = vpop.f32.mrf.mxu0
        %v9484 = vadd.f32 %v9441, %v9483
        %9485 = vdwg.mxu0
        %9486 = vmatprep.subr.bf16.mxu0 %v6718
        %9487 = vmatpush1.bf16.msra.mxu0 %v6717
        %9488 = vmatprep.subr.bf16.mxu0 %v6705
        %9489 = vmatpush1.bf16.msra.mxu0 %v6704
        %9490 = vmatprep.subr.bf16.mxu0 %v6692
        %9491 = vmatpush1.bf16.msra.mxu0 %v6691
        %9492 = vmatprep.subr.bf16.mxu0 %v6679
        %9493 = vmatpush1.bf16.msra.mxu0 %v6678
        %9494 = vmatprep.subr.bf16.mxu0 %v6666
        %9495 = vmatpush1.bf16.msra.mxu0 %v6665
        %9496 = vmatprep.subr.bf16.mxu0 %v6653
        %9497 = vmatpush1.bf16.msra.mxu0 %v6652
        %9498 = vmatprep.subr.bf16.mxu0 %v6640
        %9499 = vmatpush1.bf16.msra.mxu0 %v6639
        %9500 = vmatprep.subr.bf16.mxu0 %v6627
        %9501 = vmatpush1.bf16.msra.mxu0 %v6626
        %9502 = vmatprep.subr.bf16.mxu0 %v6822
        %9503 = vmatpush2.bf16.msra.mxu0 %v6821
        %9504 = vmatprep.subr.bf16.mxu0 %v6809
        %9505 = vmatpush2.bf16.msra.mxu0 %v6808
        %9506 = vmatprep.subr.bf16.mxu0 %v6796
        %9507 = vmatpush2.bf16.msra.mxu0 %v6795
        %9508 = vmatprep.subr.bf16.mxu0 %v6783
        %9509 = vmatpush2.bf16.msra.mxu0 %v6782
        %9510 = vmatprep.subr.bf16.mxu0 %v6770
        %9511 = vmatpush2.bf16.msra.mxu0 %v6769
        %9512 = vmatprep.subr.bf16.mxu0 %v6757
        %9513 = vmatpush2.bf16.msra.mxu0 %v6756
        %9514 = vmatprep.subr.bf16.mxu0 %v6744
        %9515 = vmatpush2.bf16.msra.mxu0 %v6743
        %9516 = vmatprep.subr.bf16.mxu0 %v6731
        %9517 = vmatpush2.bf16.msra.mxu0 %v6730
        %9518 = vmatprep.mubr.bf16.mxu0 %v1931
        %9519 = vmatmul.mubr.bf16.gmra.mxu0 %v1930
        %v9520 = vpop.f32.mrf.mxu0
        %v9521 = vadd.f32 %v9478, %v9520
        %v9522 = vpop.f32.mrf.mxu0
        %v9523 = vadd.f32 %v9480, %v9522
        %v9524 = vpop.f32.mrf.mxu0
        %v9525 = vadd.f32 %v9482, %v9524
        %v9526 = vpop.f32.mrf.mxu0
        %v9527 = vadd.f32 %v9484, %v9526
        %9528 = vdwg.mxu0
        %9529 = vmatprep.subr.bf16.mxu0 %v6926
        %9530 = vmatpush1.bf16.msra.mxu0 %v6925
        %9531 = vmatprep.subr.bf16.mxu0 %v6913
        %9532 = vmatpush1.bf16.msra.mxu0 %v6912
        %9533 = vmatprep.subr.bf16.mxu0 %v6900
        %9534 = vmatpush1.bf16.msra.mxu0 %v6899
        %9535 = vmatprep.subr.bf16.mxu0 %v6887
        %9536 = vmatpush1.bf16.msra.mxu0 %v6886
        %9537 = vmatprep.subr.bf16.mxu0 %v6874
        %9538 = vmatpush1.bf16.msra.mxu0 %v6873
        %9539 = vmatprep.subr.bf16.mxu0 %v6861
        %9540 = vmatpush1.bf16.msra.mxu0 %v6860
        %9541 = vmatprep.subr.bf16.mxu0 %v6848
        %9542 = vmatpush1.bf16.msra.mxu0 %v6847
        %9543 = vmatprep.subr.bf16.mxu0 %v6835
        %9544 = vmatpush1.bf16.msra.mxu0 %v6834
        %9545 = vmatprep.subr.bf16.mxu0 %v7030
        %9546 = vmatpush2.bf16.msra.mxu0 %v7029
        %9547 = vmatprep.subr.bf16.mxu0 %v7017
        %9548 = vmatpush2.bf16.msra.mxu0 %v7016
        %9549 = vmatprep.subr.bf16.mxu0 %v7004
        %9550 = vmatpush2.bf16.msra.mxu0 %v7003
        %9551 = vmatprep.subr.bf16.mxu0 %v6991
        %9552 = vmatpush2.bf16.msra.mxu0 %v6990
        %9553 = vmatprep.subr.bf16.mxu0 %v6978
        %9554 = vmatpush2.bf16.msra.mxu0 %v6977
        %9555 = vmatprep.subr.bf16.mxu0 %v6965
        %9556 = vmatpush2.bf16.msra.mxu0 %v6964
        %9557 = vmatprep.subr.bf16.mxu0 %v6952
        %9558 = vmatpush2.bf16.msra.mxu0 %v6951
        %9559 = vmatprep.subr.bf16.mxu0 %v6939
        %9560 = vmatpush2.bf16.msra.mxu0 %v6938
        %9561 = vmatprep.mubr.bf16.mxu0 %v1933
        %9562 = vmatmul.mubr.bf16.gmra.mxu0 %v1932
        %v9563 = vpop.f32.mrf.mxu0
        %v9564 = vadd.f32 %v9521, %v9563
        %v9565 = vpop.f32.mrf.mxu0
        %v9566 = vadd.f32 %v9523, %v9565
        %v9567 = vpop.f32.mrf.mxu0
        %v9568 = vadd.f32 %v9525, %v9567
        %v9569 = vpop.f32.mrf.mxu0
        %v9570 = vadd.f32 %v9527, %v9569
        %9571 = vdwg.mxu0
        %9572 = vmatprep.subr.bf16.mxu0 %v5888
        %9573 = vmatpush1.bf16.msra.mxu0 %v5887
        %9574 = vmatprep.subr.bf16.mxu0 %v5875
        %9575 = vmatpush1.bf16.msra.mxu0 %v5874
        %9576 = vmatprep.subr.bf16.mxu0 %v5862
        %9577 = vmatpush1.bf16.msra.mxu0 %v5861
        %9578 = vmatprep.subr.bf16.mxu0 %v5849
        %9579 = vmatpush1.bf16.msra.mxu0 %v5848
        %9580 = vmatprep.subr.bf16.mxu0 %v5836
        %9581 = vmatpush1.bf16.msra.mxu0 %v5835
        %9582 = vmatprep.subr.bf16.mxu0 %v5823
        %9583 = vmatpush1.bf16.msra.mxu0 %v5822
        %9584 = vmatprep.subr.bf16.mxu0 %v5810
        %9585 = vmatpush1.bf16.msra.mxu0 %v5809
        %9586 = vmatprep.subr.bf16.mxu0 %v5797
        %9587 = vmatpush1.bf16.msra.mxu0 %v5796
        %9588 = vmatprep.subr.bf16.mxu0 %v5992
        %9589 = vmatpush2.bf16.msra.mxu0 %v5991
        %9590 = vmatprep.subr.bf16.mxu0 %v5979
        %9591 = vmatpush2.bf16.msra.mxu0 %v5978
        %9592 = vmatprep.subr.bf16.mxu0 %v5966
        %9593 = vmatpush2.bf16.msra.mxu0 %v5965
        %9594 = vmatprep.subr.bf16.mxu0 %v5953
        %9595 = vmatpush2.bf16.msra.mxu0 %v5952
        %9596 = vmatprep.subr.bf16.mxu0 %v5940
        %9597 = vmatpush2.bf16.msra.mxu0 %v5939
        %9598 = vmatprep.subr.bf16.mxu0 %v5927
        %9599 = vmatpush2.bf16.msra.mxu0 %v5926
        %9600 = vmatprep.subr.bf16.mxu0 %v5914
        %9601 = vmatpush2.bf16.msra.mxu0 %v5913
        %9602 = vmatprep.subr.bf16.mxu0 %v5901
        %9603 = vmatpush2.bf16.msra.mxu0 %v5900
        %9604 = vmatprep.mubr.bf16.mxu0 %v1923
        %9605 = vmatmul.mubr.bf16.gmra.mxu0 %v1922
        %v9606 = vpop.f32.mrf.mxu0
        %v9607 = vadd.f32 %v1864, %v9606
        %v9608 = vpop.f32.mrf.mxu0
        %v9609 = vadd.f32 %v1868, %v9608
        %v9610 = vpop.f32.mrf.mxu0
        %v9611 = vadd.f32 %v1864, %v9610
        %v9612 = vpop.f32.mrf.mxu0
        %v9613 = vadd.f32 %v1868, %v9612
        %9614 = vdwg.mxu0
        %9615 = vmatprep.subr.bf16.mxu0 %v6096
        %9616 = vmatpush1.bf16.msra.mxu0 %v6095
        %9617 = vmatprep.subr.bf16.mxu0 %v6083
        %9618 = vmatpush1.bf16.msra.mxu0 %v6082
        %9619 = vmatprep.subr.bf16.mxu0 %v6070
        %9620 = vmatpush1.bf16.msra.mxu0 %v6069
        %9621 = vmatprep.subr.bf16.mxu0 %v6057
        %9622 = vmatpush1.bf16.msra.mxu0 %v6056
        %9623 = vmatprep.subr.bf16.mxu0 %v6044
        %9624 = vmatpush1.bf16.msra.mxu0 %v6043
        %9625 = vmatprep.subr.bf16.mxu0 %v6031
        %9626 = vmatpush1.bf16.msra.mxu0 %v6030
        %9627 = vmatprep.subr.bf16.mxu0 %v6018
        %9628 = vmatpush1.bf16.msra.mxu0 %v6017
        %9629 = vmatprep.subr.bf16.mxu0 %v6005
        %9630 = vmatpush1.bf16.msra.mxu0 %v6004
        %9631 = vmatprep.subr.bf16.mxu0 %v6200
        %9632 = vmatpush2.bf16.msra.mxu0 %v6199
        %9633 = vmatprep.subr.bf16.mxu0 %v6187
        %9634 = vmatpush2.bf16.msra.mxu0 %v6186
        %9635 = vmatprep.subr.bf16.mxu0 %v6174
        %9636 = vmatpush2.bf16.msra.mxu0 %v6173
        %9637 = vmatprep.subr.bf16.mxu0 %v6161
        %9638 = vmatpush2.bf16.msra.mxu0 %v6160
        %9639 = vmatprep.subr.bf16.mxu0 %v6148
        %9640 = vmatpush2.bf16.msra.mxu0 %v6147
        %9641 = vmatprep.subr.bf16.mxu0 %v6135
        %9642 = vmatpush2.bf16.msra.mxu0 %v6134
        %9643 = vmatprep.subr.bf16.mxu0 %v6122
        %9644 = vmatpush2.bf16.msra.mxu0 %v6121
        %9645 = vmatprep.subr.bf16.mxu0 %v6109
        %9646 = vmatpush2.bf16.msra.mxu0 %v6108
        %9647 = vmatprep.mubr.bf16.mxu0 %v1925
        %9648 = vmatmul.mubr.bf16.gmra.mxu0 %v1924
        %v9649 = vpop.f32.mrf.mxu0
        %v9650 = vadd.f32 %v9607, %v9649
        %v9651 = vpop.f32.mrf.mxu0
        %v9652 = vadd.f32 %v9609, %v9651
        %v9653 = vpop.f32.mrf.mxu0
        %v9654 = vadd.f32 %v9611, %v9653
        %v9655 = vpop.f32.mrf.mxu0
        %v9656 = vadd.f32 %v9613, %v9655
        %9657 = vdwg.mxu0
        %9658 = vmatprep.subr.bf16.mxu0 %v6304
        %9659 = vmatpush1.bf16.msra.mxu0 %v6303
        %9660 = vmatprep.subr.bf16.mxu0 %v6291
        %9661 = vmatpush1.bf16.msra.mxu0 %v6290
        %9662 = vmatprep.subr.bf16.mxu0 %v6278
        %9663 = vmatpush1.bf16.msra.mxu0 %v6277
        %9664 = vmatprep.subr.bf16.mxu0 %v6265
        %9665 = vmatpush1.bf16.msra.mxu0 %v6264
        %9666 = vmatprep.subr.bf16.mxu0 %v6252
        %9667 = vmatpush1.bf16.msra.mxu0 %v6251
        %9668 = vmatprep.subr.bf16.mxu0 %v6239
        %9669 = vmatpush1.bf16.msra.mxu0 %v6238
        %9670 = vmatprep.subr.bf16.mxu0 %v6226
        %9671 = vmatpush1.bf16.msra.mxu0 %v6225
        %9672 = vmatprep.subr.bf16.mxu0 %v6213
        %9673 = vmatpush1.bf16.msra.mxu0 %v6212
        %9674 = vmatprep.subr.bf16.mxu0 %v6408
        %9675 = vmatpush2.bf16.msra.mxu0 %v6407
        %9676 = vmatprep.subr.bf16.mxu0 %v6395
        %9677 = vmatpush2.bf16.msra.mxu0 %v6394
        %9678 = vmatprep.subr.bf16.mxu0 %v6382
        %9679 = vmatpush2.bf16.msra.mxu0 %v6381
        %9680 = vmatprep.subr.bf16.mxu0 %v6369
        %9681 = vmatpush2.bf16.msra.mxu0 %v6368
        %9682 = vmatprep.subr.bf16.mxu0 %v6356
        %9683 = vmatpush2.bf16.msra.mxu0 %v6355
        %9684 = vmatprep.subr.bf16.mxu0 %v6343
        %9685 = vmatpush2.bf16.msra.mxu0 %v6342
        %9686 = vmatprep.subr.bf16.mxu0 %v6330
        %9687 = vmatpush2.bf16.msra.mxu0 %v6329
        %9688 = vmatprep.subr.bf16.mxu0 %v6317
        %9689 = vmatpush2.bf16.msra.mxu0 %v6316
        %9690 = vmatprep.mubr.bf16.mxu0 %v1927
        %9691 = vmatmul.mubr.bf16.gmra.mxu0 %v1926
        %v9692 = vpop.f32.mrf.mxu0
        %v9693 = vadd.f32 %v9650, %v9692
        %v9694 = vpop.f32.mrf.mxu0
        %v9695 = vadd.f32 %v9652, %v9694
        %v9696 = vpop.f32.mrf.mxu0
        %v9697 = vadd.f32 %v9654, %v9696
        %v9698 = vpop.f32.mrf.mxu0
        %v9699 = vadd.f32 %v9656, %v9698
        %9700 = vdwg.mxu0
        %9701 = vmatprep.subr.bf16.mxu0 %v6512
        %9702 = vmatpush1.bf16.msra.mxu0 %v6511
        %9703 = vmatprep.subr.bf16.mxu0 %v6499
        %9704 = vmatpush1.bf16.msra.mxu0 %v6498
        %9705 = vmatprep.subr.bf16.mxu0 %v6486
        %9706 = vmatpush1.bf16.msra.mxu0 %v6485
        %9707 = vmatprep.subr.bf16.mxu0 %v6473
        %9708 = vmatpush1.bf16.msra.mxu0 %v6472
        %9709 = vmatprep.subr.bf16.mxu0 %v6460
        %9710 = vmatpush1.bf16.msra.mxu0 %v6459
        %9711 = vmatprep.subr.bf16.mxu0 %v6447
        %9712 = vmatpush1.bf16.msra.mxu0 %v6446
        %9713 = vmatprep.subr.bf16.mxu0 %v6434
        %9714 = vmatpush1.bf16.msra.mxu0 %v6433
        %9715 = vmatprep.subr.bf16.mxu0 %v6421
        %9716 = vmatpush1.bf16.msra.mxu0 %v6420
        %9717 = vmatprep.subr.bf16.mxu0 %v6616
        %9718 = vmatpush2.bf16.msra.mxu0 %v6615
        %9719 = vmatprep.subr.bf16.mxu0 %v6603
        %9720 = vmatpush2.bf16.msra.mxu0 %v6602
        %9721 = vmatprep.subr.bf16.mxu0 %v6590
        %9722 = vmatpush2.bf16.msra.mxu0 %v6589
        %9723 = vmatprep.subr.bf16.mxu0 %v6577
        %9724 = vmatpush2.bf16.msra.mxu0 %v6576
        %9725 = vmatprep.subr.bf16.mxu0 %v6564
        %9726 = vmatpush2.bf16.msra.mxu0 %v6563
        %9727 = vmatprep.subr.bf16.mxu0 %v6551
        %9728 = vmatpush2.bf16.msra.mxu0 %v6550
        %9729 = vmatprep.subr.bf16.mxu0 %v6538
        %9730 = vmatpush2.bf16.msra.mxu0 %v6537
        %9731 = vmatprep.subr.bf16.mxu0 %v6525
        %9732 = vmatpush2.bf16.msra.mxu0 %v6524
        %9733 = vmatprep.mubr.bf16.mxu0 %v1929
        %9734 = vmatmul.mubr.bf16.gmra.mxu0 %v1928
        %v9735 = vpop.f32.mrf.mxu0
        %v9736 = vadd.f32 %v9693, %v9735
        %v9737 = vpop.f32.mrf.mxu0
        %v9738 = vadd.f32 %v9695, %v9737
        %v9739 = vpop.f32.mrf.mxu0
        %v9740 = vadd.f32 %v9697, %v9739
        %v9741 = vpop.f32.mrf.mxu0
        %v9742 = vadd.f32 %v9699, %v9741
        %9743 = vdwg.mxu0
        %9744 = vmatprep.subr.bf16.mxu0 %v6720
        %9745 = vmatpush1.bf16.msra.mxu0 %v6719
        %9746 = vmatprep.subr.bf16.mxu0 %v6707
        %9747 = vmatpush1.bf16.msra.mxu0 %v6706
        %9748 = vmatprep.subr.bf16.mxu0 %v6694
        %9749 = vmatpush1.bf16.msra.mxu0 %v6693
        %9750 = vmatprep.subr.bf16.mxu0 %v6681
        %9751 = vmatpush1.bf16.msra.mxu0 %v6680
        %9752 = vmatprep.subr.bf16.mxu0 %v6668
        %9753 = vmatpush1.bf16.msra.mxu0 %v6667
        %9754 = vmatprep.subr.bf16.mxu0 %v6655
        %9755 = vmatpush1.bf16.msra.mxu0 %v6654
        %9756 = vmatprep.subr.bf16.mxu0 %v6642
        %9757 = vmatpush1.bf16.msra.mxu0 %v6641
        %9758 = vmatprep.subr.bf16.mxu0 %v6629
        %9759 = vmatpush1.bf16.msra.mxu0 %v6628
        %9760 = vmatprep.subr.bf16.mxu0 %v6824
        %9761 = vmatpush2.bf16.msra.mxu0 %v6823
        %9762 = vmatprep.subr.bf16.mxu0 %v6811
        %9763 = vmatpush2.bf16.msra.mxu0 %v6810
        %9764 = vmatprep.subr.bf16.mxu0 %v6798
        %9765 = vmatpush2.bf16.msra.mxu0 %v6797
        %9766 = vmatprep.subr.bf16.mxu0 %v6785
        %9767 = vmatpush2.bf16.msra.mxu0 %v6784
        %9768 = vmatprep.subr.bf16.mxu0 %v6772
        %9769 = vmatpush2.bf16.msra.mxu0 %v6771
        %9770 = vmatprep.subr.bf16.mxu0 %v6759
        %9771 = vmatpush2.bf16.msra.mxu0 %v6758
        %9772 = vmatprep.subr.bf16.mxu0 %v6746
        %9773 = vmatpush2.bf16.msra.mxu0 %v6745
        %9774 = vmatprep.subr.bf16.mxu0 %v6733
        %9775 = vmatpush2.bf16.msra.mxu0 %v6732
        %9776 = vmatprep.mubr.bf16.mxu0 %v1931
        %9777 = vmatmul.mubr.bf16.gmra.mxu0 %v1930
        %v9778 = vpop.f32.mrf.mxu0
        %v9779 = vadd.f32 %v9736, %v9778
        %v9780 = vpop.f32.mrf.mxu0
        %v9781 = vadd.f32 %v9738, %v9780
        %v9782 = vpop.f32.mrf.mxu0
        %v9783 = vadd.f32 %v9740, %v9782
        %v9784 = vpop.f32.mrf.mxu0
        %v9785 = vadd.f32 %v9742, %v9784
        %9786 = vdwg.mxu0
        %9787 = vmatprep.subr.bf16.mxu0 %v6928
        %9788 = vmatpush1.bf16.msra.mxu0 %v6927
        %9789 = vmatprep.subr.bf16.mxu0 %v6915
        %9790 = vmatpush1.bf16.msra.mxu0 %v6914
        %9791 = vmatprep.subr.bf16.mxu0 %v6902
        %9792 = vmatpush1.bf16.msra.mxu0 %v6901
        %9793 = vmatprep.subr.bf16.mxu0 %v6889
        %9794 = vmatpush1.bf16.msra.mxu0 %v6888
        %9795 = vmatprep.subr.bf16.mxu0 %v6876
        %9796 = vmatpush1.bf16.msra.mxu0 %v6875
        %9797 = vmatprep.subr.bf16.mxu0 %v6863
        %9798 = vmatpush1.bf16.msra.mxu0 %v6862
        %9799 = vmatprep.subr.bf16.mxu0 %v6850
        %9800 = vmatpush1.bf16.msra.mxu0 %v6849
        %9801 = vmatprep.subr.bf16.mxu0 %v6837
        %9802 = vmatpush1.bf16.msra.mxu0 %v6836
        %9803 = vmatprep.subr.bf16.mxu0 %v7032
        %9804 = vmatpush2.bf16.msra.mxu0 %v7031
        %9805 = vmatprep.subr.bf16.mxu0 %v7019
        %9806 = vmatpush2.bf16.msra.mxu0 %v7018
        %9807 = vmatprep.subr.bf16.mxu0 %v7006
        %9808 = vmatpush2.bf16.msra.mxu0 %v7005
        %9809 = vmatprep.subr.bf16.mxu0 %v6993
        %9810 = vmatpush2.bf16.msra.mxu0 %v6992
        %9811 = vmatprep.subr.bf16.mxu0 %v6980
        %9812 = vmatpush2.bf16.msra.mxu0 %v6979
        %9813 = vmatprep.subr.bf16.mxu0 %v6967
        %9814 = vmatpush2.bf16.msra.mxu0 %v6966
        %9815 = vmatprep.subr.bf16.mxu0 %v6954
        %9816 = vmatpush2.bf16.msra.mxu0 %v6953
        %9817 = vmatprep.subr.bf16.mxu0 %v6941
        %9818 = vmatpush2.bf16.msra.mxu0 %v6940
        %9819 = vmatprep.mubr.bf16.mxu0 %v1933
        %9820 = vmatmul.mubr.bf16.gmra.mxu0 %v1932
        %v9821 = vpop.f32.mrf.mxu0
        %v9822 = vadd.f32 %v9779, %v9821
        %v9823 = vpop.f32.mrf.mxu0
        %v9824 = vadd.f32 %v9781, %v9823
        %v9825 = vpop.f32.mrf.mxu0
        %v9826 = vadd.f32 %v9783, %v9825
        %v9827 = vpop.f32.mrf.mxu0
        %v9828 = vadd.f32 %v9785, %v9827
        %9829 = vdwg.mxu0
        %9830 = vmatprep.subr.bf16.mxu0 0
        %9831 = vmatpush1.bf16.msra.mxu0 %v5889
        %9832 = vmatprep.subr.bf16.mxu0 0
        %9833 = vmatpush1.bf16.msra.mxu0 %v5876
        %9834 = vmatprep.subr.bf16.mxu0 0
        %9835 = vmatpush1.bf16.msra.mxu0 %v5863
        %9836 = vmatprep.subr.bf16.mxu0 0
        %9837 = vmatpush1.bf16.msra.mxu0 %v5850
        %9838 = vmatprep.subr.bf16.mxu0 0
        %9839 = vmatpush1.bf16.msra.mxu0 %v5837
        %9840 = vmatprep.subr.bf16.mxu0 0
        %9841 = vmatpush1.bf16.msra.mxu0 %v5824
        %9842 = vmatprep.subr.bf16.mxu0 0
        %9843 = vmatpush1.bf16.msra.mxu0 %v5811
        %9844 = vmatprep.subr.bf16.mxu0 0
        %9845 = vmatpush1.bf16.msra.mxu0 %v5798
        %9846 = vmatprep.subr.bf16.mxu0 0
        %9847 = vmatpush2.bf16.msra.mxu0 %v5993
        %9848 = vmatprep.subr.bf16.mxu0 0
        %9849 = vmatpush2.bf16.msra.mxu0 %v5980
        %9850 = vmatprep.subr.bf16.mxu0 0
        %9851 = vmatpush2.bf16.msra.mxu0 %v5967
        %9852 = vmatprep.subr.bf16.mxu0 0
        %9853 = vmatpush2.bf16.msra.mxu0 %v5954
        %9854 = vmatprep.subr.bf16.mxu0 0
        %9855 = vmatpush2.bf16.msra.mxu0 %v5941
        %9856 = vmatprep.subr.bf16.mxu0 0
        %9857 = vmatpush2.bf16.msra.mxu0 %v5928
        %9858 = vmatprep.subr.bf16.mxu0 0
        %9859 = vmatpush2.bf16.msra.mxu0 %v5915
        %9860 = vmatprep.subr.bf16.mxu0 0
        %9861 = vmatpush2.bf16.msra.mxu0 %v5902
        %9862 = vmatprep.mubr.bf16.mxu0 %v1923
        %9863 = vmatmul.mubr.bf16.gmra.mxu0 %v1922
        %v9864 = vpop.f32.mrf.mxu0
        %v9865 = vadd.f32 %v1872, %v9864
        %v9866 = vpop.f32.mrf.mxu0
        %v9867 = vpop.f32.mrf.mxu0
        %v9868 = vadd.f32 %v1872, %v9867
        %v9869 = vpop.f32.mrf.mxu0
        %9870 = vdwg.mxu0
        %9871 = vmatprep.subr.bf16.mxu0 0
        %9872 = vmatpush1.bf16.msra.mxu0 %v6097
        %9873 = vmatprep.subr.bf16.mxu0 0
        %9874 = vmatpush1.bf16.msra.mxu0 %v6084
        %9875 = vmatprep.subr.bf16.mxu0 0
        %9876 = vmatpush1.bf16.msra.mxu0 %v6071
        %9877 = vmatprep.subr.bf16.mxu0 0
        %9878 = vmatpush1.bf16.msra.mxu0 %v6058
        %9879 = vmatprep.subr.bf16.mxu0 0
        %9880 = vmatpush1.bf16.msra.mxu0 %v6045
        %9881 = vmatprep.subr.bf16.mxu0 0
        %9882 = vmatpush1.bf16.msra.mxu0 %v6032
        %9883 = vmatprep.subr.bf16.mxu0 0
        %9884 = vmatpush1.bf16.msra.mxu0 %v6019
        %9885 = vmatprep.subr.bf16.mxu0 0
        %9886 = vmatpush1.bf16.msra.mxu0 %v6006
        %9887 = vmatprep.subr.bf16.mxu0 0
        %9888 = vmatpush2.bf16.msra.mxu0 %v6201
        %9889 = vmatprep.subr.bf16.mxu0 0
        %9890 = vmatpush2.bf16.msra.mxu0 %v6188
        %9891 = vmatprep.subr.bf16.mxu0 0
        %9892 = vmatpush2.bf16.msra.mxu0 %v6175
        %9893 = vmatprep.subr.bf16.mxu0 0
        %9894 = vmatpush2.bf16.msra.mxu0 %v6162
        %9895 = vmatprep.subr.bf16.mxu0 0
        %9896 = vmatpush2.bf16.msra.mxu0 %v6149
        %9897 = vmatprep.subr.bf16.mxu0 0
        %9898 = vmatpush2.bf16.msra.mxu0 %v6136
        %9899 = vmatprep.subr.bf16.mxu0 0
        %9900 = vmatpush2.bf16.msra.mxu0 %v6123
        %9901 = vmatprep.subr.bf16.mxu0 0
        %9902 = vmatpush2.bf16.msra.mxu0 %v6110
        %9903 = vmatprep.mubr.bf16.mxu0 %v1925
        %9904 = vmatmul.mubr.bf16.gmra.mxu0 %v1924
        %v9905 = vpop.f32.mrf.mxu0
        %v9906 = vadd.f32 %v9865, %v9905
        %v9907 = vpop.f32.mrf.mxu0
        %v9908 = vpop.f32.mrf.mxu0
        %v9909 = vadd.f32 %v9868, %v9908
        %v9910 = vpop.f32.mrf.mxu0
        %9911 = vdwg.mxu0
        %9912 = vmatprep.subr.bf16.mxu0 0
        %9913 = vmatpush1.bf16.msra.mxu0 %v6305
        %9914 = vmatprep.subr.bf16.mxu0 0
        %9915 = vmatpush1.bf16.msra.mxu0 %v6292
        %9916 = vmatprep.subr.bf16.mxu0 0
        %9917 = vmatpush1.bf16.msra.mxu0 %v6279
        %9918 = vmatprep.subr.bf16.mxu0 0
        %9919 = vmatpush1.bf16.msra.mxu0 %v6266
        %9920 = vmatprep.subr.bf16.mxu0 0
        %9921 = vmatpush1.bf16.msra.mxu0 %v6253
        %9922 = vmatprep.subr.bf16.mxu0 0
        %9923 = vmatpush1.bf16.msra.mxu0 %v6240
        %9924 = vmatprep.subr.bf16.mxu0 0
        %9925 = vmatpush1.bf16.msra.mxu0 %v6227
        %9926 = vmatprep.subr.bf16.mxu0 0
        %9927 = vmatpush1.bf16.msra.mxu0 %v6214
        %9928 = vmatprep.subr.bf16.mxu0 0
        %9929 = vmatpush2.bf16.msra.mxu0 %v6409
        %9930 = vmatprep.subr.bf16.mxu0 0
        %9931 = vmatpush2.bf16.msra.mxu0 %v6396
        %9932 = vmatprep.subr.bf16.mxu0 0
        %9933 = vmatpush2.bf16.msra.mxu0 %v6383
        %9934 = vmatprep.subr.bf16.mxu0 0
        %9935 = vmatpush2.bf16.msra.mxu0 %v6370
        %9936 = vmatprep.subr.bf16.mxu0 0
        %9937 = vmatpush2.bf16.msra.mxu0 %v6357
        %9938 = vmatprep.subr.bf16.mxu0 0
        %9939 = vmatpush2.bf16.msra.mxu0 %v6344
        %9940 = vmatprep.subr.bf16.mxu0 0
        %9941 = vmatpush2.bf16.msra.mxu0 %v6331
        %9942 = vmatprep.subr.bf16.mxu0 0
        %9943 = vmatpush2.bf16.msra.mxu0 %v6318
        %9944 = vmatprep.mubr.bf16.mxu0 %v1927
        %9945 = vmatmul.mubr.bf16.gmra.mxu0 %v1926
        %v9946 = vpop.f32.mrf.mxu0
        %v9947 = vadd.f32 %v9906, %v9946
        %v9948 = vpop.f32.mrf.mxu0
        %v9949 = vpop.f32.mrf.mxu0
        %v9950 = vadd.f32 %v9909, %v9949
        %v9951 = vpop.f32.mrf.mxu0
        %9952 = vdwg.mxu0
        %9953 = vmatprep.subr.bf16.mxu0 0
        %9954 = vmatpush1.bf16.msra.mxu0 %v6513
        %9955 = vmatprep.subr.bf16.mxu0 0
        %9956 = vmatpush1.bf16.msra.mxu0 %v6500
        %9957 = vmatprep.subr.bf16.mxu0 0
        %9958 = vmatpush1.bf16.msra.mxu0 %v6487
        %9959 = vmatprep.subr.bf16.mxu0 0
        %9960 = vmatpush1.bf16.msra.mxu0 %v6474
        %9961 = vmatprep.subr.bf16.mxu0 0
        %9962 = vmatpush1.bf16.msra.mxu0 %v6461
        %9963 = vmatprep.subr.bf16.mxu0 0
        %9964 = vmatpush1.bf16.msra.mxu0 %v6448
        %9965 = vmatprep.subr.bf16.mxu0 0
        %9966 = vmatpush1.bf16.msra.mxu0 %v6435
        %9967 = vmatprep.subr.bf16.mxu0 0
        %9968 = vmatpush1.bf16.msra.mxu0 %v6422
        %9969 = vmatprep.subr.bf16.mxu0 0
        %9970 = vmatpush2.bf16.msra.mxu0 %v6617
        %9971 = vmatprep.subr.bf16.mxu0 0
        %9972 = vmatpush2.bf16.msra.mxu0 %v6604
        %9973 = vmatprep.subr.bf16.mxu0 0
        %9974 = vmatpush2.bf16.msra.mxu0 %v6591
        %9975 = vmatprep.subr.bf16.mxu0 0
        %9976 = vmatpush2.bf16.msra.mxu0 %v6578
        %9977 = vmatprep.subr.bf16.mxu0 0
        %9978 = vmatpush2.bf16.msra.mxu0 %v6565
        %9979 = vmatprep.subr.bf16.mxu0 0
        %9980 = vmatpush2.bf16.msra.mxu0 %v6552
        %9981 = vmatprep.subr.bf16.mxu0 0
        %9982 = vmatpush2.bf16.msra.mxu0 %v6539
        %9983 = vmatprep.subr.bf16.mxu0 0
        %9984 = vmatpush2.bf16.msra.mxu0 %v6526
        %9985 = vmatprep.mubr.bf16.mxu0 %v1929
        %9986 = vmatmul.mubr.bf16.gmra.mxu0 %v1928
        %v9987 = vpop.f32.mrf.mxu0
        %v9988 = vadd.f32 %v9947, %v9987
        %v9989 = vpop.f32.mrf.mxu0
        %v9990 = vpop.f32.mrf.mxu0
        %v9991 = vadd.f32 %v9950, %v9990
        %v9992 = vpop.f32.mrf.mxu0
        %9993 = vdwg.mxu0
        %9994 = vmatprep.subr.bf16.mxu0 0
        %9995 = vmatpush1.bf16.msra.mxu0 %v6721
        %9996 = vmatprep.subr.bf16.mxu0 0
        %9997 = vmatpush1.bf16.msra.mxu0 %v6708
        %9998 = vmatprep.subr.bf16.mxu0 0
        %9999 = vmatpush1.bf16.msra.mxu0 %v6695
        %10000 = vmatprep.subr.bf16.mxu0 0
        %10001 = vmatpush1.bf16.msra.mxu0 %v6682
        %10002 = vmatprep.subr.bf16.mxu0 0
        %10003 = vmatpush1.bf16.msra.mxu0 %v6669
        %10004 = vmatprep.subr.bf16.mxu0 0
        %10005 = vmatpush1.bf16.msra.mxu0 %v6656
        %10006 = vmatprep.subr.bf16.mxu0 0
        %10007 = vmatpush1.bf16.msra.mxu0 %v6643
        %10008 = vmatprep.subr.bf16.mxu0 0
        %10009 = vmatpush1.bf16.msra.mxu0 %v6630
        %10010 = vmatprep.subr.bf16.mxu0 0
        %10011 = vmatpush2.bf16.msra.mxu0 %v6825
        %10012 = vmatprep.subr.bf16.mxu0 0
        %10013 = vmatpush2.bf16.msra.mxu0 %v6812
        %10014 = vmatprep.subr.bf16.mxu0 0
        %10015 = vmatpush2.bf16.msra.mxu0 %v6799
        %10016 = vmatprep.subr.bf16.mxu0 0
        %10017 = vmatpush2.bf16.msra.mxu0 %v6786
        %10018 = vmatprep.subr.bf16.mxu0 0
        %10019 = vmatpush2.bf16.msra.mxu0 %v6773
        %10020 = vmatprep.subr.bf16.mxu0 0
        %10021 = vmatpush2.bf16.msra.mxu0 %v6760
        %10022 = vmatprep.subr.bf16.mxu0 0
        %10023 = vmatpush2.bf16.msra.mxu0 %v6747
        %10024 = vmatprep.subr.bf16.mxu0 0
        %10025 = vmatpush2.bf16.msra.mxu0 %v6734
        %10026 = vmatprep.mubr.bf16.mxu0 %v1931
        %10027 = vmatmul.mubr.bf16.gmra.mxu0 %v1930
        %v10028 = vpop.f32.mrf.mxu0
        %v10029 = vadd.f32 %v9988, %v10028
        %v10030 = vpop.f32.mrf.mxu0
        %v10031 = vpop.f32.mrf.mxu0
        %v10032 = vadd.f32 %v9991, %v10031
        %v10033 = vpop.f32.mrf.mxu0
        %10034 = vdwg.mxu0
        %10035 = vmatprep.subr.bf16.mxu0 0
        %10036 = vmatpush1.bf16.msra.mxu0 %v6929
        %10037 = vmatprep.subr.bf16.mxu0 0
        %10038 = vmatpush1.bf16.msra.mxu0 %v6916
        %10039 = vmatprep.subr.bf16.mxu0 0
        %10040 = vmatpush1.bf16.msra.mxu0 %v6903
        %10041 = vmatprep.subr.bf16.mxu0 0
        %10042 = vmatpush1.bf16.msra.mxu0 %v6890
        %10043 = vmatprep.subr.bf16.mxu0 0
        %10044 = vmatpush1.bf16.msra.mxu0 %v6877
        %10045 = vmatprep.subr.bf16.mxu0 0
        %10046 = vmatpush1.bf16.msra.mxu0 %v6864
        %10047 = vmatprep.subr.bf16.mxu0 0
        %10048 = vmatpush1.bf16.msra.mxu0 %v6851
        %10049 = vmatprep.subr.bf16.mxu0 0
        %10050 = vmatpush1.bf16.msra.mxu0 %v6838
        %10051 = vmatprep.subr.bf16.mxu0 0
        %10052 = vmatpush2.bf16.msra.mxu0 %v7033
        %10053 = vmatprep.subr.bf16.mxu0 0
        %10054 = vmatpush2.bf16.msra.mxu0 %v7020
        %10055 = vmatprep.subr.bf16.mxu0 0
        %10056 = vmatpush2.bf16.msra.mxu0 %v7007
        %10057 = vmatprep.subr.bf16.mxu0 0
        %10058 = vmatpush2.bf16.msra.mxu0 %v6994
        %10059 = vmatprep.subr.bf16.mxu0 0
        %10060 = vmatpush2.bf16.msra.mxu0 %v6981
        %10061 = vmatprep.subr.bf16.mxu0 0
        %10062 = vmatpush2.bf16.msra.mxu0 %v6968
        %10063 = vmatprep.subr.bf16.mxu0 0
        %10064 = vmatpush2.bf16.msra.mxu0 %v6955
        %10065 = vmatprep.subr.bf16.mxu0 0
        %10066 = vmatpush2.bf16.msra.mxu0 %v6942
        %10067 = vmatprep.mubr.bf16.mxu0 %v1933
        %10068 = vmatmul.mubr.bf16.gmra.mxu0 %v1932
        %v10069 = vpop.f32.mrf.mxu0
        %v10070 = vadd.f32 %v10029, %v10069
        %v10071 = vpop.f32.mrf.mxu0
        %v10072 = vpop.f32.mrf.mxu0
        %v10073 = vadd.f32 %v10032, %v10072
        %v10074 = vpop.f32.mrf.mxu0
        %10075 = vdwg.mxu0
        %v10076 = vmax.f32 %v8532, 0.0
        %v10077 = vmax.f32 %v8534, 0.0
        %v10078 = vmax.f32 %v8790, 0.0
        %v10079 = vmax.f32 %v8792, 0.0
        %v10080 = vmax.f32 %v9048, 0.0
        %v10081 = vmax.f32 %v9050, 0.0
        %v10082 = vmax.f32 %v9306, 0.0
        %v10083 = vmax.f32 %v9308, 0.0
        %v10084 = vmax.f32 %v9564, 0.0
        %v10085 = vmax.f32 %v9566, 0.0
        %v10086 = vmax.f32 %v9822, 0.0
        %v10087 = vmax.f32 %v9824, 0.0
        %v10088 = vmax.f32 %v10070, 0.0
        %v10089 = vmax.f32 %v8536, 0.0
        %v10090 = vmax.f32 %v8538, 0.0
        %v10091 = vmax.f32 %v8794, 0.0
        %v10092 = vmax.f32 %v8796, 0.0
        %v10093 = vmax.f32 %v9052, 0.0
        %v10094 = vmax.f32 %v9054, 0.0
        %v10095 = vmax.f32 %v9310, 0.0
        %v10096 = vmax.f32 %v9312, 0.0
        %v10097 = vmax.f32 %v9568, 0.0
        %v10098 = vmax.f32 %v9570, 0.0
        %v10099 = vmax.f32 %v9826, 0.0
        %v10100 = vmax.f32 %v9828, 0.0
        %v10101 = vmax.f32 %v10073, 0.0
        %v10102 = vpack.c.bf16 %v10089, %v10076
        %v10103 = vpack.c.bf16 %v10090, %v10077
        %v10104 = vpack.c.bf16 %v10091, %v10078
        %v10105 = vpack.c.bf16 %v10092, %v10079
        %v10106 = vpack.c.bf16 %v10093, %v10080
        %v10107 = vpack.c.bf16 %v10094, %v10081
        %v10108 = vpack.c.bf16 %v10095, %v10082
        %v10109 = vpack.c.bf16 %v10096, %v10083
        %v10110 = vpack.c.bf16 %v10097, %v10084
        %v10111 = vpack.c.bf16 %v10098, %v10085
        %v10112 = vpack.c.bf16 %v10099, %v10086
        %v10113 = vpack.c.bf16 %v10100, %v10087
        %v10114 = vpack.c.bf16 %v10101, %v10088
        %v10115 = vld [vmem:[#allocation10] sm:$0xf]
        %v10116 = vld [vmem:[#allocation10 + $0x4] sm:$0xf]
        %v10117 = vld [vmem:[#allocation10 + $0x8] sm:$0xf]
        %v10118 = vld [vmem:[#allocation10 + $0xc] sm:$0xf]
        %v10119 = vld [vmem:[#allocation10 + $0x10] sm:$0xf]
        %v10120 = vld [vmem:[#allocation10 + $0x14] sm:$0xf]
        %v10121 = vld [vmem:[#allocation10 + $0x18] sm:$0xf]
        %v10122 = vld [vmem:[#allocation10 + $0x1c] sm:$0xf]
        %v10123 = vld [vmem:[#allocation10 + $0x20] sm:$0xf]
        %v10124 = vld [vmem:[#allocation10 + $0x24] sm:$0xf]
        %v10125 = vld [vmem:[#allocation10 + $0x28] sm:$0xf]
        %v10126 = vld [vmem:[#allocation10 + $0x2c] sm:$0xf]
        %v10127 = vld [vmem:[#allocation10 + $0x30] sm:$0xf]
        %v10128 = vld [vmem:[#allocation10 + $0x34] sm:$0xf]
        %v10129 = vld [vmem:[#allocation10 + $0x38] sm:$0xf]
        %v10130 = vld [vmem:[#allocation10 + $0x3c] sm:$0xf]
        %v10131 = vld [vmem:[#allocation10 + $0x40] sm:$0xf]
        %v10132 = vld [vmem:[#allocation10 + $0x44] sm:$0xf]
        %v10133 = vld [vmem:[#allocation10 + $0x48] sm:$0xf]
        %v10134 = vld [vmem:[#allocation10 + $0x4c] sm:$0xf]
        %v10135 = vld [vmem:[#allocation10 + $0x50] sm:$0xf]
        %v10136 = vld [vmem:[#allocation10 + $0x54] sm:$0xf]
        %v10137 = vld [vmem:[#allocation10 + $0x58] sm:$0xf]
        %v10138 = vld [vmem:[#allocation10 + $0x5c] sm:$0xf]
        %v10139 = vld [vmem:[#allocation10 + $0x60] sm:$0xf]
        %v10140 = vld [vmem:[#allocation10 + $0x64] sm:$0xf]
        %v10141 = vld [vmem:[#allocation10 + $0x68] sm:$0xf]
        %v10142 = vld [vmem:[#allocation10 + $0x6c] sm:$0xf]
        %v10143 = vld [vmem:[#allocation10 + $0x70] sm:$0xf]
        %v10144 = vld [vmem:[#allocation10 + $0x74] sm:$0xf]
        %v10145 = vld [vmem:[#allocation10 + $0x78] sm:$0xf]
        %v10146 = vld [vmem:[#allocation10 + $0x7c] sm:$0xf]
        %v10147 = vld [vmem:[#allocation10 + $0x80] sm:$0xf]
        %v10148 = vld [vmem:[#allocation10 + $0x84] sm:$0xf]
        %v10149 = vld [vmem:[#allocation10 + $0x88] sm:$0xf]
        %v10150 = vld [vmem:[#allocation10 + $0x8c] sm:$0xf]
        %v10151 = vld [vmem:[#allocation10 + $0x90] sm:$0xf]
        %v10152 = vld [vmem:[#allocation10 + $0x94] sm:$0xf]
        %v10153 = vld [vmem:[#allocation10 + $0x98] sm:$0xf]
        %v10154 = vld [vmem:[#allocation10 + $0x9c] sm:$0xf]
        %v10155 = vld [vmem:[#allocation10 + $0xa0] sm:$0xf]
        %v10156 = vld [vmem:[#allocation10 + $0xa4] sm:$0xf]
        %v10157 = vld [vmem:[#allocation10 + $0xa8] sm:$0xf]
        %v10158 = vld [vmem:[#allocation10 + $0xac] sm:$0xf]
        %v10159 = vld [vmem:[#allocation10 + $0xb0] sm:$0xf]
        %v10160 = vld [vmem:[#allocation10 + $0xb4] sm:$0xf]
        %v10161 = vld [vmem:[#allocation10 + $0xb8] sm:$0xf]
        %v10162 = vld [vmem:[#allocation10 + $0xbc] sm:$0xf]
        %v10163 = vld [vmem:[#allocation10 + $0xc0] sm:$0xf]
        %v10164 = vld [vmem:[#allocation10 + $0xc4] sm:$0xf]
        %v10165 = vld [vmem:[#allocation10 + $0xc8] sm:$0xf]
        %v10166 = vld [vmem:[#allocation10 + $0xcc] sm:$0xf]
        %v10167 = vld [vmem:[#allocation10 + $0xd0] sm:$0xf]
        %v10168 = vld [vmem:[#allocation10 + $0xd4] sm:$0xf]
        %v10169 = vld [vmem:[#allocation10 + $0xd8] sm:$0xf]
        %v10170 = vld [vmem:[#allocation10 + $0xdc] sm:$0xf]
        %v10171 = vld [vmem:[#allocation10 + $0xe0] sm:$0xf]
        %v10172 = vld [vmem:[#allocation10 + $0xe4] sm:$0xf]
        %v10173 = vld [vmem:[#allocation10 + $0xe8] sm:$0xf]
        %v10174 = vld [vmem:[#allocation10 + $0xec] sm:$0xf]
        %v10175 = vld [vmem:[#allocation10 + $0xf0] sm:$0xf]
        %v10176 = vld [vmem:[#allocation10 + $0xf4] sm:$0xf]
        %v10177 = vld [vmem:[#allocation10 + $0xf8] sm:$0xf]
        %v10178 = vld [vmem:[#allocation10 + $0xfc] sm:$0xf]
        %v10179 = vld [vmem:[#allocation10 + $0x100] sm:$0xf]
        %v10180 = vld [vmem:[#allocation10 + $0x104] sm:$0xf]
        %v10181 = vld [vmem:[#allocation10 + $0x108] sm:$0xf]
        %v10182 = vld [vmem:[#allocation10 + $0x10c] sm:$0xf]
        %v10183 = vld [vmem:[#allocation10 + $0x110] sm:$0xf]
        %v10184 = vld [vmem:[#allocation10 + $0x114] sm:$0xf]
        %v10185 = vld [vmem:[#allocation10 + $0x118] sm:$0xf]
        %v10186 = vld [vmem:[#allocation10 + $0x11c] sm:$0xf]
        %v10187 = vld [vmem:[#allocation10 + $0x120] sm:$0xf]
        %v10188 = vld [vmem:[#allocation10 + $0x124] sm:$0xf]
        %v10189 = vld [vmem:[#allocation10 + $0x128] sm:$0xf]
        %v10190 = vld [vmem:[#allocation10 + $0x12c] sm:$0xf]
        %v10191 = vld [vmem:[#allocation10 + $0x130] sm:$0xf]
        %v10192 = vld [vmem:[#allocation10 + $0x134] sm:$0xf]
        %v10193 = vld [vmem:[#allocation10 + $0x138] sm:$0xf]
        %v10194 = vld [vmem:[#allocation10 + $0x13c] sm:$0xf]
        %v10195 = vld [vmem:[#allocation10 + $0x140] sm:$0xf]
        %v10196 = vld [vmem:[#allocation10 + $0x144] sm:$0xf]
        %v10197 = vld [vmem:[#allocation10 + $0x148] sm:$0xf]
        %v10198 = vld [vmem:[#allocation10 + $0x14c] sm:$0xf]
        %v10199 = vld [vmem:[#allocation10 + $0x150] sm:$0xf]
        %v10200 = vld [vmem:[#allocation10 + $0x154] sm:$0xf]
        %v10201 = vld [vmem:[#allocation10 + $0x158] sm:$0xf]
        %v10202 = vld [vmem:[#allocation10 + $0x15c] sm:$0xf]
        %v10203 = vld [vmem:[#allocation10 + $0x160] sm:$0xf]
        %v10204 = vld [vmem:[#allocation10 + $0x164] sm:$0xf]
        %v10205 = vld [vmem:[#allocation10 + $0x168] sm:$0xf]
        %v10206 = vld [vmem:[#allocation10 + $0x16c] sm:$0xf]
        %v10207 = vld [vmem:[#allocation10 + $0x170] sm:$0xf]
        %v10208 = vld [vmem:[#allocation10 + $0x174] sm:$0xf]
        %v10209 = vld [vmem:[#allocation10 + $0x178] sm:$0xf]
        %v10210 = vld [vmem:[#allocation10 + $0x17c] sm:$0xf]
        %v10211 = vld [vmem:[#allocation10 + $0x180] sm:$0xf]
        %v10212 = vld [vmem:[#allocation10 + $0x184] sm:$0xf]
        %v10213 = vld [vmem:[#allocation10 + $0x188] sm:$0xf]
        %v10214 = vld [vmem:[#allocation10 + $0x18c] sm:$0xf]
        %v10215 = vld [vmem:[#allocation10 + $0x190] sm:$0xf]
        %v10216 = vld [vmem:[#allocation10 + $0x194] sm:$0xf]
        %v10217 = vld [vmem:[#allocation10 + $0x198] sm:$0xf]
        %v10218 = vld [vmem:[#allocation10 + $0x19c] sm:$0xf]
        %v10219 = vld [vmem:[#allocation10 + $0x1a0] sm:$0xf]
        %v10220 = vld [vmem:[#allocation10 + $0x1a4] sm:$0xf]
        %v10221 = vld [vmem:[#allocation10 + $0x1a8] sm:$0xf]
        %v10222 = vld [vmem:[#allocation10 + $0x1ac] sm:$0xf]
        %v10223 = vld [vmem:[#allocation10 + $0x1b0] sm:$0xf]
        %v10224 = vld [vmem:[#allocation10 + $0x1b4] sm:$0xf]
        %v10225 = vld [vmem:[#allocation10 + $0x1b8] sm:$0xf]
        %v10226 = vld [vmem:[#allocation10 + $0x1bc] sm:$0xf]
        %v10227 = vld [vmem:[#allocation10 + $0x1c0] sm:$0xf]
        %v10228 = vld [vmem:[#allocation10 + $0x1c4] sm:$0xf]
        %v10229 = vld [vmem:[#allocation10 + $0x1c8] sm:$0xf]
        %v10230 = vld [vmem:[#allocation10 + $0x1cc] sm:$0xf]
        %v10231 = vld [vmem:[#allocation10 + $0x1d0] sm:$0xf]
        %v10232 = vld [vmem:[#allocation10 + $0x1d4] sm:$0xf]
        %v10233 = vld [vmem:[#allocation10 + $0x1d8] sm:$0xf]
        %v10234 = vld [vmem:[#allocation10 + $0x1dc] sm:$0xf]
        %v10235 = vld [vmem:[#allocation10 + $0x1e0] sm:$0xf]
        %v10236 = vld [vmem:[#allocation10 + $0x1e4] sm:$0xf]
        %v10237 = vld [vmem:[#allocation10 + $0x1e8] sm:$0xf]
        %v10238 = vld [vmem:[#allocation10 + $0x1ec] sm:$0xf]
        %v10239 = vld [vmem:[#allocation10 + $0x1f0] sm:$0xf]
        %v10240 = vld [vmem:[#allocation10 + $0x1f4] sm:$0xf]
        %v10241 = vld [vmem:[#allocation10 + $0x1f8] sm:$0xf]
        %v10242 = vld [vmem:[#allocation10 + $0x1fc] sm:$0xf]
        %v10243 = vld [vmem:[#allocation10 + $0x200] sm:$0xf]
        %v10244 = vld [vmem:[#allocation10 + $0x204] sm:$0xf]
        %v10245 = vld [vmem:[#allocation10 + $0x208] sm:$0xf]
        %v10246 = vld [vmem:[#allocation10 + $0x20c] sm:$0xf]
        %v10247 = vld [vmem:[#allocation10 + $0x210] sm:$0xf]
        %v10248 = vld [vmem:[#allocation10 + $0x214] sm:$0xf]
        %v10249 = vld [vmem:[#allocation10 + $0x218] sm:$0xf]
        %v10250 = vld [vmem:[#allocation10 + $0x21c] sm:$0xf]
        %v10251 = vld [vmem:[#allocation10 + $0x220] sm:$0xf]
        %v10252 = vld [vmem:[#allocation10 + $0x224] sm:$0xf]
        %v10253 = vld [vmem:[#allocation10 + $0x228] sm:$0xf]
        %v10254 = vld [vmem:[#allocation10 + $0x22c] sm:$0xf]
        %v10255 = vld [vmem:[#allocation10 + $0x230] sm:$0xf]
        %v10256 = vld [vmem:[#allocation10 + $0x234] sm:$0xf]
        %v10257 = vld [vmem:[#allocation10 + $0x238] sm:$0xf]
        %v10258 = vld [vmem:[#allocation10 + $0x23c] sm:$0xf]
        %v10259 = vld [vmem:[#allocation10 + $0x240] sm:$0xf]
        %v10260 = vld [vmem:[#allocation10 + $0x244] sm:$0xf]
        %v10261 = vld [vmem:[#allocation10 + $0x248] sm:$0xf]
        %v10262 = vld [vmem:[#allocation10 + $0x24c] sm:$0xf]
        %v10263 = vld [vmem:[#allocation10 + $0x250] sm:$0xf]
        %v10264 = vld [vmem:[#allocation10 + $0x254] sm:$0xf]
        %v10265 = vld [vmem:[#allocation10 + $0x258] sm:$0xf]
        %v10266 = vld [vmem:[#allocation10 + $0x25c] sm:$0xf]
        %v10267 = vld [vmem:[#allocation10 + $0x260] sm:$0xf]
        %v10268 = vld [vmem:[#allocation10 + $0x264] sm:$0xf]
        %v10269 = vld [vmem:[#allocation10 + $0x268] sm:$0xf]
        %v10270 = vld [vmem:[#allocation10 + $0x26c] sm:$0xf]
        %v10271 = vld [vmem:[#allocation10 + $0x270] sm:$0xf]
        %v10272 = vld [vmem:[#allocation10 + $0x274] sm:$0xf]
        %v10273 = vld [vmem:[#allocation10 + $0x278] sm:$0xf]
        %v10274 = vld [vmem:[#allocation10 + $0x27c] sm:$0xf]
        %v10275 = vld [vmem:[#allocation10 + $0x280] sm:$0xf]
        %v10276 = vld [vmem:[#allocation10 + $0x284] sm:$0xf]
        %v10277 = vld [vmem:[#allocation10 + $0x288] sm:$0xf]
        %v10278 = vld [vmem:[#allocation10 + $0x28c] sm:$0xf]
        %v10279 = vld [vmem:[#allocation10 + $0x290] sm:$0xf]
        %v10280 = vld [vmem:[#allocation10 + $0x294] sm:$0xf]
        %v10281 = vld [vmem:[#allocation10 + $0x298] sm:$0xf]
        %v10282 = vld [vmem:[#allocation10 + $0x29c] sm:$0xf]
        %v10283 = vld [vmem:[#allocation10 + $0x2a0] sm:$0xf]
        %v10284 = vld [vmem:[#allocation10 + $0x2a4] sm:$0xf]
        %v10285 = vld [vmem:[#allocation10 + $0x2a8] sm:$0xf]
        %v10286 = vld [vmem:[#allocation10 + $0x2ac] sm:$0xf]
        %v10287 = vld [vmem:[#allocation10 + $0x2b0] sm:$0xf]
        %v10288 = vld [vmem:[#allocation10 + $0x2b4] sm:$0xf]
        %v10289 = vld [vmem:[#allocation10 + $0x2b8] sm:$0xf]
        %v10290 = vld [vmem:[#allocation10 + $0x2bc] sm:$0xf]
        %v10291 = vld [vmem:[#allocation10 + $0x2c0] sm:$0xf]
        %v10292 = vld [vmem:[#allocation10 + $0x2c4] sm:$0xf]
        %v10293 = vld [vmem:[#allocation10 + $0x2c8] sm:$0xf]
        %v10294 = vld [vmem:[#allocation10 + $0x2cc] sm:$0xf]
        %v10295 = vld [vmem:[#allocation10 + $0x2d0] sm:$0xf]
        %v10296 = vld [vmem:[#allocation10 + $0x2d4] sm:$0xf]
        %v10297 = vld [vmem:[#allocation10 + $0x2d8] sm:$0xf]
        %v10298 = vld [vmem:[#allocation10 + $0x2dc] sm:$0xf]
        %v10299 = vld [vmem:[#allocation10 + $0x2e0] sm:$0xf]
        %v10300 = vld [vmem:[#allocation10 + $0x2e4] sm:$0xf]
        %v10301 = vld [vmem:[#allocation10 + $0x2e8] sm:$0xf]
        %v10302 = vld [vmem:[#allocation10 + $0x2ec] sm:$0xf]
        %v10303 = vld [vmem:[#allocation10 + $0x2f0] sm:$0xf]
        %v10304 = vld [vmem:[#allocation10 + $0x2f4] sm:$0xf]
        %v10305 = vld [vmem:[#allocation10 + $0x2f8] sm:$0xf]
        %v10306 = vld [vmem:[#allocation10 + $0x2fc] sm:$0xf]
        %v10307 = vld [vmem:[#allocation10 + $0x300] sm:$0xf]
        %v10308 = vld [vmem:[#allocation10 + $0x304] sm:$0xf]
        %v10309 = vld [vmem:[#allocation10 + $0x308] sm:$0xf]
        %v10310 = vld [vmem:[#allocation10 + $0x30c] sm:$0xf]
        %v10311 = vld [vmem:[#allocation10 + $0x310] sm:$0xf]
        %v10312 = vld [vmem:[#allocation10 + $0x314] sm:$0xf]
        %v10313 = vld [vmem:[#allocation10 + $0x318] sm:$0xf]
        %v10314 = vld [vmem:[#allocation10 + $0x31c] sm:$0xf]
        %v10315 = vld [vmem:[#allocation10 + $0x320] sm:$0xf]
        %v10316 = vld [vmem:[#allocation10 + $0x324] sm:$0xf]
        %v10317 = vld [vmem:[#allocation10 + $0x328] sm:$0xf]
        %v10318 = vld [vmem:[#allocation10 + $0x32c] sm:$0xf]
        %v10319 = vld [vmem:[#allocation10 + $0x330] sm:$0xf]
        %v10320 = vld [vmem:[#allocation10 + $0x334] sm:$0xf]
        %v10321 = vld [vmem:[#allocation10 + $0x338] sm:$0xf]
        %v10322 = vld [vmem:[#allocation10 + $0x33c] sm:$0xf]
        %v10323 = vld [vmem:[#allocation11] sm:$0x1]
        %v10325 = vlaneseq
        %v10326 = vshrl.u32 %v10325, 7
        %v10327 = vsub.s32 0, %v10326
        %v10328 = vrot.slane %v10323, %v10327
        %v10538 = vunpack.c.l.b16 %v10115
        %v10539 = vunpack.c.l.b16 %v10116
        %v10540 = vunpack.c.l.b16 %v10117
        %v10541 = vunpack.c.l.b16 %v10118
        %v10542 = vunpack.c.l.b16 %v10119
        %v10543 = vunpack.c.l.b16 %v10120
        %v10544 = vunpack.c.l.b16 %v10121
        %v10545 = vunpack.c.l.b16 %v10122
        %v10546 = vunpack.c.l.b16 %v10123
        %v10547 = vunpack.c.l.b16 %v10124
        %v10548 = vunpack.c.l.b16 %v10125
        %v10549 = vunpack.c.l.b16 %v10126
        %v10550 = vunpack.c.l.b16 %v10127
        %v10551 = vunpack.c.l.b16 %v10128
        %v10552 = vunpack.c.l.b16 %v10129
        %v10553 = vunpack.c.l.b16 %v10130
        %v10554 = vunpack.c.l.b16 %v10131
        %v10555 = vunpack.c.l.b16 %v10132
        %v10556 = vunpack.c.l.b16 %v10133
        %v10557 = vunpack.c.l.b16 %v10134
        %v10558 = vunpack.c.l.b16 %v10135
        %v10559 = vunpack.c.l.b16 %v10136
        %v10560 = vunpack.c.l.b16 %v10137
        %v10561 = vunpack.c.l.b16 %v10138
        %v10562 = vunpack.c.l.b16 %v10139
        %v10563 = vunpack.c.l.b16 %v10140
        %v10564 = vunpack.c.l.b16 %v10141
        %v10565 = vunpack.c.l.b16 %v10142
        %v10566 = vunpack.c.l.b16 %v10143
        %v10567 = vunpack.c.l.b16 %v10144
        %v10568 = vunpack.c.l.b16 %v10145
        %v10569 = vunpack.c.l.b16 %v10146
        %v10570 = vunpack.c.l.b16 %v10147
        %v10571 = vunpack.c.l.b16 %v10148
        %v10572 = vunpack.c.l.b16 %v10149
        %v10573 = vunpack.c.l.b16 %v10150
        %v10574 = vunpack.c.l.b16 %v10151
        %v10575 = vunpack.c.l.b16 %v10152
        %v10576 = vunpack.c.l.b16 %v10153
        %v10577 = vunpack.c.l.b16 %v10154
        %v10578 = vunpack.c.l.b16 %v10155
        %v10579 = vunpack.c.l.b16 %v10156
        %v10580 = vunpack.c.l.b16 %v10157
        %v10581 = vunpack.c.l.b16 %v10158
        %v10582 = vunpack.c.l.b16 %v10159
        %v10583 = vunpack.c.l.b16 %v10160
        %v10584 = vunpack.c.l.b16 %v10161
        %v10585 = vunpack.c.l.b16 %v10162
        %v10586 = vunpack.c.l.b16 %v10163
        %v10587 = vunpack.c.l.b16 %v10164
        %v10588 = vunpack.c.l.b16 %v10165
        %v10589 = vunpack.c.l.b16 %v10166
        %v10590 = vunpack.c.l.b16 %v10167
        %v10591 = vunpack.c.l.b16 %v10168
        %v10592 = vunpack.c.l.b16 %v10169
        %v10593 = vunpack.c.l.b16 %v10170
        %v10594 = vunpack.c.l.b16 %v10171
        %v10595 = vunpack.c.l.b16 %v10172
        %v10596 = vunpack.c.l.b16 %v10173
        %v10597 = vunpack.c.l.b16 %v10174
        %v10598 = vunpack.c.l.b16 %v10175
        %v10599 = vunpack.c.l.b16 %v10176
        %v10600 = vunpack.c.l.b16 %v10177
        %v10601 = vunpack.c.l.b16 %v10178
        %v10602 = vunpack.c.l.b16 %v10179
        %v10603 = vunpack.c.l.b16 %v10180
        %v10604 = vunpack.c.l.b16 %v10181
        %v10605 = vunpack.c.l.b16 %v10182
        %v10606 = vunpack.c.l.b16 %v10183
        %v10607 = vunpack.c.l.b16 %v10184
        %v10608 = vunpack.c.l.b16 %v10185
        %v10609 = vunpack.c.l.b16 %v10186
        %v10610 = vunpack.c.l.b16 %v10187
        %v10611 = vunpack.c.l.b16 %v10188
        %v10612 = vunpack.c.l.b16 %v10189
        %v10613 = vunpack.c.l.b16 %v10190
        %v10614 = vunpack.c.l.b16 %v10191
        %v10615 = vunpack.c.l.b16 %v10192
        %v10616 = vunpack.c.l.b16 %v10193
        %v10617 = vunpack.c.l.b16 %v10194
        %v10618 = vunpack.c.l.b16 %v10195
        %v10619 = vunpack.c.l.b16 %v10196
        %v10620 = vunpack.c.l.b16 %v10197
        %v10621 = vunpack.c.l.b16 %v10198
        %v10622 = vunpack.c.l.b16 %v10199
        %v10623 = vunpack.c.l.b16 %v10200
        %v10624 = vunpack.c.l.b16 %v10201
        %v10625 = vunpack.c.l.b16 %v10202
        %v10626 = vunpack.c.l.b16 %v10203
        %v10627 = vunpack.c.l.b16 %v10204
        %v10628 = vunpack.c.l.b16 %v10205
        %v10629 = vunpack.c.l.b16 %v10206
        %v10630 = vunpack.c.l.b16 %v10207
        %v10631 = vunpack.c.l.b16 %v10208
        %v10632 = vunpack.c.l.b16 %v10209
        %v10633 = vunpack.c.l.b16 %v10210
        %v10634 = vunpack.c.l.b16 %v10211
        %v10635 = vunpack.c.l.b16 %v10212
        %v10636 = vunpack.c.l.b16 %v10213
        %v10637 = vunpack.c.l.b16 %v10214
        %v10638 = vunpack.c.l.b16 %v10215
        %v10639 = vunpack.c.l.b16 %v10216
        %v10640 = vunpack.c.l.b16 %v10217
        %v10641 = vunpack.c.l.b16 %v10218
        %v10642 = vunpack.c.l.b16 %v10219
        %v10643 = vunpack.c.l.b16 %v10220
        %v10644 = vunpack.c.l.b16 %v10221
        %v10645 = vunpack.c.l.b16 %v10222
        %v10646 = vunpack.c.l.b16 %v10223
        %v10647 = vunpack.c.l.b16 %v10224
        %v10648 = vunpack.c.l.b16 %v10225
        %v10649 = vunpack.c.l.b16 %v10226
        %v10650 = vunpack.c.l.b16 %v10227
        %v10651 = vunpack.c.l.b16 %v10228
        %v10652 = vunpack.c.l.b16 %v10229
        %v10653 = vunpack.c.l.b16 %v10230
        %v10654 = vunpack.c.l.b16 %v10231
        %v10655 = vunpack.c.l.b16 %v10232
        %v10656 = vunpack.c.l.b16 %v10233
        %v10657 = vunpack.c.l.b16 %v10234
        %v10658 = vunpack.c.l.b16 %v10235
        %v10659 = vunpack.c.l.b16 %v10236
        %v10660 = vunpack.c.l.b16 %v10237
        %v10661 = vunpack.c.l.b16 %v10238
        %v10662 = vunpack.c.l.b16 %v10239
        %v10663 = vunpack.c.l.b16 %v10240
        %v10664 = vunpack.c.l.b16 %v10241
        %v10665 = vunpack.c.l.b16 %v10242
        %v10666 = vunpack.c.l.b16 %v10243
        %v10667 = vunpack.c.l.b16 %v10244
        %v10668 = vunpack.c.l.b16 %v10245
        %v10669 = vunpack.c.l.b16 %v10246
        %v10670 = vunpack.c.l.b16 %v10247
        %v10671 = vunpack.c.l.b16 %v10248
        %v10672 = vunpack.c.l.b16 %v10249
        %v10673 = vunpack.c.l.b16 %v10250
        %v10674 = vunpack.c.l.b16 %v10251
        %v10675 = vunpack.c.l.b16 %v10252
        %v10676 = vunpack.c.l.b16 %v10253
        %v10677 = vunpack.c.l.b16 %v10254
        %v10678 = vunpack.c.l.b16 %v10255
        %v10679 = vunpack.c.l.b16 %v10256
        %v10680 = vunpack.c.l.b16 %v10257
        %v10681 = vunpack.c.l.b16 %v10258
        %v10682 = vunpack.c.l.b16 %v10259
        %v10683 = vunpack.c.l.b16 %v10260
        %v10684 = vunpack.c.l.b16 %v10261
        %v10685 = vunpack.c.l.b16 %v10262
        %v10686 = vunpack.c.l.b16 %v10263
        %v10687 = vunpack.c.l.b16 %v10264
        %v10688 = vunpack.c.l.b16 %v10265
        %v10689 = vunpack.c.l.b16 %v10266
        %v10690 = vunpack.c.l.b16 %v10267
        %v10691 = vunpack.c.l.b16 %v10268
        %v10692 = vunpack.c.l.b16 %v10269
        %v10693 = vunpack.c.l.b16 %v10270
        %v10694 = vunpack.c.l.b16 %v10271
        %v10695 = vunpack.c.l.b16 %v10272
        %v10696 = vunpack.c.l.b16 %v10273
        %v10697 = vunpack.c.l.b16 %v10274
        %v10698 = vunpack.c.l.b16 %v10275
        %v10699 = vunpack.c.l.b16 %v10276
        %v10700 = vunpack.c.l.b16 %v10277
        %v10701 = vunpack.c.l.b16 %v10278
        %v10702 = vunpack.c.l.b16 %v10279
        %v10703 = vunpack.c.l.b16 %v10280
        %v10704 = vunpack.c.l.b16 %v10281
        %v10705 = vunpack.c.l.b16 %v10282
        %v10706 = vunpack.c.l.b16 %v10283
        %v10707 = vunpack.c.l.b16 %v10284
        %v10708 = vunpack.c.l.b16 %v10285
        %v10709 = vunpack.c.l.b16 %v10286
        %v10710 = vunpack.c.l.b16 %v10287
        %v10711 = vunpack.c.l.b16 %v10288
        %v10712 = vunpack.c.l.b16 %v10289
        %v10713 = vunpack.c.l.b16 %v10290
        %v10714 = vunpack.c.l.b16 %v10291
        %v10715 = vunpack.c.l.b16 %v10292
        %v10716 = vunpack.c.l.b16 %v10293
        %v10717 = vunpack.c.l.b16 %v10294
        %v10718 = vunpack.c.l.b16 %v10295
        %v10719 = vunpack.c.l.b16 %v10296
        %v10720 = vunpack.c.l.b16 %v10297
        %v10721 = vunpack.c.l.b16 %v10298
        %v10722 = vunpack.c.l.b16 %v10299
        %v10723 = vunpack.c.l.b16 %v10300
        %v10724 = vunpack.c.l.b16 %v10301
        %v10725 = vunpack.c.l.b16 %v10302
        %v10726 = vunpack.c.l.b16 %v10303
        %v10727 = vunpack.c.l.b16 %v10304
        %v10728 = vunpack.c.l.b16 %v10305
        %v10729 = vunpack.c.l.b16 %v10306
        %v10730 = vunpack.c.l.b16 %v10307
        %v10731 = vunpack.c.l.b16 %v10308
        %v10732 = vunpack.c.l.b16 %v10309
        %v10733 = vunpack.c.l.b16 %v10310
        %v10734 = vunpack.c.l.b16 %v10311
        %v10735 = vunpack.c.l.b16 %v10312
        %v10736 = vunpack.c.l.b16 %v10313
        %v10737 = vunpack.c.l.b16 %v10314
        %v10738 = vunpack.c.l.b16 %v10315
        %v10739 = vunpack.c.l.b16 %v10316
        %v10740 = vunpack.c.l.b16 %v10317
        %v10741 = vunpack.c.l.b16 %v10318
        %v10742 = vunpack.c.l.b16 %v10319
        %v10743 = vunpack.c.l.b16 %v10320
        %v10744 = vunpack.c.l.b16 %v10321
        %v10745 = vunpack.c.l.b16 %v10322
        %v10746 = vpack.c.b16 %v10539, %v10538
        %v10747 = vpack.c.b16 %v10541, %v10540
        %v10748 = vpack.c.b16 %v10543, %v10542
        %v10749 = vpack.c.b16 %v10545, %v10544
        %v10750 = vpack.c.b16 %v10547, %v10546
        %v10751 = vpack.c.b16 %v10549, %v10548
        %v10752 = vpack.c.b16 %v10551, %v10550
        %v10753 = vpack.c.b16 %v10553, %v10552
        %v10754 = vpack.c.b16 %v10555, %v10554
        %v10755 = vpack.c.b16 %v10557, %v10556
        %v10756 = vpack.c.b16 %v10559, %v10558
        %v10757 = vpack.c.b16 %v10561, %v10560
        %v10758 = vpack.c.b16 %v10563, %v10562
        %v10759 = vpack.c.b16 %v10565, %v10564
        %v10760 = vpack.c.b16 %v10567, %v10566
        %v10761 = vpack.c.b16 %v10569, %v10568
        %v10762 = vpack.c.b16 %v10571, %v10570
        %v10763 = vpack.c.b16 %v10573, %v10572
        %v10764 = vpack.c.b16 %v10575, %v10574
        %v10765 = vpack.c.b16 %v10577, %v10576
        %v10766 = vpack.c.b16 %v10579, %v10578
        %v10767 = vpack.c.b16 %v10581, %v10580
        %v10768 = vpack.c.b16 %v10583, %v10582
        %v10769 = vpack.c.b16 %v10585, %v10584
        %v10770 = vpack.c.b16 %v10587, %v10586
        %v10771 = vpack.c.b16 %v10589, %v10588
        %v10772 = vpack.c.b16 %v10591, %v10590
        %v10773 = vpack.c.b16 %v10593, %v10592
        %v10774 = vpack.c.b16 %v10595, %v10594
        %v10775 = vpack.c.b16 %v10597, %v10596
        %v10776 = vpack.c.b16 %v10599, %v10598
        %v10777 = vpack.c.b16 %v10601, %v10600
        %v10778 = vpack.c.b16 %v10603, %v10602
        %v10779 = vpack.c.b16 %v10605, %v10604
        %v10780 = vpack.c.b16 %v10607, %v10606
        %v10781 = vpack.c.b16 %v10609, %v10608
        %v10782 = vpack.c.b16 %v10611, %v10610
        %v10783 = vpack.c.b16 %v10613, %v10612
        %v10784 = vpack.c.b16 %v10615, %v10614
        %v10785 = vpack.c.b16 %v10617, %v10616
        %v10786 = vpack.c.b16 %v10619, %v10618
        %v10787 = vpack.c.b16 %v10621, %v10620
        %v10788 = vpack.c.b16 %v10623, %v10622
        %v10789 = vpack.c.b16 %v10625, %v10624
        %v10790 = vpack.c.b16 %v10627, %v10626
        %v10791 = vpack.c.b16 %v10629, %v10628
        %v10792 = vpack.c.b16 %v10631, %v10630
        %v10793 = vpack.c.b16 %v10633, %v10632
        %v10794 = vpack.c.b16 %v10635, %v10634
        %v10795 = vpack.c.b16 %v10637, %v10636
        %v10796 = vpack.c.b16 %v10639, %v10638
        %v10797 = vpack.c.b16 %v10641, %v10640
        %v10798 = vpack.c.b16 %v10643, %v10642
        %v10799 = vpack.c.b16 %v10645, %v10644
        %v10800 = vpack.c.b16 %v10647, %v10646
        %v10801 = vpack.c.b16 %v10649, %v10648
        %v10802 = vpack.c.b16 %v10651, %v10650
        %v10803 = vpack.c.b16 %v10653, %v10652
        %v10804 = vpack.c.b16 %v10655, %v10654
        %v10805 = vpack.c.b16 %v10657, %v10656
        %v10806 = vpack.c.b16 %v10659, %v10658
        %v10807 = vpack.c.b16 %v10661, %v10660
        %v10808 = vpack.c.b16 %v10663, %v10662
        %v10809 = vpack.c.b16 %v10665, %v10664
        %v10810 = vpack.c.b16 %v10667, %v10666
        %v10811 = vpack.c.b16 %v10669, %v10668
        %v10812 = vpack.c.b16 %v10671, %v10670
        %v10813 = vpack.c.b16 %v10673, %v10672
        %v10814 = vpack.c.b16 %v10675, %v10674
        %v10815 = vpack.c.b16 %v10677, %v10676
        %v10816 = vpack.c.b16 %v10679, %v10678
        %v10817 = vpack.c.b16 %v10681, %v10680
        %v10818 = vpack.c.b16 %v10683, %v10682
        %v10819 = vpack.c.b16 %v10685, %v10684
        %v10820 = vpack.c.b16 %v10687, %v10686
        %v10821 = vpack.c.b16 %v10689, %v10688
        %v10822 = vpack.c.b16 %v10691, %v10690
        %v10823 = vpack.c.b16 %v10693, %v10692
        %v10824 = vpack.c.b16 %v10695, %v10694
        %v10825 = vpack.c.b16 %v10697, %v10696
        %v10826 = vpack.c.b16 %v10699, %v10698
        %v10827 = vpack.c.b16 %v10701, %v10700
        %v10828 = vpack.c.b16 %v10703, %v10702
        %v10829 = vpack.c.b16 %v10705, %v10704
        %v10830 = vpack.c.b16 %v10707, %v10706
        %v10831 = vpack.c.b16 %v10709, %v10708
        %v10832 = vpack.c.b16 %v10711, %v10710
        %v10833 = vpack.c.b16 %v10713, %v10712
        %v10834 = vpack.c.b16 %v10715, %v10714
        %v10835 = vpack.c.b16 %v10717, %v10716
        %v10836 = vpack.c.b16 %v10719, %v10718
        %v10837 = vpack.c.b16 %v10721, %v10720
        %v10838 = vpack.c.b16 %v10723, %v10722
        %v10839 = vpack.c.b16 %v10725, %v10724
        %v10840 = vpack.c.b16 %v10727, %v10726
        %v10841 = vpack.c.b16 %v10729, %v10728
        %v10842 = vpack.c.b16 %v10731, %v10730
        %v10843 = vpack.c.b16 %v10733, %v10732
        %v10844 = vpack.c.b16 %v10735, %v10734
        %v10845 = vpack.c.b16 %v10737, %v10736
        %v10846 = vpack.c.b16 %v10739, %v10738
        %v10847 = vpack.c.b16 %v10741, %v10740
        %v10848 = vpack.c.b16 %v10743, %v10742
        %v10849 = vpack.c.b16 %v10745, %v10744
        %10954 = vmatprep.subr.bf16.mxu0 0
        %10955 = vmatpush1.bf16.msra.mxu0 %v10753
        %10956 = vmatprep.subr.bf16.mxu0 0
        %10957 = vmatpush1.bf16.msra.mxu0 %v10752
        %10958 = vmatprep.subr.bf16.mxu0 0
        %10959 = vmatpush1.bf16.msra.mxu0 %v10751
        %10960 = vmatprep.subr.bf16.mxu0 0
        %10961 = vmatpush1.bf16.msra.mxu0 %v10750
        %10962 = vmatprep.subr.bf16.mxu0 0
        %10963 = vmatpush1.bf16.msra.mxu0 %v10749
        %10964 = vmatprep.subr.bf16.mxu0 0
        %10965 = vmatpush1.bf16.msra.mxu0 %v10748
        %10966 = vmatprep.subr.bf16.mxu0 0
        %10967 = vmatpush1.bf16.msra.mxu0 %v10747
        %10968 = vmatprep.subr.bf16.mxu0 0
        %10969 = vmatpush1.bf16.msra.mxu0 %v10746
        %10970 = vmatprep.subr.bf16.mxu0 0
        %10971 = vmatpush2.bf16.msra.mxu0 %v10761
        %10972 = vmatprep.subr.bf16.mxu0 0
        %10973 = vmatpush2.bf16.msra.mxu0 %v10760
        %10974 = vmatprep.subr.bf16.mxu0 0
        %10975 = vmatpush2.bf16.msra.mxu0 %v10759
        %10976 = vmatprep.subr.bf16.mxu0 0
        %10977 = vmatpush2.bf16.msra.mxu0 %v10758
        %10978 = vmatprep.subr.bf16.mxu0 0
        %10979 = vmatpush2.bf16.msra.mxu0 %v10757
        %10980 = vmatprep.subr.bf16.mxu0 0
        %10981 = vmatpush2.bf16.msra.mxu0 %v10756
        %10982 = vmatprep.subr.bf16.mxu0 0
        %10983 = vmatpush2.bf16.msra.mxu0 %v10755
        %10984 = vmatprep.subr.bf16.mxu0 0
        %10985 = vmatpush2.bf16.msra.mxu0 %v10754
        %10986 = vmatprep.mubr.bf16.mxu0 %v10103
        %10987 = vmatmul.mubr.bf16.gmra.mxu0 %v10102
        %v10988 = vpop.f32.mrf.mxu0
        %v10989 = vadd.f32 %v10328, %v10988
        %v10990 = vpop.f32.mrf.mxu0
        %v10991 = vpop.f32.mrf.mxu0
        %v10992 = vadd.f32 %v10328, %v10991
        %v10993 = vpop.f32.mrf.mxu0
        %10994 = vdwg.mxu0
        %10995 = vmatprep.subr.bf16.mxu0 0
        %10996 = vmatpush1.bf16.msra.mxu0 %v10769
        %10997 = vmatprep.subr.bf16.mxu0 0
        %10998 = vmatpush1.bf16.msra.mxu0 %v10768
        %10999 = vmatprep.subr.bf16.mxu0 0
        %11000 = vmatpush1.bf16.msra.mxu0 %v10767
        %11001 = vmatprep.subr.bf16.mxu0 0
        %11002 = vmatpush1.bf16.msra.mxu0 %v10766
        %11003 = vmatprep.subr.bf16.mxu0 0
        %11004 = vmatpush1.bf16.msra.mxu0 %v10765
        %11005 = vmatprep.subr.bf16.mxu0 0
        %11006 = vmatpush1.bf16.msra.mxu0 %v10764
        %11007 = vmatprep.subr.bf16.mxu0 0
        %11008 = vmatpush1.bf16.msra.mxu0 %v10763
        %11009 = vmatprep.subr.bf16.mxu0 0
        %11010 = vmatpush1.bf16.msra.mxu0 %v10762
        %11011 = vmatprep.subr.bf16.mxu0 0
        %11012 = vmatpush2.bf16.msra.mxu0 %v10777
        %11013 = vmatprep.subr.bf16.mxu0 0
        %11014 = vmatpush2.bf16.msra.mxu0 %v10776
        %11015 = vmatprep.subr.bf16.mxu0 0
        %11016 = vmatpush2.bf16.msra.mxu0 %v10775
        %11017 = vmatprep.subr.bf16.mxu0 0
        %11018 = vmatpush2.bf16.msra.mxu0 %v10774
        %11019 = vmatprep.subr.bf16.mxu0 0
        %11020 = vmatpush2.bf16.msra.mxu0 %v10773
        %11021 = vmatprep.subr.bf16.mxu0 0
        %11022 = vmatpush2.bf16.msra.mxu0 %v10772
        %11023 = vmatprep.subr.bf16.mxu0 0
        %11024 = vmatpush2.bf16.msra.mxu0 %v10771
        %11025 = vmatprep.subr.bf16.mxu0 0
        %11026 = vmatpush2.bf16.msra.mxu0 %v10770
        %11027 = vmatprep.mubr.bf16.mxu0 %v10105
        %11028 = vmatmul.mubr.bf16.gmra.mxu0 %v10104
        %v11029 = vpop.f32.mrf.mxu0
        %v11030 = vadd.f32 %v10989, %v11029
        %v11031 = vpop.f32.mrf.mxu0
        %v11032 = vpop.f32.mrf.mxu0
        %v11033 = vadd.f32 %v10992, %v11032
        %v11034 = vpop.f32.mrf.mxu0
        %11035 = vdwg.mxu0
        %11036 = vmatprep.subr.bf16.mxu0 0
        %11037 = vmatpush1.bf16.msra.mxu0 %v10785
        %11038 = vmatprep.subr.bf16.mxu0 0
        %11039 = vmatpush1.bf16.msra.mxu0 %v10784
        %11040 = vmatprep.subr.bf16.mxu0 0
        %11041 = vmatpush1.bf16.msra.mxu0 %v10783
        %11042 = vmatprep.subr.bf16.mxu0 0
        %11043 = vmatpush1.bf16.msra.mxu0 %v10782
        %11044 = vmatprep.subr.bf16.mxu0 0
        %11045 = vmatpush1.bf16.msra.mxu0 %v10781
        %11046 = vmatprep.subr.bf16.mxu0 0
        %11047 = vmatpush1.bf16.msra.mxu0 %v10780
        %11048 = vmatprep.subr.bf16.mxu0 0
        %11049 = vmatpush1.bf16.msra.mxu0 %v10779
        %11050 = vmatprep.subr.bf16.mxu0 0
        %11051 = vmatpush1.bf16.msra.mxu0 %v10778
        %11052 = vmatprep.subr.bf16.mxu0 0
        %11053 = vmatpush2.bf16.msra.mxu0 %v10793
        %11054 = vmatprep.subr.bf16.mxu0 0
        %11055 = vmatpush2.bf16.msra.mxu0 %v10792
        %11056 = vmatprep.subr.bf16.mxu0 0
        %11057 = vmatpush2.bf16.msra.mxu0 %v10791
        %11058 = vmatprep.subr.bf16.mxu0 0
        %11059 = vmatpush2.bf16.msra.mxu0 %v10790
        %11060 = vmatprep.subr.bf16.mxu0 0
        %11061 = vmatpush2.bf16.msra.mxu0 %v10789
        %11062 = vmatprep.subr.bf16.mxu0 0
        %11063 = vmatpush2.bf16.msra.mxu0 %v10788
        %11064 = vmatprep.subr.bf16.mxu0 0
        %11065 = vmatpush2.bf16.msra.mxu0 %v10787
        %11066 = vmatprep.subr.bf16.mxu0 0
        %11067 = vmatpush2.bf16.msra.mxu0 %v10786
        %11068 = vmatprep.mubr.bf16.mxu0 %v10107
        %11069 = vmatmul.mubr.bf16.gmra.mxu0 %v10106
        %v11070 = vpop.f32.mrf.mxu0
        %v11071 = vadd.f32 %v11030, %v11070
        %v11072 = vpop.f32.mrf.mxu0
        %v11073 = vpop.f32.mrf.mxu0
        %v11074 = vadd.f32 %v11033, %v11073
        %v11075 = vpop.f32.mrf.mxu0
        %11076 = vdwg.mxu0
        %11077 = vmatprep.subr.bf16.mxu0 0
        %11078 = vmatpush1.bf16.msra.mxu0 %v10801
        %11079 = vmatprep.subr.bf16.mxu0 0
        %11080 = vmatpush1.bf16.msra.mxu0 %v10800
        %11081 = vmatprep.subr.bf16.mxu0 0
        %11082 = vmatpush1.bf16.msra.mxu0 %v10799
        %11083 = vmatprep.subr.bf16.mxu0 0
        %11084 = vmatpush1.bf16.msra.mxu0 %v10798
        %11085 = vmatprep.subr.bf16.mxu0 0
        %11086 = vmatpush1.bf16.msra.mxu0 %v10797
        %11087 = vmatprep.subr.bf16.mxu0 0
        %11088 = vmatpush1.bf16.msra.mxu0 %v10796
        %11089 = vmatprep.subr.bf16.mxu0 0
        %11090 = vmatpush1.bf16.msra.mxu0 %v10795
        %11091 = vmatprep.subr.bf16.mxu0 0
        %11092 = vmatpush1.bf16.msra.mxu0 %v10794
        %11093 = vmatprep.subr.bf16.mxu0 0
        %11094 = vmatpush2.bf16.msra.mxu0 %v10809
        %11095 = vmatprep.subr.bf16.mxu0 0
        %11096 = vmatpush2.bf16.msra.mxu0 %v10808
        %11097 = vmatprep.subr.bf16.mxu0 0
        %11098 = vmatpush2.bf16.msra.mxu0 %v10807
        %11099 = vmatprep.subr.bf16.mxu0 0
        %11100 = vmatpush2.bf16.msra.mxu0 %v10806
        %11101 = vmatprep.subr.bf16.mxu0 0
        %11102 = vmatpush2.bf16.msra.mxu0 %v10805
        %11103 = vmatprep.subr.bf16.mxu0 0
        %11104 = vmatpush2.bf16.msra.mxu0 %v10804
        %11105 = vmatprep.subr.bf16.mxu0 0
        %11106 = vmatpush2.bf16.msra.mxu0 %v10803
        %11107 = vmatprep.subr.bf16.mxu0 0
        %11108 = vmatpush2.bf16.msra.mxu0 %v10802
        %11109 = vmatprep.mubr.bf16.mxu0 %v10109
        %11110 = vmatmul.mubr.bf16.gmra.mxu0 %v10108
        %v11111 = vpop.f32.mrf.mxu0
        %v11112 = vadd.f32 %v11071, %v11111
        %v11113 = vpop.f32.mrf.mxu0
        %v11114 = vpop.f32.mrf.mxu0
        %v11115 = vadd.f32 %v11074, %v11114
        %v11116 = vpop.f32.mrf.mxu0
        %11117 = vdwg.mxu0
        %11118 = vmatprep.subr.bf16.mxu0 0
        %11119 = vmatpush1.bf16.msra.mxu0 %v10817
        %11120 = vmatprep.subr.bf16.mxu0 0
        %11121 = vmatpush1.bf16.msra.mxu0 %v10816
        %11122 = vmatprep.subr.bf16.mxu0 0
        %11123 = vmatpush1.bf16.msra.mxu0 %v10815
        %11124 = vmatprep.subr.bf16.mxu0 0
        %11125 = vmatpush1.bf16.msra.mxu0 %v10814
        %11126 = vmatprep.subr.bf16.mxu0 0
        %11127 = vmatpush1.bf16.msra.mxu0 %v10813
        %11128 = vmatprep.subr.bf16.mxu0 0
        %11129 = vmatpush1.bf16.msra.mxu0 %v10812
        %11130 = vmatprep.subr.bf16.mxu0 0
        %11131 = vmatpush1.bf16.msra.mxu0 %v10811
        %11132 = vmatprep.subr.bf16.mxu0 0
        %11133 = vmatpush1.bf16.msra.mxu0 %v10810
        %11134 = vmatprep.subr.bf16.mxu0 0
        %11135 = vmatpush2.bf16.msra.mxu0 %v10825
        %11136 = vmatprep.subr.bf16.mxu0 0
        %11137 = vmatpush2.bf16.msra.mxu0 %v10824
        %11138 = vmatprep.subr.bf16.mxu0 0
        %11139 = vmatpush2.bf16.msra.mxu0 %v10823
        %11140 = vmatprep.subr.bf16.mxu0 0
        %11141 = vmatpush2.bf16.msra.mxu0 %v10822
        %11142 = vmatprep.subr.bf16.mxu0 0
        %11143 = vmatpush2.bf16.msra.mxu0 %v10821
        %11144 = vmatprep.subr.bf16.mxu0 0
        %11145 = vmatpush2.bf16.msra.mxu0 %v10820
        %11146 = vmatprep.subr.bf16.mxu0 0
        %11147 = vmatpush2.bf16.msra.mxu0 %v10819
        %11148 = vmatprep.subr.bf16.mxu0 0
        %11149 = vmatpush2.bf16.msra.mxu0 %v10818
        %11150 = vmatprep.mubr.bf16.mxu0 %v10111
        %11151 = vmatmul.mubr.bf16.gmra.mxu0 %v10110
        %v11152 = vpop.f32.mrf.mxu0
        %v11153 = vadd.f32 %v11112, %v11152
        %v11154 = vpop.f32.mrf.mxu0
        %v11155 = vpop.f32.mrf.mxu0
        %v11156 = vadd.f32 %v11115, %v11155
        %v11157 = vpop.f32.mrf.mxu0
        %11158 = vdwg.mxu0
        %11159 = vmatprep.subr.bf16.mxu0 0
        %11160 = vmatpush1.bf16.msra.mxu0 %v10833
        %11161 = vmatprep.subr.bf16.mxu0 0
        %11162 = vmatpush1.bf16.msra.mxu0 %v10832
        %11163 = vmatprep.subr.bf16.mxu0 0
        %11164 = vmatpush1.bf16.msra.mxu0 %v10831
        %11165 = vmatprep.subr.bf16.mxu0 0
        %11166 = vmatpush1.bf16.msra.mxu0 %v10830
        %11167 = vmatprep.subr.bf16.mxu0 0
        %11168 = vmatpush1.bf16.msra.mxu0 %v10829
        %11169 = vmatprep.subr.bf16.mxu0 0
        %11170 = vmatpush1.bf16.msra.mxu0 %v10828
        %11171 = vmatprep.subr.bf16.mxu0 0
        %11172 = vmatpush1.bf16.msra.mxu0 %v10827
        %11173 = vmatprep.subr.bf16.mxu0 0
        %11174 = vmatpush1.bf16.msra.mxu0 %v10826
        %11175 = vmatprep.subr.bf16.mxu0 0
        %11176 = vmatpush2.bf16.msra.mxu0 %v10841
        %11177 = vmatprep.subr.bf16.mxu0 0
        %11178 = vmatpush2.bf16.msra.mxu0 %v10840
        %11179 = vmatprep.subr.bf16.mxu0 0
        %11180 = vmatpush2.bf16.msra.mxu0 %v10839
        %11181 = vmatprep.subr.bf16.mxu0 0
        %11182 = vmatpush2.bf16.msra.mxu0 %v10838
        %11183 = vmatprep.subr.bf16.mxu0 0
        %11184 = vmatpush2.bf16.msra.mxu0 %v10837
        %11185 = vmatprep.subr.bf16.mxu0 0
        %11186 = vmatpush2.bf16.msra.mxu0 %v10836
        %11187 = vmatprep.subr.bf16.mxu0 0
        %11188 = vmatpush2.bf16.msra.mxu0 %v10835
        %11189 = vmatprep.subr.bf16.mxu0 0
        %11190 = vmatpush2.bf16.msra.mxu0 %v10834
        %11191 = vmatprep.mubr.bf16.mxu0 %v10113
        %11192 = vmatmul.mubr.bf16.gmra.mxu0 %v10112
        %v11193 = vpop.f32.mrf.mxu0
        %v11194 = vadd.f32 %v11153, %v11193
        %v11195 = vpop.f32.mrf.mxu0
        %v11196 = vpop.f32.mrf.mxu0
        %v11197 = vadd.f32 %v11156, %v11196
        %v11198 = vpop.f32.mrf.mxu0
        %11199 = vdwg.mxu0
        %11200 = vmatprep.subr.bf16.mxu0 0
        %11201 = vmatpush1.bf16.msra.mxu0 %v10849
        %11202 = vmatprep.subr.bf16.mxu0 0
        %11203 = vmatpush1.bf16.msra.mxu0 %v10848
        %11204 = vmatprep.subr.bf16.mxu0 0
        %11205 = vmatpush1.bf16.msra.mxu0 %v10847
        %11206 = vmatprep.subr.bf16.mxu0 0
        %11207 = vmatpush1.bf16.msra.mxu0 %v10846
        %11208 = vmatprep.subr.bf16.mxu0 0
        %11209 = vmatpush1.bf16.msra.mxu0 %v10845
        %11210 = vmatprep.subr.bf16.mxu0 0
        %11211 = vmatpush1.bf16.msra.mxu0 %v10844
        %11212 = vmatprep.subr.bf16.mxu0 0
        %11213 = vmatpush1.bf16.msra.mxu0 %v10843
        %11214 = vmatprep.subr.bf16.mxu0 0
        %11215 = vmatpush1.bf16.msra.mxu0 %v10842
        %11216 = vmatprep.subr.bf16.mxu0 0
        %11217 = vmatpush2.bf16.msra.mxu0 0
        %11218 = vmatprep.subr.bf16.mxu0 0
        %11219 = vmatpush2.bf16.msra.mxu0 0
        %11220 = vmatprep.subr.bf16.mxu0 0
        %11221 = vmatpush2.bf16.msra.mxu0 0
        %11222 = vmatprep.subr.bf16.mxu0 0
        %11223 = vmatpush2.bf16.msra.mxu0 0
        %11224 = vmatprep.subr.bf16.mxu0 0
        %11225 = vmatpush2.bf16.msra.mxu0 0
        %11226 = vmatprep.subr.bf16.mxu0 0
        %11227 = vmatpush2.bf16.msra.mxu0 0
        %11228 = vmatprep.subr.bf16.mxu0 0
        %11229 = vmatpush2.bf16.msra.mxu0 0
        %11230 = vmatprep.subr.bf16.mxu0 0
        %11231 = vmatpush2.bf16.msra.mxu0 0
        %11232 = vmatprep.mubr.bf16.mxu0 0
        %11233 = vmatmul.mubr.bf16.gmra.mxu0 %v10114
        %v11234 = vpop.f32.mrf.mxu0
        %v11235 = vadd.f32 %v11194, %v11234
        %v11236 = vpop.f32.mrf.mxu0
        %v11237 = vpop.f32.mrf.mxu0
        %v11238 = vadd.f32 %v11197, %v11237
        %v11239 = vpop.f32.mrf.mxu0
        %11240 = vdwg.mxu0
        %v11241 = vlaneseq
        %v11242 = vshrl.u32 %v11241, 7
        %v11243 = vadd.s32 %v11242, 8
        %s11244 = smul.u32 %s30, 16
        %v11245 = vstv %s11244
        %v11246 = vadd.s32 %v11242, %v11245
        %v11247 = vadd.s32 %v11243, %v11245
        %vm11248 = vcmp.lt.s32.totalorder %v11246, 16
        %vm11249 = vcmp.lt.s32.totalorder %v11247, 16
        %v11250 = vsel %vm11248, 1, 0
        %v11251 = vsel %vm11249, 1, 0
        %v11252 = vcvt.s32.f32 %v11250
        %v11253 = vcvt.s32.f32 %v11251
        %p11254 = scmp.eq.s32.totalorder %s29, 0
        %p11255 = scmp.eq.s32.totalorder %s30, 0
        %p11256 = pnand %p11254, %p11255
        %p11257 = pneg %p11256
        // Predicated region
        $region89: #{vae_encoder_forward.1} parent=55 // pred_check
          _
        $region90: #{vae_encoder_forward.1} parent=55 // pred_check_branch
          %11259 = sbr.rel (%p11256) target = $region92
        $region91: #{vae_encoder_forward.1} parent=55 // pred_region
          %11260 = vst [vmem:[#allocation2] sm:$0x1] 0.0
          %11261 = vst [vmem:[#allocation3] sm:$0x1] 0.0
        $region92: #{vae_encoder_forward.1} parent=55 // pred_fallthru
          _
        // Predicated region
        $region93: #{vae_encoder_forward.1} parent=55 // pred_check
          %p11262 = pneg %p11254
        $region94: #{vae_encoder_forward.1} parent=55 // pred_check_branch
          %11264 = sbr.rel (%p11262) target = $region96
        $region95: #{vae_encoder_forward.1} parent=55 // pred_region
          %v11265 = vmul.f32 %v11235, %v11252
          %v11266 = vmul.f32 %v11238, %v11253
          %v11267 = vld [vmem:[#allocation2] sm:$0x1]
          %v11268 = vadd.f32 %v11265, %v11266
          %v11269 = vrot.slane %v11268, 4
          %v11270 = vadd.f32 %v11268, %v11269
          %v11271 = vrot.slane %v11270, 2
          %v11272 = vadd.f32 %v11270, %v11271
          %v11273 = vrot.slane %v11272, 1
          %v11274 = vadd.f32 %v11272, %v11273
          %v11275 = vadd.f32 %v11267, %v11274
          %11276 = vst [vmem:[#allocation2] sm:$0x1] %v11275
          %v11277 = vld [vmem:[#allocation3] sm:$0x1]
          %v11278 = vmul.f32 %v11265, %v11235
          %v11279 = vmul.f32 %v11266, %v11238
          %v11280 = vadd.f32 %v11278, %v11279
          %v11281 = vrot.slane %v11280, 4
          %v11282 = vadd.f32 %v11280, %v11281
          %v11283 = vrot.slane %v11282, 2
          %v11284 = vadd.f32 %v11282, %v11283
          %v11285 = vrot.slane %v11284, 1
          %v11286 = vadd.f32 %v11284, %v11285
          %v11287 = vadd.f32 %v11277, %v11286
          %11288 = vst [vmem:[#allocation3] sm:$0x1] %v11287
          %11289 = vst [vmem:[%s458] sm:$0xff] 0.0
          %11290 = vst [vmem:[%s458 + $0x8] sm:$0xff] 0.0
          %11291 = vst [vmem:[%s458 + $0x10] sm:$0xff] 0.0
          %11292 = vst [vmem:[%s458 + $0x18] sm:$0xff] 0.0
        $region96: #{vae_encoder_forward.1} parent=55 // pred_fallthru
          _
        %p11293 = scmp.eq.s32.totalorder %s29, 1
        %p11294 = pnand %p11293, %p11255
        %p11295 = pneg %p11294
        // Predicated region
        $region97: #{vae_encoder_forward.1} parent=55 // pred_check
          _
        $region98: #{vae_encoder_forward.1} parent=55 // pred_check_branch
          %11297 = sbr.rel (%p11294) target = $region100
        $region99: #{vae_encoder_forward.1} parent=55 // pred_region
          %v11298 = vld [vmem:[#allocation2] sm:$0x1]
          %v11299 = vmul.f32 %v11298, 0.0625
          %v11300 = vld [vmem:[#allocation3] sm:$0x1]
          %v11301 = vmul.f32 %v11300, 0.0625
          %v11302 = vmul.f32 %v11299, %v11299
          %v11303 = vsub.f32 %v11301, %v11302
          %v11304 = vmax.f32 %v11303, 0.0
          %v11305 = vld [vmem:[#allocation13] sm:$0x1]
          %v11306 = vadd.f32 %v11304, 1e-05
          %v11307 = vrsqrt.pop %v11306
          %v11308 = vmul.f32 %v11305, %v11307
          %11309 = vst [vmem:[#allocation4] sm:$0x1] %v11308
          %v11310 = vld [vmem:[#allocation14] sm:$0x1]
          %v11311 = vmul.f32 %v11299, %v11308
          %v11312 = vsub.f32 %v11310, %v11311
          %11313 = vst [vmem:[#allocation5] sm:$0x1] %v11312
        $region100: #{vae_encoder_forward.1} parent=55 // pred_fallthru
          _
        // Predicated region
        $region101: #{vae_encoder_forward.1} parent=55 // pred_check
          %p11314 = pneg %p11293
        $region102: #{vae_encoder_forward.1} parent=55 // pred_check_branch
          %11316 = sbr.rel (%p11314) target = $region104
        $region103: #{vae_encoder_forward.1} parent=55 // pred_region
          %v11317 = vld [vmem:[#allocation4] sm:$0x1]
          %v11319 = vlaneseq
          %v11320 = vshrl.u32 %v11319, 7
          %v11321 = vsub.s32 0, %v11320
          %v11322 = vrot.slane %v11317, %v11321
          %v11324 = vmul.f32 %v11235, %v11322
          %v11325 = vmul.f32 %v11238, %v11322
          %v11326 = vld [vmem:[#allocation5] sm:$0x1]
          %v11328 = vlaneseq
          %v11329 = vshrl.u32 %v11328, 7
          %v11330 = vsub.s32 0, %v11329
          %v11331 = vrot.slane %v11326, %v11330
          %v11333 = vadd.f32 %v11324, %v11331
          %v11334 = vadd.f32 %v11325, %v11331
          %v11335 = vmax.f32 %v11333, 0.0
          %v11336 = vmax.f32 %v11334, 0.0
          %v11337 = vpack.c.bf16 %v11336, %v11335
          %v11338 = vld [vmem:[#allocation16] sm:$0xff]
          %v11339 = vld [vmem:[#allocation16 + $0x8] sm:$0xff]
          %v11340 = vld [vmem:[#allocation16 + $0x10] sm:$0xff]
          %v11341 = vld [vmem:[#allocation16 + $0x18] sm:$0xff]
          %v11342 = vld [vmem:[#allocation16 + $0x20] sm:$0xff]
          %v11343 = vld [vmem:[#allocation16 + $0x28] sm:$0xff]
          %v11344 = vld [vmem:[#allocation16 + $0x30] sm:$0xff]
          %v11345 = vld [vmem:[#allocation16 + $0x38] sm:$0xff]
          %v11346 = vld [vmem:[#allocation16 + $0x40] sm:$0xff]
          %v11347 = vld [vmem:[#allocation16 + $0x48] sm:$0xff]
          %v11348 = vld [vmem:[#allocation16 + $0x50] sm:$0xff]
          %v11349 = vld [vmem:[#allocation16 + $0x58] sm:$0xff]
          %v11350 = vld [vmem:[#allocation16 + $0x60] sm:$0xff]
          %v11351 = vld [vmem:[#allocation16 + $0x68] sm:$0xff]
          %v11352 = vld [vmem:[#allocation16 + $0x70] sm:$0xff]
          %v11353 = vld [vmem:[#allocation16 + $0x78] sm:$0xff]
          %v11354 = vld [vmem:[#allocation17] sm:$0x3]
          %v11356 = vlaneseq
          %v11357 = vshrl.u32 %v11356, 7
          %v11358 = vsub.s32 0, %v11357
          %v11359 = vrot.slane %v11354, %v11358
          %v11360 = vlaneseq
          %v11361 = vshrl.u32 %v11360, 7
          %v11362 = vsub.s32 1, %v11361
          %v11363 = vrot.slane %v11354, %v11362
          %v11382 = vunpack.c.l.b16 %v11338
          %v11383 = vunpack.c.h.b16 %v11338
          %v11384 = vunpack.c.l.b16 %v11339
          %v11385 = vunpack.c.h.b16 %v11339
          %v11386 = vunpack.c.l.b16 %v11340
          %v11387 = vunpack.c.h.b16 %v11340
          %v11388 = vunpack.c.l.b16 %v11341
          %v11389 = vunpack.c.h.b16 %v11341
          %v11390 = vunpack.c.l.b16 %v11342
          %v11391 = vunpack.c.h.b16 %v11342
          %v11392 = vunpack.c.l.b16 %v11343
          %v11393 = vunpack.c.h.b16 %v11343
          %v11394 = vunpack.c.l.b16 %v11344
          %v11395 = vunpack.c.h.b16 %v11344
          %v11396 = vunpack.c.l.b16 %v11345
          %v11397 = vunpack.c.h.b16 %v11345
          %v11398 = vunpack.c.l.b16 %v11346
          %v11399 = vunpack.c.h.b16 %v11346
          %v11400 = vunpack.c.l.b16 %v11347
          %v11401 = vunpack.c.h.b16 %v11347
          %v11402 = vunpack.c.l.b16 %v11348
          %v11403 = vunpack.c.h.b16 %v11348
          %v11404 = vunpack.c.l.b16 %v11349
          %v11405 = vunpack.c.h.b16 %v11349
          %v11406 = vunpack.c.l.b16 %v11350
          %v11407 = vunpack.c.h.b16 %v11350
          %v11408 = vunpack.c.l.b16 %v11351
          %v11409 = vunpack.c.h.b16 %v11351
          %v11410 = vunpack.c.l.b16 %v11352
          %v11411 = vunpack.c.h.b16 %v11352
          %v11412 = vunpack.c.l.b16 %v11353
          %v11413 = vunpack.c.h.b16 %v11353
          %v11414 = vpack.c.b16 %v11384, %v11382
          %v11415 = vpack.c.b16 %v11385, %v11383
          %v11416 = vpack.c.b16 %v11388, %v11386
          %v11417 = vpack.c.b16 %v11389, %v11387
          %v11418 = vpack.c.b16 %v11392, %v11390
          %v11419 = vpack.c.b16 %v11393, %v11391
          %v11420 = vpack.c.b16 %v11396, %v11394
          %v11421 = vpack.c.b16 %v11397, %v11395
          %v11422 = vpack.c.b16 %v11400, %v11398
          %v11423 = vpack.c.b16 %v11401, %v11399
          %v11424 = vpack.c.b16 %v11404, %v11402
          %v11425 = vpack.c.b16 %v11405, %v11403
          %v11426 = vpack.c.b16 %v11408, %v11406
          %v11427 = vpack.c.b16 %v11409, %v11407
          %v11428 = vpack.c.b16 %v11412, %v11410
          %v11429 = vpack.c.b16 %v11413, %v11411
          %11446 = vmatprep.subr.bf16.mxu0 %v11429
          %11447 = vmatpush1.bf16.msra.mxu0 %v11428
          %11448 = vmatprep.subr.bf16.mxu0 %v11427
          %11449 = vmatpush1.bf16.msra.mxu0 %v11426
          %11450 = vmatprep.subr.bf16.mxu0 %v11425
          %11451 = vmatpush1.bf16.msra.mxu0 %v11424
          %11452 = vmatprep.subr.bf16.mxu0 %v11423
          %11453 = vmatpush1.bf16.msra.mxu0 %v11422
          %11454 = vmatprep.subr.bf16.mxu0 %v11421
          %11455 = vmatpush1.bf16.msra.mxu0 %v11420
          %11456 = vmatprep.subr.bf16.mxu0 %v11419
          %11457 = vmatpush1.bf16.msra.mxu0 %v11418
          %11458 = vmatprep.subr.bf16.mxu0 %v11417
          %11459 = vmatpush1.bf16.msra.mxu0 %v11416
          %11460 = vmatprep.subr.bf16.mxu0 %v11415
          %11461 = vmatpush1.bf16.msra.mxu0 %v11414
          %11462 = vmatprep.subr.bf16.mxu0 0
          %11463 = vmatpush2.bf16.msra.mxu0 0
          %11464 = vmatprep.subr.bf16.mxu0 0
          %11465 = vmatpush2.bf16.msra.mxu0 0
          %11466 = vmatprep.subr.bf16.mxu0 0
          %11467 = vmatpush2.bf16.msra.mxu0 0
          %11468 = vmatprep.subr.bf16.mxu0 0
          %11469 = vmatpush2.bf16.msra.mxu0 0
          %11470 = vmatprep.subr.bf16.mxu0 0
          %11471 = vmatpush2.bf16.msra.mxu0 0
          %11472 = vmatprep.subr.bf16.mxu0 0
          %11473 = vmatpush2.bf16.msra.mxu0 0
          %11474 = vmatprep.subr.bf16.mxu0 0
          %11475 = vmatpush2.bf16.msra.mxu0 0
          %11476 = vmatprep.subr.bf16.mxu0 0
          %11477 = vmatpush2.bf16.msra.mxu0 0
          %11478 = vmatprep.mubr.bf16.mxu0 0
          %11479 = vmatmul.mubr.bf16.gmra.mxu0 %v11337
          %v11480 = vpop.f32.mrf.mxu0
          %v11481 = vadd.f32 %v11359, %v11480
          %v11482 = vpop.f32.mrf.mxu0
          %v11483 = vadd.f32 %v11363, %v11482
          %v11484 = vpop.f32.mrf.mxu0
          %v11485 = vadd.f32 %v11359, %v11484
          %v11486 = vpop.f32.mrf.mxu0
          %v11487 = vadd.f32 %v11363, %v11486
          %11488 = vdwg.mxu0
          %v11489 = vmul.f32 %v11481, %v11252
          %v11490 = vmul.f32 %v11485, %v11253
          %11491 = vst [vmem:[%s458] sm:$0xff] %v11489
          %11492 = vst [vmem:[%s458 + $0x10] sm:$0xff] %v11490
          %v11493 = vmul.f32 %v11483, 0.5
          %v11494 = vmul.f32 %v11487, 0.5
          %v11495 = vmul.f32 %v11493, 1.442695
          %v11496 = vpow.pop %v11495
          %v11497 = vmul.f32 %v11494, 1.442695
          %v11498 = vpow.pop %v11497
          %v11499 = vmul.f32 %v11496, %v11252
          %v11500 = vmul.f32 %v11498, %v11253
          %11501 = vst [vmem:[%s458 + $0x8] sm:$0xff] %v11499
          %11502 = vst [vmem:[%s458 + $0x18] sm:$0xff] %v11500
        $region104: #{vae_encoder_forward.1} parent=55 // pred_fallthru
          _
        %s11503 = smul.u32 2, %s30
        %p11504 = scmp.lt.s32.totalorder %s11503, 1
        %s11505 = scalar_select %p11504, %s11503, 1
        %s11506 = smul.addr %s11505, 2
        %s11507 = smul.addr %s11506, 8
        %s11508 = scalar_lea.vmem %s9, %s11507
        // Predicated region
        $region105: #{vae_encoder_forward.1} parent=55 // pred_check
          %p11509 = pneg %p249
        $region106: #{vae_encoder_forward.1} parent=55 // pred_check_branch
          %11511 = sbr.rel (%p11509) target = $region108
        $region107: #{vae_encoder_forward.1} parent=55 // pred_region
          %s11512 = smul.u32 2, %s30
        $region108: #{vae_encoder_forward.1} parent=55 // pred_fallthru
          _
        // Predicated region
        $region109: #{vae_encoder_forward.1} parent=55 // pred_check
          %p11513 = pneg %p249
        $region110: #{vae_encoder_forward.1} parent=55 // pred_check_branch
          %11515 = sbr.rel (%p11513) target = $region112
        $region111: #{vae_encoder_forward.1} parent=55 // pred_region
          %s11516 = smul.u32 2, %s30
          %p11517 = scmp.lt.s32.totalorder %s11516, 1
          %s11518 = scalar_select %p11517, %s11516, 1
          %s11519 = smul.addr %s11518, 2
          %s11520 = smul.addr %s11519, 8
          %s11521 = scalar_lea.vmem %s9, %s11520
        $region112: #{vae_encoder_forward.1} parent=55 // pred_fallthru
          _
      $region56: #{vae_encoder_forward.1} parent=5 // pred_fallthru
        _
      %p11522 = scmp.le.s32.totalorder 2, %s20
      // Predicated region
      $region113: #{vae_encoder_forward.1} parent=5 // pred_check
        %p11523 = pneg %p11522
      $region114: #{vae_encoder_forward.1} parent=5 // pred_check_branch
        %11525 = sbr.rel (%p11523) target = $region116
      $region115: #{vae_encoder_forward.1} parent=5 // pred_region
        %s11526 = ssub.s32 %s20, 2
      $region116: #{vae_encoder_forward.1} parent=5 // pred_fallthru
        _
    $region6: #{vae_encoder_forward.1} parent=1 // loop_footer
      %s24 = sadd.s32 1, %s20
    $region7: #{vae_encoder_forward.1} parent=1 // loop_footer_branch
      %19 = sbr.rel target = $region3
    $region8: #{vae_encoder_forward.1} parent=1 // loop_exit
      _
    %11527 = vsyncpa [#allocation7], 1
    %s11528 = scalar_lea.sflag [#allocation7], 1
    %11529 = vsyncpa %s11528, 1
    %11530 = vsyncpa [#allocation9], 1
    %11531 = vsyncpa [#allocation12], 1
    %11532 = vsyncpa [#allocation15], 1
    %11533 = vsyncpa [#allocation18], 1

</llo_original>
